<compile_context>
chip_gen: v7x
topology: tpu7x:2x2x1
jax: 0.10.0
libtpu: 0.0.40
codegen_flags: <defaults>
</compile_context>

<pallas_src>
import jax
import jax.numpy as jnp
from jax.experimental import pallas as pl
from jax.experimental.pallas import tpu as pltpu


def _fused_kernel(x_ref, w1_ref, gamma_ref, beta_ref, res_ref, w2_ref, out_ref):
    # x_ref:     [C_in,  P]          f32   input of conv2d251, channels-major
    # w1_ref:    [C_mid, C_in]       bf16  conv2d251 weight (native PyTorch layout)
    # gamma_ref: [C_mid, 1]          f32   batchnorm weight
    # beta_ref:  [C_mid, 1]          f32   batchnorm bias
    # res_ref:   [C_mid, P]          f32   residual (x739), channels-major
    # w2_ref:    [C_out_blk, C_mid]  bf16  this step/core's slice of conv2d252 weight
    # out_ref:   [C_out_blk, P]      f32
    x = x_ref[...].astype(jnp.bfloat16)

    # conv2d251 (1x1, no bias): h = w1 @ x -> [C_mid, P], f32 accumulation on MXU.
    h = jax.lax.dot_general(
        w1_ref[...], x,
        dimension_numbers=(((1,), (0,)), ((), ())),
        preferred_element_type=jnp.float32)

    # BatchNorm2d(384), training mode: batch statistics over P = N*H*W, biased variance.
    # Single-pass stats: the two reductions over h are independent (not serialized
    # through the mean).  All statistics / scale / shift kept in f32.
    p = h.shape[1]
    inv_p = 1.0 / p
    mean = jnp.sum(h, axis=1, keepdims=True) * inv_p            # [C_mid, 1]
    ex2 = jnp.sum(h * h, axis=1, keepdims=True) * inv_p         # [C_mid, 1]
    var = jnp.maximum(ex2 - mean * mean, 0.0)
    inv_std = jax.lax.rsqrt(var + 1e-5)
    y = (h - mean) * (inv_std * gamma_ref[...]) + beta_ref[...]

    # residual add (f32)
    z = y + res_ref[...]

    # conv2d252 (1x1, no bias): out block = w2_blk @ z -> [C_out_blk, P]
    out_ref[...] = jax.lax.dot_general(
        w2_ref[...], z.astype(jnp.bfloat16),
        dimension_numbers=(((1,), (0,)), ((), ())),
        preferred_element_type=jnp.float32)


def _tensorcores_per_chip() -> int:
    """2 for chips with two TensorCores (v7x, v4, v5p); 1 for v5e/v6e/unknown."""
    try:
        kind = jax.devices()[0].device_kind.lower()
    except Exception:
        return 1
    return 2 if any(tag in kind for tag in ("v7", "v4", "v5p")) else 1


def _const_spec(shape, single_buffer):
    """BlockSpec for a grid-invariant input (block index never changes)."""
    if single_buffer:
        # Only used on the 2-core path: double-buffering a constant block wastes VMEM.
        return pl.BlockSpec(shape, lambda j: (0, 0), pipeline_mode=pl.Buffered(1))
    return pl.BlockSpec(shape, lambda j: (0, 0))


def fused_forward(x751, x739, w1_bf16, gamma, beta, w2_bf16):
    """x751: [N, C_in, H, W] f32, x739: [N, C_mid, H, W] f32
       w1_bf16: [C_mid, C_in] bf16 (conv2d251.weight[:, :, 0, 0], pre-cast once)
       w2_bf16: [C_out, C_mid] bf16 (conv2d252.weight[:, :, 0, 0], pre-cast once)
       gamma/beta: [C_mid] f32
       returns [N, C_out, H, W] f32"""
    N, C_in, H, W = x751.shape
    C_mid = w1_bf16.shape[0]
    C_out = w2_bf16.shape[0]
    P = N * H * W

    # NCHW -> [C, P].  For N == 1 this is a pure reshape (no data movement).
    x_cp = jnp.moveaxis(x751, 1, 0).reshape(C_in, P)
    res_cp = jnp.moveaxis(x739, 1, 0).reshape(C_mid, P)
    gamma2 = gamma.reshape(C_mid, 1).astype(jnp.float32)
    beta2 = beta.reshape(C_mid, 1).astype(jnp.float32)

    # Split the second conv's output channels across TensorCores only when the chip
    # actually has 2 cores; on single-TC chips a grid of 2 is a serial loop that
    # re-runs conv1 + BN for nothing.
    n_split = _tensorcores_per_chip()
    if C_out % n_split != 0:
        n_split = 1
    c_out_blk = C_out // n_split
    multi = n_split > 1

    # Advisory cost for XLA's scheduler (kernel is small and partly latency-bound).
    flops = 2 * P * C_mid * (C_in + C_out)
    bytes_accessed = (x_cp.size * 4 + res_cp.size * 4 + w1_bf16.size * 2 +
                      w2_bf16.size * 2 + 2 * C_mid * 4 + C_out * P * 4)
    cost = pl.CostEstimate(flops=flops, transcendentals=C_mid,
                           bytes_accessed=bytes_accessed)

    out_cp = pl.pallas_call(
        _fused_kernel,
        out_shape=jax.ShapeDtypeStruct((C_out, P), jnp.float32),
        grid=(n_split,),
        in_specs=[
            _const_spec((C_in, P), multi),          # x      (grid-invariant)
            _const_spec((C_mid, C_in), multi),      # w1     (grid-invariant)
            _const_spec((C_mid, 1), multi),         # gamma  (grid-invariant)
            _const_spec((C_mid, 1), multi),         # beta   (grid-invariant)
            _const_spec((C_mid, P), multi),         # resid  (grid-invariant)
            pl.BlockSpec((c_out_blk, C_mid), lambda j: (j, 0)),   # w2 slice per step
        ],
        out_specs=pl.BlockSpec((c_out_blk, P), lambda j: (j, 0)),
        compiler_params=pltpu.CompilerParams(
            dimension_semantics=("parallel",),
            vmem_limit_bytes=40 * 1024 * 1024),
        cost_estimate=cost,
    )(x_cp, w1_bf16, gamma2, beta2, res_cp, w2_bf16)

    # [C_out, P] -> [N, C_out, H, W] (free for N == 1)
    return jnp.moveaxis(out_cp.reshape(C_out, N, H, W), 0, 1)


fused_forward_jit = jax.jit(fused_forward)


def _reference(x751, x739, w1, gamma, beta, w2):
    """Plain-JAX f32 HIGHEST-precision reference of the same forward (training-mode BN)."""
    N, C_in, H, W = x751.shape
    C_mid = w1.shape[0]
    P = N * H * W
    x = jnp.transpose(x751, (0, 2, 3, 1)).reshape(P, C_in)
    r = jnp.transpose(x739, (0, 2, 3, 1)).reshape(P, C_mid)
    h = jnp.dot(x, w1.T, precision=jax.lax.Precision.HIGHEST)
    mean = jnp.mean(h, axis=0, keepdims=True)
    var = jnp.mean((h - mean) ** 2, axis=0, keepdims=True)
    y = (h - mean) * jax.lax.rsqrt(var + 1e-5) * gamma[None, :] + beta[None, :]
    z = y + r
    o = jnp.dot(z, w2.T, precision=jax.lax.Precision.HIGHEST)
    return o.reshape(N, H, W, w2.shape[0]).transpose(0, 3, 1, 2)


if __name__ == "__main__":
    # Shapes from the module's forward: x751 [1, 2304, 7, 7], x739 [1, 384, 7, 7]
    N, H, W = 1, 7, 7
    C_in, C_mid = 2304, 384   # conv2d251: 2304 -> 384; conv2d252: 384 -> 2304
    C_out = C_in

    key = jax.random.PRNGKey(0)
    k1, k2, k3, k4, k5, k6 = jax.random.split(key, 6)

    x751 = jax.random.normal(k1, (N, C_in, H, W), dtype=jnp.float32)
    x739 = jax.random.normal(k2, (N, C_mid, H, W), dtype=jnp.float32)

    # Deterministic parameter init (synthetic; shapes from module __init__)
    w1 = jax.random.normal(k3, (C_mid, C_in), dtype=jnp.float32) * 0.02   # conv2d251.weight[:, :, 0, 0]
    w2 = jax.random.normal(k4, (C_out, C_mid), dtype=jnp.float32) * 0.02  # conv2d252.weight[:, :, 0, 0]
    gamma = 1.0 + 0.1 * jax.random.normal(k5, (C_mid,), dtype=jnp.float32)  # batchnorm weight
    beta = 0.1 * jax.random.normal(k6, (C_mid,), dtype=jnp.float32)         # batchnorm bias

    # Weights are static: cast to bf16 ONCE outside the step (halves weight HBM traffic).
    w1_bf16 = jax.block_until_ready(w1.astype(jnp.bfloat16))
    w2_bf16 = jax.block_until_ready(w2.astype(jnp.bfloat16))

    out = fused_forward_jit(x751, x739, w1_bf16, gamma, beta, w2_bf16)
    out = jax.block_until_ready(out)

    ref = jax.block_until_ready(_reference(x751, x739, w1, gamma, beta, w2))
    assert out.shape == (N, C_out, H, W), out.shape
    err = jnp.max(jnp.abs(out - ref)) / (jnp.max(jnp.abs(ref)) + 1e-6)
    assert err < 2e-2, f"relative error too large: {err}"

    print("KERNEL_OK")
</pallas_src>

<mosaic_0001>
module attributes {stable_mosaic.version = 11 : i64} {
  func.func @_fused_kernel(%arg0: i32, %arg1: memref<2304x49xf32, #tpu.memory_space<vmem>>, %arg2: memref<384x2304xbf16, #tpu.memory_space<vmem>>, %arg3: memref<384x1xf32, #tpu.memory_space<vmem>>, %arg4: memref<384x1xf32, #tpu.memory_space<vmem>>, %arg5: memref<384x49xf32, #tpu.memory_space<vmem>>, %arg6: memref<2304x384xbf16, #tpu.memory_space<vmem>>, %arg7: memref<2304x49xf32, #tpu.memory_space<vmem>>) attributes {dimension_semantics = [#tpu.dimension_semantics<parallel>], iteration_bounds = array<i64: 1>, scalar_prefetch = 0 : i64, scratch_operands = 0 : i64, tpu.core_type = #tpu.core_type<tc>, window_params = [{pipeline_mode = #tpu.pipeline_mode<synchronous>, transform_indices = @transform_0, window_bounds = array<i64: 2304, 49>}, {pipeline_mode = #tpu.pipeline_mode<synchronous>, transform_indices = @transform_1, window_bounds = array<i64: 384, 2304>}, {pipeline_mode = #tpu.pipeline_mode<synchronous>, transform_indices = @transform_2, window_bounds = array<i64: 384, 1>}, {pipeline_mode = #tpu.pipeline_mode<synchronous>, transform_indices = @transform_3, window_bounds = array<i64: 384, 1>}, {pipeline_mode = #tpu.pipeline_mode<synchronous>, transform_indices = @transform_4, window_bounds = array<i64: 384, 49>}, {transform_indices = @transform_5, window_bounds = array<i64: 2304, 384>}, {transform_indices = @transform_6, window_bounds = array<i64: 2304, 49>}]} {
    %c0 = arith.constant 0 : index
    %c0_0 = arith.constant 0 : index
    %0 = vector.load %arg1[%c0, %c0_0] : memref<2304x49xf32, #tpu.memory_space<vmem>>, vector<2304x49xf32>
    %1 = arith.truncf %0 : vector<2304x49xf32> to vector<2304x49xbf16>
    %c0_1 = arith.constant 0 : index
    %c0_2 = arith.constant 0 : index
    %2 = vector.load %arg2[%c0_1, %c0_2] : memref<384x2304xbf16, #tpu.memory_space<vmem>>, vector<384x2304xbf16>
    %cst = arith.constant dense<0.000000e+00> : vector<384x49xf32>
    %3 = tpu.matmul %2, %1, %cst {dimension_numbers = #tpu.dot_dimension_numbers<[1], [0], [0], [1], [0, 0, 1, 1], [], []>} : vector<384x2304xbf16>, vector<2304x49xbf16>, vector<384x49xf32> -> vector<384x49xf32>
    %cst_3 = arith.constant dense<0.000000e+00> : vector<384xf32>
    %4 = vector.multi_reduction <add>, %3, %cst_3 [1] : vector<384x49xf32> to vector<384xf32>
    %5 = vector.shape_cast %4 : vector<384xf32> to vector<384x1xf32>
    %cst_4 = arith.constant 0.0204081628 : f32
    %6 = vector.broadcast %cst_4 : f32 to vector<384x1xf32>
    %7 = arith.mulf %5, %6 : vector<384x1xf32>
    %8 = arith.mulf %3, %3 : vector<384x49xf32>
    %cst_5 = arith.constant dense<0.000000e+00> : vector<384xf32>
    %9 = vector.multi_reduction <add>, %8, %cst_5 [1] : vector<384x49xf32> to vector<384xf32>
    %10 = vector.shape_cast %9 : vector<384xf32> to vector<384x1xf32>
    %cst_6 = arith.constant 0.0204081628 : f32
    %11 = vector.broadcast %cst_6 : f32 to vector<384x1xf32>
    %12 = arith.mulf %10, %11 : vector<384x1xf32>
    %13 = arith.mulf %7, %7 : vector<384x1xf32>
    %14 = arith.subf %12, %13 : vector<384x1xf32>
    %cst_7 = arith.constant 0.000000e+00 : f32
    %15 = vector.broadcast %cst_7 : f32 to vector<384x1xf32>
    %16 = arith.maximumf %14, %15 : vector<384x1xf32>
    %cst_8 = arith.constant 9.99999974E-6 : f32
    %17 = vector.broadcast %cst_8 : f32 to vector<384x1xf32>
    %18 = arith.addf %16, %17 : vector<384x1xf32>
    %19 = math.rsqrt %18 : vector<384x1xf32>
    %20 = vector.broadcast %7 : vector<384x1xf32> to vector<384x49xf32>
    %21 = arith.subf %3, %20 : vector<384x49xf32>
    %c0_9 = arith.constant 0 : index
    %c0_10 = arith.constant 0 : index
    %22 = vector.load %arg3[%c0_9, %c0_10] : memref<384x1xf32, #tpu.memory_space<vmem>>, vector<384x1xf32>
    %23 = arith.mulf %19, %22 : vector<384x1xf32>
    %24 = vector.broadcast %23 : vector<384x1xf32> to vector<384x49xf32>
    %25 = arith.mulf %21, %24 : vector<384x49xf32>
    %c0_11 = arith.constant 0 : index
    %c0_12 = arith.constant 0 : index
    %26 = vector.load %arg4[%c0_11, %c0_12] : memref<384x1xf32, #tpu.memory_space<vmem>>, vector<384x1xf32>
    %27 = vector.broadcast %26 : vector<384x1xf32> to vector<384x49xf32>
    %28 = arith.addf %25, %27 : vector<384x49xf32>
    %c0_13 = arith.constant 0 : index
    %c0_14 = arith.constant 0 : index
    %29 = vector.load %arg5[%c0_13, %c0_14] : memref<384x49xf32, #tpu.memory_space<vmem>>, vector<384x49xf32>
    %30 = arith.addf %28, %29 : vector<384x49xf32>
    %c0_15 = arith.constant 0 : index
    %c0_16 = arith.constant 0 : index
    %31 = vector.load %arg6[%c0_15, %c0_16] : memref<2304x384xbf16, #tpu.memory_space<vmem>>, vector<2304x384xbf16>
    %32 = arith.truncf %30 : vector<384x49xf32> to vector<384x49xbf16>
    %cst_17 = arith.constant dense<0.000000e+00> : vector<2304x49xf32>
    %33 = tpu.matmul %31, %32, %cst_17 {dimension_numbers = #tpu.dot_dimension_numbers<[1], [0], [0], [1], [0, 0, 1, 1], [], []>} : vector<2304x384xbf16>, vector<384x49xbf16>, vector<2304x49xf32> -> vector<2304x49xf32>
    %c0_18 = arith.constant 0 : index
    %c0_19 = arith.constant 0 : index
    %34 = vector.load %arg7[%c0_18, %c0_19] : memref<2304x49xf32, #tpu.memory_space<vmem>>, vector<2304x49xf32>
    tpu.vector_store %arg7[%c0_18, %c0_19], %33 {strides = array<i32>} : memref<2304x49xf32, #tpu.memory_space<vmem>>, vector<2304x49xf32>,
    return
  }
  func.func @transform_0(%arg0: i32) -> (i32, i32) {
    %c0_i32 = arith.constant 0 : i32
    %c0_i32_0 = arith.constant 0 : i32
    %c0_i32_1 = arith.constant 0 : i32
    return %c0_i32, %c0_i32_0 : i32, i32
  }
  func.func @transform_1(%arg0: i32) -> (i32, i32) {
    %c0_i32 = arith.constant 0 : i32
    %c0_i32_0 = arith.constant 0 : i32
    %c0_i32_1 = arith.constant 0 : i32
    return %c0_i32, %c0_i32_0 : i32, i32
  }
  func.func @transform_2(%arg0: i32) -> (i32, i32) {
    %c0_i32 = arith.constant 0 : i32
    %c0_i32_0 = arith.constant 0 : i32
    %c0_i32_1 = arith.constant 0 : i32
    return %c0_i32, %c0_i32_0 : i32, i32
  }
  func.func @transform_3(%arg0: i32) -> (i32, i32) {
    %c0_i32 = arith.constant 0 : i32
    %c0_i32_0 = arith.constant 0 : i32
    %c0_i32_1 = arith.constant 0 : i32
    return %c0_i32, %c0_i32_0 : i32, i32
  }
  func.func @transform_4(%arg0: i32) -> (i32, i32) {
    %c0_i32 = arith.constant 0 : i32
    %c0_i32_0 = arith.constant 0 : i32
    %c0_i32_1 = arith.constant 0 : i32
    return %c0_i32, %c0_i32_0 : i32, i32
  }
  func.func @transform_5(%arg0: i32) -> (i32, i32) {
    %c0_i32 = arith.constant 0 : i32
    %c0_i32_0 = arith.constant 0 : i32
    return %arg0, %c0_i32 : i32, i32
  }
  func.func @transform_6(%arg0: i32) -> (i32, i32) {
    %c0_i32 = arith.constant 0 : i32
    %c0_i32_0 = arith.constant 0 : i32
    return %arg0, %c0_i32 : i32, i32
  }
}

</mosaic_0001>

<llo_original>
// kernel: fused_forward.1
$region0: #{fused_forward.1}
  #allocation0 [shape = 'u32[]', space=smem, size = 0x4, offset = 0x4, fixed_abs, tag = 'smem constant byte address 0x4 - core index']
  #allocation1 [shape = 'u32[144,128]{1,0:T(1,128)}', space=vmem, size = 0x12000, scoped, tag = 'internal scratch']
  %s0 = inlined_call_operand.vmem [shape: f32[2304,49], index: 0, kind: input, shape index: {}]
  %s1 = inlined_call_operand.vmem [shape: bf16[384,2304], index: 1, kind: input, shape index: {}]
  %s2 = inlined_call_operand.vmem [shape: f32[384,1], index: 2, kind: input, shape index: {}]
  %s3 = inlined_call_operand.vmem [shape: f32[384,1], index: 3, kind: input, shape index: {}]
  %s4 = inlined_call_operand.vmem [shape: f32[384,49], index: 4, kind: input, shape index: {}]
  %s5 = inlined_call_operand.vmem [shape: bf16[2304,384], index: 5, kind: input, shape index: {}]
  %s6 = inlined_call_operand.vmem [shape: f32[2304,49], index: 6, kind: output, shape index: {}]
  %s7 = sld [smem:[#allocation0]]
  $region34: #{fused_forward.1} parent=0
    _
  %s9 = ssub.s32 1, %s7
  %s10 = scalar_select 0, %s9, %s7
  // Predicated region
  $region2: #{fused_forward.1} parent=0 // pred_check
    _
  $region3: #{fused_forward.1} parent=0 // pred_check_branch
    %12 = sbr.rel (0) target = $region5
  $region4: #{fused_forward.1} parent=0 // pred_region
    _
  $region5: #{fused_forward.1} parent=0 // pred_fallthru
    _
  // Predicated region
  $region6: #{fused_forward.1} parent=0 // pred_check
    _
  $region7: #{fused_forward.1} parent=0 // pred_check_branch
    %14 = sbr.rel (0) target = $region9
  $region8: #{fused_forward.1} parent=0 // pred_region
    _
  $region9: #{fused_forward.1} parent=0 // pred_fallthru
    _
  // Predicated region
  $region10: #{fused_forward.1} parent=0 // pred_check
    _
  $region11: #{fused_forward.1} parent=0 // pred_check_branch
    %16 = sbr.rel (0) target = $region13
  $region12: #{fused_forward.1} parent=0 // pred_region
    _
  $region13: #{fused_forward.1} parent=0 // pred_fallthru
    _
  // Predicated region
  $region14: #{fused_forward.1} parent=0 // pred_check
    _
  $region15: #{fused_forward.1} parent=0 // pred_check_branch
    %18 = sbr.rel (0) target = $region17
  $region16: #{fused_forward.1} parent=0 // pred_region
    _
  $region17: #{fused_forward.1} parent=0 // pred_fallthru
    _
  // Predicated region
  $region18: #{fused_forward.1} parent=0 // pred_check
    _
  $region19: #{fused_forward.1} parent=0 // pred_check_branch
    %20 = sbr.rel (0) target = $region21
  $region20: #{fused_forward.1} parent=0 // pred_region
    _
  $region21: #{fused_forward.1} parent=0 // pred_fallthru
    _
  // Predicated region
  $region22: #{fused_forward.1} parent=0 // pred_check
    _
  $region23: #{fused_forward.1} parent=0 // pred_check_branch
    %22 = sbr.rel (0) target = $region25
  $region24: #{fused_forward.1} parent=0 // pred_region
    _
  $region25: #{fused_forward.1} parent=0 // pred_fallthru
    _
  %v24 = vld [vmem:[%s0] sm:$0xff]
  %v25 = vld [vmem:[%s0 + $0x8] sm:$0xff]
  %v26 = vld [vmem:[%s0 + $0x10] sm:$0xff]
  %v27 = vld [vmem:[%s0 + $0x18] sm:$0xff]
  %v28 = vld [vmem:[%s0 + $0x20] sm:$0xff]
  %v29 = vld [vmem:[%s0 + $0x28] sm:$0xff]
  %v30 = vld [vmem:[%s0 + $0x30] sm:$0xff]
  %v31 = vld [vmem:[%s0 + $0x38] sm:$0xff]
  %v32 = vld [vmem:[%s0 + $0x40] sm:$0xff]
  %v33 = vld [vmem:[%s0 + $0x48] sm:$0xff]
  %v34 = vld [vmem:[%s0 + $0x50] sm:$0xff]
  %v35 = vld [vmem:[%s0 + $0x58] sm:$0xff]
  %v36 = vld [vmem:[%s0 + $0x60] sm:$0xff]
  %v37 = vld [vmem:[%s0 + $0x68] sm:$0xff]
  %v38 = vld [vmem:[%s0 + $0x70] sm:$0xff]
  %v39 = vld [vmem:[%s0 + $0x78] sm:$0xff]
  %v40 = vld [vmem:[%s0 + $0x80] sm:$0xff]
  %v41 = vld [vmem:[%s0 + $0x88] sm:$0xff]
  %v42 = vld [vmem:[%s0 + $0x90] sm:$0xff]
  %v43 = vld [vmem:[%s0 + $0x98] sm:$0xff]
  %v44 = vld [vmem:[%s0 + $0xa0] sm:$0xff]
  %v45 = vld [vmem:[%s0 + $0xa8] sm:$0xff]
  %v46 = vld [vmem:[%s0 + $0xb0] sm:$0xff]
  %v47 = vld [vmem:[%s0 + $0xb8] sm:$0xff]
  %v48 = vld [vmem:[%s0 + $0xc0] sm:$0xff]
  %v49 = vld [vmem:[%s0 + $0xc8] sm:$0xff]
  %v50 = vld [vmem:[%s0 + $0xd0] sm:$0xff]
  %v51 = vld [vmem:[%s0 + $0xd8] sm:$0xff]
  %v52 = vld [vmem:[%s0 + $0xe0] sm:$0xff]
  %v53 = vld [vmem:[%s0 + $0xe8] sm:$0xff]
  %v54 = vld [vmem:[%s0 + $0xf0] sm:$0xff]
  %v55 = vld [vmem:[%s0 + $0xf8] sm:$0xff]
  %v56 = vld [vmem:[%s0 + $0x100] sm:$0xff]
  %v57 = vld [vmem:[%s0 + $0x108] sm:$0xff]
  %v58 = vld [vmem:[%s0 + $0x110] sm:$0xff]
  %v59 = vld [vmem:[%s0 + $0x118] sm:$0xff]
  %v60 = vld [vmem:[%s0 + $0x120] sm:$0xff]
  %v61 = vld [vmem:[%s0 + $0x128] sm:$0xff]
  %v62 = vld [vmem:[%s0 + $0x130] sm:$0xff]
  %v63 = vld [vmem:[%s0 + $0x138] sm:$0xff]
  %v64 = vld [vmem:[%s0 + $0x140] sm:$0xff]
  %v65 = vld [vmem:[%s0 + $0x148] sm:$0xff]
  %v66 = vld [vmem:[%s0 + $0x150] sm:$0xff]
  %v67 = vld [vmem:[%s0 + $0x158] sm:$0xff]
  %v68 = vld [vmem:[%s0 + $0x160] sm:$0xff]
  %v69 = vld [vmem:[%s0 + $0x168] sm:$0xff]
  %v70 = vld [vmem:[%s0 + $0x170] sm:$0xff]
  %v71 = vld [vmem:[%s0 + $0x178] sm:$0xff]
  %v72 = vld [vmem:[%s0 + $0x180] sm:$0xff]
  %v73 = vld [vmem:[%s0 + $0x188] sm:$0xff]
  %v74 = vld [vmem:[%s0 + $0x190] sm:$0xff]
  %v75 = vld [vmem:[%s0 + $0x198] sm:$0xff]
  %v76 = vld [vmem:[%s0 + $0x1a0] sm:$0xff]
  %v77 = vld [vmem:[%s0 + $0x1a8] sm:$0xff]
  %v78 = vld [vmem:[%s0 + $0x1b0] sm:$0xff]
  %v79 = vld [vmem:[%s0 + $0x1b8] sm:$0xff]
  %v80 = vld [vmem:[%s0 + $0x1c0] sm:$0xff]
  %v81 = vld [vmem:[%s0 + $0x1c8] sm:$0xff]
  %v82 = vld [vmem:[%s0 + $0x1d0] sm:$0xff]
  %v83 = vld [vmem:[%s0 + $0x1d8] sm:$0xff]
  %v84 = vld [vmem:[%s0 + $0x1e0] sm:$0xff]
  %v85 = vld [vmem:[%s0 + $0x1e8] sm:$0xff]
  %v86 = vld [vmem:[%s0 + $0x1f0] sm:$0xff]
  %v87 = vld [vmem:[%s0 + $0x1f8] sm:$0xff]
  %v88 = vld [vmem:[%s0 + $0x200] sm:$0xff]
  %v89 = vld [vmem:[%s0 + $0x208] sm:$0xff]
  %v90 = vld [vmem:[%s0 + $0x210] sm:$0xff]
  %v91 = vld [vmem:[%s0 + $0x218] sm:$0xff]
  %v92 = vld [vmem:[%s0 + $0x220] sm:$0xff]
  %v93 = vld [vmem:[%s0 + $0x228] sm:$0xff]
  %v94 = vld [vmem:[%s0 + $0x230] sm:$0xff]
  %v95 = vld [vmem:[%s0 + $0x238] sm:$0xff]
  %v96 = vld [vmem:[%s0 + $0x240] sm:$0xff]
  %v97 = vld [vmem:[%s0 + $0x248] sm:$0xff]
  %v98 = vld [vmem:[%s0 + $0x250] sm:$0xff]
  %v99 = vld [vmem:[%s0 + $0x258] sm:$0xff]
  %v100 = vld [vmem:[%s0 + $0x260] sm:$0xff]
  %v101 = vld [vmem:[%s0 + $0x268] sm:$0xff]
  %v102 = vld [vmem:[%s0 + $0x270] sm:$0xff]
  %v103 = vld [vmem:[%s0 + $0x278] sm:$0xff]
  %v104 = vld [vmem:[%s0 + $0x280] sm:$0xff]
  %v105 = vld [vmem:[%s0 + $0x288] sm:$0xff]
  %v106 = vld [vmem:[%s0 + $0x290] sm:$0xff]
  %v107 = vld [vmem:[%s0 + $0x298] sm:$0xff]
  %v108 = vld [vmem:[%s0 + $0x2a0] sm:$0xff]
  %v109 = vld [vmem:[%s0 + $0x2a8] sm:$0xff]
  %v110 = vld [vmem:[%s0 + $0x2b0] sm:$0xff]
  %v111 = vld [vmem:[%s0 + $0x2b8] sm:$0xff]
  %v112 = vld [vmem:[%s0 + $0x2c0] sm:$0xff]
  %v113 = vld [vmem:[%s0 + $0x2c8] sm:$0xff]
  %v114 = vld [vmem:[%s0 + $0x2d0] sm:$0xff]
  %v115 = vld [vmem:[%s0 + $0x2d8] sm:$0xff]
  %v116 = vld [vmem:[%s0 + $0x2e0] sm:$0xff]
  %v117 = vld [vmem:[%s0 + $0x2e8] sm:$0xff]
  %v118 = vld [vmem:[%s0 + $0x2f0] sm:$0xff]
  %v119 = vld [vmem:[%s0 + $0x2f8] sm:$0xff]
  %v120 = vld [vmem:[%s0 + $0x300] sm:$0xff]
  %v121 = vld [vmem:[%s0 + $0x308] sm:$0xff]
  %v122 = vld [vmem:[%s0 + $0x310] sm:$0xff]
  %v123 = vld [vmem:[%s0 + $0x318] sm:$0xff]
  %v124 = vld [vmem:[%s0 + $0x320] sm:$0xff]
  %v125 = vld [vmem:[%s0 + $0x328] sm:$0xff]
  %v126 = vld [vmem:[%s0 + $0x330] sm:$0xff]
  %v127 = vld [vmem:[%s0 + $0x338] sm:$0xff]
  %v128 = vld [vmem:[%s0 + $0x340] sm:$0xff]
  %v129 = vld [vmem:[%s0 + $0x348] sm:$0xff]
  %v130 = vld [vmem:[%s0 + $0x350] sm:$0xff]
  %v131 = vld [vmem:[%s0 + $0x358] sm:$0xff]
  %v132 = vld [vmem:[%s0 + $0x360] sm:$0xff]
  %v133 = vld [vmem:[%s0 + $0x368] sm:$0xff]
  %v134 = vld [vmem:[%s0 + $0x370] sm:$0xff]
  %v135 = vld [vmem:[%s0 + $0x378] sm:$0xff]
  %v136 = vld [vmem:[%s0 + $0x380] sm:$0xff]
  %v137 = vld [vmem:[%s0 + $0x388] sm:$0xff]
  %v138 = vld [vmem:[%s0 + $0x390] sm:$0xff]
  %v139 = vld [vmem:[%s0 + $0x398] sm:$0xff]
  %v140 = vld [vmem:[%s0 + $0x3a0] sm:$0xff]
  %v141 = vld [vmem:[%s0 + $0x3a8] sm:$0xff]
  %v142 = vld [vmem:[%s0 + $0x3b0] sm:$0xff]
  %v143 = vld [vmem:[%s0 + $0x3b8] sm:$0xff]
  %v144 = vld [vmem:[%s0 + $0x3c0] sm:$0xff]
  %v145 = vld [vmem:[%s0 + $0x3c8] sm:$0xff]
  %v146 = vld [vmem:[%s0 + $0x3d0] sm:$0xff]
  %v147 = vld [vmem:[%s0 + $0x3d8] sm:$0xff]
  %v148 = vld [vmem:[%s0 + $0x3e0] sm:$0xff]
  %v149 = vld [vmem:[%s0 + $0x3e8] sm:$0xff]
  %v150 = vld [vmem:[%s0 + $0x3f0] sm:$0xff]
  %v151 = vld [vmem:[%s0 + $0x3f8] sm:$0xff]
  %v152 = vld [vmem:[%s0 + $0x400] sm:$0xff]
  %v153 = vld [vmem:[%s0 + $0x408] sm:$0xff]
  %v154 = vld [vmem:[%s0 + $0x410] sm:$0xff]
  %v155 = vld [vmem:[%s0 + $0x418] sm:$0xff]
  %v156 = vld [vmem:[%s0 + $0x420] sm:$0xff]
  %v157 = vld [vmem:[%s0 + $0x428] sm:$0xff]
  %v158 = vld [vmem:[%s0 + $0x430] sm:$0xff]
  %v159 = vld [vmem:[%s0 + $0x438] sm:$0xff]
  %v160 = vld [vmem:[%s0 + $0x440] sm:$0xff]
  %v161 = vld [vmem:[%s0 + $0x448] sm:$0xff]
  %v162 = vld [vmem:[%s0 + $0x450] sm:$0xff]
  %v163 = vld [vmem:[%s0 + $0x458] sm:$0xff]
  %v164 = vld [vmem:[%s0 + $0x460] sm:$0xff]
  %v165 = vld [vmem:[%s0 + $0x468] sm:$0xff]
  %v166 = vld [vmem:[%s0 + $0x470] sm:$0xff]
  %v167 = vld [vmem:[%s0 + $0x478] sm:$0xff]
  %v168 = vld [vmem:[%s0 + $0x480] sm:$0xff]
  %v169 = vld [vmem:[%s0 + $0x488] sm:$0xff]
  %v170 = vld [vmem:[%s0 + $0x490] sm:$0xff]
  %v171 = vld [vmem:[%s0 + $0x498] sm:$0xff]
  %v172 = vld [vmem:[%s0 + $0x4a0] sm:$0xff]
  %v173 = vld [vmem:[%s0 + $0x4a8] sm:$0xff]
  %v174 = vld [vmem:[%s0 + $0x4b0] sm:$0xff]
  %v175 = vld [vmem:[%s0 + $0x4b8] sm:$0xff]
  %v176 = vld [vmem:[%s0 + $0x4c0] sm:$0xff]
  %v177 = vld [vmem:[%s0 + $0x4c8] sm:$0xff]
  %v178 = vld [vmem:[%s0 + $0x4d0] sm:$0xff]
  %v179 = vld [vmem:[%s0 + $0x4d8] sm:$0xff]
  %v180 = vld [vmem:[%s0 + $0x4e0] sm:$0xff]
  %v181 = vld [vmem:[%s0 + $0x4e8] sm:$0xff]
  %v182 = vld [vmem:[%s0 + $0x4f0] sm:$0xff]
  %v183 = vld [vmem:[%s0 + $0x4f8] sm:$0xff]
  %v184 = vld [vmem:[%s0 + $0x500] sm:$0xff]
  %v185 = vld [vmem:[%s0 + $0x508] sm:$0xff]
  %v186 = vld [vmem:[%s0 + $0x510] sm:$0xff]
  %v187 = vld [vmem:[%s0 + $0x518] sm:$0xff]
  %v188 = vld [vmem:[%s0 + $0x520] sm:$0xff]
  %v189 = vld [vmem:[%s0 + $0x528] sm:$0xff]
  %v190 = vld [vmem:[%s0 + $0x530] sm:$0xff]
  %v191 = vld [vmem:[%s0 + $0x538] sm:$0xff]
  %v192 = vld [vmem:[%s0 + $0x540] sm:$0xff]
  %v193 = vld [vmem:[%s0 + $0x548] sm:$0xff]
  %v194 = vld [vmem:[%s0 + $0x550] sm:$0xff]
  %v195 = vld [vmem:[%s0 + $0x558] sm:$0xff]
  %v196 = vld [vmem:[%s0 + $0x560] sm:$0xff]
  %v197 = vld [vmem:[%s0 + $0x568] sm:$0xff]
  %v198 = vld [vmem:[%s0 + $0x570] sm:$0xff]
  %v199 = vld [vmem:[%s0 + $0x578] sm:$0xff]
  %v200 = vld [vmem:[%s0 + $0x580] sm:$0xff]
  %v201 = vld [vmem:[%s0 + $0x588] sm:$0xff]
  %v202 = vld [vmem:[%s0 + $0x590] sm:$0xff]
  %v203 = vld [vmem:[%s0 + $0x598] sm:$0xff]
  %v204 = vld [vmem:[%s0 + $0x5a0] sm:$0xff]
  %v205 = vld [vmem:[%s0 + $0x5a8] sm:$0xff]
  %v206 = vld [vmem:[%s0 + $0x5b0] sm:$0xff]
  %v207 = vld [vmem:[%s0 + $0x5b8] sm:$0xff]
  %v208 = vld [vmem:[%s0 + $0x5c0] sm:$0xff]
  %v209 = vld [vmem:[%s0 + $0x5c8] sm:$0xff]
  %v210 = vld [vmem:[%s0 + $0x5d0] sm:$0xff]
  %v211 = vld [vmem:[%s0 + $0x5d8] sm:$0xff]
  %v212 = vld [vmem:[%s0 + $0x5e0] sm:$0xff]
  %v213 = vld [vmem:[%s0 + $0x5e8] sm:$0xff]
  %v214 = vld [vmem:[%s0 + $0x5f0] sm:$0xff]
  %v215 = vld [vmem:[%s0 + $0x5f8] sm:$0xff]
  %v216 = vld [vmem:[%s0 + $0x600] sm:$0xff]
  %v217 = vld [vmem:[%s0 + $0x608] sm:$0xff]
  %v218 = vld [vmem:[%s0 + $0x610] sm:$0xff]
  %v219 = vld [vmem:[%s0 + $0x618] sm:$0xff]
  %v220 = vld [vmem:[%s0 + $0x620] sm:$0xff]
  %v221 = vld [vmem:[%s0 + $0x628] sm:$0xff]
  %v222 = vld [vmem:[%s0 + $0x630] sm:$0xff]
  %v223 = vld [vmem:[%s0 + $0x638] sm:$0xff]
  %v224 = vld [vmem:[%s0 + $0x640] sm:$0xff]
  %v225 = vld [vmem:[%s0 + $0x648] sm:$0xff]
  %v226 = vld [vmem:[%s0 + $0x650] sm:$0xff]
  %v227 = vld [vmem:[%s0 + $0x658] sm:$0xff]
  %v228 = vld [vmem:[%s0 + $0x660] sm:$0xff]
  %v229 = vld [vmem:[%s0 + $0x668] sm:$0xff]
  %v230 = vld [vmem:[%s0 + $0x670] sm:$0xff]
  %v231 = vld [vmem:[%s0 + $0x678] sm:$0xff]
  %v232 = vld [vmem:[%s0 + $0x680] sm:$0xff]
  %v233 = vld [vmem:[%s0 + $0x688] sm:$0xff]
  %v234 = vld [vmem:[%s0 + $0x690] sm:$0xff]
  %v235 = vld [vmem:[%s0 + $0x698] sm:$0xff]
  %v236 = vld [vmem:[%s0 + $0x6a0] sm:$0xff]
  %v237 = vld [vmem:[%s0 + $0x6a8] sm:$0xff]
  %v238 = vld [vmem:[%s0 + $0x6b0] sm:$0xff]
  %v239 = vld [vmem:[%s0 + $0x6b8] sm:$0xff]
  %v240 = vld [vmem:[%s0 + $0x6c0] sm:$0xff]
  %v241 = vld [vmem:[%s0 + $0x6c8] sm:$0xff]
  %v242 = vld [vmem:[%s0 + $0x6d0] sm:$0xff]
  %v243 = vld [vmem:[%s0 + $0x6d8] sm:$0xff]
  %v244 = vld [vmem:[%s0 + $0x6e0] sm:$0xff]
  %v245 = vld [vmem:[%s0 + $0x6e8] sm:$0xff]
  %v246 = vld [vmem:[%s0 + $0x6f0] sm:$0xff]
  %v247 = vld [vmem:[%s0 + $0x6f8] sm:$0xff]
  %v248 = vld [vmem:[%s0 + $0x700] sm:$0xff]
  %v249 = vld [vmem:[%s0 + $0x708] sm:$0xff]
  %v250 = vld [vmem:[%s0 + $0x710] sm:$0xff]
  %v251 = vld [vmem:[%s0 + $0x718] sm:$0xff]
  %v252 = vld [vmem:[%s0 + $0x720] sm:$0xff]
  %v253 = vld [vmem:[%s0 + $0x728] sm:$0xff]
  %v254 = vld [vmem:[%s0 + $0x730] sm:$0xff]
  %v255 = vld [vmem:[%s0 + $0x738] sm:$0xff]
  %v256 = vld [vmem:[%s0 + $0x740] sm:$0xff]
  %v257 = vld [vmem:[%s0 + $0x748] sm:$0xff]
  %v258 = vld [vmem:[%s0 + $0x750] sm:$0xff]
  %v259 = vld [vmem:[%s0 + $0x758] sm:$0xff]
  %v260 = vld [vmem:[%s0 + $0x760] sm:$0xff]
  %v261 = vld [vmem:[%s0 + $0x768] sm:$0xff]
  %v262 = vld [vmem:[%s0 + $0x770] sm:$0xff]
  %v263 = vld [vmem:[%s0 + $0x778] sm:$0xff]
  %v264 = vld [vmem:[%s0 + $0x780] sm:$0xff]
  %v265 = vld [vmem:[%s0 + $0x788] sm:$0xff]
  %v266 = vld [vmem:[%s0 + $0x790] sm:$0xff]
  %v267 = vld [vmem:[%s0 + $0x798] sm:$0xff]
  %v268 = vld [vmem:[%s0 + $0x7a0] sm:$0xff]
  %v269 = vld [vmem:[%s0 + $0x7a8] sm:$0xff]
  %v270 = vld [vmem:[%s0 + $0x7b0] sm:$0xff]
  %v271 = vld [vmem:[%s0 + $0x7b8] sm:$0xff]
  %v272 = vld [vmem:[%s0 + $0x7c0] sm:$0xff]
  %v273 = vld [vmem:[%s0 + $0x7c8] sm:$0xff]
  %v274 = vld [vmem:[%s0 + $0x7d0] sm:$0xff]
  %v275 = vld [vmem:[%s0 + $0x7d8] sm:$0xff]
  %v276 = vld [vmem:[%s0 + $0x7e0] sm:$0xff]
  %v277 = vld [vmem:[%s0 + $0x7e8] sm:$0xff]
  %v278 = vld [vmem:[%s0 + $0x7f0] sm:$0xff]
  %v279 = vld [vmem:[%s0 + $0x7f8] sm:$0xff]
  %v280 = vld [vmem:[%s0 + $0x800] sm:$0xff]
  %v281 = vld [vmem:[%s0 + $0x808] sm:$0xff]
  %v282 = vld [vmem:[%s0 + $0x810] sm:$0xff]
  %v283 = vld [vmem:[%s0 + $0x818] sm:$0xff]
  %v284 = vld [vmem:[%s0 + $0x820] sm:$0xff]
  %v285 = vld [vmem:[%s0 + $0x828] sm:$0xff]
  %v286 = vld [vmem:[%s0 + $0x830] sm:$0xff]
  %v287 = vld [vmem:[%s0 + $0x838] sm:$0xff]
  %v288 = vld [vmem:[%s0 + $0x840] sm:$0xff]
  %v289 = vld [vmem:[%s0 + $0x848] sm:$0xff]
  %v290 = vld [vmem:[%s0 + $0x850] sm:$0xff]
  %v291 = vld [vmem:[%s0 + $0x858] sm:$0xff]
  %v292 = vld [vmem:[%s0 + $0x860] sm:$0xff]
  %v293 = vld [vmem:[%s0 + $0x868] sm:$0xff]
  %v294 = vld [vmem:[%s0 + $0x870] sm:$0xff]
  %v295 = vld [vmem:[%s0 + $0x878] sm:$0xff]
  %v296 = vld [vmem:[%s0 + $0x880] sm:$0xff]
  %v297 = vld [vmem:[%s0 + $0x888] sm:$0xff]
  %v298 = vld [vmem:[%s0 + $0x890] sm:$0xff]
  %v299 = vld [vmem:[%s0 + $0x898] sm:$0xff]
  %v300 = vld [vmem:[%s0 + $0x8a0] sm:$0xff]
  %v301 = vld [vmem:[%s0 + $0x8a8] sm:$0xff]
  %v302 = vld [vmem:[%s0 + $0x8b0] sm:$0xff]
  %v303 = vld [vmem:[%s0 + $0x8b8] sm:$0xff]
  %v304 = vld [vmem:[%s0 + $0x8c0] sm:$0xff]
  %v305 = vld [vmem:[%s0 + $0x8c8] sm:$0xff]
  %v306 = vld [vmem:[%s0 + $0x8d0] sm:$0xff]
  %v307 = vld [vmem:[%s0 + $0x8d8] sm:$0xff]
  %v308 = vld [vmem:[%s0 + $0x8e0] sm:$0xff]
  %v309 = vld [vmem:[%s0 + $0x8e8] sm:$0xff]
  %v310 = vld [vmem:[%s0 + $0x8f0] sm:$0xff]
  %v311 = vld [vmem:[%s0 + $0x8f8] sm:$0xff]
  %v312 = vpack.c.bf16 %v25, %v24
  %v313 = vpack.c.bf16 %v27, %v26
  %v314 = vpack.c.bf16 %v29, %v28
  %v315 = vpack.c.bf16 %v31, %v30
  %v316 = vpack.c.bf16 %v33, %v32
  %v317 = vpack.c.bf16 %v35, %v34
  %v318 = vpack.c.bf16 %v37, %v36
  %v319 = vpack.c.bf16 %v39, %v38
  %v320 = vpack.c.bf16 %v41, %v40
  %v321 = vpack.c.bf16 %v43, %v42
  %v322 = vpack.c.bf16 %v45, %v44
  %v323 = vpack.c.bf16 %v47, %v46
  %v324 = vpack.c.bf16 %v49, %v48
  %v325 = vpack.c.bf16 %v51, %v50
  %v326 = vpack.c.bf16 %v53, %v52
  %v327 = vpack.c.bf16 %v55, %v54
  %v328 = vpack.c.bf16 %v57, %v56
  %v329 = vpack.c.bf16 %v59, %v58
  %v330 = vpack.c.bf16 %v61, %v60
  %v331 = vpack.c.bf16 %v63, %v62
  %v332 = vpack.c.bf16 %v65, %v64
  %v333 = vpack.c.bf16 %v67, %v66
  %v334 = vpack.c.bf16 %v69, %v68
  %v335 = vpack.c.bf16 %v71, %v70
  %v336 = vpack.c.bf16 %v73, %v72
  %v337 = vpack.c.bf16 %v75, %v74
  %v338 = vpack.c.bf16 %v77, %v76
  %v339 = vpack.c.bf16 %v79, %v78
  %v340 = vpack.c.bf16 %v81, %v80
  %v341 = vpack.c.bf16 %v83, %v82
  %v342 = vpack.c.bf16 %v85, %v84
  %v343 = vpack.c.bf16 %v87, %v86
  %v344 = vpack.c.bf16 %v89, %v88
  %v345 = vpack.c.bf16 %v91, %v90
  %v346 = vpack.c.bf16 %v93, %v92
  %v347 = vpack.c.bf16 %v95, %v94
  %v348 = vpack.c.bf16 %v97, %v96
  %v349 = vpack.c.bf16 %v99, %v98
  %v350 = vpack.c.bf16 %v101, %v100
  %v351 = vpack.c.bf16 %v103, %v102
  %v352 = vpack.c.bf16 %v105, %v104
  %v353 = vpack.c.bf16 %v107, %v106
  %v354 = vpack.c.bf16 %v109, %v108
  %v355 = vpack.c.bf16 %v111, %v110
  %v356 = vpack.c.bf16 %v113, %v112
  %v357 = vpack.c.bf16 %v115, %v114
  %v358 = vpack.c.bf16 %v117, %v116
  %v359 = vpack.c.bf16 %v119, %v118
  %v360 = vpack.c.bf16 %v121, %v120
  %v361 = vpack.c.bf16 %v123, %v122
  %v362 = vpack.c.bf16 %v125, %v124
  %v363 = vpack.c.bf16 %v127, %v126
  %v364 = vpack.c.bf16 %v129, %v128
  %v365 = vpack.c.bf16 %v131, %v130
  %v366 = vpack.c.bf16 %v133, %v132
  %v367 = vpack.c.bf16 %v135, %v134
  %v368 = vpack.c.bf16 %v137, %v136
  %v369 = vpack.c.bf16 %v139, %v138
  %v370 = vpack.c.bf16 %v141, %v140
  %v371 = vpack.c.bf16 %v143, %v142
  %v372 = vpack.c.bf16 %v145, %v144
  %v373 = vpack.c.bf16 %v147, %v146
  %v374 = vpack.c.bf16 %v149, %v148
  %v375 = vpack.c.bf16 %v151, %v150
  %v376 = vpack.c.bf16 %v153, %v152
  %v377 = vpack.c.bf16 %v155, %v154
  %v378 = vpack.c.bf16 %v157, %v156
  %v379 = vpack.c.bf16 %v159, %v158
  %v380 = vpack.c.bf16 %v161, %v160
  %v381 = vpack.c.bf16 %v163, %v162
  %v382 = vpack.c.bf16 %v165, %v164
  %v383 = vpack.c.bf16 %v167, %v166
  %v384 = vpack.c.bf16 %v169, %v168
  %v385 = vpack.c.bf16 %v171, %v170
  %v386 = vpack.c.bf16 %v173, %v172
  %v387 = vpack.c.bf16 %v175, %v174
  %v388 = vpack.c.bf16 %v177, %v176
  %v389 = vpack.c.bf16 %v179, %v178
  %v390 = vpack.c.bf16 %v181, %v180
  %v391 = vpack.c.bf16 %v183, %v182
  %v392 = vpack.c.bf16 %v185, %v184
  %v393 = vpack.c.bf16 %v187, %v186
  %v394 = vpack.c.bf16 %v189, %v188
  %v395 = vpack.c.bf16 %v191, %v190
  %v396 = vpack.c.bf16 %v193, %v192
  %v397 = vpack.c.bf16 %v195, %v194
  %v398 = vpack.c.bf16 %v197, %v196
  %v399 = vpack.c.bf16 %v199, %v198
  %v400 = vpack.c.bf16 %v201, %v200
  %v401 = vpack.c.bf16 %v203, %v202
  %v402 = vpack.c.bf16 %v205, %v204
  %v403 = vpack.c.bf16 %v207, %v206
  %v404 = vpack.c.bf16 %v209, %v208
  %v405 = vpack.c.bf16 %v211, %v210
  %v406 = vpack.c.bf16 %v213, %v212
  %v407 = vpack.c.bf16 %v215, %v214
  %v408 = vpack.c.bf16 %v217, %v216
  %v409 = vpack.c.bf16 %v219, %v218
  %v410 = vpack.c.bf16 %v221, %v220
  %v411 = vpack.c.bf16 %v223, %v222
  %v412 = vpack.c.bf16 %v225, %v224
  %v413 = vpack.c.bf16 %v227, %v226
  %v414 = vpack.c.bf16 %v229, %v228
  %v415 = vpack.c.bf16 %v231, %v230
  %v416 = vpack.c.bf16 %v233, %v232
  %v417 = vpack.c.bf16 %v235, %v234
  %v418 = vpack.c.bf16 %v237, %v236
  %v419 = vpack.c.bf16 %v239, %v238
  %v420 = vpack.c.bf16 %v241, %v240
  %v421 = vpack.c.bf16 %v243, %v242
  %v422 = vpack.c.bf16 %v245, %v244
  %v423 = vpack.c.bf16 %v247, %v246
  %v424 = vpack.c.bf16 %v249, %v248
  %v425 = vpack.c.bf16 %v251, %v250
  %v426 = vpack.c.bf16 %v253, %v252
  %v427 = vpack.c.bf16 %v255, %v254
  %v428 = vpack.c.bf16 %v257, %v256
  %v429 = vpack.c.bf16 %v259, %v258
  %v430 = vpack.c.bf16 %v261, %v260
  %v431 = vpack.c.bf16 %v263, %v262
  %v432 = vpack.c.bf16 %v265, %v264
  %v433 = vpack.c.bf16 %v267, %v266
  %v434 = vpack.c.bf16 %v269, %v268
  %v435 = vpack.c.bf16 %v271, %v270
  %v436 = vpack.c.bf16 %v273, %v272
  %v437 = vpack.c.bf16 %v275, %v274
  %v438 = vpack.c.bf16 %v277, %v276
  %v439 = vpack.c.bf16 %v279, %v278
  %v440 = vpack.c.bf16 %v281, %v280
  %v441 = vpack.c.bf16 %v283, %v282
  %v442 = vpack.c.bf16 %v285, %v284
  %v443 = vpack.c.bf16 %v287, %v286
  %v444 = vpack.c.bf16 %v289, %v288
  %v445 = vpack.c.bf16 %v291, %v290
  %v446 = vpack.c.bf16 %v293, %v292
  %v447 = vpack.c.bf16 %v295, %v294
  %v448 = vpack.c.bf16 %v297, %v296
  %v449 = vpack.c.bf16 %v299, %v298
  %v450 = vpack.c.bf16 %v301, %v300
  %v451 = vpack.c.bf16 %v303, %v302
  %v452 = vpack.c.bf16 %v305, %v304
  %v453 = vpack.c.bf16 %v307, %v306
  %v454 = vpack.c.bf16 %v309, %v308
  %v455 = vpack.c.bf16 %v311, %v310
  %v456 = vld [vmem:[%s1] sm:$0xff]
  %v457 = vld [vmem:[%s1 + $0x8] sm:$0xff]
  %v458 = vld [vmem:[%s1 + $0x10] sm:$0xff]
  %v459 = vld [vmem:[%s1 + $0x18] sm:$0xff]
  %v460 = vld [vmem:[%s1 + $0x20] sm:$0xff]
  %v461 = vld [vmem:[%s1 + $0x28] sm:$0xff]
  %v462 = vld [vmem:[%s1 + $0x30] sm:$0xff]
  %v463 = vld [vmem:[%s1 + $0x38] sm:$0xff]
  %v464 = vld [vmem:[%s1 + $0x40] sm:$0xff]
  %v465 = vld [vmem:[%s1 + $0x48] sm:$0xff]
  %v466 = vld [vmem:[%s1 + $0x50] sm:$0xff]
  %v467 = vld [vmem:[%s1 + $0x58] sm:$0xff]
  %v468 = vld [vmem:[%s1 + $0x60] sm:$0xff]
  %v469 = vld [vmem:[%s1 + $0x68] sm:$0xff]
  %v470 = vld [vmem:[%s1 + $0x70] sm:$0xff]
  %v471 = vld [vmem:[%s1 + $0x78] sm:$0xff]
  %v472 = vld [vmem:[%s1 + $0x80] sm:$0xff]
  %v473 = vld [vmem:[%s1 + $0x88] sm:$0xff]
  %v474 = vld [vmem:[%s1 + $0x90] sm:$0xff]
  %v475 = vld [vmem:[%s1 + $0x98] sm:$0xff]
  %v476 = vld [vmem:[%s1 + $0xa0] sm:$0xff]
  %v477 = vld [vmem:[%s1 + $0xa8] sm:$0xff]
  %v478 = vld [vmem:[%s1 + $0xb0] sm:$0xff]
  %v479 = vld [vmem:[%s1 + $0xb8] sm:$0xff]
  %v480 = vld [vmem:[%s1 + $0xc0] sm:$0xff]
  %v481 = vld [vmem:[%s1 + $0xc8] sm:$0xff]
  %v482 = vld [vmem:[%s1 + $0xd0] sm:$0xff]
  %v483 = vld [vmem:[%s1 + $0xd8] sm:$0xff]
  %v484 = vld [vmem:[%s1 + $0xe0] sm:$0xff]
  %v485 = vld [vmem:[%s1 + $0xe8] sm:$0xff]
  %v486 = vld [vmem:[%s1 + $0xf0] sm:$0xff]
  %v487 = vld [vmem:[%s1 + $0xf8] sm:$0xff]
  %v488 = vld [vmem:[%s1 + $0x100] sm:$0xff]
  %v489 = vld [vmem:[%s1 + $0x108] sm:$0xff]
  %v490 = vld [vmem:[%s1 + $0x110] sm:$0xff]
  %v491 = vld [vmem:[%s1 + $0x118] sm:$0xff]
  %v492 = vld [vmem:[%s1 + $0x120] sm:$0xff]
  %v493 = vld [vmem:[%s1 + $0x128] sm:$0xff]
  %v494 = vld [vmem:[%s1 + $0x130] sm:$0xff]
  %v495 = vld [vmem:[%s1 + $0x138] sm:$0xff]
  %v496 = vld [vmem:[%s1 + $0x140] sm:$0xff]
  %v497 = vld [vmem:[%s1 + $0x148] sm:$0xff]
  %v498 = vld [vmem:[%s1 + $0x150] sm:$0xff]
  %v499 = vld [vmem:[%s1 + $0x158] sm:$0xff]
  %v500 = vld [vmem:[%s1 + $0x160] sm:$0xff]
  %v501 = vld [vmem:[%s1 + $0x168] sm:$0xff]
  %v502 = vld [vmem:[%s1 + $0x170] sm:$0xff]
  %v503 = vld [vmem:[%s1 + $0x178] sm:$0xff]
  %v504 = vld [vmem:[%s1 + $0x180] sm:$0xff]
  %v505 = vld [vmem:[%s1 + $0x188] sm:$0xff]
  %v506 = vld [vmem:[%s1 + $0x190] sm:$0xff]
  %v507 = vld [vmem:[%s1 + $0x198] sm:$0xff]
  %v508 = vld [vmem:[%s1 + $0x1a0] sm:$0xff]
  %v509 = vld [vmem:[%s1 + $0x1a8] sm:$0xff]
  %v510 = vld [vmem:[%s1 + $0x1b0] sm:$0xff]
  %v511 = vld [vmem:[%s1 + $0x1b8] sm:$0xff]
  %v512 = vld [vmem:[%s1 + $0x1c0] sm:$0xff]
  %v513 = vld [vmem:[%s1 + $0x1c8] sm:$0xff]
  %v514 = vld [vmem:[%s1 + $0x1d0] sm:$0xff]
  %v515 = vld [vmem:[%s1 + $0x1d8] sm:$0xff]
  %v516 = vld [vmem:[%s1 + $0x1e0] sm:$0xff]
  %v517 = vld [vmem:[%s1 + $0x1e8] sm:$0xff]
  %v518 = vld [vmem:[%s1 + $0x1f0] sm:$0xff]
  %v519 = vld [vmem:[%s1 + $0x1f8] sm:$0xff]
  %v520 = vld [vmem:[%s1 + $0x200] sm:$0xff]
  %v521 = vld [vmem:[%s1 + $0x208] sm:$0xff]
  %v522 = vld [vmem:[%s1 + $0x210] sm:$0xff]
  %v523 = vld [vmem:[%s1 + $0x218] sm:$0xff]
  %v524 = vld [vmem:[%s1 + $0x220] sm:$0xff]
  %v525 = vld [vmem:[%s1 + $0x228] sm:$0xff]
  %v526 = vld [vmem:[%s1 + $0x230] sm:$0xff]
  %v527 = vld [vmem:[%s1 + $0x238] sm:$0xff]
  %v528 = vld [vmem:[%s1 + $0x240] sm:$0xff]
  %v529 = vld [vmem:[%s1 + $0x248] sm:$0xff]
  %v530 = vld [vmem:[%s1 + $0x250] sm:$0xff]
  %v531 = vld [vmem:[%s1 + $0x258] sm:$0xff]
  %v532 = vld [vmem:[%s1 + $0x260] sm:$0xff]
  %v533 = vld [vmem:[%s1 + $0x268] sm:$0xff]
  %v534 = vld [vmem:[%s1 + $0x270] sm:$0xff]
  %v535 = vld [vmem:[%s1 + $0x278] sm:$0xff]
  %v536 = vld [vmem:[%s1 + $0x280] sm:$0xff]
  %v537 = vld [vmem:[%s1 + $0x288] sm:$0xff]
  %v538 = vld [vmem:[%s1 + $0x290] sm:$0xff]
  %v539 = vld [vmem:[%s1 + $0x298] sm:$0xff]
  %v540 = vld [vmem:[%s1 + $0x2a0] sm:$0xff]
  %v541 = vld [vmem:[%s1 + $0x2a8] sm:$0xff]
  %v542 = vld [vmem:[%s1 + $0x2b0] sm:$0xff]
  %v543 = vld [vmem:[%s1 + $0x2b8] sm:$0xff]
  %v544 = vld [vmem:[%s1 + $0x2c0] sm:$0xff]
  %v545 = vld [vmem:[%s1 + $0x2c8] sm:$0xff]
  %v546 = vld [vmem:[%s1 + $0x2d0] sm:$0xff]
  %v547 = vld [vmem:[%s1 + $0x2d8] sm:$0xff]
  %v548 = vld [vmem:[%s1 + $0x2e0] sm:$0xff]
  %v549 = vld [vmem:[%s1 + $0x2e8] sm:$0xff]
  %v550 = vld [vmem:[%s1 + $0x2f0] sm:$0xff]
  %v551 = vld [vmem:[%s1 + $0x2f8] sm:$0xff]
  %v552 = vld [vmem:[%s1 + $0x300] sm:$0xff]
  %v553 = vld [vmem:[%s1 + $0x308] sm:$0xff]
  %v554 = vld [vmem:[%s1 + $0x310] sm:$0xff]
  %v555 = vld [vmem:[%s1 + $0x318] sm:$0xff]
  %v556 = vld [vmem:[%s1 + $0x320] sm:$0xff]
  %v557 = vld [vmem:[%s1 + $0x328] sm:$0xff]
  %v558 = vld [vmem:[%s1 + $0x330] sm:$0xff]
  %v559 = vld [vmem:[%s1 + $0x338] sm:$0xff]
  %v560 = vld [vmem:[%s1 + $0x340] sm:$0xff]
  %v561 = vld [vmem:[%s1 + $0x348] sm:$0xff]
  %v562 = vld [vmem:[%s1 + $0x350] sm:$0xff]
  %v563 = vld [vmem:[%s1 + $0x358] sm:$0xff]
  %v564 = vld [vmem:[%s1 + $0x360] sm:$0xff]
  %v565 = vld [vmem:[%s1 + $0x368] sm:$0xff]
  %v566 = vld [vmem:[%s1 + $0x370] sm:$0xff]
  %v567 = vld [vmem:[%s1 + $0x378] sm:$0xff]
  %v568 = vld [vmem:[%s1 + $0x380] sm:$0xff]
  %v569 = vld [vmem:[%s1 + $0x388] sm:$0xff]
  %v570 = vld [vmem:[%s1 + $0x390] sm:$0xff]
  %v571 = vld [vmem:[%s1 + $0x398] sm:$0xff]
  %v572 = vld [vmem:[%s1 + $0x3a0] sm:$0xff]
  %v573 = vld [vmem:[%s1 + $0x3a8] sm:$0xff]
  %v574 = vld [vmem:[%s1 + $0x3b0] sm:$0xff]
  %v575 = vld [vmem:[%s1 + $0x3b8] sm:$0xff]
  %v576 = vld [vmem:[%s1 + $0x3c0] sm:$0xff]
  %v577 = vld [vmem:[%s1 + $0x3c8] sm:$0xff]
  %v578 = vld [vmem:[%s1 + $0x3d0] sm:$0xff]
  %v579 = vld [vmem:[%s1 + $0x3d8] sm:$0xff]
  %v580 = vld [vmem:[%s1 + $0x3e0] sm:$0xff]
  %v581 = vld [vmem:[%s1 + $0x3e8] sm:$0xff]
  %v582 = vld [vmem:[%s1 + $0x3f0] sm:$0xff]
  %v583 = vld [vmem:[%s1 + $0x3f8] sm:$0xff]
  %v584 = vld [vmem:[%s1 + $0x400] sm:$0xff]
  %v585 = vld [vmem:[%s1 + $0x408] sm:$0xff]
  %v586 = vld [vmem:[%s1 + $0x410] sm:$0xff]
  %v587 = vld [vmem:[%s1 + $0x418] sm:$0xff]
  %v588 = vld [vmem:[%s1 + $0x420] sm:$0xff]
  %v589 = vld [vmem:[%s1 + $0x428] sm:$0xff]
  %v590 = vld [vmem:[%s1 + $0x430] sm:$0xff]
  %v591 = vld [vmem:[%s1 + $0x438] sm:$0xff]
  %v592 = vld [vmem:[%s1 + $0x440] sm:$0xff]
  %v593 = vld [vmem:[%s1 + $0x448] sm:$0xff]
  %v594 = vld [vmem:[%s1 + $0x450] sm:$0xff]
  %v595 = vld [vmem:[%s1 + $0x458] sm:$0xff]
  %v596 = vld [vmem:[%s1 + $0x460] sm:$0xff]
  %v597 = vld [vmem:[%s1 + $0x468] sm:$0xff]
  %v598 = vld [vmem:[%s1 + $0x470] sm:$0xff]
  %v599 = vld [vmem:[%s1 + $0x478] sm:$0xff]
  %v600 = vld [vmem:[%s1 + $0x480] sm:$0xff]
  %v601 = vld [vmem:[%s1 + $0x488] sm:$0xff]
  %v602 = vld [vmem:[%s1 + $0x490] sm:$0xff]
  %v603 = vld [vmem:[%s1 + $0x498] sm:$0xff]
  %v604 = vld [vmem:[%s1 + $0x4a0] sm:$0xff]
  %v605 = vld [vmem:[%s1 + $0x4a8] sm:$0xff]
  %v606 = vld [vmem:[%s1 + $0x4b0] sm:$0xff]
  %v607 = vld [vmem:[%s1 + $0x4b8] sm:$0xff]
  %v608 = vld [vmem:[%s1 + $0x4c0] sm:$0xff]
  %v609 = vld [vmem:[%s1 + $0x4c8] sm:$0xff]
  %v610 = vld [vmem:[%s1 + $0x4d0] sm:$0xff]
  %v611 = vld [vmem:[%s1 + $0x4d8] sm:$0xff]
  %v612 = vld [vmem:[%s1 + $0x4e0] sm:$0xff]
  %v613 = vld [vmem:[%s1 + $0x4e8] sm:$0xff]
  %v614 = vld [vmem:[%s1 + $0x4f0] sm:$0xff]
  %v615 = vld [vmem:[%s1 + $0x4f8] sm:$0xff]
  %v616 = vld [vmem:[%s1 + $0x500] sm:$0xff]
  %v617 = vld [vmem:[%s1 + $0x508] sm:$0xff]
  %v618 = vld [vmem:[%s1 + $0x510] sm:$0xff]
  %v619 = vld [vmem:[%s1 + $0x518] sm:$0xff]
  %v620 = vld [vmem:[%s1 + $0x520] sm:$0xff]
  %v621 = vld [vmem:[%s1 + $0x528] sm:$0xff]
  %v622 = vld [vmem:[%s1 + $0x530] sm:$0xff]
  %v623 = vld [vmem:[%s1 + $0x538] sm:$0xff]
  %v624 = vld [vmem:[%s1 + $0x540] sm:$0xff]
  %v625 = vld [vmem:[%s1 + $0x548] sm:$0xff]
  %v626 = vld [vmem:[%s1 + $0x550] sm:$0xff]
  %v627 = vld [vmem:[%s1 + $0x558] sm:$0xff]
  %v628 = vld [vmem:[%s1 + $0x560] sm:$0xff]
  %v629 = vld [vmem:[%s1 + $0x568] sm:$0xff]
  %v630 = vld [vmem:[%s1 + $0x570] sm:$0xff]
  %v631 = vld [vmem:[%s1 + $0x578] sm:$0xff]
  %v632 = vld [vmem:[%s1 + $0x580] sm:$0xff]
  %v633 = vld [vmem:[%s1 + $0x588] sm:$0xff]
  %v634 = vld [vmem:[%s1 + $0x590] sm:$0xff]
  %v635 = vld [vmem:[%s1 + $0x598] sm:$0xff]
  %v636 = vld [vmem:[%s1 + $0x5a0] sm:$0xff]
  %v637 = vld [vmem:[%s1 + $0x5a8] sm:$0xff]
  %v638 = vld [vmem:[%s1 + $0x5b0] sm:$0xff]
  %v639 = vld [vmem:[%s1 + $0x5b8] sm:$0xff]
  %v640 = vld [vmem:[%s1 + $0x5c0] sm:$0xff]
  %v641 = vld [vmem:[%s1 + $0x5c8] sm:$0xff]
  %v642 = vld [vmem:[%s1 + $0x5d0] sm:$0xff]
  %v643 = vld [vmem:[%s1 + $0x5d8] sm:$0xff]
  %v644 = vld [vmem:[%s1 + $0x5e0] sm:$0xff]
  %v645 = vld [vmem:[%s1 + $0x5e8] sm:$0xff]
  %v646 = vld [vmem:[%s1 + $0x5f0] sm:$0xff]
  %v647 = vld [vmem:[%s1 + $0x5f8] sm:$0xff]
  %v648 = vld [vmem:[%s1 + $0x600] sm:$0xff]
  %v649 = vld [vmem:[%s1 + $0x608] sm:$0xff]
  %v650 = vld [vmem:[%s1 + $0x610] sm:$0xff]
  %v651 = vld [vmem:[%s1 + $0x618] sm:$0xff]
  %v652 = vld [vmem:[%s1 + $0x620] sm:$0xff]
  %v653 = vld [vmem:[%s1 + $0x628] sm:$0xff]
  %v654 = vld [vmem:[%s1 + $0x630] sm:$0xff]
  %v655 = vld [vmem:[%s1 + $0x638] sm:$0xff]
  %v656 = vld [vmem:[%s1 + $0x640] sm:$0xff]
  %v657 = vld [vmem:[%s1 + $0x648] sm:$0xff]
  %v658 = vld [vmem:[%s1 + $0x650] sm:$0xff]
  %v659 = vld [vmem:[%s1 + $0x658] sm:$0xff]
  %v660 = vld [vmem:[%s1 + $0x660] sm:$0xff]
  %v661 = vld [vmem:[%s1 + $0x668] sm:$0xff]
  %v662 = vld [vmem:[%s1 + $0x670] sm:$0xff]
  %v663 = vld [vmem:[%s1 + $0x678] sm:$0xff]
  %v664 = vld [vmem:[%s1 + $0x680] sm:$0xff]
  %v665 = vld [vmem:[%s1 + $0x688] sm:$0xff]
  %v666 = vld [vmem:[%s1 + $0x690] sm:$0xff]
  %v667 = vld [vmem:[%s1 + $0x698] sm:$0xff]
  %v668 = vld [vmem:[%s1 + $0x6a0] sm:$0xff]
  %v669 = vld [vmem:[%s1 + $0x6a8] sm:$0xff]
  %v670 = vld [vmem:[%s1 + $0x6b0] sm:$0xff]
  %v671 = vld [vmem:[%s1 + $0x6b8] sm:$0xff]
  %v672 = vld [vmem:[%s1 + $0x6c0] sm:$0xff]
  %v673 = vld [vmem:[%s1 + $0x6c8] sm:$0xff]
  %v674 = vld [vmem:[%s1 + $0x6d0] sm:$0xff]
  %v675 = vld [vmem:[%s1 + $0x6d8] sm:$0xff]
  %v676 = vld [vmem:[%s1 + $0x6e0] sm:$0xff]
  %v677 = vld [vmem:[%s1 + $0x6e8] sm:$0xff]
  %v678 = vld [vmem:[%s1 + $0x6f0] sm:$0xff]
  %v679 = vld [vmem:[%s1 + $0x6f8] sm:$0xff]
  %v680 = vld [vmem:[%s1 + $0x700] sm:$0xff]
  %v681 = vld [vmem:[%s1 + $0x708] sm:$0xff]
  %v682 = vld [vmem:[%s1 + $0x710] sm:$0xff]
  %v683 = vld [vmem:[%s1 + $0x718] sm:$0xff]
  %v684 = vld [vmem:[%s1 + $0x720] sm:$0xff]
  %v685 = vld [vmem:[%s1 + $0x728] sm:$0xff]
  %v686 = vld [vmem:[%s1 + $0x730] sm:$0xff]
  %v687 = vld [vmem:[%s1 + $0x738] sm:$0xff]
  %v688 = vld [vmem:[%s1 + $0x740] sm:$0xff]
  %v689 = vld [vmem:[%s1 + $0x748] sm:$0xff]
  %v690 = vld [vmem:[%s1 + $0x750] sm:$0xff]
  %v691 = vld [vmem:[%s1 + $0x758] sm:$0xff]
  %v692 = vld [vmem:[%s1 + $0x760] sm:$0xff]
  %v693 = vld [vmem:[%s1 + $0x768] sm:$0xff]
  %v694 = vld [vmem:[%s1 + $0x770] sm:$0xff]
  %v695 = vld [vmem:[%s1 + $0x778] sm:$0xff]
  %v696 = vld [vmem:[%s1 + $0x780] sm:$0xff]
  %v697 = vld [vmem:[%s1 + $0x788] sm:$0xff]
  %v698 = vld [vmem:[%s1 + $0x790] sm:$0xff]
  %v699 = vld [vmem:[%s1 + $0x798] sm:$0xff]
  %v700 = vld [vmem:[%s1 + $0x7a0] sm:$0xff]
  %v701 = vld [vmem:[%s1 + $0x7a8] sm:$0xff]
  %v702 = vld [vmem:[%s1 + $0x7b0] sm:$0xff]
  %v703 = vld [vmem:[%s1 + $0x7b8] sm:$0xff]
  %v704 = vld [vmem:[%s1 + $0x7c0] sm:$0xff]
  %v705 = vld [vmem:[%s1 + $0x7c8] sm:$0xff]
  %v706 = vld [vmem:[%s1 + $0x7d0] sm:$0xff]
  %v707 = vld [vmem:[%s1 + $0x7d8] sm:$0xff]
  %v708 = vld [vmem:[%s1 + $0x7e0] sm:$0xff]
  %v709 = vld [vmem:[%s1 + $0x7e8] sm:$0xff]
  %v710 = vld [vmem:[%s1 + $0x7f0] sm:$0xff]
  %v711 = vld [vmem:[%s1 + $0x7f8] sm:$0xff]
  %v712 = vld [vmem:[%s1 + $0x800] sm:$0xff]
  %v713 = vld [vmem:[%s1 + $0x808] sm:$0xff]
  %v714 = vld [vmem:[%s1 + $0x810] sm:$0xff]
  %v715 = vld [vmem:[%s1 + $0x818] sm:$0xff]
  %v716 = vld [vmem:[%s1 + $0x820] sm:$0xff]
  %v717 = vld [vmem:[%s1 + $0x828] sm:$0xff]
  %v718 = vld [vmem:[%s1 + $0x830] sm:$0xff]
  %v719 = vld [vmem:[%s1 + $0x838] sm:$0xff]
  %v720 = vld [vmem:[%s1 + $0x840] sm:$0xff]
  %v721 = vld [vmem:[%s1 + $0x848] sm:$0xff]
  %v722 = vld [vmem:[%s1 + $0x850] sm:$0xff]
  %v723 = vld [vmem:[%s1 + $0x858] sm:$0xff]
  %v724 = vld [vmem:[%s1 + $0x860] sm:$0xff]
  %v725 = vld [vmem:[%s1 + $0x868] sm:$0xff]
  %v726 = vld [vmem:[%s1 + $0x870] sm:$0xff]
  %v727 = vld [vmem:[%s1 + $0x878] sm:$0xff]
  %v728 = vld [vmem:[%s1 + $0x880] sm:$0xff]
  %v729 = vld [vmem:[%s1 + $0x888] sm:$0xff]
  %v730 = vld [vmem:[%s1 + $0x890] sm:$0xff]
  %v731 = vld [vmem:[%s1 + $0x898] sm:$0xff]
  %v732 = vld [vmem:[%s1 + $0x8a0] sm:$0xff]
  %v733 = vld [vmem:[%s1 + $0x8a8] sm:$0xff]
  %v734 = vld [vmem:[%s1 + $0x8b0] sm:$0xff]
  %v735 = vld [vmem:[%s1 + $0x8b8] sm:$0xff]
  %v736 = vld [vmem:[%s1 + $0x8c0] sm:$0xff]
  %v737 = vld [vmem:[%s1 + $0x8c8] sm:$0xff]
  %v738 = vld [vmem:[%s1 + $0x8d0] sm:$0xff]
  %v739 = vld [vmem:[%s1 + $0x8d8] sm:$0xff]
  %v740 = vld [vmem:[%s1 + $0x8e0] sm:$0xff]
  %v741 = vld [vmem:[%s1 + $0x8e8] sm:$0xff]
  %v742 = vld [vmem:[%s1 + $0x8f0] sm:$0xff]
  %v743 = vld [vmem:[%s1 + $0x8f8] sm:$0xff]
  %v744 = vld [vmem:[%s1 + $0x900] sm:$0xff]
  %v745 = vld [vmem:[%s1 + $0x908] sm:$0xff]
  %v746 = vld [vmem:[%s1 + $0x910] sm:$0xff]
  %v747 = vld [vmem:[%s1 + $0x918] sm:$0xff]
  %v748 = vld [vmem:[%s1 + $0x920] sm:$0xff]
  %v749 = vld [vmem:[%s1 + $0x928] sm:$0xff]
  %v750 = vld [vmem:[%s1 + $0x930] sm:$0xff]
  %v751 = vld [vmem:[%s1 + $0x938] sm:$0xff]
  %v752 = vld [vmem:[%s1 + $0x940] sm:$0xff]
  %v753 = vld [vmem:[%s1 + $0x948] sm:$0xff]
  %v754 = vld [vmem:[%s1 + $0x950] sm:$0xff]
  %v755 = vld [vmem:[%s1 + $0x958] sm:$0xff]
  %v756 = vld [vmem:[%s1 + $0x960] sm:$0xff]
  %v757 = vld [vmem:[%s1 + $0x968] sm:$0xff]
  %v758 = vld [vmem:[%s1 + $0x970] sm:$0xff]
  %v759 = vld [vmem:[%s1 + $0x978] sm:$0xff]
  %v760 = vld [vmem:[%s1 + $0x980] sm:$0xff]
  %v761 = vld [vmem:[%s1 + $0x988] sm:$0xff]
  %v762 = vld [vmem:[%s1 + $0x990] sm:$0xff]
  %v763 = vld [vmem:[%s1 + $0x998] sm:$0xff]
  %v764 = vld [vmem:[%s1 + $0x9a0] sm:$0xff]
  %v765 = vld [vmem:[%s1 + $0x9a8] sm:$0xff]
  %v766 = vld [vmem:[%s1 + $0x9b0] sm:$0xff]
  %v767 = vld [vmem:[%s1 + $0x9b8] sm:$0xff]
  %v768 = vld [vmem:[%s1 + $0x9c0] sm:$0xff]
  %v769 = vld [vmem:[%s1 + $0x9c8] sm:$0xff]
  %v770 = vld [vmem:[%s1 + $0x9d0] sm:$0xff]
  %v771 = vld [vmem:[%s1 + $0x9d8] sm:$0xff]
  %v772 = vld [vmem:[%s1 + $0x9e0] sm:$0xff]
  %v773 = vld [vmem:[%s1 + $0x9e8] sm:$0xff]
  %v774 = vld [vmem:[%s1 + $0x9f0] sm:$0xff]
  %v775 = vld [vmem:[%s1 + $0x9f8] sm:$0xff]
  %v776 = vld [vmem:[%s1 + $0xa00] sm:$0xff]
  %v777 = vld [vmem:[%s1 + $0xa08] sm:$0xff]
  %v778 = vld [vmem:[%s1 + $0xa10] sm:$0xff]
  %v779 = vld [vmem:[%s1 + $0xa18] sm:$0xff]
  %v780 = vld [vmem:[%s1 + $0xa20] sm:$0xff]
  %v781 = vld [vmem:[%s1 + $0xa28] sm:$0xff]
  %v782 = vld [vmem:[%s1 + $0xa30] sm:$0xff]
  %v783 = vld [vmem:[%s1 + $0xa38] sm:$0xff]
  %v784 = vld [vmem:[%s1 + $0xa40] sm:$0xff]
  %v785 = vld [vmem:[%s1 + $0xa48] sm:$0xff]
  %v786 = vld [vmem:[%s1 + $0xa50] sm:$0xff]
  %v787 = vld [vmem:[%s1 + $0xa58] sm:$0xff]
  %v788 = vld [vmem:[%s1 + $0xa60] sm:$0xff]
  %v789 = vld [vmem:[%s1 + $0xa68] sm:$0xff]
  %v790 = vld [vmem:[%s1 + $0xa70] sm:$0xff]
  %v791 = vld [vmem:[%s1 + $0xa78] sm:$0xff]
  %v792 = vld [vmem:[%s1 + $0xa80] sm:$0xff]
  %v793 = vld [vmem:[%s1 + $0xa88] sm:$0xff]
  %v794 = vld [vmem:[%s1 + $0xa90] sm:$0xff]
  %v795 = vld [vmem:[%s1 + $0xa98] sm:$0xff]
  %v796 = vld [vmem:[%s1 + $0xaa0] sm:$0xff]
  %v797 = vld [vmem:[%s1 + $0xaa8] sm:$0xff]
  %v798 = vld [vmem:[%s1 + $0xab0] sm:$0xff]
  %v799 = vld [vmem:[%s1 + $0xab8] sm:$0xff]
  %v800 = vld [vmem:[%s1 + $0xac0] sm:$0xff]
  %v801 = vld [vmem:[%s1 + $0xac8] sm:$0xff]
  %v802 = vld [vmem:[%s1 + $0xad0] sm:$0xff]
  %v803 = vld [vmem:[%s1 + $0xad8] sm:$0xff]
  %v804 = vld [vmem:[%s1 + $0xae0] sm:$0xff]
  %v805 = vld [vmem:[%s1 + $0xae8] sm:$0xff]
  %v806 = vld [vmem:[%s1 + $0xaf0] sm:$0xff]
  %v807 = vld [vmem:[%s1 + $0xaf8] sm:$0xff]
  %v808 = vld [vmem:[%s1 + $0xb00] sm:$0xff]
  %v809 = vld [vmem:[%s1 + $0xb08] sm:$0xff]
  %v810 = vld [vmem:[%s1 + $0xb10] sm:$0xff]
  %v811 = vld [vmem:[%s1 + $0xb18] sm:$0xff]
  %v812 = vld [vmem:[%s1 + $0xb20] sm:$0xff]
  %v813 = vld [vmem:[%s1 + $0xb28] sm:$0xff]
  %v814 = vld [vmem:[%s1 + $0xb30] sm:$0xff]
  %v815 = vld [vmem:[%s1 + $0xb38] sm:$0xff]
  %v816 = vld [vmem:[%s1 + $0xb40] sm:$0xff]
  %v817 = vld [vmem:[%s1 + $0xb48] sm:$0xff]
  %v818 = vld [vmem:[%s1 + $0xb50] sm:$0xff]
  %v819 = vld [vmem:[%s1 + $0xb58] sm:$0xff]
  %v820 = vld [vmem:[%s1 + $0xb60] sm:$0xff]
  %v821 = vld [vmem:[%s1 + $0xb68] sm:$0xff]
  %v822 = vld [vmem:[%s1 + $0xb70] sm:$0xff]
  %v823 = vld [vmem:[%s1 + $0xb78] sm:$0xff]
  %v824 = vld [vmem:[%s1 + $0xb80] sm:$0xff]
  %v825 = vld [vmem:[%s1 + $0xb88] sm:$0xff]
  %v826 = vld [vmem:[%s1 + $0xb90] sm:$0xff]
  %v827 = vld [vmem:[%s1 + $0xb98] sm:$0xff]
  %v828 = vld [vmem:[%s1 + $0xba0] sm:$0xff]
  %v829 = vld [vmem:[%s1 + $0xba8] sm:$0xff]
  %v830 = vld [vmem:[%s1 + $0xbb0] sm:$0xff]
  %v831 = vld [vmem:[%s1 + $0xbb8] sm:$0xff]
  %v832 = vld [vmem:[%s1 + $0xbc0] sm:$0xff]
  %v833 = vld [vmem:[%s1 + $0xbc8] sm:$0xff]
  %v834 = vld [vmem:[%s1 + $0xbd0] sm:$0xff]
  %v835 = vld [vmem:[%s1 + $0xbd8] sm:$0xff]
  %v836 = vld [vmem:[%s1 + $0xbe0] sm:$0xff]
  %v837 = vld [vmem:[%s1 + $0xbe8] sm:$0xff]
  %v838 = vld [vmem:[%s1 + $0xbf0] sm:$0xff]
  %v839 = vld [vmem:[%s1 + $0xbf8] sm:$0xff]
  %v840 = vld [vmem:[%s1 + $0xc00] sm:$0xff]
  %v841 = vld [vmem:[%s1 + $0xc08] sm:$0xff]
  %v842 = vld [vmem:[%s1 + $0xc10] sm:$0xff]
  %v843 = vld [vmem:[%s1 + $0xc18] sm:$0xff]
  %v844 = vld [vmem:[%s1 + $0xc20] sm:$0xff]
  %v845 = vld [vmem:[%s1 + $0xc28] sm:$0xff]
  %v846 = vld [vmem:[%s1 + $0xc30] sm:$0xff]
  %v847 = vld [vmem:[%s1 + $0xc38] sm:$0xff]
  %v848 = vld [vmem:[%s1 + $0xc40] sm:$0xff]
  %v849 = vld [vmem:[%s1 + $0xc48] sm:$0xff]
  %v850 = vld [vmem:[%s1 + $0xc50] sm:$0xff]
  %v851 = vld [vmem:[%s1 + $0xc58] sm:$0xff]
  %v852 = vld [vmem:[%s1 + $0xc60] sm:$0xff]
  %v853 = vld [vmem:[%s1 + $0xc68] sm:$0xff]
  %v854 = vld [vmem:[%s1 + $0xc70] sm:$0xff]
  %v855 = vld [vmem:[%s1 + $0xc78] sm:$0xff]
  %v856 = vld [vmem:[%s1 + $0xc80] sm:$0xff]
  %v857 = vld [vmem:[%s1 + $0xc88] sm:$0xff]
  %v858 = vld [vmem:[%s1 + $0xc90] sm:$0xff]
  %v859 = vld [vmem:[%s1 + $0xc98] sm:$0xff]
  %v860 = vld [vmem:[%s1 + $0xca0] sm:$0xff]
  %v861 = vld [vmem:[%s1 + $0xca8] sm:$0xff]
  %v862 = vld [vmem:[%s1 + $0xcb0] sm:$0xff]
  %v863 = vld [vmem:[%s1 + $0xcb8] sm:$0xff]
  %v864 = vld [vmem:[%s1 + $0xcc0] sm:$0xff]
  %v865 = vld [vmem:[%s1 + $0xcc8] sm:$0xff]
  %v866 = vld [vmem:[%s1 + $0xcd0] sm:$0xff]
  %v867 = vld [vmem:[%s1 + $0xcd8] sm:$0xff]
  %v868 = vld [vmem:[%s1 + $0xce0] sm:$0xff]
  %v869 = vld [vmem:[%s1 + $0xce8] sm:$0xff]
  %v870 = vld [vmem:[%s1 + $0xcf0] sm:$0xff]
  %v871 = vld [vmem:[%s1 + $0xcf8] sm:$0xff]
  %v872 = vld [vmem:[%s1 + $0xd00] sm:$0xff]
  %v873 = vld [vmem:[%s1 + $0xd08] sm:$0xff]
  %v874 = vld [vmem:[%s1 + $0xd10] sm:$0xff]
  %v875 = vld [vmem:[%s1 + $0xd18] sm:$0xff]
  %v876 = vld [vmem:[%s1 + $0xd20] sm:$0xff]
  %v877 = vld [vmem:[%s1 + $0xd28] sm:$0xff]
  %v878 = vld [vmem:[%s1 + $0xd30] sm:$0xff]
  %v879 = vld [vmem:[%s1 + $0xd38] sm:$0xff]
  %v880 = vld [vmem:[%s1 + $0xd40] sm:$0xff]
  %v881 = vld [vmem:[%s1 + $0xd48] sm:$0xff]
  %v882 = vld [vmem:[%s1 + $0xd50] sm:$0xff]
  %v883 = vld [vmem:[%s1 + $0xd58] sm:$0xff]
  %v884 = vld [vmem:[%s1 + $0xd60] sm:$0xff]
  %v885 = vld [vmem:[%s1 + $0xd68] sm:$0xff]
  %v886 = vld [vmem:[%s1 + $0xd70] sm:$0xff]
  %v887 = vld [vmem:[%s1 + $0xd78] sm:$0xff]
  %v1320 = vunpack.c.l.b16 %v456
  %v1321 = vunpack.c.h.b16 %v456
  %v1322 = vunpack.c.l.b16 %v457
  %v1323 = vunpack.c.h.b16 %v457
  %v1324 = vunpack.c.l.b16 %v458
  %v1325 = vunpack.c.h.b16 %v458
  %v1326 = vunpack.c.l.b16 %v459
  %v1327 = vunpack.c.h.b16 %v459
  %v1328 = vunpack.c.l.b16 %v460
  %v1329 = vunpack.c.h.b16 %v460
  %v1330 = vunpack.c.l.b16 %v461
  %v1331 = vunpack.c.h.b16 %v461
  %v1332 = vunpack.c.l.b16 %v462
  %v1333 = vunpack.c.h.b16 %v462
  %v1334 = vunpack.c.l.b16 %v463
  %v1335 = vunpack.c.h.b16 %v463
  %v1336 = vunpack.c.l.b16 %v464
  %v1337 = vunpack.c.h.b16 %v464
  %v1338 = vunpack.c.l.b16 %v465
  %v1339 = vunpack.c.h.b16 %v465
  %v1340 = vunpack.c.l.b16 %v466
  %v1341 = vunpack.c.h.b16 %v466
  %v1342 = vunpack.c.l.b16 %v467
  %v1343 = vunpack.c.h.b16 %v467
  %v1344 = vunpack.c.l.b16 %v468
  %v1345 = vunpack.c.h.b16 %v468
  %v1346 = vunpack.c.l.b16 %v469
  %v1347 = vunpack.c.h.b16 %v469
  %v1348 = vunpack.c.l.b16 %v470
  %v1349 = vunpack.c.h.b16 %v470
  %v1350 = vunpack.c.l.b16 %v471
  %v1351 = vunpack.c.h.b16 %v471
  %v1352 = vunpack.c.l.b16 %v472
  %v1353 = vunpack.c.h.b16 %v472
  %v1354 = vunpack.c.l.b16 %v473
  %v1355 = vunpack.c.h.b16 %v473
  %v1356 = vunpack.c.l.b16 %v474
  %v1357 = vunpack.c.h.b16 %v474
  %v1358 = vunpack.c.l.b16 %v475
  %v1359 = vunpack.c.h.b16 %v475
  %v1360 = vunpack.c.l.b16 %v476
  %v1361 = vunpack.c.h.b16 %v476
  %v1362 = vunpack.c.l.b16 %v477
  %v1363 = vunpack.c.h.b16 %v477
  %v1364 = vunpack.c.l.b16 %v478
  %v1365 = vunpack.c.h.b16 %v478
  %v1366 = vunpack.c.l.b16 %v479
  %v1367 = vunpack.c.h.b16 %v479
  %v1368 = vunpack.c.l.b16 %v480
  %v1369 = vunpack.c.h.b16 %v480
  %v1370 = vunpack.c.l.b16 %v481
  %v1371 = vunpack.c.h.b16 %v481
  %v1372 = vunpack.c.l.b16 %v482
  %v1373 = vunpack.c.h.b16 %v482
  %v1374 = vunpack.c.l.b16 %v483
  %v1375 = vunpack.c.h.b16 %v483
  %v1376 = vunpack.c.l.b16 %v484
  %v1377 = vunpack.c.h.b16 %v484
  %v1378 = vunpack.c.l.b16 %v485
  %v1379 = vunpack.c.h.b16 %v485
  %v1380 = vunpack.c.l.b16 %v486
  %v1381 = vunpack.c.h.b16 %v486
  %v1382 = vunpack.c.l.b16 %v487
  %v1383 = vunpack.c.h.b16 %v487
  %v1384 = vunpack.c.l.b16 %v488
  %v1385 = vunpack.c.h.b16 %v488
  %v1386 = vunpack.c.l.b16 %v489
  %v1387 = vunpack.c.h.b16 %v489
  %v1388 = vunpack.c.l.b16 %v490
  %v1389 = vunpack.c.h.b16 %v490
  %v1390 = vunpack.c.l.b16 %v491
  %v1391 = vunpack.c.h.b16 %v491
  %v1392 = vunpack.c.l.b16 %v492
  %v1393 = vunpack.c.h.b16 %v492
  %v1394 = vunpack.c.l.b16 %v493
  %v1395 = vunpack.c.h.b16 %v493
  %v1396 = vunpack.c.l.b16 %v494
  %v1397 = vunpack.c.h.b16 %v494
  %v1398 = vunpack.c.l.b16 %v495
  %v1399 = vunpack.c.h.b16 %v495
  %v1400 = vunpack.c.l.b16 %v496
  %v1401 = vunpack.c.h.b16 %v496
  %v1402 = vunpack.c.l.b16 %v497
  %v1403 = vunpack.c.h.b16 %v497
  %v1404 = vunpack.c.l.b16 %v498
  %v1405 = vunpack.c.h.b16 %v498
  %v1406 = vunpack.c.l.b16 %v499
  %v1407 = vunpack.c.h.b16 %v499
  %v1408 = vunpack.c.l.b16 %v500
  %v1409 = vunpack.c.h.b16 %v500
  %v1410 = vunpack.c.l.b16 %v501
  %v1411 = vunpack.c.h.b16 %v501
  %v1412 = vunpack.c.l.b16 %v502
  %v1413 = vunpack.c.h.b16 %v502
  %v1414 = vunpack.c.l.b16 %v503
  %v1415 = vunpack.c.h.b16 %v503
  %v1416 = vunpack.c.l.b16 %v504
  %v1417 = vunpack.c.h.b16 %v504
  %v1418 = vunpack.c.l.b16 %v505
  %v1419 = vunpack.c.h.b16 %v505
  %v1420 = vunpack.c.l.b16 %v506
  %v1421 = vunpack.c.h.b16 %v506
  %v1422 = vunpack.c.l.b16 %v507
  %v1423 = vunpack.c.h.b16 %v507
  %v1424 = vunpack.c.l.b16 %v508
  %v1425 = vunpack.c.h.b16 %v508
  %v1426 = vunpack.c.l.b16 %v509
  %v1427 = vunpack.c.h.b16 %v509
  %v1428 = vunpack.c.l.b16 %v510
  %v1429 = vunpack.c.h.b16 %v510
  %v1430 = vunpack.c.l.b16 %v511
  %v1431 = vunpack.c.h.b16 %v511
  %v1432 = vunpack.c.l.b16 %v512
  %v1433 = vunpack.c.h.b16 %v512
  %v1434 = vunpack.c.l.b16 %v513
  %v1435 = vunpack.c.h.b16 %v513
  %v1436 = vunpack.c.l.b16 %v514
  %v1437 = vunpack.c.h.b16 %v514
  %v1438 = vunpack.c.l.b16 %v515
  %v1439 = vunpack.c.h.b16 %v515
  %v1440 = vunpack.c.l.b16 %v516
  %v1441 = vunpack.c.h.b16 %v516
  %v1442 = vunpack.c.l.b16 %v517
  %v1443 = vunpack.c.h.b16 %v517
  %v1444 = vunpack.c.l.b16 %v518
  %v1445 = vunpack.c.h.b16 %v518
  %v1446 = vunpack.c.l.b16 %v519
  %v1447 = vunpack.c.h.b16 %v519
  %v1448 = vunpack.c.l.b16 %v520
  %v1449 = vunpack.c.h.b16 %v520
  %v1450 = vunpack.c.l.b16 %v521
  %v1451 = vunpack.c.h.b16 %v521
  %v1452 = vunpack.c.l.b16 %v522
  %v1453 = vunpack.c.h.b16 %v522
  %v1454 = vunpack.c.l.b16 %v523
  %v1455 = vunpack.c.h.b16 %v523
  %v1456 = vunpack.c.l.b16 %v524
  %v1457 = vunpack.c.h.b16 %v524
  %v1458 = vunpack.c.l.b16 %v525
  %v1459 = vunpack.c.h.b16 %v525
  %v1460 = vunpack.c.l.b16 %v526
  %v1461 = vunpack.c.h.b16 %v526
  %v1462 = vunpack.c.l.b16 %v527
  %v1463 = vunpack.c.h.b16 %v527
  %v1464 = vunpack.c.l.b16 %v528
  %v1465 = vunpack.c.h.b16 %v528
  %v1466 = vunpack.c.l.b16 %v529
  %v1467 = vunpack.c.h.b16 %v529
  %v1468 = vunpack.c.l.b16 %v530
  %v1469 = vunpack.c.h.b16 %v530
  %v1470 = vunpack.c.l.b16 %v531
  %v1471 = vunpack.c.h.b16 %v531
  %v1472 = vunpack.c.l.b16 %v532
  %v1473 = vunpack.c.h.b16 %v532
  %v1474 = vunpack.c.l.b16 %v533
  %v1475 = vunpack.c.h.b16 %v533
  %v1476 = vunpack.c.l.b16 %v534
  %v1477 = vunpack.c.h.b16 %v534
  %v1478 = vunpack.c.l.b16 %v535
  %v1479 = vunpack.c.h.b16 %v535
  %v1480 = vunpack.c.l.b16 %v536
  %v1481 = vunpack.c.h.b16 %v536
  %v1482 = vunpack.c.l.b16 %v537
  %v1483 = vunpack.c.h.b16 %v537
  %v1484 = vunpack.c.l.b16 %v538
  %v1485 = vunpack.c.h.b16 %v538
  %v1486 = vunpack.c.l.b16 %v539
  %v1487 = vunpack.c.h.b16 %v539
  %v1488 = vunpack.c.l.b16 %v540
  %v1489 = vunpack.c.h.b16 %v540
  %v1490 = vunpack.c.l.b16 %v541
  %v1491 = vunpack.c.h.b16 %v541
  %v1492 = vunpack.c.l.b16 %v542
  %v1493 = vunpack.c.h.b16 %v542
  %v1494 = vunpack.c.l.b16 %v543
  %v1495 = vunpack.c.h.b16 %v543
  %v1496 = vunpack.c.l.b16 %v544
  %v1497 = vunpack.c.h.b16 %v544
  %v1498 = vunpack.c.l.b16 %v545
  %v1499 = vunpack.c.h.b16 %v545
  %v1500 = vunpack.c.l.b16 %v546
  %v1501 = vunpack.c.h.b16 %v546
  %v1502 = vunpack.c.l.b16 %v547
  %v1503 = vunpack.c.h.b16 %v547
  %v1504 = vunpack.c.l.b16 %v548
  %v1505 = vunpack.c.h.b16 %v548
  %v1506 = vunpack.c.l.b16 %v549
  %v1507 = vunpack.c.h.b16 %v549
  %v1508 = vunpack.c.l.b16 %v550
  %v1509 = vunpack.c.h.b16 %v550
  %v1510 = vunpack.c.l.b16 %v551
  %v1511 = vunpack.c.h.b16 %v551
  %v1512 = vunpack.c.l.b16 %v552
  %v1513 = vunpack.c.h.b16 %v552
  %v1514 = vunpack.c.l.b16 %v553
  %v1515 = vunpack.c.h.b16 %v553
  %v1516 = vunpack.c.l.b16 %v554
  %v1517 = vunpack.c.h.b16 %v554
  %v1518 = vunpack.c.l.b16 %v555
  %v1519 = vunpack.c.h.b16 %v555
  %v1520 = vunpack.c.l.b16 %v556
  %v1521 = vunpack.c.h.b16 %v556
  %v1522 = vunpack.c.l.b16 %v557
  %v1523 = vunpack.c.h.b16 %v557
  %v1524 = vunpack.c.l.b16 %v558
  %v1525 = vunpack.c.h.b16 %v558
  %v1526 = vunpack.c.l.b16 %v559
  %v1527 = vunpack.c.h.b16 %v559
  %v1528 = vunpack.c.l.b16 %v560
  %v1529 = vunpack.c.h.b16 %v560
  %v1530 = vunpack.c.l.b16 %v561
  %v1531 = vunpack.c.h.b16 %v561
  %v1532 = vunpack.c.l.b16 %v562
  %v1533 = vunpack.c.h.b16 %v562
  %v1534 = vunpack.c.l.b16 %v563
  %v1535 = vunpack.c.h.b16 %v563
  %v1536 = vunpack.c.l.b16 %v564
  %v1537 = vunpack.c.h.b16 %v564
  %v1538 = vunpack.c.l.b16 %v565
  %v1539 = vunpack.c.h.b16 %v565
  %v1540 = vunpack.c.l.b16 %v566
  %v1541 = vunpack.c.h.b16 %v566
  %v1542 = vunpack.c.l.b16 %v567
  %v1543 = vunpack.c.h.b16 %v567
  %v1544 = vunpack.c.l.b16 %v568
  %v1545 = vunpack.c.h.b16 %v568
  %v1546 = vunpack.c.l.b16 %v569
  %v1547 = vunpack.c.h.b16 %v569
  %v1548 = vunpack.c.l.b16 %v570
  %v1549 = vunpack.c.h.b16 %v570
  %v1550 = vunpack.c.l.b16 %v571
  %v1551 = vunpack.c.h.b16 %v571
  %v1552 = vunpack.c.l.b16 %v572
  %v1553 = vunpack.c.h.b16 %v572
  %v1554 = vunpack.c.l.b16 %v573
  %v1555 = vunpack.c.h.b16 %v573
  %v1556 = vunpack.c.l.b16 %v574
  %v1557 = vunpack.c.h.b16 %v574
  %v1558 = vunpack.c.l.b16 %v575
  %v1559 = vunpack.c.h.b16 %v575
  %v1560 = vunpack.c.l.b16 %v576
  %v1561 = vunpack.c.h.b16 %v576
  %v1562 = vunpack.c.l.b16 %v577
  %v1563 = vunpack.c.h.b16 %v577
  %v1564 = vunpack.c.l.b16 %v578
  %v1565 = vunpack.c.h.b16 %v578
  %v1566 = vunpack.c.l.b16 %v579
  %v1567 = vunpack.c.h.b16 %v579
  %v1568 = vunpack.c.l.b16 %v580
  %v1569 = vunpack.c.h.b16 %v580
  %v1570 = vunpack.c.l.b16 %v581
  %v1571 = vunpack.c.h.b16 %v581
  %v1572 = vunpack.c.l.b16 %v582
  %v1573 = vunpack.c.h.b16 %v582
  %v1574 = vunpack.c.l.b16 %v583
  %v1575 = vunpack.c.h.b16 %v583
  %v1576 = vunpack.c.l.b16 %v584
  %v1577 = vunpack.c.h.b16 %v584
  %v1578 = vunpack.c.l.b16 %v585
  %v1579 = vunpack.c.h.b16 %v585
  %v1580 = vunpack.c.l.b16 %v586
  %v1581 = vunpack.c.h.b16 %v586
  %v1582 = vunpack.c.l.b16 %v587
  %v1583 = vunpack.c.h.b16 %v587
  %v1584 = vunpack.c.l.b16 %v588
  %v1585 = vunpack.c.h.b16 %v588
  %v1586 = vunpack.c.l.b16 %v589
  %v1587 = vunpack.c.h.b16 %v589
  %v1588 = vunpack.c.l.b16 %v590
  %v1589 = vunpack.c.h.b16 %v590
  %v1590 = vunpack.c.l.b16 %v591
  %v1591 = vunpack.c.h.b16 %v591
  %v1592 = vunpack.c.l.b16 %v592
  %v1593 = vunpack.c.h.b16 %v592
  %v1594 = vunpack.c.l.b16 %v593
  %v1595 = vunpack.c.h.b16 %v593
  %v1596 = vunpack.c.l.b16 %v594
  %v1597 = vunpack.c.h.b16 %v594
  %v1598 = vunpack.c.l.b16 %v595
  %v1599 = vunpack.c.h.b16 %v595
  %v1600 = vunpack.c.l.b16 %v596
  %v1601 = vunpack.c.h.b16 %v596
  %v1602 = vunpack.c.l.b16 %v597
  %v1603 = vunpack.c.h.b16 %v597
  %v1604 = vunpack.c.l.b16 %v598
  %v1605 = vunpack.c.h.b16 %v598
  %v1606 = vunpack.c.l.b16 %v599
  %v1607 = vunpack.c.h.b16 %v599
  %v1608 = vunpack.c.l.b16 %v600
  %v1609 = vunpack.c.h.b16 %v600
  %v1610 = vunpack.c.l.b16 %v601
  %v1611 = vunpack.c.h.b16 %v601
  %v1612 = vunpack.c.l.b16 %v602
  %v1613 = vunpack.c.h.b16 %v602
  %v1614 = vunpack.c.l.b16 %v603
  %v1615 = vunpack.c.h.b16 %v603
  %v1616 = vunpack.c.l.b16 %v604
  %v1617 = vunpack.c.h.b16 %v604
  %v1618 = vunpack.c.l.b16 %v605
  %v1619 = vunpack.c.h.b16 %v605
  %v1620 = vunpack.c.l.b16 %v606
  %v1621 = vunpack.c.h.b16 %v606
  %v1622 = vunpack.c.l.b16 %v607
  %v1623 = vunpack.c.h.b16 %v607
  %v1624 = vunpack.c.l.b16 %v608
  %v1625 = vunpack.c.h.b16 %v608
  %v1626 = vunpack.c.l.b16 %v609
  %v1627 = vunpack.c.h.b16 %v609
  %v1628 = vunpack.c.l.b16 %v610
  %v1629 = vunpack.c.h.b16 %v610
  %v1630 = vunpack.c.l.b16 %v611
  %v1631 = vunpack.c.h.b16 %v611
  %v1632 = vunpack.c.l.b16 %v612
  %v1633 = vunpack.c.h.b16 %v612
  %v1634 = vunpack.c.l.b16 %v613
  %v1635 = vunpack.c.h.b16 %v613
  %v1636 = vunpack.c.l.b16 %v614
  %v1637 = vunpack.c.h.b16 %v614
  %v1638 = vunpack.c.l.b16 %v615
  %v1639 = vunpack.c.h.b16 %v615
  %v1640 = vunpack.c.l.b16 %v616
  %v1641 = vunpack.c.h.b16 %v616
  %v1642 = vunpack.c.l.b16 %v617
  %v1643 = vunpack.c.h.b16 %v617
  %v1644 = vunpack.c.l.b16 %v618
  %v1645 = vunpack.c.h.b16 %v618
  %v1646 = vunpack.c.l.b16 %v619
  %v1647 = vunpack.c.h.b16 %v619
  %v1648 = vunpack.c.l.b16 %v620
  %v1649 = vunpack.c.h.b16 %v620
  %v1650 = vunpack.c.l.b16 %v621
  %v1651 = vunpack.c.h.b16 %v621
  %v1652 = vunpack.c.l.b16 %v622
  %v1653 = vunpack.c.h.b16 %v622
  %v1654 = vunpack.c.l.b16 %v623
  %v1655 = vunpack.c.h.b16 %v623
  %v1656 = vunpack.c.l.b16 %v624
  %v1657 = vunpack.c.h.b16 %v624
  %v1658 = vunpack.c.l.b16 %v625
  %v1659 = vunpack.c.h.b16 %v625
  %v1660 = vunpack.c.l.b16 %v626
  %v1661 = vunpack.c.h.b16 %v626
  %v1662 = vunpack.c.l.b16 %v627
  %v1663 = vunpack.c.h.b16 %v627
  %v1664 = vunpack.c.l.b16 %v628
  %v1665 = vunpack.c.h.b16 %v628
  %v1666 = vunpack.c.l.b16 %v629
  %v1667 = vunpack.c.h.b16 %v629
  %v1668 = vunpack.c.l.b16 %v630
  %v1669 = vunpack.c.h.b16 %v630
  %v1670 = vunpack.c.l.b16 %v631
  %v1671 = vunpack.c.h.b16 %v631
  %v1672 = vunpack.c.l.b16 %v632
  %v1673 = vunpack.c.h.b16 %v632
  %v1674 = vunpack.c.l.b16 %v633
  %v1675 = vunpack.c.h.b16 %v633
  %v1676 = vunpack.c.l.b16 %v634
  %v1677 = vunpack.c.h.b16 %v634
  %v1678 = vunpack.c.l.b16 %v635
  %v1679 = vunpack.c.h.b16 %v635
  %v1680 = vunpack.c.l.b16 %v636
  %v1681 = vunpack.c.h.b16 %v636
  %v1682 = vunpack.c.l.b16 %v637
  %v1683 = vunpack.c.h.b16 %v637
  %v1684 = vunpack.c.l.b16 %v638
  %v1685 = vunpack.c.h.b16 %v638
  %v1686 = vunpack.c.l.b16 %v639
  %v1687 = vunpack.c.h.b16 %v639
  %v1688 = vunpack.c.l.b16 %v640
  %v1689 = vunpack.c.h.b16 %v640
  %v1690 = vunpack.c.l.b16 %v641
  %v1691 = vunpack.c.h.b16 %v641
  %v1692 = vunpack.c.l.b16 %v642
  %v1693 = vunpack.c.h.b16 %v642
  %v1694 = vunpack.c.l.b16 %v643
  %v1695 = vunpack.c.h.b16 %v643
  %v1696 = vunpack.c.l.b16 %v644
  %v1697 = vunpack.c.h.b16 %v644
  %v1698 = vunpack.c.l.b16 %v645
  %v1699 = vunpack.c.h.b16 %v645
  %v1700 = vunpack.c.l.b16 %v646
  %v1701 = vunpack.c.h.b16 %v646
  %v1702 = vunpack.c.l.b16 %v647
  %v1703 = vunpack.c.h.b16 %v647
  %v1704 = vunpack.c.l.b16 %v648
  %v1705 = vunpack.c.h.b16 %v648
  %v1706 = vunpack.c.l.b16 %v649
  %v1707 = vunpack.c.h.b16 %v649
  %v1708 = vunpack.c.l.b16 %v650
  %v1709 = vunpack.c.h.b16 %v650
  %v1710 = vunpack.c.l.b16 %v651
  %v1711 = vunpack.c.h.b16 %v651
  %v1712 = vunpack.c.l.b16 %v652
  %v1713 = vunpack.c.h.b16 %v652
  %v1714 = vunpack.c.l.b16 %v653
  %v1715 = vunpack.c.h.b16 %v653
  %v1716 = vunpack.c.l.b16 %v654
  %v1717 = vunpack.c.h.b16 %v654
  %v1718 = vunpack.c.l.b16 %v655
  %v1719 = vunpack.c.h.b16 %v655
  %v1720 = vunpack.c.l.b16 %v656
  %v1721 = vunpack.c.h.b16 %v656
  %v1722 = vunpack.c.l.b16 %v657
  %v1723 = vunpack.c.h.b16 %v657
  %v1724 = vunpack.c.l.b16 %v658
  %v1725 = vunpack.c.h.b16 %v658
  %v1726 = vunpack.c.l.b16 %v659
  %v1727 = vunpack.c.h.b16 %v659
  %v1728 = vunpack.c.l.b16 %v660
  %v1729 = vunpack.c.h.b16 %v660
  %v1730 = vunpack.c.l.b16 %v661
  %v1731 = vunpack.c.h.b16 %v661
  %v1732 = vunpack.c.l.b16 %v662
  %v1733 = vunpack.c.h.b16 %v662
  %v1734 = vunpack.c.l.b16 %v663
  %v1735 = vunpack.c.h.b16 %v663
  %v1736 = vunpack.c.l.b16 %v664
  %v1737 = vunpack.c.h.b16 %v664
  %v1738 = vunpack.c.l.b16 %v665
  %v1739 = vunpack.c.h.b16 %v665
  %v1740 = vunpack.c.l.b16 %v666
  %v1741 = vunpack.c.h.b16 %v666
  %v1742 = vunpack.c.l.b16 %v667
  %v1743 = vunpack.c.h.b16 %v667
  %v1744 = vunpack.c.l.b16 %v668
  %v1745 = vunpack.c.h.b16 %v668
  %v1746 = vunpack.c.l.b16 %v669
  %v1747 = vunpack.c.h.b16 %v669
  %v1748 = vunpack.c.l.b16 %v670
  %v1749 = vunpack.c.h.b16 %v670
  %v1750 = vunpack.c.l.b16 %v671
  %v1751 = vunpack.c.h.b16 %v671
  %v1752 = vunpack.c.l.b16 %v672
  %v1753 = vunpack.c.h.b16 %v672
  %v1754 = vunpack.c.l.b16 %v673
  %v1755 = vunpack.c.h.b16 %v673
  %v1756 = vunpack.c.l.b16 %v674
  %v1757 = vunpack.c.h.b16 %v674
  %v1758 = vunpack.c.l.b16 %v675
  %v1759 = vunpack.c.h.b16 %v675
  %v1760 = vunpack.c.l.b16 %v676
  %v1761 = vunpack.c.h.b16 %v676
  %v1762 = vunpack.c.l.b16 %v677
  %v1763 = vunpack.c.h.b16 %v677
  %v1764 = vunpack.c.l.b16 %v678
  %v1765 = vunpack.c.h.b16 %v678
  %v1766 = vunpack.c.l.b16 %v679
  %v1767 = vunpack.c.h.b16 %v679
  %v1768 = vunpack.c.l.b16 %v680
  %v1769 = vunpack.c.h.b16 %v680
  %v1770 = vunpack.c.l.b16 %v681
  %v1771 = vunpack.c.h.b16 %v681
  %v1772 = vunpack.c.l.b16 %v682
  %v1773 = vunpack.c.h.b16 %v682
  %v1774 = vunpack.c.l.b16 %v683
  %v1775 = vunpack.c.h.b16 %v683
  %v1776 = vunpack.c.l.b16 %v684
  %v1777 = vunpack.c.h.b16 %v684
  %v1778 = vunpack.c.l.b16 %v685
  %v1779 = vunpack.c.h.b16 %v685
  %v1780 = vunpack.c.l.b16 %v686
  %v1781 = vunpack.c.h.b16 %v686
  %v1782 = vunpack.c.l.b16 %v687
  %v1783 = vunpack.c.h.b16 %v687
  %v1784 = vunpack.c.l.b16 %v688
  %v1785 = vunpack.c.h.b16 %v688
  %v1786 = vunpack.c.l.b16 %v689
  %v1787 = vunpack.c.h.b16 %v689
  %v1788 = vunpack.c.l.b16 %v690
  %v1789 = vunpack.c.h.b16 %v690
  %v1790 = vunpack.c.l.b16 %v691
  %v1791 = vunpack.c.h.b16 %v691
  %v1792 = vunpack.c.l.b16 %v692
  %v1793 = vunpack.c.h.b16 %v692
  %v1794 = vunpack.c.l.b16 %v693
  %v1795 = vunpack.c.h.b16 %v693
  %v1796 = vunpack.c.l.b16 %v694
  %v1797 = vunpack.c.h.b16 %v694
  %v1798 = vunpack.c.l.b16 %v695
  %v1799 = vunpack.c.h.b16 %v695
  %v1800 = vunpack.c.l.b16 %v696
  %v1801 = vunpack.c.h.b16 %v696
  %v1802 = vunpack.c.l.b16 %v697
  %v1803 = vunpack.c.h.b16 %v697
  %v1804 = vunpack.c.l.b16 %v698
  %v1805 = vunpack.c.h.b16 %v698
  %v1806 = vunpack.c.l.b16 %v699
  %v1807 = vunpack.c.h.b16 %v699
  %v1808 = vunpack.c.l.b16 %v700
  %v1809 = vunpack.c.h.b16 %v700
  %v1810 = vunpack.c.l.b16 %v701
  %v1811 = vunpack.c.h.b16 %v701
  %v1812 = vunpack.c.l.b16 %v702
  %v1813 = vunpack.c.h.b16 %v702
  %v1814 = vunpack.c.l.b16 %v703
  %v1815 = vunpack.c.h.b16 %v703
  %v1816 = vunpack.c.l.b16 %v704
  %v1817 = vunpack.c.h.b16 %v704
  %v1818 = vunpack.c.l.b16 %v705
  %v1819 = vunpack.c.h.b16 %v705
  %v1820 = vunpack.c.l.b16 %v706
  %v1821 = vunpack.c.h.b16 %v706
  %v1822 = vunpack.c.l.b16 %v707
  %v1823 = vunpack.c.h.b16 %v707
  %v1824 = vunpack.c.l.b16 %v708
  %v1825 = vunpack.c.h.b16 %v708
  %v1826 = vunpack.c.l.b16 %v709
  %v1827 = vunpack.c.h.b16 %v709
  %v1828 = vunpack.c.l.b16 %v710
  %v1829 = vunpack.c.h.b16 %v710
  %v1830 = vunpack.c.l.b16 %v711
  %v1831 = vunpack.c.h.b16 %v711
  %v1832 = vunpack.c.l.b16 %v712
  %v1833 = vunpack.c.h.b16 %v712
  %v1834 = vunpack.c.l.b16 %v713
  %v1835 = vunpack.c.h.b16 %v713
  %v1836 = vunpack.c.l.b16 %v714
  %v1837 = vunpack.c.h.b16 %v714
  %v1838 = vunpack.c.l.b16 %v715
  %v1839 = vunpack.c.h.b16 %v715
  %v1840 = vunpack.c.l.b16 %v716
  %v1841 = vunpack.c.h.b16 %v716
  %v1842 = vunpack.c.l.b16 %v717
  %v1843 = vunpack.c.h.b16 %v717
  %v1844 = vunpack.c.l.b16 %v718
  %v1845 = vunpack.c.h.b16 %v718
  %v1846 = vunpack.c.l.b16 %v719
  %v1847 = vunpack.c.h.b16 %v719
  %v1848 = vunpack.c.l.b16 %v720
  %v1849 = vunpack.c.h.b16 %v720
  %v1850 = vunpack.c.l.b16 %v721
  %v1851 = vunpack.c.h.b16 %v721
  %v1852 = vunpack.c.l.b16 %v722
  %v1853 = vunpack.c.h.b16 %v722
  %v1854 = vunpack.c.l.b16 %v723
  %v1855 = vunpack.c.h.b16 %v723
  %v1856 = vunpack.c.l.b16 %v724
  %v1857 = vunpack.c.h.b16 %v724
  %v1858 = vunpack.c.l.b16 %v725
  %v1859 = vunpack.c.h.b16 %v725
  %v1860 = vunpack.c.l.b16 %v726
  %v1861 = vunpack.c.h.b16 %v726
  %v1862 = vunpack.c.l.b16 %v727
  %v1863 = vunpack.c.h.b16 %v727
  %v1864 = vunpack.c.l.b16 %v728
  %v1865 = vunpack.c.h.b16 %v728
  %v1866 = vunpack.c.l.b16 %v729
  %v1867 = vunpack.c.h.b16 %v729
  %v1868 = vunpack.c.l.b16 %v730
  %v1869 = vunpack.c.h.b16 %v730
  %v1870 = vunpack.c.l.b16 %v731
  %v1871 = vunpack.c.h.b16 %v731
  %v1872 = vunpack.c.l.b16 %v732
  %v1873 = vunpack.c.h.b16 %v732
  %v1874 = vunpack.c.l.b16 %v733
  %v1875 = vunpack.c.h.b16 %v733
  %v1876 = vunpack.c.l.b16 %v734
  %v1877 = vunpack.c.h.b16 %v734
  %v1878 = vunpack.c.l.b16 %v735
  %v1879 = vunpack.c.h.b16 %v735
  %v1880 = vunpack.c.l.b16 %v736
  %v1881 = vunpack.c.h.b16 %v736
  %v1882 = vunpack.c.l.b16 %v737
  %v1883 = vunpack.c.h.b16 %v737
  %v1884 = vunpack.c.l.b16 %v738
  %v1885 = vunpack.c.h.b16 %v738
  %v1886 = vunpack.c.l.b16 %v739
  %v1887 = vunpack.c.h.b16 %v739
  %v1888 = vunpack.c.l.b16 %v740
  %v1889 = vunpack.c.h.b16 %v740
  %v1890 = vunpack.c.l.b16 %v741
  %v1891 = vunpack.c.h.b16 %v741
  %v1892 = vunpack.c.l.b16 %v742
  %v1893 = vunpack.c.h.b16 %v742
  %v1894 = vunpack.c.l.b16 %v743
  %v1895 = vunpack.c.h.b16 %v743
  %v1896 = vunpack.c.l.b16 %v744
  %v1897 = vunpack.c.h.b16 %v744
  %v1898 = vunpack.c.l.b16 %v745
  %v1899 = vunpack.c.h.b16 %v745
  %v1900 = vunpack.c.l.b16 %v746
  %v1901 = vunpack.c.h.b16 %v746
  %v1902 = vunpack.c.l.b16 %v747
  %v1903 = vunpack.c.h.b16 %v747
  %v1904 = vunpack.c.l.b16 %v748
  %v1905 = vunpack.c.h.b16 %v748
  %v1906 = vunpack.c.l.b16 %v749
  %v1907 = vunpack.c.h.b16 %v749
  %v1908 = vunpack.c.l.b16 %v750
  %v1909 = vunpack.c.h.b16 %v750
  %v1910 = vunpack.c.l.b16 %v751
  %v1911 = vunpack.c.h.b16 %v751
  %v1912 = vunpack.c.l.b16 %v752
  %v1913 = vunpack.c.h.b16 %v752
  %v1914 = vunpack.c.l.b16 %v753
  %v1915 = vunpack.c.h.b16 %v753
  %v1916 = vunpack.c.l.b16 %v754
  %v1917 = vunpack.c.h.b16 %v754
  %v1918 = vunpack.c.l.b16 %v755
  %v1919 = vunpack.c.h.b16 %v755
  %v1920 = vunpack.c.l.b16 %v756
  %v1921 = vunpack.c.h.b16 %v756
  %v1922 = vunpack.c.l.b16 %v757
  %v1923 = vunpack.c.h.b16 %v757
  %v1924 = vunpack.c.l.b16 %v758
  %v1925 = vunpack.c.h.b16 %v758
  %v1926 = vunpack.c.l.b16 %v759
  %v1927 = vunpack.c.h.b16 %v759
  %v1928 = vunpack.c.l.b16 %v760
  %v1929 = vunpack.c.h.b16 %v760
  %v1930 = vunpack.c.l.b16 %v761
  %v1931 = vunpack.c.h.b16 %v761
  %v1932 = vunpack.c.l.b16 %v762
  %v1933 = vunpack.c.h.b16 %v762
  %v1934 = vunpack.c.l.b16 %v763
  %v1935 = vunpack.c.h.b16 %v763
  %v1936 = vunpack.c.l.b16 %v764
  %v1937 = vunpack.c.h.b16 %v764
  %v1938 = vunpack.c.l.b16 %v765
  %v1939 = vunpack.c.h.b16 %v765
  %v1940 = vunpack.c.l.b16 %v766
  %v1941 = vunpack.c.h.b16 %v766
  %v1942 = vunpack.c.l.b16 %v767
  %v1943 = vunpack.c.h.b16 %v767
  %v1944 = vunpack.c.l.b16 %v768
  %v1945 = vunpack.c.h.b16 %v768
  %v1946 = vunpack.c.l.b16 %v769
  %v1947 = vunpack.c.h.b16 %v769
  %v1948 = vunpack.c.l.b16 %v770
  %v1949 = vunpack.c.h.b16 %v770
  %v1950 = vunpack.c.l.b16 %v771
  %v1951 = vunpack.c.h.b16 %v771
  %v1952 = vunpack.c.l.b16 %v772
  %v1953 = vunpack.c.h.b16 %v772
  %v1954 = vunpack.c.l.b16 %v773
  %v1955 = vunpack.c.h.b16 %v773
  %v1956 = vunpack.c.l.b16 %v774
  %v1957 = vunpack.c.h.b16 %v774
  %v1958 = vunpack.c.l.b16 %v775
  %v1959 = vunpack.c.h.b16 %v775
  %v1960 = vunpack.c.l.b16 %v776
  %v1961 = vunpack.c.h.b16 %v776
  %v1962 = vunpack.c.l.b16 %v777
  %v1963 = vunpack.c.h.b16 %v777
  %v1964 = vunpack.c.l.b16 %v778
  %v1965 = vunpack.c.h.b16 %v778
  %v1966 = vunpack.c.l.b16 %v779
  %v1967 = vunpack.c.h.b16 %v779
  %v1968 = vunpack.c.l.b16 %v780
  %v1969 = vunpack.c.h.b16 %v780
  %v1970 = vunpack.c.l.b16 %v781
  %v1971 = vunpack.c.h.b16 %v781
  %v1972 = vunpack.c.l.b16 %v782
  %v1973 = vunpack.c.h.b16 %v782
  %v1974 = vunpack.c.l.b16 %v783
  %v1975 = vunpack.c.h.b16 %v783
  %v1976 = vunpack.c.l.b16 %v784
  %v1977 = vunpack.c.h.b16 %v784
  %v1978 = vunpack.c.l.b16 %v785
  %v1979 = vunpack.c.h.b16 %v785
  %v1980 = vunpack.c.l.b16 %v786
  %v1981 = vunpack.c.h.b16 %v786
  %v1982 = vunpack.c.l.b16 %v787
  %v1983 = vunpack.c.h.b16 %v787
  %v1984 = vunpack.c.l.b16 %v788
  %v1985 = vunpack.c.h.b16 %v788
  %v1986 = vunpack.c.l.b16 %v789
  %v1987 = vunpack.c.h.b16 %v789
  %v1988 = vunpack.c.l.b16 %v790
  %v1989 = vunpack.c.h.b16 %v790
  %v1990 = vunpack.c.l.b16 %v791
  %v1991 = vunpack.c.h.b16 %v791
  %v1992 = vunpack.c.l.b16 %v792
  %v1993 = vunpack.c.h.b16 %v792
  %v1994 = vunpack.c.l.b16 %v793
  %v1995 = vunpack.c.h.b16 %v793
  %v1996 = vunpack.c.l.b16 %v794
  %v1997 = vunpack.c.h.b16 %v794
  %v1998 = vunpack.c.l.b16 %v795
  %v1999 = vunpack.c.h.b16 %v795
  %v2000 = vunpack.c.l.b16 %v796
  %v2001 = vunpack.c.h.b16 %v796
  %v2002 = vunpack.c.l.b16 %v797
  %v2003 = vunpack.c.h.b16 %v797
  %v2004 = vunpack.c.l.b16 %v798
  %v2005 = vunpack.c.h.b16 %v798
  %v2006 = vunpack.c.l.b16 %v799
  %v2007 = vunpack.c.h.b16 %v799
  %v2008 = vunpack.c.l.b16 %v800
  %v2009 = vunpack.c.h.b16 %v800
  %v2010 = vunpack.c.l.b16 %v801
  %v2011 = vunpack.c.h.b16 %v801
  %v2012 = vunpack.c.l.b16 %v802
  %v2013 = vunpack.c.h.b16 %v802
  %v2014 = vunpack.c.l.b16 %v803
  %v2015 = vunpack.c.h.b16 %v803
  %v2016 = vunpack.c.l.b16 %v804
  %v2017 = vunpack.c.h.b16 %v804
  %v2018 = vunpack.c.l.b16 %v805
  %v2019 = vunpack.c.h.b16 %v805
  %v2020 = vunpack.c.l.b16 %v806
  %v2021 = vunpack.c.h.b16 %v806
  %v2022 = vunpack.c.l.b16 %v807
  %v2023 = vunpack.c.h.b16 %v807
  %v2024 = vunpack.c.l.b16 %v808
  %v2025 = vunpack.c.h.b16 %v808
  %v2026 = vunpack.c.l.b16 %v809
  %v2027 = vunpack.c.h.b16 %v809
  %v2028 = vunpack.c.l.b16 %v810
  %v2029 = vunpack.c.h.b16 %v810
  %v2030 = vunpack.c.l.b16 %v811
  %v2031 = vunpack.c.h.b16 %v811
  %v2032 = vunpack.c.l.b16 %v812
  %v2033 = vunpack.c.h.b16 %v812
  %v2034 = vunpack.c.l.b16 %v813
  %v2035 = vunpack.c.h.b16 %v813
  %v2036 = vunpack.c.l.b16 %v814
  %v2037 = vunpack.c.h.b16 %v814
  %v2038 = vunpack.c.l.b16 %v815
  %v2039 = vunpack.c.h.b16 %v815
  %v2040 = vunpack.c.l.b16 %v816
  %v2041 = vunpack.c.h.b16 %v816
  %v2042 = vunpack.c.l.b16 %v817
  %v2043 = vunpack.c.h.b16 %v817
  %v2044 = vunpack.c.l.b16 %v818
  %v2045 = vunpack.c.h.b16 %v818
  %v2046 = vunpack.c.l.b16 %v819
  %v2047 = vunpack.c.h.b16 %v819
  %v2048 = vunpack.c.l.b16 %v820
  %v2049 = vunpack.c.h.b16 %v820
  %v2050 = vunpack.c.l.b16 %v821
  %v2051 = vunpack.c.h.b16 %v821
  %v2052 = vunpack.c.l.b16 %v822
  %v2053 = vunpack.c.h.b16 %v822
  %v2054 = vunpack.c.l.b16 %v823
  %v2055 = vunpack.c.h.b16 %v823
  %v2056 = vunpack.c.l.b16 %v824
  %v2057 = vunpack.c.h.b16 %v824
  %v2058 = vunpack.c.l.b16 %v825
  %v2059 = vunpack.c.h.b16 %v825
  %v2060 = vunpack.c.l.b16 %v826
  %v2061 = vunpack.c.h.b16 %v826
  %v2062 = vunpack.c.l.b16 %v827
  %v2063 = vunpack.c.h.b16 %v827
  %v2064 = vunpack.c.l.b16 %v828
  %v2065 = vunpack.c.h.b16 %v828
  %v2066 = vunpack.c.l.b16 %v829
  %v2067 = vunpack.c.h.b16 %v829
  %v2068 = vunpack.c.l.b16 %v830
  %v2069 = vunpack.c.h.b16 %v830
  %v2070 = vunpack.c.l.b16 %v831
  %v2071 = vunpack.c.h.b16 %v831
  %v2072 = vunpack.c.l.b16 %v832
  %v2073 = vunpack.c.h.b16 %v832
  %v2074 = vunpack.c.l.b16 %v833
  %v2075 = vunpack.c.h.b16 %v833
  %v2076 = vunpack.c.l.b16 %v834
  %v2077 = vunpack.c.h.b16 %v834
  %v2078 = vunpack.c.l.b16 %v835
  %v2079 = vunpack.c.h.b16 %v835
  %v2080 = vunpack.c.l.b16 %v836
  %v2081 = vunpack.c.h.b16 %v836
  %v2082 = vunpack.c.l.b16 %v837
  %v2083 = vunpack.c.h.b16 %v837
  %v2084 = vunpack.c.l.b16 %v838
  %v2085 = vunpack.c.h.b16 %v838
  %v2086 = vunpack.c.l.b16 %v839
  %v2087 = vunpack.c.h.b16 %v839
  %v2088 = vunpack.c.l.b16 %v840
  %v2089 = vunpack.c.h.b16 %v840
  %v2090 = vunpack.c.l.b16 %v841
  %v2091 = vunpack.c.h.b16 %v841
  %v2092 = vunpack.c.l.b16 %v842
  %v2093 = vunpack.c.h.b16 %v842
  %v2094 = vunpack.c.l.b16 %v843
  %v2095 = vunpack.c.h.b16 %v843
  %v2096 = vunpack.c.l.b16 %v844
  %v2097 = vunpack.c.h.b16 %v844
  %v2098 = vunpack.c.l.b16 %v845
  %v2099 = vunpack.c.h.b16 %v845
  %v2100 = vunpack.c.l.b16 %v846
  %v2101 = vunpack.c.h.b16 %v846
  %v2102 = vunpack.c.l.b16 %v847
  %v2103 = vunpack.c.h.b16 %v847
  %v2104 = vunpack.c.l.b16 %v848
  %v2105 = vunpack.c.h.b16 %v848
  %v2106 = vunpack.c.l.b16 %v849
  %v2107 = vunpack.c.h.b16 %v849
  %v2108 = vunpack.c.l.b16 %v850
  %v2109 = vunpack.c.h.b16 %v850
  %v2110 = vunpack.c.l.b16 %v851
  %v2111 = vunpack.c.h.b16 %v851
  %v2112 = vunpack.c.l.b16 %v852
  %v2113 = vunpack.c.h.b16 %v852
  %v2114 = vunpack.c.l.b16 %v853
  %v2115 = vunpack.c.h.b16 %v853
  %v2116 = vunpack.c.l.b16 %v854
  %v2117 = vunpack.c.h.b16 %v854
  %v2118 = vunpack.c.l.b16 %v855
  %v2119 = vunpack.c.h.b16 %v855
  %v2120 = vunpack.c.l.b16 %v856
  %v2121 = vunpack.c.h.b16 %v856
  %v2122 = vunpack.c.l.b16 %v857
  %v2123 = vunpack.c.h.b16 %v857
  %v2124 = vunpack.c.l.b16 %v858
  %v2125 = vunpack.c.h.b16 %v858
  %v2126 = vunpack.c.l.b16 %v859
  %v2127 = vunpack.c.h.b16 %v859
  %v2128 = vunpack.c.l.b16 %v860
  %v2129 = vunpack.c.h.b16 %v860
  %v2130 = vunpack.c.l.b16 %v861
  %v2131 = vunpack.c.h.b16 %v861
  %v2132 = vunpack.c.l.b16 %v862
  %v2133 = vunpack.c.h.b16 %v862
  %v2134 = vunpack.c.l.b16 %v863
  %v2135 = vunpack.c.h.b16 %v863
  %v2136 = vunpack.c.l.b16 %v864
  %v2137 = vunpack.c.h.b16 %v864
  %v2138 = vunpack.c.l.b16 %v865
  %v2139 = vunpack.c.h.b16 %v865
  %v2140 = vunpack.c.l.b16 %v866
  %v2141 = vunpack.c.h.b16 %v866
  %v2142 = vunpack.c.l.b16 %v867
  %v2143 = vunpack.c.h.b16 %v867
  %v2144 = vunpack.c.l.b16 %v868
  %v2145 = vunpack.c.h.b16 %v868
  %v2146 = vunpack.c.l.b16 %v869
  %v2147 = vunpack.c.h.b16 %v869
  %v2148 = vunpack.c.l.b16 %v870
  %v2149 = vunpack.c.h.b16 %v870
  %v2150 = vunpack.c.l.b16 %v871
  %v2151 = vunpack.c.h.b16 %v871
  %v2152 = vunpack.c.l.b16 %v872
  %v2153 = vunpack.c.h.b16 %v872
  %v2154 = vunpack.c.l.b16 %v873
  %v2155 = vunpack.c.h.b16 %v873
  %v2156 = vunpack.c.l.b16 %v874
  %v2157 = vunpack.c.h.b16 %v874
  %v2158 = vunpack.c.l.b16 %v875
  %v2159 = vunpack.c.h.b16 %v875
  %v2160 = vunpack.c.l.b16 %v876
  %v2161 = vunpack.c.h.b16 %v876
  %v2162 = vunpack.c.l.b16 %v877
  %v2163 = vunpack.c.h.b16 %v877
  %v2164 = vunpack.c.l.b16 %v878
  %v2165 = vunpack.c.h.b16 %v878
  %v2166 = vunpack.c.l.b16 %v879
  %v2167 = vunpack.c.h.b16 %v879
  %v2168 = vunpack.c.l.b16 %v880
  %v2169 = vunpack.c.h.b16 %v880
  %v2170 = vunpack.c.l.b16 %v881
  %v2171 = vunpack.c.h.b16 %v881
  %v2172 = vunpack.c.l.b16 %v882
  %v2173 = vunpack.c.h.b16 %v882
  %v2174 = vunpack.c.l.b16 %v883
  %v2175 = vunpack.c.h.b16 %v883
  %v2176 = vunpack.c.l.b16 %v884
  %v2177 = vunpack.c.h.b16 %v884
  %v2178 = vunpack.c.l.b16 %v885
  %v2179 = vunpack.c.h.b16 %v885
  %v2180 = vunpack.c.l.b16 %v886
  %v2181 = vunpack.c.h.b16 %v886
  %v2182 = vunpack.c.l.b16 %v887
  %v2183 = vunpack.c.h.b16 %v887
  %v2184 = vpack.c.b16 %v1338, %v1320
  %v2185 = vpack.c.b16 %v1339, %v1321
  %v2186 = vpack.c.b16 %v1340, %v1322
  %v2187 = vpack.c.b16 %v1341, %v1323
  %v2188 = vpack.c.b16 %v1342, %v1324
  %v2189 = vpack.c.b16 %v1343, %v1325
  %v2190 = vpack.c.b16 %v1344, %v1326
  %v2191 = vpack.c.b16 %v1345, %v1327
  %v2192 = vpack.c.b16 %v1346, %v1328
  %v2193 = vpack.c.b16 %v1347, %v1329
  %v2194 = vpack.c.b16 %v1348, %v1330
  %v2195 = vpack.c.b16 %v1349, %v1331
  %v2196 = vpack.c.b16 %v1350, %v1332
  %v2197 = vpack.c.b16 %v1351, %v1333
  %v2198 = vpack.c.b16 %v1352, %v1334
  %v2199 = vpack.c.b16 %v1353, %v1335
  %v2200 = vpack.c.b16 %v1354, %v1336
  %v2201 = vpack.c.b16 %v1355, %v1337
  %v2202 = vpack.c.b16 %v1374, %v1356
  %v2203 = vpack.c.b16 %v1375, %v1357
  %v2204 = vpack.c.b16 %v1376, %v1358
  %v2205 = vpack.c.b16 %v1377, %v1359
  %v2206 = vpack.c.b16 %v1378, %v1360
  %v2207 = vpack.c.b16 %v1379, %v1361
  %v2208 = vpack.c.b16 %v1380, %v1362
  %v2209 = vpack.c.b16 %v1381, %v1363
  %v2210 = vpack.c.b16 %v1382, %v1364
  %v2211 = vpack.c.b16 %v1383, %v1365
  %v2212 = vpack.c.b16 %v1384, %v1366
  %v2213 = vpack.c.b16 %v1385, %v1367
  %v2214 = vpack.c.b16 %v1386, %v1368
  %v2215 = vpack.c.b16 %v1387, %v1369
  %v2216 = vpack.c.b16 %v1388, %v1370
  %v2217 = vpack.c.b16 %v1389, %v1371
  %v2218 = vpack.c.b16 %v1390, %v1372
  %v2219 = vpack.c.b16 %v1391, %v1373
  %v2220 = vpack.c.b16 %v1410, %v1392
  %v2221 = vpack.c.b16 %v1411, %v1393
  %v2222 = vpack.c.b16 %v1412, %v1394
  %v2223 = vpack.c.b16 %v1413, %v1395
  %v2224 = vpack.c.b16 %v1414, %v1396
  %v2225 = vpack.c.b16 %v1415, %v1397
  %v2226 = vpack.c.b16 %v1416, %v1398
  %v2227 = vpack.c.b16 %v1417, %v1399
  %v2228 = vpack.c.b16 %v1418, %v1400
  %v2229 = vpack.c.b16 %v1419, %v1401
  %v2230 = vpack.c.b16 %v1420, %v1402
  %v2231 = vpack.c.b16 %v1421, %v1403
  %v2232 = vpack.c.b16 %v1422, %v1404
  %v2233 = vpack.c.b16 %v1423, %v1405
  %v2234 = vpack.c.b16 %v1424, %v1406
  %v2235 = vpack.c.b16 %v1425, %v1407
  %v2236 = vpack.c.b16 %v1426, %v1408
  %v2237 = vpack.c.b16 %v1427, %v1409
  %v2238 = vpack.c.b16 %v1446, %v1428
  %v2239 = vpack.c.b16 %v1447, %v1429
  %v2240 = vpack.c.b16 %v1448, %v1430
  %v2241 = vpack.c.b16 %v1449, %v1431
  %v2242 = vpack.c.b16 %v1450, %v1432
  %v2243 = vpack.c.b16 %v1451, %v1433
  %v2244 = vpack.c.b16 %v1452, %v1434
  %v2245 = vpack.c.b16 %v1453, %v1435
  %v2246 = vpack.c.b16 %v1454, %v1436
  %v2247 = vpack.c.b16 %v1455, %v1437
  %v2248 = vpack.c.b16 %v1456, %v1438
  %v2249 = vpack.c.b16 %v1457, %v1439
  %v2250 = vpack.c.b16 %v1458, %v1440
  %v2251 = vpack.c.b16 %v1459, %v1441
  %v2252 = vpack.c.b16 %v1460, %v1442
  %v2253 = vpack.c.b16 %v1461, %v1443
  %v2254 = vpack.c.b16 %v1462, %v1444
  %v2255 = vpack.c.b16 %v1463, %v1445
  %v2256 = vpack.c.b16 %v1482, %v1464
  %v2257 = vpack.c.b16 %v1483, %v1465
  %v2258 = vpack.c.b16 %v1484, %v1466
  %v2259 = vpack.c.b16 %v1485, %v1467
  %v2260 = vpack.c.b16 %v1486, %v1468
  %v2261 = vpack.c.b16 %v1487, %v1469
  %v2262 = vpack.c.b16 %v1488, %v1470
  %v2263 = vpack.c.b16 %v1489, %v1471
  %v2264 = vpack.c.b16 %v1490, %v1472
  %v2265 = vpack.c.b16 %v1491, %v1473
  %v2266 = vpack.c.b16 %v1492, %v1474
  %v2267 = vpack.c.b16 %v1493, %v1475
  %v2268 = vpack.c.b16 %v1494, %v1476
  %v2269 = vpack.c.b16 %v1495, %v1477
  %v2270 = vpack.c.b16 %v1496, %v1478
  %v2271 = vpack.c.b16 %v1497, %v1479
  %v2272 = vpack.c.b16 %v1498, %v1480
  %v2273 = vpack.c.b16 %v1499, %v1481
  %v2274 = vpack.c.b16 %v1518, %v1500
  %v2275 = vpack.c.b16 %v1519, %v1501
  %v2276 = vpack.c.b16 %v1520, %v1502
  %v2277 = vpack.c.b16 %v1521, %v1503
  %v2278 = vpack.c.b16 %v1522, %v1504
  %v2279 = vpack.c.b16 %v1523, %v1505
  %v2280 = vpack.c.b16 %v1524, %v1506
  %v2281 = vpack.c.b16 %v1525, %v1507
  %v2282 = vpack.c.b16 %v1526, %v1508
  %v2283 = vpack.c.b16 %v1527, %v1509
  %v2284 = vpack.c.b16 %v1528, %v1510
  %v2285 = vpack.c.b16 %v1529, %v1511
  %v2286 = vpack.c.b16 %v1530, %v1512
  %v2287 = vpack.c.b16 %v1531, %v1513
  %v2288 = vpack.c.b16 %v1532, %v1514
  %v2289 = vpack.c.b16 %v1533, %v1515
  %v2290 = vpack.c.b16 %v1534, %v1516
  %v2291 = vpack.c.b16 %v1535, %v1517
  %v2292 = vpack.c.b16 %v1554, %v1536
  %v2293 = vpack.c.b16 %v1555, %v1537
  %v2294 = vpack.c.b16 %v1556, %v1538
  %v2295 = vpack.c.b16 %v1557, %v1539
  %v2296 = vpack.c.b16 %v1558, %v1540
  %v2297 = vpack.c.b16 %v1559, %v1541
  %v2298 = vpack.c.b16 %v1560, %v1542
  %v2299 = vpack.c.b16 %v1561, %v1543
  %v2300 = vpack.c.b16 %v1562, %v1544
  %v2301 = vpack.c.b16 %v1563, %v1545
  %v2302 = vpack.c.b16 %v1564, %v1546
  %v2303 = vpack.c.b16 %v1565, %v1547
  %v2304 = vpack.c.b16 %v1566, %v1548
  %v2305 = vpack.c.b16 %v1567, %v1549
  %v2306 = vpack.c.b16 %v1568, %v1550
  %v2307 = vpack.c.b16 %v1569, %v1551
  %v2308 = vpack.c.b16 %v1570, %v1552
  %v2309 = vpack.c.b16 %v1571, %v1553
  %v2310 = vpack.c.b16 %v1590, %v1572
  %v2311 = vpack.c.b16 %v1591, %v1573
  %v2312 = vpack.c.b16 %v1592, %v1574
  %v2313 = vpack.c.b16 %v1593, %v1575
  %v2314 = vpack.c.b16 %v1594, %v1576
  %v2315 = vpack.c.b16 %v1595, %v1577
  %v2316 = vpack.c.b16 %v1596, %v1578
  %v2317 = vpack.c.b16 %v1597, %v1579
  %v2318 = vpack.c.b16 %v1598, %v1580
  %v2319 = vpack.c.b16 %v1599, %v1581
  %v2320 = vpack.c.b16 %v1600, %v1582
  %v2321 = vpack.c.b16 %v1601, %v1583
  %v2322 = vpack.c.b16 %v1602, %v1584
  %v2323 = vpack.c.b16 %v1603, %v1585
  %v2324 = vpack.c.b16 %v1604, %v1586
  %v2325 = vpack.c.b16 %v1605, %v1587
  %v2326 = vpack.c.b16 %v1606, %v1588
  %v2327 = vpack.c.b16 %v1607, %v1589
  %v2328 = vpack.c.b16 %v1626, %v1608
  %v2329 = vpack.c.b16 %v1627, %v1609
  %v2330 = vpack.c.b16 %v1628, %v1610
  %v2331 = vpack.c.b16 %v1629, %v1611
  %v2332 = vpack.c.b16 %v1630, %v1612
  %v2333 = vpack.c.b16 %v1631, %v1613
  %v2334 = vpack.c.b16 %v1632, %v1614
  %v2335 = vpack.c.b16 %v1633, %v1615
  %v2336 = vpack.c.b16 %v1634, %v1616
  %v2337 = vpack.c.b16 %v1635, %v1617
  %v2338 = vpack.c.b16 %v1636, %v1618
  %v2339 = vpack.c.b16 %v1637, %v1619
  %v2340 = vpack.c.b16 %v1638, %v1620
  %v2341 = vpack.c.b16 %v1639, %v1621
  %v2342 = vpack.c.b16 %v1640, %v1622
  %v2343 = vpack.c.b16 %v1641, %v1623
  %v2344 = vpack.c.b16 %v1642, %v1624
  %v2345 = vpack.c.b16 %v1643, %v1625
  %v2346 = vpack.c.b16 %v1662, %v1644
  %v2347 = vpack.c.b16 %v1663, %v1645
  %v2348 = vpack.c.b16 %v1664, %v1646
  %v2349 = vpack.c.b16 %v1665, %v1647
  %v2350 = vpack.c.b16 %v1666, %v1648
  %v2351 = vpack.c.b16 %v1667, %v1649
  %v2352 = vpack.c.b16 %v1668, %v1650
  %v2353 = vpack.c.b16 %v1669, %v1651
  %v2354 = vpack.c.b16 %v1670, %v1652
  %v2355 = vpack.c.b16 %v1671, %v1653
  %v2356 = vpack.c.b16 %v1672, %v1654
  %v2357 = vpack.c.b16 %v1673, %v1655
  %v2358 = vpack.c.b16 %v1674, %v1656
  %v2359 = vpack.c.b16 %v1675, %v1657
  %v2360 = vpack.c.b16 %v1676, %v1658
  %v2361 = vpack.c.b16 %v1677, %v1659
  %v2362 = vpack.c.b16 %v1678, %v1660
  %v2363 = vpack.c.b16 %v1679, %v1661
  %v2364 = vpack.c.b16 %v1698, %v1680
  %v2365 = vpack.c.b16 %v1699, %v1681
  %v2366 = vpack.c.b16 %v1700, %v1682
  %v2367 = vpack.c.b16 %v1701, %v1683
  %v2368 = vpack.c.b16 %v1702, %v1684
  %v2369 = vpack.c.b16 %v1703, %v1685
  %v2370 = vpack.c.b16 %v1704, %v1686
  %v2371 = vpack.c.b16 %v1705, %v1687
  %v2372 = vpack.c.b16 %v1706, %v1688
  %v2373 = vpack.c.b16 %v1707, %v1689
  %v2374 = vpack.c.b16 %v1708, %v1690
  %v2375 = vpack.c.b16 %v1709, %v1691
  %v2376 = vpack.c.b16 %v1710, %v1692
  %v2377 = vpack.c.b16 %v1711, %v1693
  %v2378 = vpack.c.b16 %v1712, %v1694
  %v2379 = vpack.c.b16 %v1713, %v1695
  %v2380 = vpack.c.b16 %v1714, %v1696
  %v2381 = vpack.c.b16 %v1715, %v1697
  %v2382 = vpack.c.b16 %v1734, %v1716
  %v2383 = vpack.c.b16 %v1735, %v1717
  %v2384 = vpack.c.b16 %v1736, %v1718
  %v2385 = vpack.c.b16 %v1737, %v1719
  %v2386 = vpack.c.b16 %v1738, %v1720
  %v2387 = vpack.c.b16 %v1739, %v1721
  %v2388 = vpack.c.b16 %v1740, %v1722
  %v2389 = vpack.c.b16 %v1741, %v1723
  %v2390 = vpack.c.b16 %v1742, %v1724
  %v2391 = vpack.c.b16 %v1743, %v1725
  %v2392 = vpack.c.b16 %v1744, %v1726
  %v2393 = vpack.c.b16 %v1745, %v1727
  %v2394 = vpack.c.b16 %v1746, %v1728
  %v2395 = vpack.c.b16 %v1747, %v1729
  %v2396 = vpack.c.b16 %v1748, %v1730
  %v2397 = vpack.c.b16 %v1749, %v1731
  %v2398 = vpack.c.b16 %v1750, %v1732
  %v2399 = vpack.c.b16 %v1751, %v1733
  %v2400 = vpack.c.b16 %v1770, %v1752
  %v2401 = vpack.c.b16 %v1771, %v1753
  %v2402 = vpack.c.b16 %v1772, %v1754
  %v2403 = vpack.c.b16 %v1773, %v1755
  %v2404 = vpack.c.b16 %v1774, %v1756
  %v2405 = vpack.c.b16 %v1775, %v1757
  %v2406 = vpack.c.b16 %v1776, %v1758
  %v2407 = vpack.c.b16 %v1777, %v1759
  %v2408 = vpack.c.b16 %v1778, %v1760
  %v2409 = vpack.c.b16 %v1779, %v1761
  %v2410 = vpack.c.b16 %v1780, %v1762
  %v2411 = vpack.c.b16 %v1781, %v1763
  %v2412 = vpack.c.b16 %v1782, %v1764
  %v2413 = vpack.c.b16 %v1783, %v1765
  %v2414 = vpack.c.b16 %v1784, %v1766
  %v2415 = vpack.c.b16 %v1785, %v1767
  %v2416 = vpack.c.b16 %v1786, %v1768
  %v2417 = vpack.c.b16 %v1787, %v1769
  %v2418 = vpack.c.b16 %v1806, %v1788
  %v2419 = vpack.c.b16 %v1807, %v1789
  %v2420 = vpack.c.b16 %v1808, %v1790
  %v2421 = vpack.c.b16 %v1809, %v1791
  %v2422 = vpack.c.b16 %v1810, %v1792
  %v2423 = vpack.c.b16 %v1811, %v1793
  %v2424 = vpack.c.b16 %v1812, %v1794
  %v2425 = vpack.c.b16 %v1813, %v1795
  %v2426 = vpack.c.b16 %v1814, %v1796
  %v2427 = vpack.c.b16 %v1815, %v1797
  %v2428 = vpack.c.b16 %v1816, %v1798
  %v2429 = vpack.c.b16 %v1817, %v1799
  %v2430 = vpack.c.b16 %v1818, %v1800
  %v2431 = vpack.c.b16 %v1819, %v1801
  %v2432 = vpack.c.b16 %v1820, %v1802
  %v2433 = vpack.c.b16 %v1821, %v1803
  %v2434 = vpack.c.b16 %v1822, %v1804
  %v2435 = vpack.c.b16 %v1823, %v1805
  %v2436 = vpack.c.b16 %v1842, %v1824
  %v2437 = vpack.c.b16 %v1843, %v1825
  %v2438 = vpack.c.b16 %v1844, %v1826
  %v2439 = vpack.c.b16 %v1845, %v1827
  %v2440 = vpack.c.b16 %v1846, %v1828
  %v2441 = vpack.c.b16 %v1847, %v1829
  %v2442 = vpack.c.b16 %v1848, %v1830
  %v2443 = vpack.c.b16 %v1849, %v1831
  %v2444 = vpack.c.b16 %v1850, %v1832
  %v2445 = vpack.c.b16 %v1851, %v1833
  %v2446 = vpack.c.b16 %v1852, %v1834
  %v2447 = vpack.c.b16 %v1853, %v1835
  %v2448 = vpack.c.b16 %v1854, %v1836
  %v2449 = vpack.c.b16 %v1855, %v1837
  %v2450 = vpack.c.b16 %v1856, %v1838
  %v2451 = vpack.c.b16 %v1857, %v1839
  %v2452 = vpack.c.b16 %v1858, %v1840
  %v2453 = vpack.c.b16 %v1859, %v1841
  %v2454 = vpack.c.b16 %v1878, %v1860
  %v2455 = vpack.c.b16 %v1879, %v1861
  %v2456 = vpack.c.b16 %v1880, %v1862
  %v2457 = vpack.c.b16 %v1881, %v1863
  %v2458 = vpack.c.b16 %v1882, %v1864
  %v2459 = vpack.c.b16 %v1883, %v1865
  %v2460 = vpack.c.b16 %v1884, %v1866
  %v2461 = vpack.c.b16 %v1885, %v1867
  %v2462 = vpack.c.b16 %v1886, %v1868
  %v2463 = vpack.c.b16 %v1887, %v1869
  %v2464 = vpack.c.b16 %v1888, %v1870
  %v2465 = vpack.c.b16 %v1889, %v1871
  %v2466 = vpack.c.b16 %v1890, %v1872
  %v2467 = vpack.c.b16 %v1891, %v1873
  %v2468 = vpack.c.b16 %v1892, %v1874
  %v2469 = vpack.c.b16 %v1893, %v1875
  %v2470 = vpack.c.b16 %v1894, %v1876
  %v2471 = vpack.c.b16 %v1895, %v1877
  %v2472 = vpack.c.b16 %v1914, %v1896
  %v2473 = vpack.c.b16 %v1915, %v1897
  %v2474 = vpack.c.b16 %v1916, %v1898
  %v2475 = vpack.c.b16 %v1917, %v1899
  %v2476 = vpack.c.b16 %v1918, %v1900
  %v2477 = vpack.c.b16 %v1919, %v1901
  %v2478 = vpack.c.b16 %v1920, %v1902
  %v2479 = vpack.c.b16 %v1921, %v1903
  %v2480 = vpack.c.b16 %v1922, %v1904
  %v2481 = vpack.c.b16 %v1923, %v1905
  %v2482 = vpack.c.b16 %v1924, %v1906
  %v2483 = vpack.c.b16 %v1925, %v1907
  %v2484 = vpack.c.b16 %v1926, %v1908
  %v2485 = vpack.c.b16 %v1927, %v1909
  %v2486 = vpack.c.b16 %v1928, %v1910
  %v2487 = vpack.c.b16 %v1929, %v1911
  %v2488 = vpack.c.b16 %v1930, %v1912
  %v2489 = vpack.c.b16 %v1931, %v1913
  %v2490 = vpack.c.b16 %v1950, %v1932
  %v2491 = vpack.c.b16 %v1951, %v1933
  %v2492 = vpack.c.b16 %v1952, %v1934
  %v2493 = vpack.c.b16 %v1953, %v1935
  %v2494 = vpack.c.b16 %v1954, %v1936
  %v2495 = vpack.c.b16 %v1955, %v1937
  %v2496 = vpack.c.b16 %v1956, %v1938
  %v2497 = vpack.c.b16 %v1957, %v1939
  %v2498 = vpack.c.b16 %v1958, %v1940
  %v2499 = vpack.c.b16 %v1959, %v1941
  %v2500 = vpack.c.b16 %v1960, %v1942
  %v2501 = vpack.c.b16 %v1961, %v1943
  %v2502 = vpack.c.b16 %v1962, %v1944
  %v2503 = vpack.c.b16 %v1963, %v1945
  %v2504 = vpack.c.b16 %v1964, %v1946
  %v2505 = vpack.c.b16 %v1965, %v1947
  %v2506 = vpack.c.b16 %v1966, %v1948
  %v2507 = vpack.c.b16 %v1967, %v1949
  %v2508 = vpack.c.b16 %v1986, %v1968
  %v2509 = vpack.c.b16 %v1987, %v1969
  %v2510 = vpack.c.b16 %v1988, %v1970
  %v2511 = vpack.c.b16 %v1989, %v1971
  %v2512 = vpack.c.b16 %v1990, %v1972
  %v2513 = vpack.c.b16 %v1991, %v1973
  %v2514 = vpack.c.b16 %v1992, %v1974
  %v2515 = vpack.c.b16 %v1993, %v1975
  %v2516 = vpack.c.b16 %v1994, %v1976
  %v2517 = vpack.c.b16 %v1995, %v1977
  %v2518 = vpack.c.b16 %v1996, %v1978
  %v2519 = vpack.c.b16 %v1997, %v1979
  %v2520 = vpack.c.b16 %v1998, %v1980
  %v2521 = vpack.c.b16 %v1999, %v1981
  %v2522 = vpack.c.b16 %v2000, %v1982
  %v2523 = vpack.c.b16 %v2001, %v1983
  %v2524 = vpack.c.b16 %v2002, %v1984
  %v2525 = vpack.c.b16 %v2003, %v1985
  %v2526 = vpack.c.b16 %v2022, %v2004
  %v2527 = vpack.c.b16 %v2023, %v2005
  %v2528 = vpack.c.b16 %v2024, %v2006
  %v2529 = vpack.c.b16 %v2025, %v2007
  %v2530 = vpack.c.b16 %v2026, %v2008
  %v2531 = vpack.c.b16 %v2027, %v2009
  %v2532 = vpack.c.b16 %v2028, %v2010
  %v2533 = vpack.c.b16 %v2029, %v2011
  %v2534 = vpack.c.b16 %v2030, %v2012
  %v2535 = vpack.c.b16 %v2031, %v2013
  %v2536 = vpack.c.b16 %v2032, %v2014
  %v2537 = vpack.c.b16 %v2033, %v2015
  %v2538 = vpack.c.b16 %v2034, %v2016
  %v2539 = vpack.c.b16 %v2035, %v2017
  %v2540 = vpack.c.b16 %v2036, %v2018
  %v2541 = vpack.c.b16 %v2037, %v2019
  %v2542 = vpack.c.b16 %v2038, %v2020
  %v2543 = vpack.c.b16 %v2039, %v2021
  %v2544 = vpack.c.b16 %v2058, %v2040
  %v2545 = vpack.c.b16 %v2059, %v2041
  %v2546 = vpack.c.b16 %v2060, %v2042
  %v2547 = vpack.c.b16 %v2061, %v2043
  %v2548 = vpack.c.b16 %v2062, %v2044
  %v2549 = vpack.c.b16 %v2063, %v2045
  %v2550 = vpack.c.b16 %v2064, %v2046
  %v2551 = vpack.c.b16 %v2065, %v2047
  %v2552 = vpack.c.b16 %v2066, %v2048
  %v2553 = vpack.c.b16 %v2067, %v2049
  %v2554 = vpack.c.b16 %v2068, %v2050
  %v2555 = vpack.c.b16 %v2069, %v2051
  %v2556 = vpack.c.b16 %v2070, %v2052
  %v2557 = vpack.c.b16 %v2071, %v2053
  %v2558 = vpack.c.b16 %v2072, %v2054
  %v2559 = vpack.c.b16 %v2073, %v2055
  %v2560 = vpack.c.b16 %v2074, %v2056
  %v2561 = vpack.c.b16 %v2075, %v2057
  %v2562 = vpack.c.b16 %v2094, %v2076
  %v2563 = vpack.c.b16 %v2095, %v2077
  %v2564 = vpack.c.b16 %v2096, %v2078
  %v2565 = vpack.c.b16 %v2097, %v2079
  %v2566 = vpack.c.b16 %v2098, %v2080
  %v2567 = vpack.c.b16 %v2099, %v2081
  %v2568 = vpack.c.b16 %v2100, %v2082
  %v2569 = vpack.c.b16 %v2101, %v2083
  %v2570 = vpack.c.b16 %v2102, %v2084
  %v2571 = vpack.c.b16 %v2103, %v2085
  %v2572 = vpack.c.b16 %v2104, %v2086
  %v2573 = vpack.c.b16 %v2105, %v2087
  %v2574 = vpack.c.b16 %v2106, %v2088
  %v2575 = vpack.c.b16 %v2107, %v2089
  %v2576 = vpack.c.b16 %v2108, %v2090
  %v2577 = vpack.c.b16 %v2109, %v2091
  %v2578 = vpack.c.b16 %v2110, %v2092
  %v2579 = vpack.c.b16 %v2111, %v2093
  %v2580 = vpack.c.b16 %v2130, %v2112
  %v2581 = vpack.c.b16 %v2131, %v2113
  %v2582 = vpack.c.b16 %v2132, %v2114
  %v2583 = vpack.c.b16 %v2133, %v2115
  %v2584 = vpack.c.b16 %v2134, %v2116
  %v2585 = vpack.c.b16 %v2135, %v2117
  %v2586 = vpack.c.b16 %v2136, %v2118
  %v2587 = vpack.c.b16 %v2137, %v2119
  %v2588 = vpack.c.b16 %v2138, %v2120
  %v2589 = vpack.c.b16 %v2139, %v2121
  %v2590 = vpack.c.b16 %v2140, %v2122
  %v2591 = vpack.c.b16 %v2141, %v2123
  %v2592 = vpack.c.b16 %v2142, %v2124
  %v2593 = vpack.c.b16 %v2143, %v2125
  %v2594 = vpack.c.b16 %v2144, %v2126
  %v2595 = vpack.c.b16 %v2145, %v2127
  %v2596 = vpack.c.b16 %v2146, %v2128
  %v2597 = vpack.c.b16 %v2147, %v2129
  %v2598 = vpack.c.b16 %v2166, %v2148
  %v2599 = vpack.c.b16 %v2167, %v2149
  %v2600 = vpack.c.b16 %v2168, %v2150
  %v2601 = vpack.c.b16 %v2169, %v2151
  %v2602 = vpack.c.b16 %v2170, %v2152
  %v2603 = vpack.c.b16 %v2171, %v2153
  %v2604 = vpack.c.b16 %v2172, %v2154
  %v2605 = vpack.c.b16 %v2173, %v2155
  %v2606 = vpack.c.b16 %v2174, %v2156
  %v2607 = vpack.c.b16 %v2175, %v2157
  %v2608 = vpack.c.b16 %v2176, %v2158
  %v2609 = vpack.c.b16 %v2177, %v2159
  %v2610 = vpack.c.b16 %v2178, %v2160
  %v2611 = vpack.c.b16 %v2179, %v2161
  %v2612 = vpack.c.b16 %v2180, %v2162
  %v2613 = vpack.c.b16 %v2181, %v2163
  %v2614 = vpack.c.b16 %v2182, %v2164
  %v2615 = vpack.c.b16 %v2183, %v2165
  %3048 = vmatprep.subr.bf16.mxu0 0
  %3049 = vmatpush1.bf16.msra.mxu0 %v312
  %3050 = vmatprep.subr.bf16.mxu0 0
  %3051 = vmatpush1.bf16.msra.mxu0 %v313
  %3052 = vmatprep.subr.bf16.mxu0 0
  %3053 = vmatpush1.bf16.msra.mxu0 %v314
  %3054 = vmatprep.subr.bf16.mxu0 0
  %3055 = vmatpush1.bf16.msra.mxu0 %v315
  %3056 = vmatprep.subr.bf16.mxu0 0
  %3057 = vmatpush1.bf16.msra.mxu0 %v316
  %3058 = vmatprep.subr.bf16.mxu0 0
  %3059 = vmatpush1.bf16.msra.mxu0 %v317
  %3060 = vmatprep.subr.bf16.mxu0 0
  %3061 = vmatpush1.bf16.msra.mxu0 %v318
  %3062 = vmatprep.subr.bf16.mxu0 0
  %3063 = vmatpush1.bf16.msra.mxu0 %v319
  %3064 = vmatprep.subr.bf16.mxu0 0
  %3065 = vmatpush1.bf16.msra.mxu0 %v320
  %3066 = vmatprep.subr.bf16.mxu0 0
  %3067 = vmatpush1.bf16.msra.mxu0 %v321
  %3068 = vmatprep.subr.bf16.mxu0 0
  %3069 = vmatpush1.bf16.msra.mxu0 %v322
  %3070 = vmatprep.subr.bf16.mxu0 0
  %3071 = vmatpush1.bf16.msra.mxu0 %v323
  %3072 = vmatprep.subr.bf16.mxu0 0
  %3073 = vmatpush1.bf16.msra.mxu0 %v324
  %3074 = vmatprep.subr.bf16.mxu0 0
  %3075 = vmatpush1.bf16.msra.mxu0 %v325
  %3076 = vmatprep.subr.bf16.mxu0 0
  %3077 = vmatpush1.bf16.msra.mxu0 %v326
  %3078 = vmatprep.subr.bf16.mxu0 0
  %3079 = vmatpush1.bf16.msra.mxu0 %v327
  %3080 = vmatprep.mubr.bf16.mxu0 %v2185
  %3081 = vmatmul.mubr.bf16.gmra.mrb[0].mxu0 %v2184
  %v3082 = vpop.f32.mrb[0].mxu0
  %v3083 = vadd.f32 0.0, %v3082
  %v3084 = vpop.f32.mrb[0].mxu0
  %v3085 = vpop.f32.mrb[0].mxu0
  %v3086 = vadd.f32 0.0, %v3085
  %v3087 = vpop.f32.mrb[0].mxu0
  %3088 = vmatprep.mubr.bf16.mxu0 %v2203
  %3089 = vmatmul.mubr.bf16.gmra.mrb[0].mxu0 %v2202
  %v3090 = vpop.f32.mrb[0].mxu0
  %v3091 = vadd.f32 0.0, %v3090
  %v3092 = vpop.f32.mrb[0].mxu0
  %v3093 = vpop.f32.mrb[0].mxu0
  %v3094 = vadd.f32 0.0, %v3093
  %v3095 = vpop.f32.mrb[0].mxu0
  %3096 = vmatprep.mubr.bf16.mxu0 %v2221
  %3097 = vmatmul.mubr.bf16.gmra.mrb[0].mxu0 %v2220
  %v3098 = vpop.f32.mrb[0].mxu0
  %v3099 = vadd.f32 0.0, %v3098
  %v3100 = vpop.f32.mrb[0].mxu0
  %v3101 = vpop.f32.mrb[0].mxu0
  %v3102 = vadd.f32 0.0, %v3101
  %v3103 = vpop.f32.mrb[0].mxu0
  %3104 = vmatprep.mubr.bf16.mxu0 %v2239
  %3105 = vmatmul.mubr.bf16.gmra.mrb[0].mxu0 %v2238
  %v3106 = vpop.f32.mrb[0].mxu0
  %v3107 = vadd.f32 0.0, %v3106
  %v3108 = vpop.f32.mrb[0].mxu0
  %v3109 = vpop.f32.mrb[0].mxu0
  %v3110 = vadd.f32 0.0, %v3109
  %v3111 = vpop.f32.mrb[0].mxu0
  %3112 = vmatprep.mubr.bf16.mxu0 %v2257
  %3113 = vmatmul.mubr.bf16.gmra.mrb[0].mxu0 %v2256
  %v3114 = vpop.f32.mrb[0].mxu0
  %v3115 = vadd.f32 0.0, %v3114
  %v3116 = vpop.f32.mrb[0].mxu0
  %v3117 = vpop.f32.mrb[0].mxu0
  %v3118 = vadd.f32 0.0, %v3117
  %v3119 = vpop.f32.mrb[0].mxu0
  %3120 = vmatprep.mubr.bf16.mxu0 %v2275
  %3121 = vmatmul.mubr.bf16.gmra.mrb[0].mxu0 %v2274
  %v3122 = vpop.f32.mrb[0].mxu0
  %v3123 = vadd.f32 0.0, %v3122
  %v3124 = vpop.f32.mrb[0].mxu0
  %v3125 = vpop.f32.mrb[0].mxu0
  %v3126 = vadd.f32 0.0, %v3125
  %v3127 = vpop.f32.mrb[0].mxu0
  %3128 = vmatprep.mubr.bf16.mxu0 %v2293
  %3129 = vmatmul.mubr.bf16.gmra.mrb[0].mxu0 %v2292
  %v3130 = vpop.f32.mrb[0].mxu0
  %v3131 = vadd.f32 0.0, %v3130
  %v3132 = vpop.f32.mrb[0].mxu0
  %v3133 = vpop.f32.mrb[0].mxu0
  %v3134 = vadd.f32 0.0, %v3133
  %v3135 = vpop.f32.mrb[0].mxu0
  %3136 = vmatprep.mubr.bf16.mxu0 %v2311
  %3137 = vmatmul.mubr.bf16.gmra.mrb[0].mxu0 %v2310
  %v3138 = vpop.f32.mrb[0].mxu0
  %v3139 = vadd.f32 0.0, %v3138
  %v3140 = vpop.f32.mrb[0].mxu0
  %v3141 = vpop.f32.mrb[0].mxu0
  %v3142 = vadd.f32 0.0, %v3141
  %v3143 = vpop.f32.mrb[0].mxu0
  %3144 = vmatprep.mubr.bf16.mxu0 %v2329
  %3145 = vmatmul.mubr.bf16.gmra.mrb[0].mxu0 %v2328
  %v3146 = vpop.f32.mrb[0].mxu0
  %v3147 = vadd.f32 0.0, %v3146
  %v3148 = vpop.f32.mrb[0].mxu0
  %v3149 = vpop.f32.mrb[0].mxu0
  %v3150 = vadd.f32 0.0, %v3149
  %v3151 = vpop.f32.mrb[0].mxu0
  %3152 = vmatprep.mubr.bf16.mxu0 %v2347
  %3153 = vmatmul.mubr.bf16.gmra.mrb[0].mxu0 %v2346
  %v3154 = vpop.f32.mrb[0].mxu0
  %v3155 = vadd.f32 0.0, %v3154
  %v3156 = vpop.f32.mrb[0].mxu0
  %v3157 = vpop.f32.mrb[0].mxu0
  %v3158 = vadd.f32 0.0, %v3157
  %v3159 = vpop.f32.mrb[0].mxu0
  %3160 = vmatprep.mubr.bf16.mxu0 %v2365
  %3161 = vmatmul.mubr.bf16.gmra.mrb[0].mxu0 %v2364
  %v3162 = vpop.f32.mrb[0].mxu0
  %v3163 = vadd.f32 0.0, %v3162
  %v3164 = vpop.f32.mrb[0].mxu0
  %v3165 = vpop.f32.mrb[0].mxu0
  %v3166 = vadd.f32 0.0, %v3165
  %v3167 = vpop.f32.mrb[0].mxu0
  %3168 = vmatprep.mubr.bf16.mxu0 %v2383
  %3169 = vmatmul.mubr.bf16.gmra.mrb[0].mxu0 %v2382
  %v3170 = vpop.f32.mrb[0].mxu0
  %v3171 = vadd.f32 0.0, %v3170
  %v3172 = vpop.f32.mrb[0].mxu0
  %v3173 = vpop.f32.mrb[0].mxu0
  %v3174 = vadd.f32 0.0, %v3173
  %v3175 = vpop.f32.mrb[0].mxu0
  %3176 = vmatprep.mubr.bf16.mxu0 %v2401
  %3177 = vmatmul.mubr.bf16.gmra.mrb[0].mxu0 %v2400
  %v3178 = vpop.f32.mrb[0].mxu0
  %v3179 = vadd.f32 0.0, %v3178
  %v3180 = vpop.f32.mrb[0].mxu0
  %v3181 = vpop.f32.mrb[0].mxu0
  %v3182 = vadd.f32 0.0, %v3181
  %v3183 = vpop.f32.mrb[0].mxu0
  %3184 = vmatprep.mubr.bf16.mxu0 %v2419
  %3185 = vmatmul.mubr.bf16.gmra.mrb[0].mxu0 %v2418
  %v3186 = vpop.f32.mrb[0].mxu0
  %v3187 = vadd.f32 0.0, %v3186
  %v3188 = vpop.f32.mrb[0].mxu0
  %v3189 = vpop.f32.mrb[0].mxu0
  %v3190 = vadd.f32 0.0, %v3189
  %v3191 = vpop.f32.mrb[0].mxu0
  %3192 = vmatprep.mubr.bf16.mxu0 %v2437
  %3193 = vmatmul.mubr.bf16.gmra.mrb[0].mxu0 %v2436
  %v3194 = vpop.f32.mrb[0].mxu0
  %v3195 = vadd.f32 0.0, %v3194
  %v3196 = vpop.f32.mrb[0].mxu0
  %v3197 = vpop.f32.mrb[0].mxu0
  %v3198 = vadd.f32 0.0, %v3197
  %v3199 = vpop.f32.mrb[0].mxu0
  %3200 = vmatprep.mubr.bf16.mxu0 %v2455
  %3201 = vmatmul.mubr.bf16.gmra.mrb[0].mxu0 %v2454
  %v3202 = vpop.f32.mrb[0].mxu0
  %v3203 = vadd.f32 0.0, %v3202
  %v3204 = vpop.f32.mrb[0].mxu0
  %v3205 = vpop.f32.mrb[0].mxu0
  %v3206 = vadd.f32 0.0, %v3205
  %v3207 = vpop.f32.mrb[0].mxu0
  %3208 = vmatprep.mubr.bf16.mxu0 %v2473
  %3209 = vmatmul.mubr.bf16.gmra.mrb[0].mxu0 %v2472
  %v3210 = vpop.f32.mrb[0].mxu0
  %v3211 = vadd.f32 0.0, %v3210
  %v3212 = vpop.f32.mrb[0].mxu0
  %v3213 = vpop.f32.mrb[0].mxu0
  %v3214 = vadd.f32 0.0, %v3213
  %v3215 = vpop.f32.mrb[0].mxu0
  %3216 = vmatprep.mubr.bf16.mxu0 %v2491
  %3217 = vmatmul.mubr.bf16.gmra.mrb[0].mxu0 %v2490
  %v3218 = vpop.f32.mrb[0].mxu0
  %v3219 = vadd.f32 0.0, %v3218
  %v3220 = vpop.f32.mrb[0].mxu0
  %v3221 = vpop.f32.mrb[0].mxu0
  %v3222 = vadd.f32 0.0, %v3221
  %v3223 = vpop.f32.mrb[0].mxu0
  %3224 = vmatprep.mubr.bf16.mxu0 %v2509
  %3225 = vmatmul.mubr.bf16.gmra.mrb[0].mxu0 %v2508
  %v3226 = vpop.f32.mrb[0].mxu0
  %v3227 = vadd.f32 0.0, %v3226
  %v3228 = vpop.f32.mrb[0].mxu0
  %v3229 = vpop.f32.mrb[0].mxu0
  %v3230 = vadd.f32 0.0, %v3229
  %v3231 = vpop.f32.mrb[0].mxu0
  %3232 = vmatprep.mubr.bf16.mxu0 %v2527
  %3233 = vmatmul.mubr.bf16.gmra.mrb[0].mxu0 %v2526
  %v3234 = vpop.f32.mrb[0].mxu0
  %v3235 = vadd.f32 0.0, %v3234
  %v3236 = vpop.f32.mrb[0].mxu0
  %v3237 = vpop.f32.mrb[0].mxu0
  %v3238 = vadd.f32 0.0, %v3237
  %v3239 = vpop.f32.mrb[0].mxu0
  %3240 = vmatprep.mubr.bf16.mxu0 %v2545
  %3241 = vmatmul.mubr.bf16.gmra.mrb[0].mxu0 %v2544
  %v3242 = vpop.f32.mrb[0].mxu0
  %v3243 = vadd.f32 0.0, %v3242
  %v3244 = vpop.f32.mrb[0].mxu0
  %v3245 = vpop.f32.mrb[0].mxu0
  %v3246 = vadd.f32 0.0, %v3245
  %v3247 = vpop.f32.mrb[0].mxu0
  %3248 = vmatprep.mubr.bf16.mxu0 %v2563
  %3249 = vmatmul.mubr.bf16.gmra.mrb[0].mxu0 %v2562
  %v3250 = vpop.f32.mrb[0].mxu0
  %v3251 = vadd.f32 0.0, %v3250
  %v3252 = vpop.f32.mrb[0].mxu0
  %v3253 = vpop.f32.mrb[0].mxu0
  %v3254 = vadd.f32 0.0, %v3253
  %v3255 = vpop.f32.mrb[0].mxu0
  %3256 = vmatprep.mubr.bf16.mxu0 %v2581
  %3257 = vmatmul.mubr.bf16.gmra.mrb[0].mxu0 %v2580
  %v3258 = vpop.f32.mrb[0].mxu0
  %v3259 = vadd.f32 0.0, %v3258
  %v3260 = vpop.f32.mrb[0].mxu0
  %v3261 = vpop.f32.mrb[0].mxu0
  %v3262 = vadd.f32 0.0, %v3261
  %v3263 = vpop.f32.mrb[0].mxu0
  %3264 = vmatprep.mubr.bf16.mxu0 %v2599
  %3265 = vmatmul.mubr.bf16.gmra.mrb[0].mxu0 %v2598
  %v3266 = vpop.f32.mrb[0].mxu0
  %v3267 = vadd.f32 0.0, %v3266
  %v3268 = vpop.f32.mrb[0].mxu0
  %v3269 = vpop.f32.mrb[0].mxu0
  %v3270 = vadd.f32 0.0, %v3269
  %v3271 = vpop.f32.mrb[0].mxu0
  %3272 = vdwg.mxu0
  %3273 = vmatprep.subr.bf16.mxu0 0
  %3274 = vmatpush1.bf16.msra.mxu0 %v328
  %3275 = vmatprep.subr.bf16.mxu0 0
  %3276 = vmatpush1.bf16.msra.mxu0 %v329
  %3277 = vmatprep.subr.bf16.mxu0 0
  %3278 = vmatpush1.bf16.msra.mxu0 %v330
  %3279 = vmatprep.subr.bf16.mxu0 0
  %3280 = vmatpush1.bf16.msra.mxu0 %v331
  %3281 = vmatprep.subr.bf16.mxu0 0
  %3282 = vmatpush1.bf16.msra.mxu0 %v332
  %3283 = vmatprep.subr.bf16.mxu0 0
  %3284 = vmatpush1.bf16.msra.mxu0 %v333
  %3285 = vmatprep.subr.bf16.mxu0 0
  %3286 = vmatpush1.bf16.msra.mxu0 %v334
  %3287 = vmatprep.subr.bf16.mxu0 0
  %3288 = vmatpush1.bf16.msra.mxu0 %v335
  %3289 = vmatprep.subr.bf16.mxu0 0
  %3290 = vmatpush1.bf16.msra.mxu0 %v336
  %3291 = vmatprep.subr.bf16.mxu0 0
  %3292 = vmatpush1.bf16.msra.mxu0 %v337
  %3293 = vmatprep.subr.bf16.mxu0 0
  %3294 = vmatpush1.bf16.msra.mxu0 %v338
  %3295 = vmatprep.subr.bf16.mxu0 0
  %3296 = vmatpush1.bf16.msra.mxu0 %v339
  %3297 = vmatprep.subr.bf16.mxu0 0
  %3298 = vmatpush1.bf16.msra.mxu0 %v340
  %3299 = vmatprep.subr.bf16.mxu0 0
  %3300 = vmatpush1.bf16.msra.mxu0 %v341
  %3301 = vmatprep.subr.bf16.mxu0 0
  %3302 = vmatpush1.bf16.msra.mxu0 %v342
  %3303 = vmatprep.subr.bf16.mxu0 0
  %3304 = vmatpush1.bf16.msra.mxu0 %v343
  %3305 = vmatprep.mubr.bf16.mxu0 %v2187
  %3306 = vmatmul.mubr.bf16.gmra.mrb[0].mxu0 %v2186
  %v3307 = vpop.f32.mrb[0].mxu0
  %v3308 = vadd.f32 %v3083, %v3307
  %v3309 = vpop.f32.mrb[0].mxu0
  %v3310 = vpop.f32.mrb[0].mxu0
  %v3311 = vadd.f32 %v3086, %v3310
  %v3312 = vpop.f32.mrb[0].mxu0
  %3313 = vmatprep.mubr.bf16.mxu0 %v2205
  %3314 = vmatmul.mubr.bf16.gmra.mrb[0].mxu0 %v2204
  %v3315 = vpop.f32.mrb[0].mxu0
  %v3316 = vadd.f32 %v3091, %v3315
  %v3317 = vpop.f32.mrb[0].mxu0
  %v3318 = vpop.f32.mrb[0].mxu0
  %v3319 = vadd.f32 %v3094, %v3318
  %v3320 = vpop.f32.mrb[0].mxu0
  %3321 = vmatprep.mubr.bf16.mxu0 %v2223
  %3322 = vmatmul.mubr.bf16.gmra.mrb[0].mxu0 %v2222
  %v3323 = vpop.f32.mrb[0].mxu0
  %v3324 = vadd.f32 %v3099, %v3323
  %v3325 = vpop.f32.mrb[0].mxu0
  %v3326 = vpop.f32.mrb[0].mxu0
  %v3327 = vadd.f32 %v3102, %v3326
  %v3328 = vpop.f32.mrb[0].mxu0
  %3329 = vmatprep.mubr.bf16.mxu0 %v2241
  %3330 = vmatmul.mubr.bf16.gmra.mrb[0].mxu0 %v2240
  %v3331 = vpop.f32.mrb[0].mxu0
  %v3332 = vadd.f32 %v3107, %v3331
  %v3333 = vpop.f32.mrb[0].mxu0
  %v3334 = vpop.f32.mrb[0].mxu0
  %v3335 = vadd.f32 %v3110, %v3334
  %v3336 = vpop.f32.mrb[0].mxu0
  %3337 = vmatprep.mubr.bf16.mxu0 %v2259
  %3338 = vmatmul.mubr.bf16.gmra.mrb[0].mxu0 %v2258
  %v3339 = vpop.f32.mrb[0].mxu0
  %v3340 = vadd.f32 %v3115, %v3339
  %v3341 = vpop.f32.mrb[0].mxu0
  %v3342 = vpop.f32.mrb[0].mxu0
  %v3343 = vadd.f32 %v3118, %v3342
  %v3344 = vpop.f32.mrb[0].mxu0
  %3345 = vmatprep.mubr.bf16.mxu0 %v2277
  %3346 = vmatmul.mubr.bf16.gmra.mrb[0].mxu0 %v2276
  %v3347 = vpop.f32.mrb[0].mxu0
  %v3348 = vadd.f32 %v3123, %v3347
  %v3349 = vpop.f32.mrb[0].mxu0
  %v3350 = vpop.f32.mrb[0].mxu0
  %v3351 = vadd.f32 %v3126, %v3350
  %v3352 = vpop.f32.mrb[0].mxu0
  %3353 = vmatprep.mubr.bf16.mxu0 %v2295
  %3354 = vmatmul.mubr.bf16.gmra.mrb[0].mxu0 %v2294
  %v3355 = vpop.f32.mrb[0].mxu0
  %v3356 = vadd.f32 %v3131, %v3355
  %v3357 = vpop.f32.mrb[0].mxu0
  %v3358 = vpop.f32.mrb[0].mxu0
  %v3359 = vadd.f32 %v3134, %v3358
  %v3360 = vpop.f32.mrb[0].mxu0
  %3361 = vmatprep.mubr.bf16.mxu0 %v2313
  %3362 = vmatmul.mubr.bf16.gmra.mrb[0].mxu0 %v2312
  %v3363 = vpop.f32.mrb[0].mxu0
  %v3364 = vadd.f32 %v3139, %v3363
  %v3365 = vpop.f32.mrb[0].mxu0
  %v3366 = vpop.f32.mrb[0].mxu0
  %v3367 = vadd.f32 %v3142, %v3366
  %v3368 = vpop.f32.mrb[0].mxu0
  %3369 = vmatprep.mubr.bf16.mxu0 %v2331
  %3370 = vmatmul.mubr.bf16.gmra.mrb[0].mxu0 %v2330
  %v3371 = vpop.f32.mrb[0].mxu0
  %v3372 = vadd.f32 %v3147, %v3371
  %v3373 = vpop.f32.mrb[0].mxu0
  %v3374 = vpop.f32.mrb[0].mxu0
  %v3375 = vadd.f32 %v3150, %v3374
  %v3376 = vpop.f32.mrb[0].mxu0
  %3377 = vmatprep.mubr.bf16.mxu0 %v2349
  %3378 = vmatmul.mubr.bf16.gmra.mrb[0].mxu0 %v2348
  %v3379 = vpop.f32.mrb[0].mxu0
  %v3380 = vadd.f32 %v3155, %v3379
  %v3381 = vpop.f32.mrb[0].mxu0
  %v3382 = vpop.f32.mrb[0].mxu0
  %v3383 = vadd.f32 %v3158, %v3382
  %v3384 = vpop.f32.mrb[0].mxu0
  %3385 = vmatprep.mubr.bf16.mxu0 %v2367
  %3386 = vmatmul.mubr.bf16.gmra.mrb[0].mxu0 %v2366
  %v3387 = vpop.f32.mrb[0].mxu0
  %v3388 = vadd.f32 %v3163, %v3387
  %v3389 = vpop.f32.mrb[0].mxu0
  %v3390 = vpop.f32.mrb[0].mxu0
  %v3391 = vadd.f32 %v3166, %v3390
  %v3392 = vpop.f32.mrb[0].mxu0
  %3393 = vmatprep.mubr.bf16.mxu0 %v2385
  %3394 = vmatmul.mubr.bf16.gmra.mrb[0].mxu0 %v2384
  %v3395 = vpop.f32.mrb[0].mxu0
  %v3396 = vadd.f32 %v3171, %v3395
  %v3397 = vpop.f32.mrb[0].mxu0
  %v3398 = vpop.f32.mrb[0].mxu0
  %v3399 = vadd.f32 %v3174, %v3398
  %v3400 = vpop.f32.mrb[0].mxu0
  %3401 = vmatprep.mubr.bf16.mxu0 %v2403
  %3402 = vmatmul.mubr.bf16.gmra.mrb[0].mxu0 %v2402
  %v3403 = vpop.f32.mrb[0].mxu0
  %v3404 = vadd.f32 %v3179, %v3403
  %v3405 = vpop.f32.mrb[0].mxu0
  %v3406 = vpop.f32.mrb[0].mxu0
  %v3407 = vadd.f32 %v3182, %v3406
  %v3408 = vpop.f32.mrb[0].mxu0
  %3409 = vmatprep.mubr.bf16.mxu0 %v2421
  %3410 = vmatmul.mubr.bf16.gmra.mrb[0].mxu0 %v2420
  %v3411 = vpop.f32.mrb[0].mxu0
  %v3412 = vadd.f32 %v3187, %v3411
  %v3413 = vpop.f32.mrb[0].mxu0
  %v3414 = vpop.f32.mrb[0].mxu0
  %v3415 = vadd.f32 %v3190, %v3414
  %v3416 = vpop.f32.mrb[0].mxu0
  %3417 = vmatprep.mubr.bf16.mxu0 %v2439
  %3418 = vmatmul.mubr.bf16.gmra.mrb[0].mxu0 %v2438
  %v3419 = vpop.f32.mrb[0].mxu0
  %v3420 = vadd.f32 %v3195, %v3419
  %v3421 = vpop.f32.mrb[0].mxu0
  %v3422 = vpop.f32.mrb[0].mxu0
  %v3423 = vadd.f32 %v3198, %v3422
  %v3424 = vpop.f32.mrb[0].mxu0
  %3425 = vmatprep.mubr.bf16.mxu0 %v2457
  %3426 = vmatmul.mubr.bf16.gmra.mrb[0].mxu0 %v2456
  %v3427 = vpop.f32.mrb[0].mxu0
  %v3428 = vadd.f32 %v3203, %v3427
  %v3429 = vpop.f32.mrb[0].mxu0
  %v3430 = vpop.f32.mrb[0].mxu0
  %v3431 = vadd.f32 %v3206, %v3430
  %v3432 = vpop.f32.mrb[0].mxu0
  %3433 = vmatprep.mubr.bf16.mxu0 %v2475
  %3434 = vmatmul.mubr.bf16.gmra.mrb[0].mxu0 %v2474
  %v3435 = vpop.f32.mrb[0].mxu0
  %v3436 = vadd.f32 %v3211, %v3435
  %v3437 = vpop.f32.mrb[0].mxu0
  %v3438 = vpop.f32.mrb[0].mxu0
  %v3439 = vadd.f32 %v3214, %v3438
  %v3440 = vpop.f32.mrb[0].mxu0
  %3441 = vmatprep.mubr.bf16.mxu0 %v2493
  %3442 = vmatmul.mubr.bf16.gmra.mrb[0].mxu0 %v2492
  %v3443 = vpop.f32.mrb[0].mxu0
  %v3444 = vadd.f32 %v3219, %v3443
  %v3445 = vpop.f32.mrb[0].mxu0
  %v3446 = vpop.f32.mrb[0].mxu0
  %v3447 = vadd.f32 %v3222, %v3446
  %v3448 = vpop.f32.mrb[0].mxu0
  %3449 = vmatprep.mubr.bf16.mxu0 %v2511
  %3450 = vmatmul.mubr.bf16.gmra.mrb[0].mxu0 %v2510
  %v3451 = vpop.f32.mrb[0].mxu0
  %v3452 = vadd.f32 %v3227, %v3451
  %v3453 = vpop.f32.mrb[0].mxu0
  %v3454 = vpop.f32.mrb[0].mxu0
  %v3455 = vadd.f32 %v3230, %v3454
  %v3456 = vpop.f32.mrb[0].mxu0
  %3457 = vmatprep.mubr.bf16.mxu0 %v2529
  %3458 = vmatmul.mubr.bf16.gmra.mrb[0].mxu0 %v2528
  %v3459 = vpop.f32.mrb[0].mxu0
  %v3460 = vadd.f32 %v3235, %v3459
  %v3461 = vpop.f32.mrb[0].mxu0
  %v3462 = vpop.f32.mrb[0].mxu0
  %v3463 = vadd.f32 %v3238, %v3462
  %v3464 = vpop.f32.mrb[0].mxu0
  %3465 = vmatprep.mubr.bf16.mxu0 %v2547
  %3466 = vmatmul.mubr.bf16.gmra.mrb[0].mxu0 %v2546
  %v3467 = vpop.f32.mrb[0].mxu0
  %v3468 = vadd.f32 %v3243, %v3467
  %v3469 = vpop.f32.mrb[0].mxu0
  %v3470 = vpop.f32.mrb[0].mxu0
  %v3471 = vadd.f32 %v3246, %v3470
  %v3472 = vpop.f32.mrb[0].mxu0
  %3473 = vmatprep.mubr.bf16.mxu0 %v2565
  %3474 = vmatmul.mubr.bf16.gmra.mrb[0].mxu0 %v2564
  %v3475 = vpop.f32.mrb[0].mxu0
  %v3476 = vadd.f32 %v3251, %v3475
  %v3477 = vpop.f32.mrb[0].mxu0
  %v3478 = vpop.f32.mrb[0].mxu0
  %v3479 = vadd.f32 %v3254, %v3478
  %v3480 = vpop.f32.mrb[0].mxu0
  %3481 = vmatprep.mubr.bf16.mxu0 %v2583
  %3482 = vmatmul.mubr.bf16.gmra.mrb[0].mxu0 %v2582
  %v3483 = vpop.f32.mrb[0].mxu0
  %v3484 = vadd.f32 %v3259, %v3483
  %v3485 = vpop.f32.mrb[0].mxu0
  %v3486 = vpop.f32.mrb[0].mxu0
  %v3487 = vadd.f32 %v3262, %v3486
  %v3488 = vpop.f32.mrb[0].mxu0
  %3489 = vmatprep.mubr.bf16.mxu0 %v2601
  %3490 = vmatmul.mubr.bf16.gmra.mrb[0].mxu0 %v2600
  %v3491 = vpop.f32.mrb[0].mxu0
  %v3492 = vadd.f32 %v3267, %v3491
  %v3493 = vpop.f32.mrb[0].mxu0
  %v3494 = vpop.f32.mrb[0].mxu0
  %v3495 = vadd.f32 %v3270, %v3494
  %v3496 = vpop.f32.mrb[0].mxu0
  %3497 = vdwg.mxu0
  %3498 = vmatprep.subr.bf16.mxu0 0
  %3499 = vmatpush1.bf16.msra.mxu0 %v344
  %3500 = vmatprep.subr.bf16.mxu0 0
  %3501 = vmatpush1.bf16.msra.mxu0 %v345
  %3502 = vmatprep.subr.bf16.mxu0 0
  %3503 = vmatpush1.bf16.msra.mxu0 %v346
  %3504 = vmatprep.subr.bf16.mxu0 0
  %3505 = vmatpush1.bf16.msra.mxu0 %v347
  %3506 = vmatprep.subr.bf16.mxu0 0
  %3507 = vmatpush1.bf16.msra.mxu0 %v348
  %3508 = vmatprep.subr.bf16.mxu0 0
  %3509 = vmatpush1.bf16.msra.mxu0 %v349
  %3510 = vmatprep.subr.bf16.mxu0 0
  %3511 = vmatpush1.bf16.msra.mxu0 %v350
  %3512 = vmatprep.subr.bf16.mxu0 0
  %3513 = vmatpush1.bf16.msra.mxu0 %v351
  %3514 = vmatprep.subr.bf16.mxu0 0
  %3515 = vmatpush1.bf16.msra.mxu0 %v352
  %3516 = vmatprep.subr.bf16.mxu0 0
  %3517 = vmatpush1.bf16.msra.mxu0 %v353
  %3518 = vmatprep.subr.bf16.mxu0 0
  %3519 = vmatpush1.bf16.msra.mxu0 %v354
  %3520 = vmatprep.subr.bf16.mxu0 0
  %3521 = vmatpush1.bf16.msra.mxu0 %v355
  %3522 = vmatprep.subr.bf16.mxu0 0
  %3523 = vmatpush1.bf16.msra.mxu0 %v356
  %3524 = vmatprep.subr.bf16.mxu0 0
  %3525 = vmatpush1.bf16.msra.mxu0 %v357
  %3526 = vmatprep.subr.bf16.mxu0 0
  %3527 = vmatpush1.bf16.msra.mxu0 %v358
  %3528 = vmatprep.subr.bf16.mxu0 0
  %3529 = vmatpush1.bf16.msra.mxu0 %v359
  %3530 = vmatprep.mubr.bf16.mxu0 %v2189
  %3531 = vmatmul.mubr.bf16.gmra.mrb[0].mxu0 %v2188
  %v3532 = vpop.f32.mrb[0].mxu0
  %v3533 = vadd.f32 %v3308, %v3532
  %v3534 = vpop.f32.mrb[0].mxu0
  %v3535 = vpop.f32.mrb[0].mxu0
  %v3536 = vadd.f32 %v3311, %v3535
  %v3537 = vpop.f32.mrb[0].mxu0
  %3538 = vmatprep.mubr.bf16.mxu0 %v2207
  %3539 = vmatmul.mubr.bf16.gmra.mrb[0].mxu0 %v2206
  %v3540 = vpop.f32.mrb[0].mxu0
  %v3541 = vadd.f32 %v3316, %v3540
  %v3542 = vpop.f32.mrb[0].mxu0
  %v3543 = vpop.f32.mrb[0].mxu0
  %v3544 = vadd.f32 %v3319, %v3543
  %v3545 = vpop.f32.mrb[0].mxu0
  %3546 = vmatprep.mubr.bf16.mxu0 %v2225
  %3547 = vmatmul.mubr.bf16.gmra.mrb[0].mxu0 %v2224
  %v3548 = vpop.f32.mrb[0].mxu0
  %v3549 = vadd.f32 %v3324, %v3548
  %v3550 = vpop.f32.mrb[0].mxu0
  %v3551 = vpop.f32.mrb[0].mxu0
  %v3552 = vadd.f32 %v3327, %v3551
  %v3553 = vpop.f32.mrb[0].mxu0
  %3554 = vmatprep.mubr.bf16.mxu0 %v2243
  %3555 = vmatmul.mubr.bf16.gmra.mrb[0].mxu0 %v2242
  %v3556 = vpop.f32.mrb[0].mxu0
  %v3557 = vadd.f32 %v3332, %v3556
  %v3558 = vpop.f32.mrb[0].mxu0
  %v3559 = vpop.f32.mrb[0].mxu0
  %v3560 = vadd.f32 %v3335, %v3559
  %v3561 = vpop.f32.mrb[0].mxu0
  %3562 = vmatprep.mubr.bf16.mxu0 %v2261
  %3563 = vmatmul.mubr.bf16.gmra.mrb[0].mxu0 %v2260
  %v3564 = vpop.f32.mrb[0].mxu0
  %v3565 = vadd.f32 %v3340, %v3564
  %v3566 = vpop.f32.mrb[0].mxu0
  %v3567 = vpop.f32.mrb[0].mxu0
  %v3568 = vadd.f32 %v3343, %v3567
  %v3569 = vpop.f32.mrb[0].mxu0
  %3570 = vmatprep.mubr.bf16.mxu0 %v2279
  %3571 = vmatmul.mubr.bf16.gmra.mrb[0].mxu0 %v2278
  %v3572 = vpop.f32.mrb[0].mxu0
  %v3573 = vadd.f32 %v3348, %v3572
  %v3574 = vpop.f32.mrb[0].mxu0
  %v3575 = vpop.f32.mrb[0].mxu0
  %v3576 = vadd.f32 %v3351, %v3575
  %v3577 = vpop.f32.mrb[0].mxu0
  %3578 = vmatprep.mubr.bf16.mxu0 %v2297
  %3579 = vmatmul.mubr.bf16.gmra.mrb[0].mxu0 %v2296
  %v3580 = vpop.f32.mrb[0].mxu0
  %v3581 = vadd.f32 %v3356, %v3580
  %v3582 = vpop.f32.mrb[0].mxu0
  %v3583 = vpop.f32.mrb[0].mxu0
  %v3584 = vadd.f32 %v3359, %v3583
  %v3585 = vpop.f32.mrb[0].mxu0
  %3586 = vmatprep.mubr.bf16.mxu0 %v2315
  %3587 = vmatmul.mubr.bf16.gmra.mrb[0].mxu0 %v2314
  %v3588 = vpop.f32.mrb[0].mxu0
  %v3589 = vadd.f32 %v3364, %v3588
  %v3590 = vpop.f32.mrb[0].mxu0
  %v3591 = vpop.f32.mrb[0].mxu0
  %v3592 = vadd.f32 %v3367, %v3591
  %v3593 = vpop.f32.mrb[0].mxu0
  %3594 = vmatprep.mubr.bf16.mxu0 %v2333
  %3595 = vmatmul.mubr.bf16.gmra.mrb[0].mxu0 %v2332
  %v3596 = vpop.f32.mrb[0].mxu0
  %v3597 = vadd.f32 %v3372, %v3596
  %v3598 = vpop.f32.mrb[0].mxu0
  %v3599 = vpop.f32.mrb[0].mxu0
  %v3600 = vadd.f32 %v3375, %v3599
  %v3601 = vpop.f32.mrb[0].mxu0
  %3602 = vmatprep.mubr.bf16.mxu0 %v2351
  %3603 = vmatmul.mubr.bf16.gmra.mrb[0].mxu0 %v2350
  %v3604 = vpop.f32.mrb[0].mxu0
  %v3605 = vadd.f32 %v3380, %v3604
  %v3606 = vpop.f32.mrb[0].mxu0
  %v3607 = vpop.f32.mrb[0].mxu0
  %v3608 = vadd.f32 %v3383, %v3607
  %v3609 = vpop.f32.mrb[0].mxu0
  %3610 = vmatprep.mubr.bf16.mxu0 %v2369
  %3611 = vmatmul.mubr.bf16.gmra.mrb[0].mxu0 %v2368
  %v3612 = vpop.f32.mrb[0].mxu0
  %v3613 = vadd.f32 %v3388, %v3612
  %v3614 = vpop.f32.mrb[0].mxu0
  %v3615 = vpop.f32.mrb[0].mxu0
  %v3616 = vadd.f32 %v3391, %v3615
  %v3617 = vpop.f32.mrb[0].mxu0
  %3618 = vmatprep.mubr.bf16.mxu0 %v2387
  %3619 = vmatmul.mubr.bf16.gmra.mrb[0].mxu0 %v2386
  %v3620 = vpop.f32.mrb[0].mxu0
  %v3621 = vadd.f32 %v3396, %v3620
  %v3622 = vpop.f32.mrb[0].mxu0
  %v3623 = vpop.f32.mrb[0].mxu0
  %v3624 = vadd.f32 %v3399, %v3623
  %v3625 = vpop.f32.mrb[0].mxu0
  %3626 = vmatprep.mubr.bf16.mxu0 %v2405
  %3627 = vmatmul.mubr.bf16.gmra.mrb[0].mxu0 %v2404
  %v3628 = vpop.f32.mrb[0].mxu0
  %v3629 = vadd.f32 %v3404, %v3628
  %v3630 = vpop.f32.mrb[0].mxu0
  %v3631 = vpop.f32.mrb[0].mxu0
  %v3632 = vadd.f32 %v3407, %v3631
  %v3633 = vpop.f32.mrb[0].mxu0
  %3634 = vmatprep.mubr.bf16.mxu0 %v2423
  %3635 = vmatmul.mubr.bf16.gmra.mrb[0].mxu0 %v2422
  %v3636 = vpop.f32.mrb[0].mxu0
  %v3637 = vadd.f32 %v3412, %v3636
  %v3638 = vpop.f32.mrb[0].mxu0
  %v3639 = vpop.f32.mrb[0].mxu0
  %v3640 = vadd.f32 %v3415, %v3639
  %v3641 = vpop.f32.mrb[0].mxu0
  %3642 = vmatprep.mubr.bf16.mxu0 %v2441
  %3643 = vmatmul.mubr.bf16.gmra.mrb[0].mxu0 %v2440
  %v3644 = vpop.f32.mrb[0].mxu0
  %v3645 = vadd.f32 %v3420, %v3644
  %v3646 = vpop.f32.mrb[0].mxu0
  %v3647 = vpop.f32.mrb[0].mxu0
  %v3648 = vadd.f32 %v3423, %v3647
  %v3649 = vpop.f32.mrb[0].mxu0
  %3650 = vmatprep.mubr.bf16.mxu0 %v2459
  %3651 = vmatmul.mubr.bf16.gmra.mrb[0].mxu0 %v2458
  %v3652 = vpop.f32.mrb[0].mxu0
  %v3653 = vadd.f32 %v3428, %v3652
  %v3654 = vpop.f32.mrb[0].mxu0
  %v3655 = vpop.f32.mrb[0].mxu0
  %v3656 = vadd.f32 %v3431, %v3655
  %v3657 = vpop.f32.mrb[0].mxu0
  %3658 = vmatprep.mubr.bf16.mxu0 %v2477
  %3659 = vmatmul.mubr.bf16.gmra.mrb[0].mxu0 %v2476
  %v3660 = vpop.f32.mrb[0].mxu0
  %v3661 = vadd.f32 %v3436, %v3660
  %v3662 = vpop.f32.mrb[0].mxu0
  %v3663 = vpop.f32.mrb[0].mxu0
  %v3664 = vadd.f32 %v3439, %v3663
  %v3665 = vpop.f32.mrb[0].mxu0
  %3666 = vmatprep.mubr.bf16.mxu0 %v2495
  %3667 = vmatmul.mubr.bf16.gmra.mrb[0].mxu0 %v2494
  %v3668 = vpop.f32.mrb[0].mxu0
  %v3669 = vadd.f32 %v3444, %v3668
  %v3670 = vpop.f32.mrb[0].mxu0
  %v3671 = vpop.f32.mrb[0].mxu0
  %v3672 = vadd.f32 %v3447, %v3671
  %v3673 = vpop.f32.mrb[0].mxu0
  %3674 = vmatprep.mubr.bf16.mxu0 %v2513
  %3675 = vmatmul.mubr.bf16.gmra.mrb[0].mxu0 %v2512
  %v3676 = vpop.f32.mrb[0].mxu0
  %v3677 = vadd.f32 %v3452, %v3676
  %v3678 = vpop.f32.mrb[0].mxu0
  %v3679 = vpop.f32.mrb[0].mxu0
  %v3680 = vadd.f32 %v3455, %v3679
  %v3681 = vpop.f32.mrb[0].mxu0
  %3682 = vmatprep.mubr.bf16.mxu0 %v2531
  %3683 = vmatmul.mubr.bf16.gmra.mrb[0].mxu0 %v2530
  %v3684 = vpop.f32.mrb[0].mxu0
  %v3685 = vadd.f32 %v3460, %v3684
  %v3686 = vpop.f32.mrb[0].mxu0
  %v3687 = vpop.f32.mrb[0].mxu0
  %v3688 = vadd.f32 %v3463, %v3687
  %v3689 = vpop.f32.mrb[0].mxu0
  %3690 = vmatprep.mubr.bf16.mxu0 %v2549
  %3691 = vmatmul.mubr.bf16.gmra.mrb[0].mxu0 %v2548
  %v3692 = vpop.f32.mrb[0].mxu0
  %v3693 = vadd.f32 %v3468, %v3692
  %v3694 = vpop.f32.mrb[0].mxu0
  %v3695 = vpop.f32.mrb[0].mxu0
  %v3696 = vadd.f32 %v3471, %v3695
  %v3697 = vpop.f32.mrb[0].mxu0
  %3698 = vmatprep.mubr.bf16.mxu0 %v2567
  %3699 = vmatmul.mubr.bf16.gmra.mrb[0].mxu0 %v2566
  %v3700 = vpop.f32.mrb[0].mxu0
  %v3701 = vadd.f32 %v3476, %v3700
  %v3702 = vpop.f32.mrb[0].mxu0
  %v3703 = vpop.f32.mrb[0].mxu0
  %v3704 = vadd.f32 %v3479, %v3703
  %v3705 = vpop.f32.mrb[0].mxu0
  %3706 = vmatprep.mubr.bf16.mxu0 %v2585
  %3707 = vmatmul.mubr.bf16.gmra.mrb[0].mxu0 %v2584
  %v3708 = vpop.f32.mrb[0].mxu0
  %v3709 = vadd.f32 %v3484, %v3708
  %v3710 = vpop.f32.mrb[0].mxu0
  %v3711 = vpop.f32.mrb[0].mxu0
  %v3712 = vadd.f32 %v3487, %v3711
  %v3713 = vpop.f32.mrb[0].mxu0
  %3714 = vmatprep.mubr.bf16.mxu0 %v2603
  %3715 = vmatmul.mubr.bf16.gmra.mrb[0].mxu0 %v2602
  %v3716 = vpop.f32.mrb[0].mxu0
  %v3717 = vadd.f32 %v3492, %v3716
  %v3718 = vpop.f32.mrb[0].mxu0
  %v3719 = vpop.f32.mrb[0].mxu0
  %v3720 = vadd.f32 %v3495, %v3719
  %v3721 = vpop.f32.mrb[0].mxu0
  %3722 = vdwg.mxu0
  %3723 = vmatprep.subr.bf16.mxu0 0
  %3724 = vmatpush1.bf16.msra.mxu0 %v360
  %3725 = vmatprep.subr.bf16.mxu0 0
  %3726 = vmatpush1.bf16.msra.mxu0 %v361
  %3727 = vmatprep.subr.bf16.mxu0 0
  %3728 = vmatpush1.bf16.msra.mxu0 %v362
  %3729 = vmatprep.subr.bf16.mxu0 0
  %3730 = vmatpush1.bf16.msra.mxu0 %v363
  %3731 = vmatprep.subr.bf16.mxu0 0
  %3732 = vmatpush1.bf16.msra.mxu0 %v364
  %3733 = vmatprep.subr.bf16.mxu0 0
  %3734 = vmatpush1.bf16.msra.mxu0 %v365
  %3735 = vmatprep.subr.bf16.mxu0 0
  %3736 = vmatpush1.bf16.msra.mxu0 %v366
  %3737 = vmatprep.subr.bf16.mxu0 0
  %3738 = vmatpush1.bf16.msra.mxu0 %v367
  %3739 = vmatprep.subr.bf16.mxu0 0
  %3740 = vmatpush1.bf16.msra.mxu0 %v368
  %3741 = vmatprep.subr.bf16.mxu0 0
  %3742 = vmatpush1.bf16.msra.mxu0 %v369
  %3743 = vmatprep.subr.bf16.mxu0 0
  %3744 = vmatpush1.bf16.msra.mxu0 %v370
  %3745 = vmatprep.subr.bf16.mxu0 0
  %3746 = vmatpush1.bf16.msra.mxu0 %v371
  %3747 = vmatprep.subr.bf16.mxu0 0
  %3748 = vmatpush1.bf16.msra.mxu0 %v372
  %3749 = vmatprep.subr.bf16.mxu0 0
  %3750 = vmatpush1.bf16.msra.mxu0 %v373
  %3751 = vmatprep.subr.bf16.mxu0 0
  %3752 = vmatpush1.bf16.msra.mxu0 %v374
  %3753 = vmatprep.subr.bf16.mxu0 0
  %3754 = vmatpush1.bf16.msra.mxu0 %v375
  %3755 = vmatprep.mubr.bf16.mxu0 %v2191
  %3756 = vmatmul.mubr.bf16.gmra.mrb[0].mxu0 %v2190
  %v3757 = vpop.f32.mrb[0].mxu0
  %v3758 = vadd.f32 %v3533, %v3757
  %v3759 = vpop.f32.mrb[0].mxu0
  %v3760 = vpop.f32.mrb[0].mxu0
  %v3761 = vadd.f32 %v3536, %v3760
  %v3762 = vpop.f32.mrb[0].mxu0
  %3763 = vmatprep.mubr.bf16.mxu0 %v2209
  %3764 = vmatmul.mubr.bf16.gmra.mrb[0].mxu0 %v2208
  %v3765 = vpop.f32.mrb[0].mxu0
  %v3766 = vadd.f32 %v3541, %v3765
  %v3767 = vpop.f32.mrb[0].mxu0
  %v3768 = vpop.f32.mrb[0].mxu0
  %v3769 = vadd.f32 %v3544, %v3768
  %v3770 = vpop.f32.mrb[0].mxu0
  %3771 = vmatprep.mubr.bf16.mxu0 %v2227
  %3772 = vmatmul.mubr.bf16.gmra.mrb[0].mxu0 %v2226
  %v3773 = vpop.f32.mrb[0].mxu0
  %v3774 = vadd.f32 %v3549, %v3773
  %v3775 = vpop.f32.mrb[0].mxu0
  %v3776 = vpop.f32.mrb[0].mxu0
  %v3777 = vadd.f32 %v3552, %v3776
  %v3778 = vpop.f32.mrb[0].mxu0
  %3779 = vmatprep.mubr.bf16.mxu0 %v2245
  %3780 = vmatmul.mubr.bf16.gmra.mrb[0].mxu0 %v2244
  %v3781 = vpop.f32.mrb[0].mxu0
  %v3782 = vadd.f32 %v3557, %v3781
  %v3783 = vpop.f32.mrb[0].mxu0
  %v3784 = vpop.f32.mrb[0].mxu0
  %v3785 = vadd.f32 %v3560, %v3784
  %v3786 = vpop.f32.mrb[0].mxu0
  %3787 = vmatprep.mubr.bf16.mxu0 %v2263
  %3788 = vmatmul.mubr.bf16.gmra.mrb[0].mxu0 %v2262
  %v3789 = vpop.f32.mrb[0].mxu0
  %v3790 = vadd.f32 %v3565, %v3789
  %v3791 = vpop.f32.mrb[0].mxu0
  %v3792 = vpop.f32.mrb[0].mxu0
  %v3793 = vadd.f32 %v3568, %v3792
  %v3794 = vpop.f32.mrb[0].mxu0
  %3795 = vmatprep.mubr.bf16.mxu0 %v2281
  %3796 = vmatmul.mubr.bf16.gmra.mrb[0].mxu0 %v2280
  %v3797 = vpop.f32.mrb[0].mxu0
  %v3798 = vadd.f32 %v3573, %v3797
  %v3799 = vpop.f32.mrb[0].mxu0
  %v3800 = vpop.f32.mrb[0].mxu0
  %v3801 = vadd.f32 %v3576, %v3800
  %v3802 = vpop.f32.mrb[0].mxu0
  %3803 = vmatprep.mubr.bf16.mxu0 %v2299
  %3804 = vmatmul.mubr.bf16.gmra.mrb[0].mxu0 %v2298
  %v3805 = vpop.f32.mrb[0].mxu0
  %v3806 = vadd.f32 %v3581, %v3805
  %v3807 = vpop.f32.mrb[0].mxu0
  %v3808 = vpop.f32.mrb[0].mxu0
  %v3809 = vadd.f32 %v3584, %v3808
  %v3810 = vpop.f32.mrb[0].mxu0
  %3811 = vmatprep.mubr.bf16.mxu0 %v2317
  %3812 = vmatmul.mubr.bf16.gmra.mrb[0].mxu0 %v2316
  %v3813 = vpop.f32.mrb[0].mxu0
  %v3814 = vadd.f32 %v3589, %v3813
  %v3815 = vpop.f32.mrb[0].mxu0
  %v3816 = vpop.f32.mrb[0].mxu0
  %v3817 = vadd.f32 %v3592, %v3816
  %v3818 = vpop.f32.mrb[0].mxu0
  %3819 = vmatprep.mubr.bf16.mxu0 %v2335
  %3820 = vmatmul.mubr.bf16.gmra.mrb[0].mxu0 %v2334
  %v3821 = vpop.f32.mrb[0].mxu0
  %v3822 = vadd.f32 %v3597, %v3821
  %v3823 = vpop.f32.mrb[0].mxu0
  %v3824 = vpop.f32.mrb[0].mxu0
  %v3825 = vadd.f32 %v3600, %v3824
  %v3826 = vpop.f32.mrb[0].mxu0
  %3827 = vmatprep.mubr.bf16.mxu0 %v2353
  %3828 = vmatmul.mubr.bf16.gmra.mrb[0].mxu0 %v2352
  %v3829 = vpop.f32.mrb[0].mxu0
  %v3830 = vadd.f32 %v3605, %v3829
  %v3831 = vpop.f32.mrb[0].mxu0
  %v3832 = vpop.f32.mrb[0].mxu0
  %v3833 = vadd.f32 %v3608, %v3832
  %v3834 = vpop.f32.mrb[0].mxu0
  %3835 = vmatprep.mubr.bf16.mxu0 %v2371
  %3836 = vmatmul.mubr.bf16.gmra.mrb[0].mxu0 %v2370
  %v3837 = vpop.f32.mrb[0].mxu0
  %v3838 = vadd.f32 %v3613, %v3837
  %v3839 = vpop.f32.mrb[0].mxu0
  %v3840 = vpop.f32.mrb[0].mxu0
  %v3841 = vadd.f32 %v3616, %v3840
  %v3842 = vpop.f32.mrb[0].mxu0
  %3843 = vmatprep.mubr.bf16.mxu0 %v2389
  %3844 = vmatmul.mubr.bf16.gmra.mrb[0].mxu0 %v2388
  %v3845 = vpop.f32.mrb[0].mxu0
  %v3846 = vadd.f32 %v3621, %v3845
  %v3847 = vpop.f32.mrb[0].mxu0
  %v3848 = vpop.f32.mrb[0].mxu0
  %v3849 = vadd.f32 %v3624, %v3848
  %v3850 = vpop.f32.mrb[0].mxu0
  %3851 = vmatprep.mubr.bf16.mxu0 %v2407
  %3852 = vmatmul.mubr.bf16.gmra.mrb[0].mxu0 %v2406
  %v3853 = vpop.f32.mrb[0].mxu0
  %v3854 = vadd.f32 %v3629, %v3853
  %v3855 = vpop.f32.mrb[0].mxu0
  %v3856 = vpop.f32.mrb[0].mxu0
  %v3857 = vadd.f32 %v3632, %v3856
  %v3858 = vpop.f32.mrb[0].mxu0
  %3859 = vmatprep.mubr.bf16.mxu0 %v2425
  %3860 = vmatmul.mubr.bf16.gmra.mrb[0].mxu0 %v2424
  %v3861 = vpop.f32.mrb[0].mxu0
  %v3862 = vadd.f32 %v3637, %v3861
  %v3863 = vpop.f32.mrb[0].mxu0
  %v3864 = vpop.f32.mrb[0].mxu0
  %v3865 = vadd.f32 %v3640, %v3864
  %v3866 = vpop.f32.mrb[0].mxu0
  %3867 = vmatprep.mubr.bf16.mxu0 %v2443
  %3868 = vmatmul.mubr.bf16.gmra.mrb[0].mxu0 %v2442
  %v3869 = vpop.f32.mrb[0].mxu0
  %v3870 = vadd.f32 %v3645, %v3869
  %v3871 = vpop.f32.mrb[0].mxu0
  %v3872 = vpop.f32.mrb[0].mxu0
  %v3873 = vadd.f32 %v3648, %v3872
  %v3874 = vpop.f32.mrb[0].mxu0
  %3875 = vmatprep.mubr.bf16.mxu0 %v2461
  %3876 = vmatmul.mubr.bf16.gmra.mrb[0].mxu0 %v2460
  %v3877 = vpop.f32.mrb[0].mxu0
  %v3878 = vadd.f32 %v3653, %v3877
  %v3879 = vpop.f32.mrb[0].mxu0
  %v3880 = vpop.f32.mrb[0].mxu0
  %v3881 = vadd.f32 %v3656, %v3880
  %v3882 = vpop.f32.mrb[0].mxu0
  %3883 = vmatprep.mubr.bf16.mxu0 %v2479
  %3884 = vmatmul.mubr.bf16.gmra.mrb[0].mxu0 %v2478
  %v3885 = vpop.f32.mrb[0].mxu0
  %v3886 = vadd.f32 %v3661, %v3885
  %v3887 = vpop.f32.mrb[0].mxu0
  %v3888 = vpop.f32.mrb[0].mxu0
  %v3889 = vadd.f32 %v3664, %v3888
  %v3890 = vpop.f32.mrb[0].mxu0
  %3891 = vmatprep.mubr.bf16.mxu0 %v2497
  %3892 = vmatmul.mubr.bf16.gmra.mrb[0].mxu0 %v2496
  %v3893 = vpop.f32.mrb[0].mxu0
  %v3894 = vadd.f32 %v3669, %v3893
  %v3895 = vpop.f32.mrb[0].mxu0
  %v3896 = vpop.f32.mrb[0].mxu0
  %v3897 = vadd.f32 %v3672, %v3896
  %v3898 = vpop.f32.mrb[0].mxu0
  %3899 = vmatprep.mubr.bf16.mxu0 %v2515
  %3900 = vmatmul.mubr.bf16.gmra.mrb[0].mxu0 %v2514
  %v3901 = vpop.f32.mrb[0].mxu0
  %v3902 = vadd.f32 %v3677, %v3901
  %v3903 = vpop.f32.mrb[0].mxu0
  %v3904 = vpop.f32.mrb[0].mxu0
  %v3905 = vadd.f32 %v3680, %v3904
  %v3906 = vpop.f32.mrb[0].mxu0
  %3907 = vmatprep.mubr.bf16.mxu0 %v2533
  %3908 = vmatmul.mubr.bf16.gmra.mrb[0].mxu0 %v2532
  %v3909 = vpop.f32.mrb[0].mxu0
  %v3910 = vadd.f32 %v3685, %v3909
  %v3911 = vpop.f32.mrb[0].mxu0
  %v3912 = vpop.f32.mrb[0].mxu0
  %v3913 = vadd.f32 %v3688, %v3912
  %v3914 = vpop.f32.mrb[0].mxu0
  %3915 = vmatprep.mubr.bf16.mxu0 %v2551
  %3916 = vmatmul.mubr.bf16.gmra.mrb[0].mxu0 %v2550
  %v3917 = vpop.f32.mrb[0].mxu0
  %v3918 = vadd.f32 %v3693, %v3917
  %v3919 = vpop.f32.mrb[0].mxu0
  %v3920 = vpop.f32.mrb[0].mxu0
  %v3921 = vadd.f32 %v3696, %v3920
  %v3922 = vpop.f32.mrb[0].mxu0
  %3923 = vmatprep.mubr.bf16.mxu0 %v2569
  %3924 = vmatmul.mubr.bf16.gmra.mrb[0].mxu0 %v2568
  %v3925 = vpop.f32.mrb[0].mxu0
  %v3926 = vadd.f32 %v3701, %v3925
  %v3927 = vpop.f32.mrb[0].mxu0
  %v3928 = vpop.f32.mrb[0].mxu0
  %v3929 = vadd.f32 %v3704, %v3928
  %v3930 = vpop.f32.mrb[0].mxu0
  %3931 = vmatprep.mubr.bf16.mxu0 %v2587
  %3932 = vmatmul.mubr.bf16.gmra.mrb[0].mxu0 %v2586
  %v3933 = vpop.f32.mrb[0].mxu0
  %v3934 = vadd.f32 %v3709, %v3933
  %v3935 = vpop.f32.mrb[0].mxu0
  %v3936 = vpop.f32.mrb[0].mxu0
  %v3937 = vadd.f32 %v3712, %v3936
  %v3938 = vpop.f32.mrb[0].mxu0
  %3939 = vmatprep.mubr.bf16.mxu0 %v2605
  %3940 = vmatmul.mubr.bf16.gmra.mrb[0].mxu0 %v2604
  %v3941 = vpop.f32.mrb[0].mxu0
  %v3942 = vadd.f32 %v3717, %v3941
  %v3943 = vpop.f32.mrb[0].mxu0
  %v3944 = vpop.f32.mrb[0].mxu0
  %v3945 = vadd.f32 %v3720, %v3944
  %v3946 = vpop.f32.mrb[0].mxu0
  %3947 = vdwg.mxu0
  %3948 = vmatprep.subr.bf16.mxu0 0
  %3949 = vmatpush1.bf16.msra.mxu0 %v376
  %3950 = vmatprep.subr.bf16.mxu0 0
  %3951 = vmatpush1.bf16.msra.mxu0 %v377
  %3952 = vmatprep.subr.bf16.mxu0 0
  %3953 = vmatpush1.bf16.msra.mxu0 %v378
  %3954 = vmatprep.subr.bf16.mxu0 0
  %3955 = vmatpush1.bf16.msra.mxu0 %v379
  %3956 = vmatprep.subr.bf16.mxu0 0
  %3957 = vmatpush1.bf16.msra.mxu0 %v380
  %3958 = vmatprep.subr.bf16.mxu0 0
  %3959 = vmatpush1.bf16.msra.mxu0 %v381
  %3960 = vmatprep.subr.bf16.mxu0 0
  %3961 = vmatpush1.bf16.msra.mxu0 %v382
  %3962 = vmatprep.subr.bf16.mxu0 0
  %3963 = vmatpush1.bf16.msra.mxu0 %v383
  %3964 = vmatprep.subr.bf16.mxu0 0
  %3965 = vmatpush1.bf16.msra.mxu0 %v384
  %3966 = vmatprep.subr.bf16.mxu0 0
  %3967 = vmatpush1.bf16.msra.mxu0 %v385
  %3968 = vmatprep.subr.bf16.mxu0 0
  %3969 = vmatpush1.bf16.msra.mxu0 %v386
  %3970 = vmatprep.subr.bf16.mxu0 0
  %3971 = vmatpush1.bf16.msra.mxu0 %v387
  %3972 = vmatprep.subr.bf16.mxu0 0
  %3973 = vmatpush1.bf16.msra.mxu0 %v388
  %3974 = vmatprep.subr.bf16.mxu0 0
  %3975 = vmatpush1.bf16.msra.mxu0 %v389
  %3976 = vmatprep.subr.bf16.mxu0 0
  %3977 = vmatpush1.bf16.msra.mxu0 %v390
  %3978 = vmatprep.subr.bf16.mxu0 0
  %3979 = vmatpush1.bf16.msra.mxu0 %v391
  %3980 = vmatprep.mubr.bf16.mxu0 %v2193
  %3981 = vmatmul.mubr.bf16.gmra.mrb[0].mxu0 %v2192
  %v3982 = vpop.f32.mrb[0].mxu0
  %v3983 = vadd.f32 %v3758, %v3982
  %v3984 = vpop.f32.mrb[0].mxu0
  %v3985 = vpop.f32.mrb[0].mxu0
  %v3986 = vadd.f32 %v3761, %v3985
  %v3987 = vpop.f32.mrb[0].mxu0
  %3988 = vmatprep.mubr.bf16.mxu0 %v2211
  %3989 = vmatmul.mubr.bf16.gmra.mrb[0].mxu0 %v2210
  %v3990 = vpop.f32.mrb[0].mxu0
  %v3991 = vadd.f32 %v3766, %v3990
  %v3992 = vpop.f32.mrb[0].mxu0
  %v3993 = vpop.f32.mrb[0].mxu0
  %v3994 = vadd.f32 %v3769, %v3993
  %v3995 = vpop.f32.mrb[0].mxu0
  %3996 = vmatprep.mubr.bf16.mxu0 %v2229
  %3997 = vmatmul.mubr.bf16.gmra.mrb[0].mxu0 %v2228
  %v3998 = vpop.f32.mrb[0].mxu0
  %v3999 = vadd.f32 %v3774, %v3998
  %v4000 = vpop.f32.mrb[0].mxu0
  %v4001 = vpop.f32.mrb[0].mxu0
  %v4002 = vadd.f32 %v3777, %v4001
  %v4003 = vpop.f32.mrb[0].mxu0
  %4004 = vmatprep.mubr.bf16.mxu0 %v2247
  %4005 = vmatmul.mubr.bf16.gmra.mrb[0].mxu0 %v2246
  %v4006 = vpop.f32.mrb[0].mxu0
  %v4007 = vadd.f32 %v3782, %v4006
  %v4008 = vpop.f32.mrb[0].mxu0
  %v4009 = vpop.f32.mrb[0].mxu0
  %v4010 = vadd.f32 %v3785, %v4009
  %v4011 = vpop.f32.mrb[0].mxu0
  %4012 = vmatprep.mubr.bf16.mxu0 %v2265
  %4013 = vmatmul.mubr.bf16.gmra.mrb[0].mxu0 %v2264
  %v4014 = vpop.f32.mrb[0].mxu0
  %v4015 = vadd.f32 %v3790, %v4014
  %v4016 = vpop.f32.mrb[0].mxu0
  %v4017 = vpop.f32.mrb[0].mxu0
  %v4018 = vadd.f32 %v3793, %v4017
  %v4019 = vpop.f32.mrb[0].mxu0
  %4020 = vmatprep.mubr.bf16.mxu0 %v2283
  %4021 = vmatmul.mubr.bf16.gmra.mrb[0].mxu0 %v2282
  %v4022 = vpop.f32.mrb[0].mxu0
  %v4023 = vadd.f32 %v3798, %v4022
  %v4024 = vpop.f32.mrb[0].mxu0
  %v4025 = vpop.f32.mrb[0].mxu0
  %v4026 = vadd.f32 %v3801, %v4025
  %v4027 = vpop.f32.mrb[0].mxu0
  %4028 = vmatprep.mubr.bf16.mxu0 %v2301
  %4029 = vmatmul.mubr.bf16.gmra.mrb[0].mxu0 %v2300
  %v4030 = vpop.f32.mrb[0].mxu0
  %v4031 = vadd.f32 %v3806, %v4030
  %v4032 = vpop.f32.mrb[0].mxu0
  %v4033 = vpop.f32.mrb[0].mxu0
  %v4034 = vadd.f32 %v3809, %v4033
  %v4035 = vpop.f32.mrb[0].mxu0
  %4036 = vmatprep.mubr.bf16.mxu0 %v2319
  %4037 = vmatmul.mubr.bf16.gmra.mrb[0].mxu0 %v2318
  %v4038 = vpop.f32.mrb[0].mxu0
  %v4039 = vadd.f32 %v3814, %v4038
  %v4040 = vpop.f32.mrb[0].mxu0
  %v4041 = vpop.f32.mrb[0].mxu0
  %v4042 = vadd.f32 %v3817, %v4041
  %v4043 = vpop.f32.mrb[0].mxu0
  %4044 = vmatprep.mubr.bf16.mxu0 %v2337
  %4045 = vmatmul.mubr.bf16.gmra.mrb[0].mxu0 %v2336
  %v4046 = vpop.f32.mrb[0].mxu0
  %v4047 = vadd.f32 %v3822, %v4046
  %v4048 = vpop.f32.mrb[0].mxu0
  %v4049 = vpop.f32.mrb[0].mxu0
  %v4050 = vadd.f32 %v3825, %v4049
  %v4051 = vpop.f32.mrb[0].mxu0
  %4052 = vmatprep.mubr.bf16.mxu0 %v2355
  %4053 = vmatmul.mubr.bf16.gmra.mrb[0].mxu0 %v2354
  %v4054 = vpop.f32.mrb[0].mxu0
  %v4055 = vadd.f32 %v3830, %v4054
  %v4056 = vpop.f32.mrb[0].mxu0
  %v4057 = vpop.f32.mrb[0].mxu0
  %v4058 = vadd.f32 %v3833, %v4057
  %v4059 = vpop.f32.mrb[0].mxu0
  %4060 = vmatprep.mubr.bf16.mxu0 %v2373
  %4061 = vmatmul.mubr.bf16.gmra.mrb[0].mxu0 %v2372
  %v4062 = vpop.f32.mrb[0].mxu0
  %v4063 = vadd.f32 %v3838, %v4062
  %v4064 = vpop.f32.mrb[0].mxu0
  %v4065 = vpop.f32.mrb[0].mxu0
  %v4066 = vadd.f32 %v3841, %v4065
  %v4067 = vpop.f32.mrb[0].mxu0
  %4068 = vmatprep.mubr.bf16.mxu0 %v2391
  %4069 = vmatmul.mubr.bf16.gmra.mrb[0].mxu0 %v2390
  %v4070 = vpop.f32.mrb[0].mxu0
  %v4071 = vadd.f32 %v3846, %v4070
  %v4072 = vpop.f32.mrb[0].mxu0
  %v4073 = vpop.f32.mrb[0].mxu0
  %v4074 = vadd.f32 %v3849, %v4073
  %v4075 = vpop.f32.mrb[0].mxu0
  %4076 = vmatprep.mubr.bf16.mxu0 %v2409
  %4077 = vmatmul.mubr.bf16.gmra.mrb[0].mxu0 %v2408
  %v4078 = vpop.f32.mrb[0].mxu0
  %v4079 = vadd.f32 %v3854, %v4078
  %v4080 = vpop.f32.mrb[0].mxu0
  %v4081 = vpop.f32.mrb[0].mxu0
  %v4082 = vadd.f32 %v3857, %v4081
  %v4083 = vpop.f32.mrb[0].mxu0
  %4084 = vmatprep.mubr.bf16.mxu0 %v2427
  %4085 = vmatmul.mubr.bf16.gmra.mrb[0].mxu0 %v2426
  %v4086 = vpop.f32.mrb[0].mxu0
  %v4087 = vadd.f32 %v3862, %v4086
  %v4088 = vpop.f32.mrb[0].mxu0
  %v4089 = vpop.f32.mrb[0].mxu0
  %v4090 = vadd.f32 %v3865, %v4089
  %v4091 = vpop.f32.mrb[0].mxu0
  %4092 = vmatprep.mubr.bf16.mxu0 %v2445
  %4093 = vmatmul.mubr.bf16.gmra.mrb[0].mxu0 %v2444
  %v4094 = vpop.f32.mrb[0].mxu0
  %v4095 = vadd.f32 %v3870, %v4094
  %v4096 = vpop.f32.mrb[0].mxu0
  %v4097 = vpop.f32.mrb[0].mxu0
  %v4098 = vadd.f32 %v3873, %v4097
  %v4099 = vpop.f32.mrb[0].mxu0
  %4100 = vmatprep.mubr.bf16.mxu0 %v2463
  %4101 = vmatmul.mubr.bf16.gmra.mrb[0].mxu0 %v2462
  %v4102 = vpop.f32.mrb[0].mxu0
  %v4103 = vadd.f32 %v3878, %v4102
  %v4104 = vpop.f32.mrb[0].mxu0
  %v4105 = vpop.f32.mrb[0].mxu0
  %v4106 = vadd.f32 %v3881, %v4105
  %v4107 = vpop.f32.mrb[0].mxu0
  %4108 = vmatprep.mubr.bf16.mxu0 %v2481
  %4109 = vmatmul.mubr.bf16.gmra.mrb[0].mxu0 %v2480
  %v4110 = vpop.f32.mrb[0].mxu0
  %v4111 = vadd.f32 %v3886, %v4110
  %v4112 = vpop.f32.mrb[0].mxu0
  %v4113 = vpop.f32.mrb[0].mxu0
  %v4114 = vadd.f32 %v3889, %v4113
  %v4115 = vpop.f32.mrb[0].mxu0
  %4116 = vmatprep.mubr.bf16.mxu0 %v2499
  %4117 = vmatmul.mubr.bf16.gmra.mrb[0].mxu0 %v2498
  %v4118 = vpop.f32.mrb[0].mxu0
  %v4119 = vadd.f32 %v3894, %v4118
  %v4120 = vpop.f32.mrb[0].mxu0
  %v4121 = vpop.f32.mrb[0].mxu0
  %v4122 = vadd.f32 %v3897, %v4121
  %v4123 = vpop.f32.mrb[0].mxu0
  %4124 = vmatprep.mubr.bf16.mxu0 %v2517
  %4125 = vmatmul.mubr.bf16.gmra.mrb[0].mxu0 %v2516
  %v4126 = vpop.f32.mrb[0].mxu0
  %v4127 = vadd.f32 %v3902, %v4126
  %v4128 = vpop.f32.mrb[0].mxu0
  %v4129 = vpop.f32.mrb[0].mxu0
  %v4130 = vadd.f32 %v3905, %v4129
  %v4131 = vpop.f32.mrb[0].mxu0
  %4132 = vmatprep.mubr.bf16.mxu0 %v2535
  %4133 = vmatmul.mubr.bf16.gmra.mrb[0].mxu0 %v2534
  %v4134 = vpop.f32.mrb[0].mxu0
  %v4135 = vadd.f32 %v3910, %v4134
  %v4136 = vpop.f32.mrb[0].mxu0
  %v4137 = vpop.f32.mrb[0].mxu0
  %v4138 = vadd.f32 %v3913, %v4137
  %v4139 = vpop.f32.mrb[0].mxu0
  %4140 = vmatprep.mubr.bf16.mxu0 %v2553
  %4141 = vmatmul.mubr.bf16.gmra.mrb[0].mxu0 %v2552
  %v4142 = vpop.f32.mrb[0].mxu0
  %v4143 = vadd.f32 %v3918, %v4142
  %v4144 = vpop.f32.mrb[0].mxu0
  %v4145 = vpop.f32.mrb[0].mxu0
  %v4146 = vadd.f32 %v3921, %v4145
  %v4147 = vpop.f32.mrb[0].mxu0
  %4148 = vmatprep.mubr.bf16.mxu0 %v2571
  %4149 = vmatmul.mubr.bf16.gmra.mrb[0].mxu0 %v2570
  %v4150 = vpop.f32.mrb[0].mxu0
  %v4151 = vadd.f32 %v3926, %v4150
  %v4152 = vpop.f32.mrb[0].mxu0
  %v4153 = vpop.f32.mrb[0].mxu0
  %v4154 = vadd.f32 %v3929, %v4153
  %v4155 = vpop.f32.mrb[0].mxu0
  %4156 = vmatprep.mubr.bf16.mxu0 %v2589
  %4157 = vmatmul.mubr.bf16.gmra.mrb[0].mxu0 %v2588
  %v4158 = vpop.f32.mrb[0].mxu0
  %v4159 = vadd.f32 %v3934, %v4158
  %v4160 = vpop.f32.mrb[0].mxu0
  %v4161 = vpop.f32.mrb[0].mxu0
  %v4162 = vadd.f32 %v3937, %v4161
  %v4163 = vpop.f32.mrb[0].mxu0
  %4164 = vmatprep.mubr.bf16.mxu0 %v2607
  %4165 = vmatmul.mubr.bf16.gmra.mrb[0].mxu0 %v2606
  %v4166 = vpop.f32.mrb[0].mxu0
  %v4167 = vadd.f32 %v3942, %v4166
  %v4168 = vpop.f32.mrb[0].mxu0
  %v4169 = vpop.f32.mrb[0].mxu0
  %v4170 = vadd.f32 %v3945, %v4169
  %v4171 = vpop.f32.mrb[0].mxu0
  %4172 = vdwg.mxu0
  %4173 = vmatprep.subr.bf16.mxu0 0
  %4174 = vmatpush1.bf16.msra.mxu0 %v392
  %4175 = vmatprep.subr.bf16.mxu0 0
  %4176 = vmatpush1.bf16.msra.mxu0 %v393
  %4177 = vmatprep.subr.bf16.mxu0 0
  %4178 = vmatpush1.bf16.msra.mxu0 %v394
  %4179 = vmatprep.subr.bf16.mxu0 0
  %4180 = vmatpush1.bf16.msra.mxu0 %v395
  %4181 = vmatprep.subr.bf16.mxu0 0
  %4182 = vmatpush1.bf16.msra.mxu0 %v396
  %4183 = vmatprep.subr.bf16.mxu0 0
  %4184 = vmatpush1.bf16.msra.mxu0 %v397
  %4185 = vmatprep.subr.bf16.mxu0 0
  %4186 = vmatpush1.bf16.msra.mxu0 %v398
  %4187 = vmatprep.subr.bf16.mxu0 0
  %4188 = vmatpush1.bf16.msra.mxu0 %v399
  %4189 = vmatprep.subr.bf16.mxu0 0
  %4190 = vmatpush1.bf16.msra.mxu0 %v400
  %4191 = vmatprep.subr.bf16.mxu0 0
  %4192 = vmatpush1.bf16.msra.mxu0 %v401
  %4193 = vmatprep.subr.bf16.mxu0 0
  %4194 = vmatpush1.bf16.msra.mxu0 %v402
  %4195 = vmatprep.subr.bf16.mxu0 0
  %4196 = vmatpush1.bf16.msra.mxu0 %v403
  %4197 = vmatprep.subr.bf16.mxu0 0
  %4198 = vmatpush1.bf16.msra.mxu0 %v404
  %4199 = vmatprep.subr.bf16.mxu0 0
  %4200 = vmatpush1.bf16.msra.mxu0 %v405
  %4201 = vmatprep.subr.bf16.mxu0 0
  %4202 = vmatpush1.bf16.msra.mxu0 %v406
  %4203 = vmatprep.subr.bf16.mxu0 0
  %4204 = vmatpush1.bf16.msra.mxu0 %v407
  %4205 = vmatprep.mubr.bf16.mxu0 %v2195
  %4206 = vmatmul.mubr.bf16.gmra.mrb[0].mxu0 %v2194
  %v4207 = vpop.f32.mrb[0].mxu0
  %v4208 = vadd.f32 %v3983, %v4207
  %v4209 = vpop.f32.mrb[0].mxu0
  %v4210 = vpop.f32.mrb[0].mxu0
  %v4211 = vadd.f32 %v3986, %v4210
  %v4212 = vpop.f32.mrb[0].mxu0
  %4213 = vmatprep.mubr.bf16.mxu0 %v2213
  %4214 = vmatmul.mubr.bf16.gmra.mrb[0].mxu0 %v2212
  %v4215 = vpop.f32.mrb[0].mxu0
  %v4216 = vadd.f32 %v3991, %v4215
  %v4217 = vpop.f32.mrb[0].mxu0
  %v4218 = vpop.f32.mrb[0].mxu0
  %v4219 = vadd.f32 %v3994, %v4218
  %v4220 = vpop.f32.mrb[0].mxu0
  %4221 = vmatprep.mubr.bf16.mxu0 %v2231
  %4222 = vmatmul.mubr.bf16.gmra.mrb[0].mxu0 %v2230
  %v4223 = vpop.f32.mrb[0].mxu0
  %v4224 = vadd.f32 %v3999, %v4223
  %v4225 = vpop.f32.mrb[0].mxu0
  %v4226 = vpop.f32.mrb[0].mxu0
  %v4227 = vadd.f32 %v4002, %v4226
  %v4228 = vpop.f32.mrb[0].mxu0
  %4229 = vmatprep.mubr.bf16.mxu0 %v2249
  %4230 = vmatmul.mubr.bf16.gmra.mrb[0].mxu0 %v2248
  %v4231 = vpop.f32.mrb[0].mxu0
  %v4232 = vadd.f32 %v4007, %v4231
  %v4233 = vpop.f32.mrb[0].mxu0
  %v4234 = vpop.f32.mrb[0].mxu0
  %v4235 = vadd.f32 %v4010, %v4234
  %v4236 = vpop.f32.mrb[0].mxu0
  %4237 = vmatprep.mubr.bf16.mxu0 %v2267
  %4238 = vmatmul.mubr.bf16.gmra.mrb[0].mxu0 %v2266
  %v4239 = vpop.f32.mrb[0].mxu0
  %v4240 = vadd.f32 %v4015, %v4239
  %v4241 = vpop.f32.mrb[0].mxu0
  %v4242 = vpop.f32.mrb[0].mxu0
  %v4243 = vadd.f32 %v4018, %v4242
  %v4244 = vpop.f32.mrb[0].mxu0
  %4245 = vmatprep.mubr.bf16.mxu0 %v2285
  %4246 = vmatmul.mubr.bf16.gmra.mrb[0].mxu0 %v2284
  %v4247 = vpop.f32.mrb[0].mxu0
  %v4248 = vadd.f32 %v4023, %v4247
  %v4249 = vpop.f32.mrb[0].mxu0
  %v4250 = vpop.f32.mrb[0].mxu0
  %v4251 = vadd.f32 %v4026, %v4250
  %v4252 = vpop.f32.mrb[0].mxu0
  %4253 = vmatprep.mubr.bf16.mxu0 %v2303
  %4254 = vmatmul.mubr.bf16.gmra.mrb[0].mxu0 %v2302
  %v4255 = vpop.f32.mrb[0].mxu0
  %v4256 = vadd.f32 %v4031, %v4255
  %v4257 = vpop.f32.mrb[0].mxu0
  %v4258 = vpop.f32.mrb[0].mxu0
  %v4259 = vadd.f32 %v4034, %v4258
  %v4260 = vpop.f32.mrb[0].mxu0
  %4261 = vmatprep.mubr.bf16.mxu0 %v2321
  %4262 = vmatmul.mubr.bf16.gmra.mrb[0].mxu0 %v2320
  %v4263 = vpop.f32.mrb[0].mxu0
  %v4264 = vadd.f32 %v4039, %v4263
  %v4265 = vpop.f32.mrb[0].mxu0
  %v4266 = vpop.f32.mrb[0].mxu0
  %v4267 = vadd.f32 %v4042, %v4266
  %v4268 = vpop.f32.mrb[0].mxu0
  %4269 = vmatprep.mubr.bf16.mxu0 %v2339
  %4270 = vmatmul.mubr.bf16.gmra.mrb[0].mxu0 %v2338
  %v4271 = vpop.f32.mrb[0].mxu0
  %v4272 = vadd.f32 %v4047, %v4271
  %v4273 = vpop.f32.mrb[0].mxu0
  %v4274 = vpop.f32.mrb[0].mxu0
  %v4275 = vadd.f32 %v4050, %v4274
  %v4276 = vpop.f32.mrb[0].mxu0
  %4277 = vmatprep.mubr.bf16.mxu0 %v2357
  %4278 = vmatmul.mubr.bf16.gmra.mrb[0].mxu0 %v2356
  %v4279 = vpop.f32.mrb[0].mxu0
  %v4280 = vadd.f32 %v4055, %v4279
  %v4281 = vpop.f32.mrb[0].mxu0
  %v4282 = vpop.f32.mrb[0].mxu0
  %v4283 = vadd.f32 %v4058, %v4282
  %v4284 = vpop.f32.mrb[0].mxu0
  %4285 = vmatprep.mubr.bf16.mxu0 %v2375
  %4286 = vmatmul.mubr.bf16.gmra.mrb[0].mxu0 %v2374
  %v4287 = vpop.f32.mrb[0].mxu0
  %v4288 = vadd.f32 %v4063, %v4287
  %v4289 = vpop.f32.mrb[0].mxu0
  %v4290 = vpop.f32.mrb[0].mxu0
  %v4291 = vadd.f32 %v4066, %v4290
  %v4292 = vpop.f32.mrb[0].mxu0
  %4293 = vmatprep.mubr.bf16.mxu0 %v2393
  %4294 = vmatmul.mubr.bf16.gmra.mrb[0].mxu0 %v2392
  %v4295 = vpop.f32.mrb[0].mxu0
  %v4296 = vadd.f32 %v4071, %v4295
  %v4297 = vpop.f32.mrb[0].mxu0
  %v4298 = vpop.f32.mrb[0].mxu0
  %v4299 = vadd.f32 %v4074, %v4298
  %v4300 = vpop.f32.mrb[0].mxu0
  %4301 = vmatprep.mubr.bf16.mxu0 %v2411
  %4302 = vmatmul.mubr.bf16.gmra.mrb[0].mxu0 %v2410
  %v4303 = vpop.f32.mrb[0].mxu0
  %v4304 = vadd.f32 %v4079, %v4303
  %v4305 = vpop.f32.mrb[0].mxu0
  %v4306 = vpop.f32.mrb[0].mxu0
  %v4307 = vadd.f32 %v4082, %v4306
  %v4308 = vpop.f32.mrb[0].mxu0
  %4309 = vmatprep.mubr.bf16.mxu0 %v2429
  %4310 = vmatmul.mubr.bf16.gmra.mrb[0].mxu0 %v2428
  %v4311 = vpop.f32.mrb[0].mxu0
  %v4312 = vadd.f32 %v4087, %v4311
  %v4313 = vpop.f32.mrb[0].mxu0
  %v4314 = vpop.f32.mrb[0].mxu0
  %v4315 = vadd.f32 %v4090, %v4314
  %v4316 = vpop.f32.mrb[0].mxu0
  %4317 = vmatprep.mubr.bf16.mxu0 %v2447
  %4318 = vmatmul.mubr.bf16.gmra.mrb[0].mxu0 %v2446
  %v4319 = vpop.f32.mrb[0].mxu0
  %v4320 = vadd.f32 %v4095, %v4319
  %v4321 = vpop.f32.mrb[0].mxu0
  %v4322 = vpop.f32.mrb[0].mxu0
  %v4323 = vadd.f32 %v4098, %v4322
  %v4324 = vpop.f32.mrb[0].mxu0
  %4325 = vmatprep.mubr.bf16.mxu0 %v2465
  %4326 = vmatmul.mubr.bf16.gmra.mrb[0].mxu0 %v2464
  %v4327 = vpop.f32.mrb[0].mxu0
  %v4328 = vadd.f32 %v4103, %v4327
  %v4329 = vpop.f32.mrb[0].mxu0
  %v4330 = vpop.f32.mrb[0].mxu0
  %v4331 = vadd.f32 %v4106, %v4330
  %v4332 = vpop.f32.mrb[0].mxu0
  %4333 = vmatprep.mubr.bf16.mxu0 %v2483
  %4334 = vmatmul.mubr.bf16.gmra.mrb[0].mxu0 %v2482
  %v4335 = vpop.f32.mrb[0].mxu0
  %v4336 = vadd.f32 %v4111, %v4335
  %v4337 = vpop.f32.mrb[0].mxu0
  %v4338 = vpop.f32.mrb[0].mxu0
  %v4339 = vadd.f32 %v4114, %v4338
  %v4340 = vpop.f32.mrb[0].mxu0
  %4341 = vmatprep.mubr.bf16.mxu0 %v2501
  %4342 = vmatmul.mubr.bf16.gmra.mrb[0].mxu0 %v2500
  %v4343 = vpop.f32.mrb[0].mxu0
  %v4344 = vadd.f32 %v4119, %v4343
  %v4345 = vpop.f32.mrb[0].mxu0
  %v4346 = vpop.f32.mrb[0].mxu0
  %v4347 = vadd.f32 %v4122, %v4346
  %v4348 = vpop.f32.mrb[0].mxu0
  %4349 = vmatprep.mubr.bf16.mxu0 %v2519
  %4350 = vmatmul.mubr.bf16.gmra.mrb[0].mxu0 %v2518
  %v4351 = vpop.f32.mrb[0].mxu0
  %v4352 = vadd.f32 %v4127, %v4351
  %v4353 = vpop.f32.mrb[0].mxu0
  %v4354 = vpop.f32.mrb[0].mxu0
  %v4355 = vadd.f32 %v4130, %v4354
  %v4356 = vpop.f32.mrb[0].mxu0
  %4357 = vmatprep.mubr.bf16.mxu0 %v2537
  %4358 = vmatmul.mubr.bf16.gmra.mrb[0].mxu0 %v2536
  %v4359 = vpop.f32.mrb[0].mxu0
  %v4360 = vadd.f32 %v4135, %v4359
  %v4361 = vpop.f32.mrb[0].mxu0
  %v4362 = vpop.f32.mrb[0].mxu0
  %v4363 = vadd.f32 %v4138, %v4362
  %v4364 = vpop.f32.mrb[0].mxu0
  %4365 = vmatprep.mubr.bf16.mxu0 %v2555
  %4366 = vmatmul.mubr.bf16.gmra.mrb[0].mxu0 %v2554
  %v4367 = vpop.f32.mrb[0].mxu0
  %v4368 = vadd.f32 %v4143, %v4367
  %v4369 = vpop.f32.mrb[0].mxu0
  %v4370 = vpop.f32.mrb[0].mxu0
  %v4371 = vadd.f32 %v4146, %v4370
  %v4372 = vpop.f32.mrb[0].mxu0
  %4373 = vmatprep.mubr.bf16.mxu0 %v2573
  %4374 = vmatmul.mubr.bf16.gmra.mrb[0].mxu0 %v2572
  %v4375 = vpop.f32.mrb[0].mxu0
  %v4376 = vadd.f32 %v4151, %v4375
  %v4377 = vpop.f32.mrb[0].mxu0
  %v4378 = vpop.f32.mrb[0].mxu0
  %v4379 = vadd.f32 %v4154, %v4378
  %v4380 = vpop.f32.mrb[0].mxu0
  %4381 = vmatprep.mubr.bf16.mxu0 %v2591
  %4382 = vmatmul.mubr.bf16.gmra.mrb[0].mxu0 %v2590
  %v4383 = vpop.f32.mrb[0].mxu0
  %v4384 = vadd.f32 %v4159, %v4383
  %v4385 = vpop.f32.mrb[0].mxu0
  %v4386 = vpop.f32.mrb[0].mxu0
  %v4387 = vadd.f32 %v4162, %v4386
  %v4388 = vpop.f32.mrb[0].mxu0
  %4389 = vmatprep.mubr.bf16.mxu0 %v2609
  %4390 = vmatmul.mubr.bf16.gmra.mrb[0].mxu0 %v2608
  %v4391 = vpop.f32.mrb[0].mxu0
  %v4392 = vadd.f32 %v4167, %v4391
  %v4393 = vpop.f32.mrb[0].mxu0
  %v4394 = vpop.f32.mrb[0].mxu0
  %v4395 = vadd.f32 %v4170, %v4394
  %v4396 = vpop.f32.mrb[0].mxu0
  %4397 = vdwg.mxu0
  %4398 = vmatprep.subr.bf16.mxu0 0
  %4399 = vmatpush1.bf16.msra.mxu0 %v408
  %4400 = vmatprep.subr.bf16.mxu0 0
  %4401 = vmatpush1.bf16.msra.mxu0 %v409
  %4402 = vmatprep.subr.bf16.mxu0 0
  %4403 = vmatpush1.bf16.msra.mxu0 %v410
  %4404 = vmatprep.subr.bf16.mxu0 0
  %4405 = vmatpush1.bf16.msra.mxu0 %v411
  %4406 = vmatprep.subr.bf16.mxu0 0
  %4407 = vmatpush1.bf16.msra.mxu0 %v412
  %4408 = vmatprep.subr.bf16.mxu0 0
  %4409 = vmatpush1.bf16.msra.mxu0 %v413
  %4410 = vmatprep.subr.bf16.mxu0 0
  %4411 = vmatpush1.bf16.msra.mxu0 %v414
  %4412 = vmatprep.subr.bf16.mxu0 0
  %4413 = vmatpush1.bf16.msra.mxu0 %v415
  %4414 = vmatprep.subr.bf16.mxu0 0
  %4415 = vmatpush1.bf16.msra.mxu0 %v416
  %4416 = vmatprep.subr.bf16.mxu0 0
  %4417 = vmatpush1.bf16.msra.mxu0 %v417
  %4418 = vmatprep.subr.bf16.mxu0 0
  %4419 = vmatpush1.bf16.msra.mxu0 %v418
  %4420 = vmatprep.subr.bf16.mxu0 0
  %4421 = vmatpush1.bf16.msra.mxu0 %v419
  %4422 = vmatprep.subr.bf16.mxu0 0
  %4423 = vmatpush1.bf16.msra.mxu0 %v420
  %4424 = vmatprep.subr.bf16.mxu0 0
  %4425 = vmatpush1.bf16.msra.mxu0 %v421
  %4426 = vmatprep.subr.bf16.mxu0 0
  %4427 = vmatpush1.bf16.msra.mxu0 %v422
  %4428 = vmatprep.subr.bf16.mxu0 0
  %4429 = vmatpush1.bf16.msra.mxu0 %v423
  %4430 = vmatprep.mubr.bf16.mxu0 %v2197
  %4431 = vmatmul.mubr.bf16.gmra.mrb[0].mxu0 %v2196
  %v4432 = vpop.f32.mrb[0].mxu0
  %v4433 = vadd.f32 %v4208, %v4432
  %v4434 = vpop.f32.mrb[0].mxu0
  %v4435 = vpop.f32.mrb[0].mxu0
  %v4436 = vadd.f32 %v4211, %v4435
  %v4437 = vpop.f32.mrb[0].mxu0
  %4438 = vmatprep.mubr.bf16.mxu0 %v2215
  %4439 = vmatmul.mubr.bf16.gmra.mrb[0].mxu0 %v2214
  %v4440 = vpop.f32.mrb[0].mxu0
  %v4441 = vadd.f32 %v4216, %v4440
  %v4442 = vpop.f32.mrb[0].mxu0
  %v4443 = vpop.f32.mrb[0].mxu0
  %v4444 = vadd.f32 %v4219, %v4443
  %v4445 = vpop.f32.mrb[0].mxu0
  %4446 = vmatprep.mubr.bf16.mxu0 %v2233
  %4447 = vmatmul.mubr.bf16.gmra.mrb[0].mxu0 %v2232
  %v4448 = vpop.f32.mrb[0].mxu0
  %v4449 = vadd.f32 %v4224, %v4448
  %v4450 = vpop.f32.mrb[0].mxu0
  %v4451 = vpop.f32.mrb[0].mxu0
  %v4452 = vadd.f32 %v4227, %v4451
  %v4453 = vpop.f32.mrb[0].mxu0
  %4454 = vmatprep.mubr.bf16.mxu0 %v2251
  %4455 = vmatmul.mubr.bf16.gmra.mrb[0].mxu0 %v2250
  %v4456 = vpop.f32.mrb[0].mxu0
  %v4457 = vadd.f32 %v4232, %v4456
  %v4458 = vpop.f32.mrb[0].mxu0
  %v4459 = vpop.f32.mrb[0].mxu0
  %v4460 = vadd.f32 %v4235, %v4459
  %v4461 = vpop.f32.mrb[0].mxu0
  %4462 = vmatprep.mubr.bf16.mxu0 %v2269
  %4463 = vmatmul.mubr.bf16.gmra.mrb[0].mxu0 %v2268
  %v4464 = vpop.f32.mrb[0].mxu0
  %v4465 = vadd.f32 %v4240, %v4464
  %v4466 = vpop.f32.mrb[0].mxu0
  %v4467 = vpop.f32.mrb[0].mxu0
  %v4468 = vadd.f32 %v4243, %v4467
  %v4469 = vpop.f32.mrb[0].mxu0
  %4470 = vmatprep.mubr.bf16.mxu0 %v2287
  %4471 = vmatmul.mubr.bf16.gmra.mrb[0].mxu0 %v2286
  %v4472 = vpop.f32.mrb[0].mxu0
  %v4473 = vadd.f32 %v4248, %v4472
  %v4474 = vpop.f32.mrb[0].mxu0
  %v4475 = vpop.f32.mrb[0].mxu0
  %v4476 = vadd.f32 %v4251, %v4475
  %v4477 = vpop.f32.mrb[0].mxu0
  %4478 = vmatprep.mubr.bf16.mxu0 %v2305
  %4479 = vmatmul.mubr.bf16.gmra.mrb[0].mxu0 %v2304
  %v4480 = vpop.f32.mrb[0].mxu0
  %v4481 = vadd.f32 %v4256, %v4480
  %v4482 = vpop.f32.mrb[0].mxu0
  %v4483 = vpop.f32.mrb[0].mxu0
  %v4484 = vadd.f32 %v4259, %v4483
  %v4485 = vpop.f32.mrb[0].mxu0
  %4486 = vmatprep.mubr.bf16.mxu0 %v2323
  %4487 = vmatmul.mubr.bf16.gmra.mrb[0].mxu0 %v2322
  %v4488 = vpop.f32.mrb[0].mxu0
  %v4489 = vadd.f32 %v4264, %v4488
  %v4490 = vpop.f32.mrb[0].mxu0
  %v4491 = vpop.f32.mrb[0].mxu0
  %v4492 = vadd.f32 %v4267, %v4491
  %v4493 = vpop.f32.mrb[0].mxu0
  %4494 = vmatprep.mubr.bf16.mxu0 %v2341
  %4495 = vmatmul.mubr.bf16.gmra.mrb[0].mxu0 %v2340
  %v4496 = vpop.f32.mrb[0].mxu0
  %v4497 = vadd.f32 %v4272, %v4496
  %v4498 = vpop.f32.mrb[0].mxu0
  %v4499 = vpop.f32.mrb[0].mxu0
  %v4500 = vadd.f32 %v4275, %v4499
  %v4501 = vpop.f32.mrb[0].mxu0
  %4502 = vmatprep.mubr.bf16.mxu0 %v2359
  %4503 = vmatmul.mubr.bf16.gmra.mrb[0].mxu0 %v2358
  %v4504 = vpop.f32.mrb[0].mxu0
  %v4505 = vadd.f32 %v4280, %v4504
  %v4506 = vpop.f32.mrb[0].mxu0
  %v4507 = vpop.f32.mrb[0].mxu0
  %v4508 = vadd.f32 %v4283, %v4507
  %v4509 = vpop.f32.mrb[0].mxu0
  %4510 = vmatprep.mubr.bf16.mxu0 %v2377
  %4511 = vmatmul.mubr.bf16.gmra.mrb[0].mxu0 %v2376
  %v4512 = vpop.f32.mrb[0].mxu0
  %v4513 = vadd.f32 %v4288, %v4512
  %v4514 = vpop.f32.mrb[0].mxu0
  %v4515 = vpop.f32.mrb[0].mxu0
  %v4516 = vadd.f32 %v4291, %v4515
  %v4517 = vpop.f32.mrb[0].mxu0
  %4518 = vmatprep.mubr.bf16.mxu0 %v2395
  %4519 = vmatmul.mubr.bf16.gmra.mrb[0].mxu0 %v2394
  %v4520 = vpop.f32.mrb[0].mxu0
  %v4521 = vadd.f32 %v4296, %v4520
  %v4522 = vpop.f32.mrb[0].mxu0
  %v4523 = vpop.f32.mrb[0].mxu0
  %v4524 = vadd.f32 %v4299, %v4523
  %v4525 = vpop.f32.mrb[0].mxu0
  %4526 = vmatprep.mubr.bf16.mxu0 %v2413
  %4527 = vmatmul.mubr.bf16.gmra.mrb[0].mxu0 %v2412
  %v4528 = vpop.f32.mrb[0].mxu0
  %v4529 = vadd.f32 %v4304, %v4528
  %v4530 = vpop.f32.mrb[0].mxu0
  %v4531 = vpop.f32.mrb[0].mxu0
  %v4532 = vadd.f32 %v4307, %v4531
  %v4533 = vpop.f32.mrb[0].mxu0
  %4534 = vmatprep.mubr.bf16.mxu0 %v2431
  %4535 = vmatmul.mubr.bf16.gmra.mrb[0].mxu0 %v2430
  %v4536 = vpop.f32.mrb[0].mxu0
  %v4537 = vadd.f32 %v4312, %v4536
  %v4538 = vpop.f32.mrb[0].mxu0
  %v4539 = vpop.f32.mrb[0].mxu0
  %v4540 = vadd.f32 %v4315, %v4539
  %v4541 = vpop.f32.mrb[0].mxu0
  %4542 = vmatprep.mubr.bf16.mxu0 %v2449
  %4543 = vmatmul.mubr.bf16.gmra.mrb[0].mxu0 %v2448
  %v4544 = vpop.f32.mrb[0].mxu0
  %v4545 = vadd.f32 %v4320, %v4544
  %v4546 = vpop.f32.mrb[0].mxu0
  %v4547 = vpop.f32.mrb[0].mxu0
  %v4548 = vadd.f32 %v4323, %v4547
  %v4549 = vpop.f32.mrb[0].mxu0
  %4550 = vmatprep.mubr.bf16.mxu0 %v2467
  %4551 = vmatmul.mubr.bf16.gmra.mrb[0].mxu0 %v2466
  %v4552 = vpop.f32.mrb[0].mxu0
  %v4553 = vadd.f32 %v4328, %v4552
  %v4554 = vpop.f32.mrb[0].mxu0
  %v4555 = vpop.f32.mrb[0].mxu0
  %v4556 = vadd.f32 %v4331, %v4555
  %v4557 = vpop.f32.mrb[0].mxu0
  %4558 = vmatprep.mubr.bf16.mxu0 %v2485
  %4559 = vmatmul.mubr.bf16.gmra.mrb[0].mxu0 %v2484
  %v4560 = vpop.f32.mrb[0].mxu0
  %v4561 = vadd.f32 %v4336, %v4560
  %v4562 = vpop.f32.mrb[0].mxu0
  %v4563 = vpop.f32.mrb[0].mxu0
  %v4564 = vadd.f32 %v4339, %v4563
  %v4565 = vpop.f32.mrb[0].mxu0
  %4566 = vmatprep.mubr.bf16.mxu0 %v2503
  %4567 = vmatmul.mubr.bf16.gmra.mrb[0].mxu0 %v2502
  %v4568 = vpop.f32.mrb[0].mxu0
  %v4569 = vadd.f32 %v4344, %v4568
  %v4570 = vpop.f32.mrb[0].mxu0
  %v4571 = vpop.f32.mrb[0].mxu0
  %v4572 = vadd.f32 %v4347, %v4571
  %v4573 = vpop.f32.mrb[0].mxu0
  %4574 = vmatprep.mubr.bf16.mxu0 %v2521
  %4575 = vmatmul.mubr.bf16.gmra.mrb[0].mxu0 %v2520
  %v4576 = vpop.f32.mrb[0].mxu0
  %v4577 = vadd.f32 %v4352, %v4576
  %v4578 = vpop.f32.mrb[0].mxu0
  %v4579 = vpop.f32.mrb[0].mxu0
  %v4580 = vadd.f32 %v4355, %v4579
  %v4581 = vpop.f32.mrb[0].mxu0
  %4582 = vmatprep.mubr.bf16.mxu0 %v2539
  %4583 = vmatmul.mubr.bf16.gmra.mrb[0].mxu0 %v2538
  %v4584 = vpop.f32.mrb[0].mxu0
  %v4585 = vadd.f32 %v4360, %v4584
  %v4586 = vpop.f32.mrb[0].mxu0
  %v4587 = vpop.f32.mrb[0].mxu0
  %v4588 = vadd.f32 %v4363, %v4587
  %v4589 = vpop.f32.mrb[0].mxu0
  %4590 = vmatprep.mubr.bf16.mxu0 %v2557
  %4591 = vmatmul.mubr.bf16.gmra.mrb[0].mxu0 %v2556
  %v4592 = vpop.f32.mrb[0].mxu0
  %v4593 = vadd.f32 %v4368, %v4592
  %v4594 = vpop.f32.mrb[0].mxu0
  %v4595 = vpop.f32.mrb[0].mxu0
  %v4596 = vadd.f32 %v4371, %v4595
  %v4597 = vpop.f32.mrb[0].mxu0
  %4598 = vmatprep.mubr.bf16.mxu0 %v2575
  %4599 = vmatmul.mubr.bf16.gmra.mrb[0].mxu0 %v2574
  %v4600 = vpop.f32.mrb[0].mxu0
  %v4601 = vadd.f32 %v4376, %v4600
  %v4602 = vpop.f32.mrb[0].mxu0
  %v4603 = vpop.f32.mrb[0].mxu0
  %v4604 = vadd.f32 %v4379, %v4603
  %v4605 = vpop.f32.mrb[0].mxu0
  %4606 = vmatprep.mubr.bf16.mxu0 %v2593
  %4607 = vmatmul.mubr.bf16.gmra.mrb[0].mxu0 %v2592
  %v4608 = vpop.f32.mrb[0].mxu0
  %v4609 = vadd.f32 %v4384, %v4608
  %v4610 = vpop.f32.mrb[0].mxu0
  %v4611 = vpop.f32.mrb[0].mxu0
  %v4612 = vadd.f32 %v4387, %v4611
  %v4613 = vpop.f32.mrb[0].mxu0
  %4614 = vmatprep.mubr.bf16.mxu0 %v2611
  %4615 = vmatmul.mubr.bf16.gmra.mrb[0].mxu0 %v2610
  %v4616 = vpop.f32.mrb[0].mxu0
  %v4617 = vadd.f32 %v4392, %v4616
  %v4618 = vpop.f32.mrb[0].mxu0
  %v4619 = vpop.f32.mrb[0].mxu0
  %v4620 = vadd.f32 %v4395, %v4619
  %v4621 = vpop.f32.mrb[0].mxu0
  %4622 = vdwg.mxu0
  %4623 = vmatprep.subr.bf16.mxu0 0
  %4624 = vmatpush1.bf16.msra.mxu0 %v424
  %4625 = vmatprep.subr.bf16.mxu0 0
  %4626 = vmatpush1.bf16.msra.mxu0 %v425
  %4627 = vmatprep.subr.bf16.mxu0 0
  %4628 = vmatpush1.bf16.msra.mxu0 %v426
  %4629 = vmatprep.subr.bf16.mxu0 0
  %4630 = vmatpush1.bf16.msra.mxu0 %v427
  %4631 = vmatprep.subr.bf16.mxu0 0
  %4632 = vmatpush1.bf16.msra.mxu0 %v428
  %4633 = vmatprep.subr.bf16.mxu0 0
  %4634 = vmatpush1.bf16.msra.mxu0 %v429
  %4635 = vmatprep.subr.bf16.mxu0 0
  %4636 = vmatpush1.bf16.msra.mxu0 %v430
  %4637 = vmatprep.subr.bf16.mxu0 0
  %4638 = vmatpush1.bf16.msra.mxu0 %v431
  %4639 = vmatprep.subr.bf16.mxu0 0
  %4640 = vmatpush1.bf16.msra.mxu0 %v432
  %4641 = vmatprep.subr.bf16.mxu0 0
  %4642 = vmatpush1.bf16.msra.mxu0 %v433
  %4643 = vmatprep.subr.bf16.mxu0 0
  %4644 = vmatpush1.bf16.msra.mxu0 %v434
  %4645 = vmatprep.subr.bf16.mxu0 0
  %4646 = vmatpush1.bf16.msra.mxu0 %v435
  %4647 = vmatprep.subr.bf16.mxu0 0
  %4648 = vmatpush1.bf16.msra.mxu0 %v436
  %4649 = vmatprep.subr.bf16.mxu0 0
  %4650 = vmatpush1.bf16.msra.mxu0 %v437
  %4651 = vmatprep.subr.bf16.mxu0 0
  %4652 = vmatpush1.bf16.msra.mxu0 %v438
  %4653 = vmatprep.subr.bf16.mxu0 0
  %4654 = vmatpush1.bf16.msra.mxu0 %v439
  %4655 = vmatprep.mubr.bf16.mxu0 %v2199
  %4656 = vmatmul.mubr.bf16.gmra.mrb[0].mxu0 %v2198
  %v4657 = vpop.f32.mrb[0].mxu0
  %v4658 = vadd.f32 %v4433, %v4657
  %v4659 = vpop.f32.mrb[0].mxu0
  %v4660 = vpop.f32.mrb[0].mxu0
  %v4661 = vadd.f32 %v4436, %v4660
  %v4662 = vpop.f32.mrb[0].mxu0
  %4663 = vmatprep.mubr.bf16.mxu0 %v2217
  %4664 = vmatmul.mubr.bf16.gmra.mrb[0].mxu0 %v2216
  %v4665 = vpop.f32.mrb[0].mxu0
  %v4666 = vadd.f32 %v4441, %v4665
  %v4667 = vpop.f32.mrb[0].mxu0
  %v4668 = vpop.f32.mrb[0].mxu0
  %v4669 = vadd.f32 %v4444, %v4668
  %v4670 = vpop.f32.mrb[0].mxu0
  %4671 = vmatprep.mubr.bf16.mxu0 %v2235
  %4672 = vmatmul.mubr.bf16.gmra.mrb[0].mxu0 %v2234
  %v4673 = vpop.f32.mrb[0].mxu0
  %v4674 = vadd.f32 %v4449, %v4673
  %v4675 = vpop.f32.mrb[0].mxu0
  %v4676 = vpop.f32.mrb[0].mxu0
  %v4677 = vadd.f32 %v4452, %v4676
  %v4678 = vpop.f32.mrb[0].mxu0
  %4679 = vmatprep.mubr.bf16.mxu0 %v2253
  %4680 = vmatmul.mubr.bf16.gmra.mrb[0].mxu0 %v2252
  %v4681 = vpop.f32.mrb[0].mxu0
  %v4682 = vadd.f32 %v4457, %v4681
  %v4683 = vpop.f32.mrb[0].mxu0
  %v4684 = vpop.f32.mrb[0].mxu0
  %v4685 = vadd.f32 %v4460, %v4684
  %v4686 = vpop.f32.mrb[0].mxu0
  %4687 = vmatprep.mubr.bf16.mxu0 %v2271
  %4688 = vmatmul.mubr.bf16.gmra.mrb[0].mxu0 %v2270
  %v4689 = vpop.f32.mrb[0].mxu0
  %v4690 = vadd.f32 %v4465, %v4689
  %v4691 = vpop.f32.mrb[0].mxu0
  %v4692 = vpop.f32.mrb[0].mxu0
  %v4693 = vadd.f32 %v4468, %v4692
  %v4694 = vpop.f32.mrb[0].mxu0
  %4695 = vmatprep.mubr.bf16.mxu0 %v2289
  %4696 = vmatmul.mubr.bf16.gmra.mrb[0].mxu0 %v2288
  %v4697 = vpop.f32.mrb[0].mxu0
  %v4698 = vadd.f32 %v4473, %v4697
  %v4699 = vpop.f32.mrb[0].mxu0
  %v4700 = vpop.f32.mrb[0].mxu0
  %v4701 = vadd.f32 %v4476, %v4700
  %v4702 = vpop.f32.mrb[0].mxu0
  %4703 = vmatprep.mubr.bf16.mxu0 %v2307
  %4704 = vmatmul.mubr.bf16.gmra.mrb[0].mxu0 %v2306
  %v4705 = vpop.f32.mrb[0].mxu0
  %v4706 = vadd.f32 %v4481, %v4705
  %v4707 = vpop.f32.mrb[0].mxu0
  %v4708 = vpop.f32.mrb[0].mxu0
  %v4709 = vadd.f32 %v4484, %v4708
  %v4710 = vpop.f32.mrb[0].mxu0
  %4711 = vmatprep.mubr.bf16.mxu0 %v2325
  %4712 = vmatmul.mubr.bf16.gmra.mrb[0].mxu0 %v2324
  %v4713 = vpop.f32.mrb[0].mxu0
  %v4714 = vadd.f32 %v4489, %v4713
  %v4715 = vpop.f32.mrb[0].mxu0
  %v4716 = vpop.f32.mrb[0].mxu0
  %v4717 = vadd.f32 %v4492, %v4716
  %v4718 = vpop.f32.mrb[0].mxu0
  %4719 = vmatprep.mubr.bf16.mxu0 %v2343
  %4720 = vmatmul.mubr.bf16.gmra.mrb[0].mxu0 %v2342
  %v4721 = vpop.f32.mrb[0].mxu0
  %v4722 = vadd.f32 %v4497, %v4721
  %v4723 = vpop.f32.mrb[0].mxu0
  %v4724 = vpop.f32.mrb[0].mxu0
  %v4725 = vadd.f32 %v4500, %v4724
  %v4726 = vpop.f32.mrb[0].mxu0
  %4727 = vmatprep.mubr.bf16.mxu0 %v2361
  %4728 = vmatmul.mubr.bf16.gmra.mrb[0].mxu0 %v2360
  %v4729 = vpop.f32.mrb[0].mxu0
  %v4730 = vadd.f32 %v4505, %v4729
  %v4731 = vpop.f32.mrb[0].mxu0
  %v4732 = vpop.f32.mrb[0].mxu0
  %v4733 = vadd.f32 %v4508, %v4732
  %v4734 = vpop.f32.mrb[0].mxu0
  %4735 = vmatprep.mubr.bf16.mxu0 %v2379
  %4736 = vmatmul.mubr.bf16.gmra.mrb[0].mxu0 %v2378
  %v4737 = vpop.f32.mrb[0].mxu0
  %v4738 = vadd.f32 %v4513, %v4737
  %v4739 = vpop.f32.mrb[0].mxu0
  %v4740 = vpop.f32.mrb[0].mxu0
  %v4741 = vadd.f32 %v4516, %v4740
  %v4742 = vpop.f32.mrb[0].mxu0
  %4743 = vmatprep.mubr.bf16.mxu0 %v2397
  %4744 = vmatmul.mubr.bf16.gmra.mrb[0].mxu0 %v2396
  %v4745 = vpop.f32.mrb[0].mxu0
  %v4746 = vadd.f32 %v4521, %v4745
  %v4747 = vpop.f32.mrb[0].mxu0
  %v4748 = vpop.f32.mrb[0].mxu0
  %v4749 = vadd.f32 %v4524, %v4748
  %v4750 = vpop.f32.mrb[0].mxu0
  %4751 = vmatprep.mubr.bf16.mxu0 %v2415
  %4752 = vmatmul.mubr.bf16.gmra.mrb[0].mxu0 %v2414
  %v4753 = vpop.f32.mrb[0].mxu0
  %v4754 = vadd.f32 %v4529, %v4753
  %v4755 = vpop.f32.mrb[0].mxu0
  %v4756 = vpop.f32.mrb[0].mxu0
  %v4757 = vadd.f32 %v4532, %v4756
  %v4758 = vpop.f32.mrb[0].mxu0
  %4759 = vmatprep.mubr.bf16.mxu0 %v2433
  %4760 = vmatmul.mubr.bf16.gmra.mrb[0].mxu0 %v2432
  %v4761 = vpop.f32.mrb[0].mxu0
  %v4762 = vadd.f32 %v4537, %v4761
  %v4763 = vpop.f32.mrb[0].mxu0
  %v4764 = vpop.f32.mrb[0].mxu0
  %v4765 = vadd.f32 %v4540, %v4764
  %v4766 = vpop.f32.mrb[0].mxu0
  %4767 = vmatprep.mubr.bf16.mxu0 %v2451
  %4768 = vmatmul.mubr.bf16.gmra.mrb[0].mxu0 %v2450
  %v4769 = vpop.f32.mrb[0].mxu0
  %v4770 = vadd.f32 %v4545, %v4769
  %v4771 = vpop.f32.mrb[0].mxu0
  %v4772 = vpop.f32.mrb[0].mxu0
  %v4773 = vadd.f32 %v4548, %v4772
  %v4774 = vpop.f32.mrb[0].mxu0
  %4775 = vmatprep.mubr.bf16.mxu0 %v2469
  %4776 = vmatmul.mubr.bf16.gmra.mrb[0].mxu0 %v2468
  %v4777 = vpop.f32.mrb[0].mxu0
  %v4778 = vadd.f32 %v4553, %v4777
  %v4779 = vpop.f32.mrb[0].mxu0
  %v4780 = vpop.f32.mrb[0].mxu0
  %v4781 = vadd.f32 %v4556, %v4780
  %v4782 = vpop.f32.mrb[0].mxu0
  %4783 = vmatprep.mubr.bf16.mxu0 %v2487
  %4784 = vmatmul.mubr.bf16.gmra.mrb[0].mxu0 %v2486
  %v4785 = vpop.f32.mrb[0].mxu0
  %v4786 = vadd.f32 %v4561, %v4785
  %v4787 = vpop.f32.mrb[0].mxu0
  %v4788 = vpop.f32.mrb[0].mxu0
  %v4789 = vadd.f32 %v4564, %v4788
  %v4790 = vpop.f32.mrb[0].mxu0
  %4791 = vmatprep.mubr.bf16.mxu0 %v2505
  %4792 = vmatmul.mubr.bf16.gmra.mrb[0].mxu0 %v2504
  %v4793 = vpop.f32.mrb[0].mxu0
  %v4794 = vadd.f32 %v4569, %v4793
  %v4795 = vpop.f32.mrb[0].mxu0
  %v4796 = vpop.f32.mrb[0].mxu0
  %v4797 = vadd.f32 %v4572, %v4796
  %v4798 = vpop.f32.mrb[0].mxu0
  %4799 = vmatprep.mubr.bf16.mxu0 %v2523
  %4800 = vmatmul.mubr.bf16.gmra.mrb[0].mxu0 %v2522
  %v4801 = vpop.f32.mrb[0].mxu0
  %v4802 = vadd.f32 %v4577, %v4801
  %v4803 = vpop.f32.mrb[0].mxu0
  %v4804 = vpop.f32.mrb[0].mxu0
  %v4805 = vadd.f32 %v4580, %v4804
  %v4806 = vpop.f32.mrb[0].mxu0
  %4807 = vmatprep.mubr.bf16.mxu0 %v2541
  %4808 = vmatmul.mubr.bf16.gmra.mrb[0].mxu0 %v2540
  %v4809 = vpop.f32.mrb[0].mxu0
  %v4810 = vadd.f32 %v4585, %v4809
  %v4811 = vpop.f32.mrb[0].mxu0
  %v4812 = vpop.f32.mrb[0].mxu0
  %v4813 = vadd.f32 %v4588, %v4812
  %v4814 = vpop.f32.mrb[0].mxu0
  %4815 = vmatprep.mubr.bf16.mxu0 %v2559
  %4816 = vmatmul.mubr.bf16.gmra.mrb[0].mxu0 %v2558
  %v4817 = vpop.f32.mrb[0].mxu0
  %v4818 = vadd.f32 %v4593, %v4817
  %v4819 = vpop.f32.mrb[0].mxu0
  %v4820 = vpop.f32.mrb[0].mxu0
  %v4821 = vadd.f32 %v4596, %v4820
  %v4822 = vpop.f32.mrb[0].mxu0
  %4823 = vmatprep.mubr.bf16.mxu0 %v2577
  %4824 = vmatmul.mubr.bf16.gmra.mrb[0].mxu0 %v2576
  %v4825 = vpop.f32.mrb[0].mxu0
  %v4826 = vadd.f32 %v4601, %v4825
  %v4827 = vpop.f32.mrb[0].mxu0
  %v4828 = vpop.f32.mrb[0].mxu0
  %v4829 = vadd.f32 %v4604, %v4828
  %v4830 = vpop.f32.mrb[0].mxu0
  %4831 = vmatprep.mubr.bf16.mxu0 %v2595
  %4832 = vmatmul.mubr.bf16.gmra.mrb[0].mxu0 %v2594
  %v4833 = vpop.f32.mrb[0].mxu0
  %v4834 = vadd.f32 %v4609, %v4833
  %v4835 = vpop.f32.mrb[0].mxu0
  %v4836 = vpop.f32.mrb[0].mxu0
  %v4837 = vadd.f32 %v4612, %v4836
  %v4838 = vpop.f32.mrb[0].mxu0
  %4839 = vmatprep.mubr.bf16.mxu0 %v2613
  %4840 = vmatmul.mubr.bf16.gmra.mrb[0].mxu0 %v2612
  %v4841 = vpop.f32.mrb[0].mxu0
  %v4842 = vadd.f32 %v4617, %v4841
  %v4843 = vpop.f32.mrb[0].mxu0
  %v4844 = vpop.f32.mrb[0].mxu0
  %v4845 = vadd.f32 %v4620, %v4844
  %v4846 = vpop.f32.mrb[0].mxu0
  %4847 = vdwg.mxu0
  %4848 = vmatprep.subr.bf16.mxu0 0
  %4849 = vmatpush1.bf16.msra.mxu0 %v440
  %4850 = vmatprep.subr.bf16.mxu0 0
  %4851 = vmatpush1.bf16.msra.mxu0 %v441
  %4852 = vmatprep.subr.bf16.mxu0 0
  %4853 = vmatpush1.bf16.msra.mxu0 %v442
  %4854 = vmatprep.subr.bf16.mxu0 0
  %4855 = vmatpush1.bf16.msra.mxu0 %v443
  %4856 = vmatprep.subr.bf16.mxu0 0
  %4857 = vmatpush1.bf16.msra.mxu0 %v444
  %4858 = vmatprep.subr.bf16.mxu0 0
  %4859 = vmatpush1.bf16.msra.mxu0 %v445
  %4860 = vmatprep.subr.bf16.mxu0 0
  %4861 = vmatpush1.bf16.msra.mxu0 %v446
  %4862 = vmatprep.subr.bf16.mxu0 0
  %4863 = vmatpush1.bf16.msra.mxu0 %v447
  %4864 = vmatprep.subr.bf16.mxu0 0
  %4865 = vmatpush1.bf16.msra.mxu0 %v448
  %4866 = vmatprep.subr.bf16.mxu0 0
  %4867 = vmatpush1.bf16.msra.mxu0 %v449
  %4868 = vmatprep.subr.bf16.mxu0 0
  %4869 = vmatpush1.bf16.msra.mxu0 %v450
  %4870 = vmatprep.subr.bf16.mxu0 0
  %4871 = vmatpush1.bf16.msra.mxu0 %v451
  %4872 = vmatprep.subr.bf16.mxu0 0
  %4873 = vmatpush1.bf16.msra.mxu0 %v452
  %4874 = vmatprep.subr.bf16.mxu0 0
  %4875 = vmatpush1.bf16.msra.mxu0 %v453
  %4876 = vmatprep.subr.bf16.mxu0 0
  %4877 = vmatpush1.bf16.msra.mxu0 %v454
  %4878 = vmatprep.subr.bf16.mxu0 0
  %4879 = vmatpush1.bf16.msra.mxu0 %v455
  %4880 = vmatprep.mubr.bf16.mxu0 %v2201
  %4881 = vmatmul.mubr.bf16.gmra.mrb[0].mxu0 %v2200
  %v4882 = vpop.f32.mrb[0].mxu0
  %v4883 = vadd.f32 %v4658, %v4882
  %v4884 = vpop.f32.mrb[0].mxu0
  %v4885 = vpop.f32.mrb[0].mxu0
  %v4886 = vadd.f32 %v4661, %v4885
  %v4887 = vpop.f32.mrb[0].mxu0
  %4888 = vmatprep.mubr.bf16.mxu0 %v2219
  %4889 = vmatmul.mubr.bf16.gmra.mrb[0].mxu0 %v2218
  %v4890 = vpop.f32.mrb[0].mxu0
  %v4891 = vadd.f32 %v4666, %v4890
  %v4892 = vpop.f32.mrb[0].mxu0
  %v4893 = vpop.f32.mrb[0].mxu0
  %v4894 = vadd.f32 %v4669, %v4893
  %v4895 = vpop.f32.mrb[0].mxu0
  %4896 = vmatprep.mubr.bf16.mxu0 %v2237
  %4897 = vmatmul.mubr.bf16.gmra.mrb[0].mxu0 %v2236
  %v4898 = vpop.f32.mrb[0].mxu0
  %v4899 = vadd.f32 %v4674, %v4898
  %v4900 = vpop.f32.mrb[0].mxu0
  %v4901 = vpop.f32.mrb[0].mxu0
  %v4902 = vadd.f32 %v4677, %v4901
  %v4903 = vpop.f32.mrb[0].mxu0
  %4904 = vmatprep.mubr.bf16.mxu0 %v2255
  %4905 = vmatmul.mubr.bf16.gmra.mrb[0].mxu0 %v2254
  %v4906 = vpop.f32.mrb[0].mxu0
  %v4907 = vadd.f32 %v4682, %v4906
  %v4908 = vpop.f32.mrb[0].mxu0
  %v4909 = vpop.f32.mrb[0].mxu0
  %v4910 = vadd.f32 %v4685, %v4909
  %v4911 = vpop.f32.mrb[0].mxu0
  %4912 = vmatprep.mubr.bf16.mxu0 %v2273
  %4913 = vmatmul.mubr.bf16.gmra.mrb[0].mxu0 %v2272
  %v4914 = vpop.f32.mrb[0].mxu0
  %v4915 = vadd.f32 %v4690, %v4914
  %v4916 = vpop.f32.mrb[0].mxu0
  %v4917 = vpop.f32.mrb[0].mxu0
  %v4918 = vadd.f32 %v4693, %v4917
  %v4919 = vpop.f32.mrb[0].mxu0
  %4920 = vmatprep.mubr.bf16.mxu0 %v2291
  %4921 = vmatmul.mubr.bf16.gmra.mrb[0].mxu0 %v2290
  %v4922 = vpop.f32.mrb[0].mxu0
  %v4923 = vadd.f32 %v4698, %v4922
  %v4924 = vpop.f32.mrb[0].mxu0
  %v4925 = vpop.f32.mrb[0].mxu0
  %v4926 = vadd.f32 %v4701, %v4925
  %v4927 = vpop.f32.mrb[0].mxu0
  %4928 = vmatprep.mubr.bf16.mxu0 %v2309
  %4929 = vmatmul.mubr.bf16.gmra.mrb[0].mxu0 %v2308
  %v4930 = vpop.f32.mrb[0].mxu0
  %v4931 = vadd.f32 %v4706, %v4930
  %v4932 = vpop.f32.mrb[0].mxu0
  %v4933 = vpop.f32.mrb[0].mxu0
  %v4934 = vadd.f32 %v4709, %v4933
  %v4935 = vpop.f32.mrb[0].mxu0
  %4936 = vmatprep.mubr.bf16.mxu0 %v2327
  %4937 = vmatmul.mubr.bf16.gmra.mrb[0].mxu0 %v2326
  %v4938 = vpop.f32.mrb[0].mxu0
  %v4939 = vadd.f32 %v4714, %v4938
  %v4940 = vpop.f32.mrb[0].mxu0
  %v4941 = vpop.f32.mrb[0].mxu0
  %v4942 = vadd.f32 %v4717, %v4941
  %v4943 = vpop.f32.mrb[0].mxu0
  %4944 = vmatprep.mubr.bf16.mxu0 %v2345
  %4945 = vmatmul.mubr.bf16.gmra.mrb[0].mxu0 %v2344
  %v4946 = vpop.f32.mrb[0].mxu0
  %v4947 = vadd.f32 %v4722, %v4946
  %v4948 = vpop.f32.mrb[0].mxu0
  %v4949 = vpop.f32.mrb[0].mxu0
  %v4950 = vadd.f32 %v4725, %v4949
  %v4951 = vpop.f32.mrb[0].mxu0
  %4952 = vmatprep.mubr.bf16.mxu0 %v2363
  %4953 = vmatmul.mubr.bf16.gmra.mrb[0].mxu0 %v2362
  %v4954 = vpop.f32.mrb[0].mxu0
  %v4955 = vadd.f32 %v4730, %v4954
  %v4956 = vpop.f32.mrb[0].mxu0
  %v4957 = vpop.f32.mrb[0].mxu0
  %v4958 = vadd.f32 %v4733, %v4957
  %v4959 = vpop.f32.mrb[0].mxu0
  %4960 = vmatprep.mubr.bf16.mxu0 %v2381
  %4961 = vmatmul.mubr.bf16.gmra.mrb[0].mxu0 %v2380
  %v4962 = vpop.f32.mrb[0].mxu0
  %v4963 = vadd.f32 %v4738, %v4962
  %v4964 = vpop.f32.mrb[0].mxu0
  %v4965 = vpop.f32.mrb[0].mxu0
  %v4966 = vadd.f32 %v4741, %v4965
  %v4967 = vpop.f32.mrb[0].mxu0
  %4968 = vmatprep.mubr.bf16.mxu0 %v2399
  %4969 = vmatmul.mubr.bf16.gmra.mrb[0].mxu0 %v2398
  %v4970 = vpop.f32.mrb[0].mxu0
  %v4971 = vadd.f32 %v4746, %v4970
  %v4972 = vpop.f32.mrb[0].mxu0
  %v4973 = vpop.f32.mrb[0].mxu0
  %v4974 = vadd.f32 %v4749, %v4973
  %v4975 = vpop.f32.mrb[0].mxu0
  %4976 = vmatprep.mubr.bf16.mxu0 %v2417
  %4977 = vmatmul.mubr.bf16.gmra.mrb[0].mxu0 %v2416
  %v4978 = vpop.f32.mrb[0].mxu0
  %v4979 = vadd.f32 %v4754, %v4978
  %v4980 = vpop.f32.mrb[0].mxu0
  %v4981 = vpop.f32.mrb[0].mxu0
  %v4982 = vadd.f32 %v4757, %v4981
  %v4983 = vpop.f32.mrb[0].mxu0
  %4984 = vmatprep.mubr.bf16.mxu0 %v2435
  %4985 = vmatmul.mubr.bf16.gmra.mrb[0].mxu0 %v2434
  %v4986 = vpop.f32.mrb[0].mxu0
  %v4987 = vadd.f32 %v4762, %v4986
  %v4988 = vpop.f32.mrb[0].mxu0
  %v4989 = vpop.f32.mrb[0].mxu0
  %v4990 = vadd.f32 %v4765, %v4989
  %v4991 = vpop.f32.mrb[0].mxu0
  %4992 = vmatprep.mubr.bf16.mxu0 %v2453
  %4993 = vmatmul.mubr.bf16.gmra.mrb[0].mxu0 %v2452
  %v4994 = vpop.f32.mrb[0].mxu0
  %v4995 = vadd.f32 %v4770, %v4994
  %v4996 = vpop.f32.mrb[0].mxu0
  %v4997 = vpop.f32.mrb[0].mxu0
  %v4998 = vadd.f32 %v4773, %v4997
  %v4999 = vpop.f32.mrb[0].mxu0
  %5000 = vmatprep.mubr.bf16.mxu0 %v2471
  %5001 = vmatmul.mubr.bf16.gmra.mrb[0].mxu0 %v2470
  %v5002 = vpop.f32.mrb[0].mxu0
  %v5003 = vadd.f32 %v4778, %v5002
  %v5004 = vpop.f32.mrb[0].mxu0
  %v5005 = vpop.f32.mrb[0].mxu0
  %v5006 = vadd.f32 %v4781, %v5005
  %v5007 = vpop.f32.mrb[0].mxu0
  %5008 = vmatprep.mubr.bf16.mxu0 %v2489
  %5009 = vmatmul.mubr.bf16.gmra.mrb[0].mxu0 %v2488
  %v5010 = vpop.f32.mrb[0].mxu0
  %v5011 = vadd.f32 %v4786, %v5010
  %v5012 = vpop.f32.mrb[0].mxu0
  %v5013 = vpop.f32.mrb[0].mxu0
  %v5014 = vadd.f32 %v4789, %v5013
  %v5015 = vpop.f32.mrb[0].mxu0
  %5016 = vmatprep.mubr.bf16.mxu0 %v2507
  %5017 = vmatmul.mubr.bf16.gmra.mrb[0].mxu0 %v2506
  %v5018 = vpop.f32.mrb[0].mxu0
  %v5019 = vadd.f32 %v4794, %v5018
  %v5020 = vpop.f32.mrb[0].mxu0
  %v5021 = vpop.f32.mrb[0].mxu0
  %v5022 = vadd.f32 %v4797, %v5021
  %v5023 = vpop.f32.mrb[0].mxu0
  %5024 = vmatprep.mubr.bf16.mxu0 %v2525
  %5025 = vmatmul.mubr.bf16.gmra.mrb[0].mxu0 %v2524
  %v5026 = vpop.f32.mrb[0].mxu0
  %v5027 = vadd.f32 %v4802, %v5026
  %v5028 = vpop.f32.mrb[0].mxu0
  %v5029 = vpop.f32.mrb[0].mxu0
  %v5030 = vadd.f32 %v4805, %v5029
  %v5031 = vpop.f32.mrb[0].mxu0
  %5032 = vmatprep.mubr.bf16.mxu0 %v2543
  %5033 = vmatmul.mubr.bf16.gmra.mrb[0].mxu0 %v2542
  %v5034 = vpop.f32.mrb[0].mxu0
  %v5035 = vadd.f32 %v4810, %v5034
  %v5036 = vpop.f32.mrb[0].mxu0
  %v5037 = vpop.f32.mrb[0].mxu0
  %v5038 = vadd.f32 %v4813, %v5037
  %v5039 = vpop.f32.mrb[0].mxu0
  %5040 = vmatprep.mubr.bf16.mxu0 %v2561
  %5041 = vmatmul.mubr.bf16.gmra.mrb[0].mxu0 %v2560
  %v5042 = vpop.f32.mrb[0].mxu0
  %v5043 = vadd.f32 %v4818, %v5042
  %v5044 = vpop.f32.mrb[0].mxu0
  %v5045 = vpop.f32.mrb[0].mxu0
  %v5046 = vadd.f32 %v4821, %v5045
  %v5047 = vpop.f32.mrb[0].mxu0
  %5048 = vmatprep.mubr.bf16.mxu0 %v2579
  %5049 = vmatmul.mubr.bf16.gmra.mrb[0].mxu0 %v2578
  %v5050 = vpop.f32.mrb[0].mxu0
  %v5051 = vadd.f32 %v4826, %v5050
  %v5052 = vpop.f32.mrb[0].mxu0
  %v5053 = vpop.f32.mrb[0].mxu0
  %v5054 = vadd.f32 %v4829, %v5053
  %v5055 = vpop.f32.mrb[0].mxu0
  %5056 = vmatprep.mubr.bf16.mxu0 %v2597
  %5057 = vmatmul.mubr.bf16.gmra.mrb[0].mxu0 %v2596
  %v5058 = vpop.f32.mrb[0].mxu0
  %v5059 = vadd.f32 %v4834, %v5058
  %v5060 = vpop.f32.mrb[0].mxu0
  %v5061 = vpop.f32.mrb[0].mxu0
  %v5062 = vadd.f32 %v4837, %v5061
  %v5063 = vpop.f32.mrb[0].mxu0
  %5064 = vmatprep.mubr.bf16.mxu0 %v2615
  %5065 = vmatmul.mubr.bf16.gmra.mrb[0].mxu0 %v2614
  %v5066 = vpop.f32.mrb[0].mxu0
  %v5067 = vadd.f32 %v4842, %v5066
  %v5068 = vpop.f32.mrb[0].mxu0
  %v5069 = vpop.f32.mrb[0].mxu0
  %v5070 = vadd.f32 %v4845, %v5069
  %v5071 = vpop.f32.mrb[0].mxu0
  %5072 = vdwg.mxu0
  %vm5073 = vcmask 400384
  %v5074 = vsel %vm5073, %v4883, 0.0
  %5075 = vadd.xlane.f32.xlu0 %v5074
  %v5076 = vpop.xlane.xlu0 %5075
  %v5077 = vsel %vm5073, %v4886, 0.0
  %5078 = vadd.xlane.f32.xlu0 %v5077
  %v5079 = vpop.xlane.xlu0 %5078
  %v5080 = vsel %vm5073, %v4891, 0.0
  %5081 = vadd.xlane.f32.xlu0 %v5080
  %v5082 = vpop.xlane.xlu0 %5081
  %v5083 = vsel %vm5073, %v4894, 0.0
  %5084 = vadd.xlane.f32.xlu0 %v5083
  %v5085 = vpop.xlane.xlu0 %5084
  %v5086 = vsel %vm5073, %v4899, 0.0
  %5087 = vadd.xlane.f32.xlu0 %v5086
  %v5088 = vpop.xlane.xlu0 %5087
  %v5089 = vsel %vm5073, %v4902, 0.0
  %5090 = vadd.xlane.f32.xlu0 %v5089
  %v5091 = vpop.xlane.xlu0 %5090
  %v5092 = vsel %vm5073, %v4907, 0.0
  %5093 = vadd.xlane.f32.xlu0 %v5092
  %v5094 = vpop.xlane.xlu0 %5093
  %v5095 = vsel %vm5073, %v4910, 0.0
  %5096 = vadd.xlane.f32.xlu0 %v5095
  %v5097 = vpop.xlane.xlu0 %5096
  %v5098 = vsel %vm5073, %v4915, 0.0
  %5099 = vadd.xlane.f32.xlu0 %v5098
  %v5100 = vpop.xlane.xlu0 %5099
  %v5101 = vsel %vm5073, %v4918, 0.0
  %5102 = vadd.xlane.f32.xlu0 %v5101
  %v5103 = vpop.xlane.xlu0 %5102
  %v5104 = vsel %vm5073, %v4923, 0.0
  %5105 = vadd.xlane.f32.xlu0 %v5104
  %v5106 = vpop.xlane.xlu0 %5105
  %v5107 = vsel %vm5073, %v4926, 0.0
  %5108 = vadd.xlane.f32.xlu0 %v5107
  %v5109 = vpop.xlane.xlu0 %5108
  %v5110 = vsel %vm5073, %v4931, 0.0
  %5111 = vadd.xlane.f32.xlu0 %v5110
  %v5112 = vpop.xlane.xlu0 %5111
  %v5113 = vsel %vm5073, %v4934, 0.0
  %5114 = vadd.xlane.f32.xlu0 %v5113
  %v5115 = vpop.xlane.xlu0 %5114
  %v5116 = vsel %vm5073, %v4939, 0.0
  %5117 = vadd.xlane.f32.xlu0 %v5116
  %v5118 = vpop.xlane.xlu0 %5117
  %v5119 = vsel %vm5073, %v4942, 0.0
  %5120 = vadd.xlane.f32.xlu0 %v5119
  %v5121 = vpop.xlane.xlu0 %5120
  %v5122 = vsel %vm5073, %v4947, 0.0
  %5123 = vadd.xlane.f32.xlu0 %v5122
  %v5124 = vpop.xlane.xlu0 %5123
  %v5125 = vsel %vm5073, %v4950, 0.0
  %5126 = vadd.xlane.f32.xlu0 %v5125
  %v5127 = vpop.xlane.xlu0 %5126
  %v5128 = vsel %vm5073, %v4955, 0.0
  %5129 = vadd.xlane.f32.xlu0 %v5128
  %v5130 = vpop.xlane.xlu0 %5129
  %v5131 = vsel %vm5073, %v4958, 0.0
  %5132 = vadd.xlane.f32.xlu0 %v5131
  %v5133 = vpop.xlane.xlu0 %5132
  %v5134 = vsel %vm5073, %v4963, 0.0
  %5135 = vadd.xlane.f32.xlu0 %v5134
  %v5136 = vpop.xlane.xlu0 %5135
  %v5137 = vsel %vm5073, %v4966, 0.0
  %5138 = vadd.xlane.f32.xlu0 %v5137
  %v5139 = vpop.xlane.xlu0 %5138
  %v5140 = vsel %vm5073, %v4971, 0.0
  %5141 = vadd.xlane.f32.xlu0 %v5140
  %v5142 = vpop.xlane.xlu0 %5141
  %v5143 = vsel %vm5073, %v4974, 0.0
  %5144 = vadd.xlane.f32.xlu0 %v5143
  %v5145 = vpop.xlane.xlu0 %5144
  %v5146 = vsel %vm5073, %v4979, 0.0
  %5147 = vadd.xlane.f32.xlu0 %v5146
  %v5148 = vpop.xlane.xlu0 %5147
  %v5149 = vsel %vm5073, %v4982, 0.0
  %5150 = vadd.xlane.f32.xlu0 %v5149
  %v5151 = vpop.xlane.xlu0 %5150
  %v5152 = vsel %vm5073, %v4987, 0.0
  %5153 = vadd.xlane.f32.xlu0 %v5152
  %v5154 = vpop.xlane.xlu0 %5153
  %v5155 = vsel %vm5073, %v4990, 0.0
  %5156 = vadd.xlane.f32.xlu0 %v5155
  %v5157 = vpop.xlane.xlu0 %5156
  %v5158 = vsel %vm5073, %v4995, 0.0
  %5159 = vadd.xlane.f32.xlu0 %v5158
  %v5160 = vpop.xlane.xlu0 %5159
  %v5161 = vsel %vm5073, %v4998, 0.0
  %5162 = vadd.xlane.f32.xlu0 %v5161
  %v5163 = vpop.xlane.xlu0 %5162
  %v5164 = vsel %vm5073, %v5003, 0.0
  %5165 = vadd.xlane.f32.xlu0 %v5164
  %v5166 = vpop.xlane.xlu0 %5165
  %v5167 = vsel %vm5073, %v5006, 0.0
  %5168 = vadd.xlane.f32.xlu0 %v5167
  %v5169 = vpop.xlane.xlu0 %5168
  %v5170 = vsel %vm5073, %v5011, 0.0
  %5171 = vadd.xlane.f32.xlu0 %v5170
  %v5172 = vpop.xlane.xlu0 %5171
  %v5173 = vsel %vm5073, %v5014, 0.0
  %5174 = vadd.xlane.f32.xlu0 %v5173
  %v5175 = vpop.xlane.xlu0 %5174
  %v5176 = vsel %vm5073, %v5019, 0.0
  %5177 = vadd.xlane.f32.xlu0 %v5176
  %v5178 = vpop.xlane.xlu0 %5177
  %v5179 = vsel %vm5073, %v5022, 0.0
  %5180 = vadd.xlane.f32.xlu0 %v5179
  %v5181 = vpop.xlane.xlu0 %5180
  %v5182 = vsel %vm5073, %v5027, 0.0
  %5183 = vadd.xlane.f32.xlu0 %v5182
  %v5184 = vpop.xlane.xlu0 %5183
  %v5185 = vsel %vm5073, %v5030, 0.0
  %5186 = vadd.xlane.f32.xlu0 %v5185
  %v5187 = vpop.xlane.xlu0 %5186
  %v5188 = vsel %vm5073, %v5035, 0.0
  %5189 = vadd.xlane.f32.xlu0 %v5188
  %v5190 = vpop.xlane.xlu0 %5189
  %v5191 = vsel %vm5073, %v5038, 0.0
  %5192 = vadd.xlane.f32.xlu0 %v5191
  %v5193 = vpop.xlane.xlu0 %5192
  %v5194 = vsel %vm5073, %v5043, 0.0
  %5195 = vadd.xlane.f32.xlu0 %v5194
  %v5196 = vpop.xlane.xlu0 %5195
  %v5197 = vsel %vm5073, %v5046, 0.0
  %5198 = vadd.xlane.f32.xlu0 %v5197
  %v5199 = vpop.xlane.xlu0 %5198
  %v5200 = vsel %vm5073, %v5051, 0.0
  %5201 = vadd.xlane.f32.xlu0 %v5200
  %v5202 = vpop.xlane.xlu0 %5201
  %v5203 = vsel %vm5073, %v5054, 0.0
  %5204 = vadd.xlane.f32.xlu0 %v5203
  %v5205 = vpop.xlane.xlu0 %5204
  %v5206 = vsel %vm5073, %v5059, 0.0
  %5207 = vadd.xlane.f32.xlu0 %v5206
  %v5208 = vpop.xlane.xlu0 %5207
  %v5209 = vsel %vm5073, %v5062, 0.0
  %5210 = vadd.xlane.f32.xlu0 %v5209
  %v5211 = vpop.xlane.xlu0 %5210
  %v5212 = vsel %vm5073, %v5067, 0.0
  %5213 = vadd.xlane.f32.xlu0 %v5212
  %v5214 = vpop.xlane.xlu0 %5213
  %v5215 = vsel %vm5073, %v5070, 0.0
  %5216 = vadd.xlane.f32.xlu0 %v5215
  %v5217 = vpop.xlane.xlu0 %5216
  %v5218 = vmul.f32 %v5076, 0.020408163
  %v5219 = vmul.f32 %v5079, 0.020408163
  %v5220 = vmul.f32 %v5082, 0.020408163
  %v5221 = vmul.f32 %v5085, 0.020408163
  %v5222 = vmul.f32 %v5088, 0.020408163
  %v5223 = vmul.f32 %v5091, 0.020408163
  %v5224 = vmul.f32 %v5094, 0.020408163
  %v5225 = vmul.f32 %v5097, 0.020408163
  %v5226 = vmul.f32 %v5100, 0.020408163
  %v5227 = vmul.f32 %v5103, 0.020408163
  %v5228 = vmul.f32 %v5106, 0.020408163
  %v5229 = vmul.f32 %v5109, 0.020408163
  %v5230 = vmul.f32 %v5112, 0.020408163
  %v5231 = vmul.f32 %v5115, 0.020408163
  %v5232 = vmul.f32 %v5118, 0.020408163
  %v5233 = vmul.f32 %v5121, 0.020408163
  %v5234 = vmul.f32 %v5124, 0.020408163
  %v5235 = vmul.f32 %v5127, 0.020408163
  %v5236 = vmul.f32 %v5130, 0.020408163
  %v5237 = vmul.f32 %v5133, 0.020408163
  %v5238 = vmul.f32 %v5136, 0.020408163
  %v5239 = vmul.f32 %v5139, 0.020408163
  %v5240 = vmul.f32 %v5142, 0.020408163
  %v5241 = vmul.f32 %v5145, 0.020408163
  %v5242 = vmul.f32 %v5148, 0.020408163
  %v5243 = vmul.f32 %v5151, 0.020408163
  %v5244 = vmul.f32 %v5154, 0.020408163
  %v5245 = vmul.f32 %v5157, 0.020408163
  %v5246 = vmul.f32 %v5160, 0.020408163
  %v5247 = vmul.f32 %v5163, 0.020408163
  %v5248 = vmul.f32 %v5166, 0.020408163
  %v5249 = vmul.f32 %v5169, 0.020408163
  %v5250 = vmul.f32 %v5172, 0.020408163
  %v5251 = vmul.f32 %v5175, 0.020408163
  %v5252 = vmul.f32 %v5178, 0.020408163
  %v5253 = vmul.f32 %v5181, 0.020408163
  %v5254 = vmul.f32 %v5184, 0.020408163
  %v5255 = vmul.f32 %v5187, 0.020408163
  %v5256 = vmul.f32 %v5190, 0.020408163
  %v5257 = vmul.f32 %v5193, 0.020408163
  %v5258 = vmul.f32 %v5196, 0.020408163
  %v5259 = vmul.f32 %v5199, 0.020408163
  %v5260 = vmul.f32 %v5202, 0.020408163
  %v5261 = vmul.f32 %v5205, 0.020408163
  %v5262 = vmul.f32 %v5208, 0.020408163
  %v5263 = vmul.f32 %v5211, 0.020408163
  %v5264 = vmul.f32 %v5214, 0.020408163
  %v5265 = vmul.f32 %v5217, 0.020408163
  %v5266 = vmul.f32 %v4883, %v4883
  %v5267 = vmul.f32 %v4886, %v4886
  %v5268 = vmul.f32 %v4891, %v4891
  %v5269 = vmul.f32 %v4894, %v4894
  %v5270 = vmul.f32 %v4899, %v4899
  %v5271 = vmul.f32 %v4902, %v4902
  %v5272 = vmul.f32 %v4907, %v4907
  %v5273 = vmul.f32 %v4910, %v4910
  %v5274 = vmul.f32 %v4915, %v4915
  %v5275 = vmul.f32 %v4918, %v4918
  %v5276 = vmul.f32 %v4923, %v4923
  %v5277 = vmul.f32 %v4926, %v4926
  %v5278 = vmul.f32 %v4931, %v4931
  %v5279 = vmul.f32 %v4934, %v4934
  %v5280 = vmul.f32 %v4939, %v4939
  %v5281 = vmul.f32 %v4942, %v4942
  %v5282 = vmul.f32 %v4947, %v4947
  %v5283 = vmul.f32 %v4950, %v4950
  %v5284 = vmul.f32 %v4955, %v4955
  %v5285 = vmul.f32 %v4958, %v4958
  %v5286 = vmul.f32 %v4963, %v4963
  %v5287 = vmul.f32 %v4966, %v4966
  %v5288 = vmul.f32 %v4971, %v4971
  %v5289 = vmul.f32 %v4974, %v4974
  %v5290 = vmul.f32 %v4979, %v4979
  %v5291 = vmul.f32 %v4982, %v4982
  %v5292 = vmul.f32 %v4987, %v4987
  %v5293 = vmul.f32 %v4990, %v4990
  %v5294 = vmul.f32 %v4995, %v4995
  %v5295 = vmul.f32 %v4998, %v4998
  %v5296 = vmul.f32 %v5003, %v5003
  %v5297 = vmul.f32 %v5006, %v5006
  %v5298 = vmul.f32 %v5011, %v5011
  %v5299 = vmul.f32 %v5014, %v5014
  %v5300 = vmul.f32 %v5019, %v5019
  %v5301 = vmul.f32 %v5022, %v5022
  %v5302 = vmul.f32 %v5027, %v5027
  %v5303 = vmul.f32 %v5030, %v5030
  %v5304 = vmul.f32 %v5035, %v5035
  %v5305 = vmul.f32 %v5038, %v5038
  %v5306 = vmul.f32 %v5043, %v5043
  %v5307 = vmul.f32 %v5046, %v5046
  %v5308 = vmul.f32 %v5051, %v5051
  %v5309 = vmul.f32 %v5054, %v5054
  %v5310 = vmul.f32 %v5059, %v5059
  %v5311 = vmul.f32 %v5062, %v5062
  %v5312 = vmul.f32 %v5067, %v5067
  %v5313 = vmul.f32 %v5070, %v5070
  %v5314 = vsel %vm5073, %v5266, 0.0
  %5315 = vadd.xlane.f32.xlu0 %v5314
  %v5316 = vpop.xlane.xlu0 %5315
  %v5317 = vsel %vm5073, %v5267, 0.0
  %5318 = vadd.xlane.f32.xlu0 %v5317
  %v5319 = vpop.xlane.xlu0 %5318
  %v5320 = vsel %vm5073, %v5268, 0.0
  %5321 = vadd.xlane.f32.xlu0 %v5320
  %v5322 = vpop.xlane.xlu0 %5321
  %v5323 = vsel %vm5073, %v5269, 0.0
  %5324 = vadd.xlane.f32.xlu0 %v5323
  %v5325 = vpop.xlane.xlu0 %5324
  %v5326 = vsel %vm5073, %v5270, 0.0
  %5327 = vadd.xlane.f32.xlu0 %v5326
  %v5328 = vpop.xlane.xlu0 %5327
  %v5329 = vsel %vm5073, %v5271, 0.0
  %5330 = vadd.xlane.f32.xlu0 %v5329
  %v5331 = vpop.xlane.xlu0 %5330
  %v5332 = vsel %vm5073, %v5272, 0.0
  %5333 = vadd.xlane.f32.xlu0 %v5332
  %v5334 = vpop.xlane.xlu0 %5333
  %v5335 = vsel %vm5073, %v5273, 0.0
  %5336 = vadd.xlane.f32.xlu0 %v5335
  %v5337 = vpop.xlane.xlu0 %5336
  %v5338 = vsel %vm5073, %v5274, 0.0
  %5339 = vadd.xlane.f32.xlu0 %v5338
  %v5340 = vpop.xlane.xlu0 %5339
  %v5341 = vsel %vm5073, %v5275, 0.0
  %5342 = vadd.xlane.f32.xlu0 %v5341
  %v5343 = vpop.xlane.xlu0 %5342
  %v5344 = vsel %vm5073, %v5276, 0.0
  %5345 = vadd.xlane.f32.xlu0 %v5344
  %v5346 = vpop.xlane.xlu0 %5345
  %v5347 = vsel %vm5073, %v5277, 0.0
  %5348 = vadd.xlane.f32.xlu0 %v5347
  %v5349 = vpop.xlane.xlu0 %5348
  %v5350 = vsel %vm5073, %v5278, 0.0
  %5351 = vadd.xlane.f32.xlu0 %v5350
  %v5352 = vpop.xlane.xlu0 %5351
  %v5353 = vsel %vm5073, %v5279, 0.0
  %5354 = vadd.xlane.f32.xlu0 %v5353
  %v5355 = vpop.xlane.xlu0 %5354
  %v5356 = vsel %vm5073, %v5280, 0.0
  %5357 = vadd.xlane.f32.xlu0 %v5356
  %v5358 = vpop.xlane.xlu0 %5357
  %v5359 = vsel %vm5073, %v5281, 0.0
  %5360 = vadd.xlane.f32.xlu0 %v5359
  %v5361 = vpop.xlane.xlu0 %5360
  %v5362 = vsel %vm5073, %v5282, 0.0
  %5363 = vadd.xlane.f32.xlu0 %v5362
  %v5364 = vpop.xlane.xlu0 %5363
  %v5365 = vsel %vm5073, %v5283, 0.0
  %5366 = vadd.xlane.f32.xlu0 %v5365
  %v5367 = vpop.xlane.xlu0 %5366
  %v5368 = vsel %vm5073, %v5284, 0.0
  %5369 = vadd.xlane.f32.xlu0 %v5368
  %v5370 = vpop.xlane.xlu0 %5369
  %v5371 = vsel %vm5073, %v5285, 0.0
  %5372 = vadd.xlane.f32.xlu0 %v5371
  %v5373 = vpop.xlane.xlu0 %5372
  %v5374 = vsel %vm5073, %v5286, 0.0
  %5375 = vadd.xlane.f32.xlu0 %v5374
  %v5376 = vpop.xlane.xlu0 %5375
  %v5377 = vsel %vm5073, %v5287, 0.0
  %5378 = vadd.xlane.f32.xlu0 %v5377
  %v5379 = vpop.xlane.xlu0 %5378
  %v5380 = vsel %vm5073, %v5288, 0.0
  %5381 = vadd.xlane.f32.xlu0 %v5380
  %v5382 = vpop.xlane.xlu0 %5381
  %v5383 = vsel %vm5073, %v5289, 0.0
  %5384 = vadd.xlane.f32.xlu0 %v5383
  %v5385 = vpop.xlane.xlu0 %5384
  %v5386 = vsel %vm5073, %v5290, 0.0
  %5387 = vadd.xlane.f32.xlu0 %v5386
  %v5388 = vpop.xlane.xlu0 %5387
  %v5389 = vsel %vm5073, %v5291, 0.0
  %5390 = vadd.xlane.f32.xlu0 %v5389
  %v5391 = vpop.xlane.xlu0 %5390
  %v5392 = vsel %vm5073, %v5292, 0.0
  %5393 = vadd.xlane.f32.xlu0 %v5392
  %v5394 = vpop.xlane.xlu0 %5393
  %v5395 = vsel %vm5073, %v5293, 0.0
  %5396 = vadd.xlane.f32.xlu0 %v5395
  %v5397 = vpop.xlane.xlu0 %5396
  %v5398 = vsel %vm5073, %v5294, 0.0
  %5399 = vadd.xlane.f32.xlu0 %v5398
  %v5400 = vpop.xlane.xlu0 %5399
  %v5401 = vsel %vm5073, %v5295, 0.0
  %5402 = vadd.xlane.f32.xlu0 %v5401
  %v5403 = vpop.xlane.xlu0 %5402
  %v5404 = vsel %vm5073, %v5296, 0.0
  %5405 = vadd.xlane.f32.xlu0 %v5404
  %v5406 = vpop.xlane.xlu0 %5405
  %v5407 = vsel %vm5073, %v5297, 0.0
  %5408 = vadd.xlane.f32.xlu0 %v5407
  %v5409 = vpop.xlane.xlu0 %5408
  %v5410 = vsel %vm5073, %v5298, 0.0
  %5411 = vadd.xlane.f32.xlu0 %v5410
  %v5412 = vpop.xlane.xlu0 %5411
  %v5413 = vsel %vm5073, %v5299, 0.0
  %5414 = vadd.xlane.f32.xlu0 %v5413
  %v5415 = vpop.xlane.xlu0 %5414
  %v5416 = vsel %vm5073, %v5300, 0.0
  %5417 = vadd.xlane.f32.xlu0 %v5416
  %v5418 = vpop.xlane.xlu0 %5417
  %v5419 = vsel %vm5073, %v5301, 0.0
  %5420 = vadd.xlane.f32.xlu0 %v5419
  %v5421 = vpop.xlane.xlu0 %5420
  %v5422 = vsel %vm5073, %v5302, 0.0
  %5423 = vadd.xlane.f32.xlu0 %v5422
  %v5424 = vpop.xlane.xlu0 %5423
  %v5425 = vsel %vm5073, %v5303, 0.0
  %5426 = vadd.xlane.f32.xlu0 %v5425
  %v5427 = vpop.xlane.xlu0 %5426
  %v5428 = vsel %vm5073, %v5304, 0.0
  %5429 = vadd.xlane.f32.xlu0 %v5428
  %v5430 = vpop.xlane.xlu0 %5429
  %v5431 = vsel %vm5073, %v5305, 0.0
  %5432 = vadd.xlane.f32.xlu0 %v5431
  %v5433 = vpop.xlane.xlu0 %5432
  %v5434 = vsel %vm5073, %v5306, 0.0
  %5435 = vadd.xlane.f32.xlu0 %v5434
  %v5436 = vpop.xlane.xlu0 %5435
  %v5437 = vsel %vm5073, %v5307, 0.0
  %5438 = vadd.xlane.f32.xlu0 %v5437
  %v5439 = vpop.xlane.xlu0 %5438
  %v5440 = vsel %vm5073, %v5308, 0.0
  %5441 = vadd.xlane.f32.xlu0 %v5440
  %v5442 = vpop.xlane.xlu0 %5441
  %v5443 = vsel %vm5073, %v5309, 0.0
  %5444 = vadd.xlane.f32.xlu0 %v5443
  %v5445 = vpop.xlane.xlu0 %5444
  %v5446 = vsel %vm5073, %v5310, 0.0
  %5447 = vadd.xlane.f32.xlu0 %v5446
  %v5448 = vpop.xlane.xlu0 %5447
  %v5449 = vsel %vm5073, %v5311, 0.0
  %5450 = vadd.xlane.f32.xlu0 %v5449
  %v5451 = vpop.xlane.xlu0 %5450
  %v5452 = vsel %vm5073, %v5312, 0.0
  %5453 = vadd.xlane.f32.xlu0 %v5452
  %v5454 = vpop.xlane.xlu0 %5453
  %v5455 = vsel %vm5073, %v5313, 0.0
  %5456 = vadd.xlane.f32.xlu0 %v5455
  %v5457 = vpop.xlane.xlu0 %5456
  %v5458 = vmul.f32 %v5316, 0.020408163
  %v5459 = vmul.f32 %v5319, 0.020408163
  %v5460 = vmul.f32 %v5322, 0.020408163
  %v5461 = vmul.f32 %v5325, 0.020408163
  %v5462 = vmul.f32 %v5328, 0.020408163
  %v5463 = vmul.f32 %v5331, 0.020408163
  %v5464 = vmul.f32 %v5334, 0.020408163
  %v5465 = vmul.f32 %v5337, 0.020408163
  %v5466 = vmul.f32 %v5340, 0.020408163
  %v5467 = vmul.f32 %v5343, 0.020408163
  %v5468 = vmul.f32 %v5346, 0.020408163
  %v5469 = vmul.f32 %v5349, 0.020408163
  %v5470 = vmul.f32 %v5352, 0.020408163
  %v5471 = vmul.f32 %v5355, 0.020408163
  %v5472 = vmul.f32 %v5358, 0.020408163
  %v5473 = vmul.f32 %v5361, 0.020408163
  %v5474 = vmul.f32 %v5364, 0.020408163
  %v5475 = vmul.f32 %v5367, 0.020408163
  %v5476 = vmul.f32 %v5370, 0.020408163
  %v5477 = vmul.f32 %v5373, 0.020408163
  %v5478 = vmul.f32 %v5376, 0.020408163
  %v5479 = vmul.f32 %v5379, 0.020408163
  %v5480 = vmul.f32 %v5382, 0.020408163
  %v5481 = vmul.f32 %v5385, 0.020408163
  %v5482 = vmul.f32 %v5388, 0.020408163
  %v5483 = vmul.f32 %v5391, 0.020408163
  %v5484 = vmul.f32 %v5394, 0.020408163
  %v5485 = vmul.f32 %v5397, 0.020408163
  %v5486 = vmul.f32 %v5400, 0.020408163
  %v5487 = vmul.f32 %v5403, 0.020408163
  %v5488 = vmul.f32 %v5406, 0.020408163
  %v5489 = vmul.f32 %v5409, 0.020408163
  %v5490 = vmul.f32 %v5412, 0.020408163
  %v5491 = vmul.f32 %v5415, 0.020408163
  %v5492 = vmul.f32 %v5418, 0.020408163
  %v5493 = vmul.f32 %v5421, 0.020408163
  %v5494 = vmul.f32 %v5424, 0.020408163
  %v5495 = vmul.f32 %v5427, 0.020408163
  %v5496 = vmul.f32 %v5430, 0.020408163
  %v5497 = vmul.f32 %v5433, 0.020408163
  %v5498 = vmul.f32 %v5436, 0.020408163
  %v5499 = vmul.f32 %v5439, 0.020408163
  %v5500 = vmul.f32 %v5442, 0.020408163
  %v5501 = vmul.f32 %v5445, 0.020408163
  %v5502 = vmul.f32 %v5448, 0.020408163
  %v5503 = vmul.f32 %v5451, 0.020408163
  %v5504 = vmul.f32 %v5454, 0.020408163
  %v5505 = vmul.f32 %v5457, 0.020408163
  %v5506 = vmul.f32 %v5218, %v5218
  %v5507 = vmul.f32 %v5219, %v5219
  %v5508 = vmul.f32 %v5220, %v5220
  %v5509 = vmul.f32 %v5221, %v5221
  %v5510 = vmul.f32 %v5222, %v5222
  %v5511 = vmul.f32 %v5223, %v5223
  %v5512 = vmul.f32 %v5224, %v5224
  %v5513 = vmul.f32 %v5225, %v5225
  %v5514 = vmul.f32 %v5226, %v5226
  %v5515 = vmul.f32 %v5227, %v5227
  %v5516 = vmul.f32 %v5228, %v5228
  %v5517 = vmul.f32 %v5229, %v5229
  %v5518 = vmul.f32 %v5230, %v5230
  %v5519 = vmul.f32 %v5231, %v5231
  %v5520 = vmul.f32 %v5232, %v5232
  %v5521 = vmul.f32 %v5233, %v5233
  %v5522 = vmul.f32 %v5234, %v5234
  %v5523 = vmul.f32 %v5235, %v5235
  %v5524 = vmul.f32 %v5236, %v5236
  %v5525 = vmul.f32 %v5237, %v5237
  %v5526 = vmul.f32 %v5238, %v5238
  %v5527 = vmul.f32 %v5239, %v5239
  %v5528 = vmul.f32 %v5240, %v5240
  %v5529 = vmul.f32 %v5241, %v5241
  %v5530 = vmul.f32 %v5242, %v5242
  %v5531 = vmul.f32 %v5243, %v5243
  %v5532 = vmul.f32 %v5244, %v5244
  %v5533 = vmul.f32 %v5245, %v5245
  %v5534 = vmul.f32 %v5246, %v5246
  %v5535 = vmul.f32 %v5247, %v5247
  %v5536 = vmul.f32 %v5248, %v5248
  %v5537 = vmul.f32 %v5249, %v5249
  %v5538 = vmul.f32 %v5250, %v5250
  %v5539 = vmul.f32 %v5251, %v5251
  %v5540 = vmul.f32 %v5252, %v5252
  %v5541 = vmul.f32 %v5253, %v5253
  %v5542 = vmul.f32 %v5254, %v5254
  %v5543 = vmul.f32 %v5255, %v5255
  %v5544 = vmul.f32 %v5256, %v5256
  %v5545 = vmul.f32 %v5257, %v5257
  %v5546 = vmul.f32 %v5258, %v5258
  %v5547 = vmul.f32 %v5259, %v5259
  %v5548 = vmul.f32 %v5260, %v5260
  %v5549 = vmul.f32 %v5261, %v5261
  %v5550 = vmul.f32 %v5262, %v5262
  %v5551 = vmul.f32 %v5263, %v5263
  %v5552 = vmul.f32 %v5264, %v5264
  %v5553 = vmul.f32 %v5265, %v5265
  %v5554 = vsub.f32 %v5458, %v5506
  %v5555 = vsub.f32 %v5459, %v5507
  %v5556 = vsub.f32 %v5460, %v5508
  %v5557 = vsub.f32 %v5461, %v5509
  %v5558 = vsub.f32 %v5462, %v5510
  %v5559 = vsub.f32 %v5463, %v5511
  %v5560 = vsub.f32 %v5464, %v5512
  %v5561 = vsub.f32 %v5465, %v5513
  %v5562 = vsub.f32 %v5466, %v5514
  %v5563 = vsub.f32 %v5467, %v5515
  %v5564 = vsub.f32 %v5468, %v5516
  %v5565 = vsub.f32 %v5469, %v5517
  %v5566 = vsub.f32 %v5470, %v5518
  %v5567 = vsub.f32 %v5471, %v5519
  %v5568 = vsub.f32 %v5472, %v5520
  %v5569 = vsub.f32 %v5473, %v5521
  %v5570 = vsub.f32 %v5474, %v5522
  %v5571 = vsub.f32 %v5475, %v5523
  %v5572 = vsub.f32 %v5476, %v5524
  %v5573 = vsub.f32 %v5477, %v5525
  %v5574 = vsub.f32 %v5478, %v5526
  %v5575 = vsub.f32 %v5479, %v5527
  %v5576 = vsub.f32 %v5480, %v5528
  %v5577 = vsub.f32 %v5481, %v5529
  %v5578 = vsub.f32 %v5482, %v5530
  %v5579 = vsub.f32 %v5483, %v5531
  %v5580 = vsub.f32 %v5484, %v5532
  %v5581 = vsub.f32 %v5485, %v5533
  %v5582 = vsub.f32 %v5486, %v5534
  %v5583 = vsub.f32 %v5487, %v5535
  %v5584 = vsub.f32 %v5488, %v5536
  %v5585 = vsub.f32 %v5489, %v5537
  %v5586 = vsub.f32 %v5490, %v5538
  %v5587 = vsub.f32 %v5491, %v5539
  %v5588 = vsub.f32 %v5492, %v5540
  %v5589 = vsub.f32 %v5493, %v5541
  %v5590 = vsub.f32 %v5494, %v5542
  %v5591 = vsub.f32 %v5495, %v5543
  %v5592 = vsub.f32 %v5496, %v5544
  %v5593 = vsub.f32 %v5497, %v5545
  %v5594 = vsub.f32 %v5498, %v5546
  %v5595 = vsub.f32 %v5499, %v5547
  %v5596 = vsub.f32 %v5500, %v5548
  %v5597 = vsub.f32 %v5501, %v5549
  %v5598 = vsub.f32 %v5502, %v5550
  %v5599 = vsub.f32 %v5503, %v5551
  %v5600 = vsub.f32 %v5504, %v5552
  %v5601 = vsub.f32 %v5505, %v5553
  %v5602 = vmax.f32 %v5554, 0.0
  %v5603 = vmax.f32 %v5555, 0.0
  %v5604 = vmax.f32 %v5556, 0.0
  %v5605 = vmax.f32 %v5557, 0.0
  %v5606 = vmax.f32 %v5558, 0.0
  %v5607 = vmax.f32 %v5559, 0.0
  %v5608 = vmax.f32 %v5560, 0.0
  %v5609 = vmax.f32 %v5561, 0.0
  %v5610 = vmax.f32 %v5562, 0.0
  %v5611 = vmax.f32 %v5563, 0.0
  %v5612 = vmax.f32 %v5564, 0.0
  %v5613 = vmax.f32 %v5565, 0.0
  %v5614 = vmax.f32 %v5566, 0.0
  %v5615 = vmax.f32 %v5567, 0.0
  %v5616 = vmax.f32 %v5568, 0.0
  %v5617 = vmax.f32 %v5569, 0.0
  %v5618 = vmax.f32 %v5570, 0.0
  %v5619 = vmax.f32 %v5571, 0.0
  %v5620 = vmax.f32 %v5572, 0.0
  %v5621 = vmax.f32 %v5573, 0.0
  %v5622 = vmax.f32 %v5574, 0.0
  %v5623 = vmax.f32 %v5575, 0.0
  %v5624 = vmax.f32 %v5576, 0.0
  %v5625 = vmax.f32 %v5577, 0.0
  %v5626 = vmax.f32 %v5578, 0.0
  %v5627 = vmax.f32 %v5579, 0.0
  %v5628 = vmax.f32 %v5580, 0.0
  %v5629 = vmax.f32 %v5581, 0.0
  %v5630 = vmax.f32 %v5582, 0.0
  %v5631 = vmax.f32 %v5583, 0.0
  %v5632 = vmax.f32 %v5584, 0.0
  %v5633 = vmax.f32 %v5585, 0.0
  %v5634 = vmax.f32 %v5586, 0.0
  %v5635 = vmax.f32 %v5587, 0.0
  %v5636 = vmax.f32 %v5588, 0.0
  %v5637 = vmax.f32 %v5589, 0.0
  %v5638 = vmax.f32 %v5590, 0.0
  %v5639 = vmax.f32 %v5591, 0.0
  %v5640 = vmax.f32 %v5592, 0.0
  %v5641 = vmax.f32 %v5593, 0.0
  %v5642 = vmax.f32 %v5594, 0.0
  %v5643 = vmax.f32 %v5595, 0.0
  %v5644 = vmax.f32 %v5596, 0.0
  %v5645 = vmax.f32 %v5597, 0.0
  %v5646 = vmax.f32 %v5598, 0.0
  %v5647 = vmax.f32 %v5599, 0.0
  %v5648 = vmax.f32 %v5600, 0.0
  %v5649 = vmax.f32 %v5601, 0.0
  %v5650 = vadd.f32 %v5602, 1e-05
  %v5651 = vadd.f32 %v5603, 1e-05
  %v5652 = vadd.f32 %v5604, 1e-05
  %v5653 = vadd.f32 %v5605, 1e-05
  %v5654 = vadd.f32 %v5606, 1e-05
  %v5655 = vadd.f32 %v5607, 1e-05
  %v5656 = vadd.f32 %v5608, 1e-05
  %v5657 = vadd.f32 %v5609, 1e-05
  %v5658 = vadd.f32 %v5610, 1e-05
  %v5659 = vadd.f32 %v5611, 1e-05
  %v5660 = vadd.f32 %v5612, 1e-05
  %v5661 = vadd.f32 %v5613, 1e-05
  %v5662 = vadd.f32 %v5614, 1e-05
  %v5663 = vadd.f32 %v5615, 1e-05
  %v5664 = vadd.f32 %v5616, 1e-05
  %v5665 = vadd.f32 %v5617, 1e-05
  %v5666 = vadd.f32 %v5618, 1e-05
  %v5667 = vadd.f32 %v5619, 1e-05
  %v5668 = vadd.f32 %v5620, 1e-05
  %v5669 = vadd.f32 %v5621, 1e-05
  %v5670 = vadd.f32 %v5622, 1e-05
  %v5671 = vadd.f32 %v5623, 1e-05
  %v5672 = vadd.f32 %v5624, 1e-05
  %v5673 = vadd.f32 %v5625, 1e-05
  %v5674 = vadd.f32 %v5626, 1e-05
  %v5675 = vadd.f32 %v5627, 1e-05
  %v5676 = vadd.f32 %v5628, 1e-05
  %v5677 = vadd.f32 %v5629, 1e-05
  %v5678 = vadd.f32 %v5630, 1e-05
  %v5679 = vadd.f32 %v5631, 1e-05
  %v5680 = vadd.f32 %v5632, 1e-05
  %v5681 = vadd.f32 %v5633, 1e-05
  %v5682 = vadd.f32 %v5634, 1e-05
  %v5683 = vadd.f32 %v5635, 1e-05
  %v5684 = vadd.f32 %v5636, 1e-05
  %v5685 = vadd.f32 %v5637, 1e-05
  %v5686 = vadd.f32 %v5638, 1e-05
  %v5687 = vadd.f32 %v5639, 1e-05
  %v5688 = vadd.f32 %v5640, 1e-05
  %v5689 = vadd.f32 %v5641, 1e-05
  %v5690 = vadd.f32 %v5642, 1e-05
  %v5691 = vadd.f32 %v5643, 1e-05
  %v5692 = vadd.f32 %v5644, 1e-05
  %v5693 = vadd.f32 %v5645, 1e-05
  %v5694 = vadd.f32 %v5646, 1e-05
  %v5695 = vadd.f32 %v5647, 1e-05
  %v5696 = vadd.f32 %v5648, 1e-05
  %v5697 = vadd.f32 %v5649, 1e-05
  %v5698 = vrsqrt.pop %v5650
  %v5699 = vrsqrt.pop %v5651
  %v5700 = vrsqrt.pop %v5652
  %v5701 = vrsqrt.pop %v5653
  %v5702 = vrsqrt.pop %v5654
  %v5703 = vrsqrt.pop %v5655
  %v5704 = vrsqrt.pop %v5656
  %v5705 = vrsqrt.pop %v5657
  %v5706 = vrsqrt.pop %v5658
  %v5707 = vrsqrt.pop %v5659
  %v5708 = vrsqrt.pop %v5660
  %v5709 = vrsqrt.pop %v5661
  %v5710 = vrsqrt.pop %v5662
  %v5711 = vrsqrt.pop %v5663
  %v5712 = vrsqrt.pop %v5664
  %v5713 = vrsqrt.pop %v5665
  %v5714 = vrsqrt.pop %v5666
  %v5715 = vrsqrt.pop %v5667
  %v5716 = vrsqrt.pop %v5668
  %v5717 = vrsqrt.pop %v5669
  %v5718 = vrsqrt.pop %v5670
  %v5719 = vrsqrt.pop %v5671
  %v5720 = vrsqrt.pop %v5672
  %v5721 = vrsqrt.pop %v5673
  %v5722 = vrsqrt.pop %v5674
  %v5723 = vrsqrt.pop %v5675
  %v5724 = vrsqrt.pop %v5676
  %v5725 = vrsqrt.pop %v5677
  %v5726 = vrsqrt.pop %v5678
  %v5727 = vrsqrt.pop %v5679
  %v5728 = vrsqrt.pop %v5680
  %v5729 = vrsqrt.pop %v5681
  %v5730 = vrsqrt.pop %v5682
  %v5731 = vrsqrt.pop %v5683
  %v5732 = vrsqrt.pop %v5684
  %v5733 = vrsqrt.pop %v5685
  %v5734 = vrsqrt.pop %v5686
  %v5735 = vrsqrt.pop %v5687
  %v5736 = vrsqrt.pop %v5688
  %v5737 = vrsqrt.pop %v5689
  %v5738 = vrsqrt.pop %v5690
  %v5739 = vrsqrt.pop %v5691
  %v5740 = vrsqrt.pop %v5692
  %v5741 = vrsqrt.pop %v5693
  %v5742 = vrsqrt.pop %v5694
  %v5743 = vrsqrt.pop %v5695
  %v5744 = vrsqrt.pop %v5696
  %v5745 = vrsqrt.pop %v5697
  %v5746 = vsub.f32 %v4883, %v5218
  %v5747 = vsub.f32 %v4886, %v5219
  %v5748 = vsub.f32 %v4891, %v5220
  %v5749 = vsub.f32 %v4894, %v5221
  %v5750 = vsub.f32 %v4899, %v5222
  %v5751 = vsub.f32 %v4902, %v5223
  %v5752 = vsub.f32 %v4907, %v5224
  %v5753 = vsub.f32 %v4910, %v5225
  %v5754 = vsub.f32 %v4915, %v5226
  %v5755 = vsub.f32 %v4918, %v5227
  %v5756 = vsub.f32 %v4923, %v5228
  %v5757 = vsub.f32 %v4926, %v5229
  %v5758 = vsub.f32 %v4931, %v5230
  %v5759 = vsub.f32 %v4934, %v5231
  %v5760 = vsub.f32 %v4939, %v5232
  %v5761 = vsub.f32 %v4942, %v5233
  %v5762 = vsub.f32 %v4947, %v5234
  %v5763 = vsub.f32 %v4950, %v5235
  %v5764 = vsub.f32 %v4955, %v5236
  %v5765 = vsub.f32 %v4958, %v5237
  %v5766 = vsub.f32 %v4963, %v5238
  %v5767 = vsub.f32 %v4966, %v5239
  %v5768 = vsub.f32 %v4971, %v5240
  %v5769 = vsub.f32 %v4974, %v5241
  %v5770 = vsub.f32 %v4979, %v5242
  %v5771 = vsub.f32 %v4982, %v5243
  %v5772 = vsub.f32 %v4987, %v5244
  %v5773 = vsub.f32 %v4990, %v5245
  %v5774 = vsub.f32 %v4995, %v5246
  %v5775 = vsub.f32 %v4998, %v5247
  %v5776 = vsub.f32 %v5003, %v5248
  %v5777 = vsub.f32 %v5006, %v5249
  %v5778 = vsub.f32 %v5011, %v5250
  %v5779 = vsub.f32 %v5014, %v5251
  %v5780 = vsub.f32 %v5019, %v5252
  %v5781 = vsub.f32 %v5022, %v5253
  %v5782 = vsub.f32 %v5027, %v5254
  %v5783 = vsub.f32 %v5030, %v5255
  %v5784 = vsub.f32 %v5035, %v5256
  %v5785 = vsub.f32 %v5038, %v5257
  %v5786 = vsub.f32 %v5043, %v5258
  %v5787 = vsub.f32 %v5046, %v5259
  %v5788 = vsub.f32 %v5051, %v5260
  %v5789 = vsub.f32 %v5054, %v5261
  %v5790 = vsub.f32 %v5059, %v5262
  %v5791 = vsub.f32 %v5062, %v5263
  %v5792 = vsub.f32 %v5067, %v5264
  %v5793 = vsub.f32 %v5070, %v5265
  %v5794 = vld [vmem:[%s2] sm:$0xff]
  %v5795 = vld [vmem:[%s2 + $0x8] sm:$0xff]
  %v5796 = vld [vmem:[%s2 + $0x10] sm:$0xff]
  %v5797 = vld [vmem:[%s2 + $0x18] sm:$0xff]
  %v5798 = vld [vmem:[%s2 + $0x20] sm:$0xff]
  %v5799 = vld [vmem:[%s2 + $0x28] sm:$0xff]
  %v5800 = vld [vmem:[%s2 + $0x30] sm:$0xff]
  %v5801 = vld [vmem:[%s2 + $0x38] sm:$0xff]
  %v5802 = vld [vmem:[%s2 + $0x40] sm:$0xff]
  %v5803 = vld [vmem:[%s2 + $0x48] sm:$0xff]
  %v5804 = vld [vmem:[%s2 + $0x50] sm:$0xff]
  %v5805 = vld [vmem:[%s2 + $0x58] sm:$0xff]
  %v5806 = vld [vmem:[%s2 + $0x60] sm:$0xff]
  %v5807 = vld [vmem:[%s2 + $0x68] sm:$0xff]
  %v5808 = vld [vmem:[%s2 + $0x70] sm:$0xff]
  %v5809 = vld [vmem:[%s2 + $0x78] sm:$0xff]
  %v5810 = vld [vmem:[%s2 + $0x80] sm:$0xff]
  %v5811 = vld [vmem:[%s2 + $0x88] sm:$0xff]
  %v5812 = vld [vmem:[%s2 + $0x90] sm:$0xff]
  %v5813 = vld [vmem:[%s2 + $0x98] sm:$0xff]
  %v5814 = vld [vmem:[%s2 + $0xa0] sm:$0xff]
  %v5815 = vld [vmem:[%s2 + $0xa8] sm:$0xff]
  %v5816 = vld [vmem:[%s2 + $0xb0] sm:$0xff]
  %v5817 = vld [vmem:[%s2 + $0xb8] sm:$0xff]
  %v5818 = vld [vmem:[%s2 + $0xc0] sm:$0xff]
  %v5819 = vld [vmem:[%s2 + $0xc8] sm:$0xff]
  %v5820 = vld [vmem:[%s2 + $0xd0] sm:$0xff]
  %v5821 = vld [vmem:[%s2 + $0xd8] sm:$0xff]
  %v5822 = vld [vmem:[%s2 + $0xe0] sm:$0xff]
  %v5823 = vld [vmem:[%s2 + $0xe8] sm:$0xff]
  %v5824 = vld [vmem:[%s2 + $0xf0] sm:$0xff]
  %v5825 = vld [vmem:[%s2 + $0xf8] sm:$0xff]
  %v5826 = vld [vmem:[%s2 + $0x100] sm:$0xff]
  %v5827 = vld [vmem:[%s2 + $0x108] sm:$0xff]
  %v5828 = vld [vmem:[%s2 + $0x110] sm:$0xff]
  %v5829 = vld [vmem:[%s2 + $0x118] sm:$0xff]
  %v5830 = vld [vmem:[%s2 + $0x120] sm:$0xff]
  %v5831 = vld [vmem:[%s2 + $0x128] sm:$0xff]
  %v5832 = vld [vmem:[%s2 + $0x130] sm:$0xff]
  %v5833 = vld [vmem:[%s2 + $0x138] sm:$0xff]
  %v5834 = vld [vmem:[%s2 + $0x140] sm:$0xff]
  %v5835 = vld [vmem:[%s2 + $0x148] sm:$0xff]
  %v5836 = vld [vmem:[%s2 + $0x150] sm:$0xff]
  %v5837 = vld [vmem:[%s2 + $0x158] sm:$0xff]
  %v5838 = vld [vmem:[%s2 + $0x160] sm:$0xff]
  %v5839 = vld [vmem:[%s2 + $0x168] sm:$0xff]
  %v5840 = vld [vmem:[%s2 + $0x170] sm:$0xff]
  %v5841 = vld [vmem:[%s2 + $0x178] sm:$0xff]
  %v5842 = vmul.f32 %v5698, %v5794
  %v5843 = vmul.f32 %v5699, %v5795
  %v5844 = vmul.f32 %v5700, %v5796
  %v5845 = vmul.f32 %v5701, %v5797
  %v5846 = vmul.f32 %v5702, %v5798
  %v5847 = vmul.f32 %v5703, %v5799
  %v5848 = vmul.f32 %v5704, %v5800
  %v5849 = vmul.f32 %v5705, %v5801
  %v5850 = vmul.f32 %v5706, %v5802
  %v5851 = vmul.f32 %v5707, %v5803
  %v5852 = vmul.f32 %v5708, %v5804
  %v5853 = vmul.f32 %v5709, %v5805
  %v5854 = vmul.f32 %v5710, %v5806
  %v5855 = vmul.f32 %v5711, %v5807
  %v5856 = vmul.f32 %v5712, %v5808
  %v5857 = vmul.f32 %v5713, %v5809
  %v5858 = vmul.f32 %v5714, %v5810
  %v5859 = vmul.f32 %v5715, %v5811
  %v5860 = vmul.f32 %v5716, %v5812
  %v5861 = vmul.f32 %v5717, %v5813
  %v5862 = vmul.f32 %v5718, %v5814
  %v5863 = vmul.f32 %v5719, %v5815
  %v5864 = vmul.f32 %v5720, %v5816
  %v5865 = vmul.f32 %v5721, %v5817
  %v5866 = vmul.f32 %v5722, %v5818
  %v5867 = vmul.f32 %v5723, %v5819
  %v5868 = vmul.f32 %v5724, %v5820
  %v5869 = vmul.f32 %v5725, %v5821
  %v5870 = vmul.f32 %v5726, %v5822
  %v5871 = vmul.f32 %v5727, %v5823
  %v5872 = vmul.f32 %v5728, %v5824
  %v5873 = vmul.f32 %v5729, %v5825
  %v5874 = vmul.f32 %v5730, %v5826
  %v5875 = vmul.f32 %v5731, %v5827
  %v5876 = vmul.f32 %v5732, %v5828
  %v5877 = vmul.f32 %v5733, %v5829
  %v5878 = vmul.f32 %v5734, %v5830
  %v5879 = vmul.f32 %v5735, %v5831
  %v5880 = vmul.f32 %v5736, %v5832
  %v5881 = vmul.f32 %v5737, %v5833
  %v5882 = vmul.f32 %v5738, %v5834
  %v5883 = vmul.f32 %v5739, %v5835
  %v5884 = vmul.f32 %v5740, %v5836
  %v5885 = vmul.f32 %v5741, %v5837
  %v5886 = vmul.f32 %v5742, %v5838
  %v5887 = vmul.f32 %v5743, %v5839
  %v5888 = vmul.f32 %v5744, %v5840
  %v5889 = vmul.f32 %v5745, %v5841
  %5891 = vset.pattern.permute.xlu0 0
  %5892 = vperm.xlu0 %5891, %v5842
  %v5893 = vpop.permute.xlu0 %5892
  %5896 = vset.pattern.permute.xlu0 0
  %5897 = vperm.xlu0 %5896, %v5843
  %v5898 = vpop.permute.xlu0 %5897
  %5901 = vset.pattern.permute.xlu0 0
  %5902 = vperm.xlu0 %5901, %v5844
  %v5903 = vpop.permute.xlu0 %5902
  %5906 = vset.pattern.permute.xlu0 0
  %5907 = vperm.xlu0 %5906, %v5845
  %v5908 = vpop.permute.xlu0 %5907
  %5911 = vset.pattern.permute.xlu0 0
  %5912 = vperm.xlu0 %5911, %v5846
  %v5913 = vpop.permute.xlu0 %5912
  %5916 = vset.pattern.permute.xlu0 0
  %5917 = vperm.xlu0 %5916, %v5847
  %v5918 = vpop.permute.xlu0 %5917
  %5921 = vset.pattern.permute.xlu0 0
  %5922 = vperm.xlu0 %5921, %v5848
  %v5923 = vpop.permute.xlu0 %5922
  %5926 = vset.pattern.permute.xlu0 0
  %5927 = vperm.xlu0 %5926, %v5849
  %v5928 = vpop.permute.xlu0 %5927
  %5931 = vset.pattern.permute.xlu0 0
  %5932 = vperm.xlu0 %5931, %v5850
  %v5933 = vpop.permute.xlu0 %5932
  %5936 = vset.pattern.permute.xlu0 0
  %5937 = vperm.xlu0 %5936, %v5851
  %v5938 = vpop.permute.xlu0 %5937
  %5941 = vset.pattern.permute.xlu0 0
  %5942 = vperm.xlu0 %5941, %v5852
  %v5943 = vpop.permute.xlu0 %5942
  %5946 = vset.pattern.permute.xlu0 0
  %5947 = vperm.xlu0 %5946, %v5853
  %v5948 = vpop.permute.xlu0 %5947
  %5951 = vset.pattern.permute.xlu0 0
  %5952 = vperm.xlu0 %5951, %v5854
  %v5953 = vpop.permute.xlu0 %5952
  %5956 = vset.pattern.permute.xlu0 0
  %5957 = vperm.xlu0 %5956, %v5855
  %v5958 = vpop.permute.xlu0 %5957
  %5961 = vset.pattern.permute.xlu0 0
  %5962 = vperm.xlu0 %5961, %v5856
  %v5963 = vpop.permute.xlu0 %5962
  %5966 = vset.pattern.permute.xlu0 0
  %5967 = vperm.xlu0 %5966, %v5857
  %v5968 = vpop.permute.xlu0 %5967
  %5971 = vset.pattern.permute.xlu0 0
  %5972 = vperm.xlu0 %5971, %v5858
  %v5973 = vpop.permute.xlu0 %5972
  %5976 = vset.pattern.permute.xlu0 0
  %5977 = vperm.xlu0 %5976, %v5859
  %v5978 = vpop.permute.xlu0 %5977
  %5981 = vset.pattern.permute.xlu0 0
  %5982 = vperm.xlu0 %5981, %v5860
  %v5983 = vpop.permute.xlu0 %5982
  %5986 = vset.pattern.permute.xlu0 0
  %5987 = vperm.xlu0 %5986, %v5861
  %v5988 = vpop.permute.xlu0 %5987
  %5991 = vset.pattern.permute.xlu0 0
  %5992 = vperm.xlu0 %5991, %v5862
  %v5993 = vpop.permute.xlu0 %5992
  %5996 = vset.pattern.permute.xlu0 0
  %5997 = vperm.xlu0 %5996, %v5863
  %v5998 = vpop.permute.xlu0 %5997
  %6001 = vset.pattern.permute.xlu0 0
  %6002 = vperm.xlu0 %6001, %v5864
  %v6003 = vpop.permute.xlu0 %6002
  %6006 = vset.pattern.permute.xlu0 0
  %6007 = vperm.xlu0 %6006, %v5865
  %v6008 = vpop.permute.xlu0 %6007
  %6011 = vset.pattern.permute.xlu0 0
  %6012 = vperm.xlu0 %6011, %v5866
  %v6013 = vpop.permute.xlu0 %6012
  %6016 = vset.pattern.permute.xlu0 0
  %6017 = vperm.xlu0 %6016, %v5867
  %v6018 = vpop.permute.xlu0 %6017
  %6021 = vset.pattern.permute.xlu0 0
  %6022 = vperm.xlu0 %6021, %v5868
  %v6023 = vpop.permute.xlu0 %6022
  %6026 = vset.pattern.permute.xlu0 0
  %6027 = vperm.xlu0 %6026, %v5869
  %v6028 = vpop.permute.xlu0 %6027
  %6031 = vset.pattern.permute.xlu0 0
  %6032 = vperm.xlu0 %6031, %v5870
  %v6033 = vpop.permute.xlu0 %6032
  %6036 = vset.pattern.permute.xlu0 0
  %6037 = vperm.xlu0 %6036, %v5871
  %v6038 = vpop.permute.xlu0 %6037
  %6041 = vset.pattern.permute.xlu0 0
  %6042 = vperm.xlu0 %6041, %v5872
  %v6043 = vpop.permute.xlu0 %6042
  %6046 = vset.pattern.permute.xlu0 0
  %6047 = vperm.xlu0 %6046, %v5873
  %v6048 = vpop.permute.xlu0 %6047
  %6051 = vset.pattern.permute.xlu0 0
  %6052 = vperm.xlu0 %6051, %v5874
  %v6053 = vpop.permute.xlu0 %6052
  %6056 = vset.pattern.permute.xlu0 0
  %6057 = vperm.xlu0 %6056, %v5875
  %v6058 = vpop.permute.xlu0 %6057
  %6061 = vset.pattern.permute.xlu0 0
  %6062 = vperm.xlu0 %6061, %v5876
  %v6063 = vpop.permute.xlu0 %6062
  %6066 = vset.pattern.permute.xlu0 0
  %6067 = vperm.xlu0 %6066, %v5877
  %v6068 = vpop.permute.xlu0 %6067
  %6071 = vset.pattern.permute.xlu0 0
  %6072 = vperm.xlu0 %6071, %v5878
  %v6073 = vpop.permute.xlu0 %6072
  %6076 = vset.pattern.permute.xlu0 0
  %6077 = vperm.xlu0 %6076, %v5879
  %v6078 = vpop.permute.xlu0 %6077
  %6081 = vset.pattern.permute.xlu0 0
  %6082 = vperm.xlu0 %6081, %v5880
  %v6083 = vpop.permute.xlu0 %6082
  %6086 = vset.pattern.permute.xlu0 0
  %6087 = vperm.xlu0 %6086, %v5881
  %v6088 = vpop.permute.xlu0 %6087
  %6091 = vset.pattern.permute.xlu0 0
  %6092 = vperm.xlu0 %6091, %v5882
  %v6093 = vpop.permute.xlu0 %6092
  %6096 = vset.pattern.permute.xlu0 0
  %6097 = vperm.xlu0 %6096, %v5883
  %v6098 = vpop.permute.xlu0 %6097
  %6101 = vset.pattern.permute.xlu0 0
  %6102 = vperm.xlu0 %6101, %v5884
  %v6103 = vpop.permute.xlu0 %6102
  %6106 = vset.pattern.permute.xlu0 0
  %6107 = vperm.xlu0 %6106, %v5885
  %v6108 = vpop.permute.xlu0 %6107
  %6111 = vset.pattern.permute.xlu0 0
  %6112 = vperm.xlu0 %6111, %v5886
  %v6113 = vpop.permute.xlu0 %6112
  %6116 = vset.pattern.permute.xlu0 0
  %6117 = vperm.xlu0 %6116, %v5887
  %v6118 = vpop.permute.xlu0 %6117
  %6121 = vset.pattern.permute.xlu0 0
  %6122 = vperm.xlu0 %6121, %v5888
  %v6123 = vpop.permute.xlu0 %6122
  %6126 = vset.pattern.permute.xlu0 0
  %6127 = vperm.xlu0 %6126, %v5889
  %v6128 = vpop.permute.xlu0 %6127
  %v6130 = vmul.f32 %v5746, %v5893
  %v6131 = vmul.f32 %v5747, %v5898
  %v6132 = vmul.f32 %v5748, %v5903
  %v6133 = vmul.f32 %v5749, %v5908
  %v6134 = vmul.f32 %v5750, %v5913
  %v6135 = vmul.f32 %v5751, %v5918
  %v6136 = vmul.f32 %v5752, %v5923
  %v6137 = vmul.f32 %v5753, %v5928
  %v6138 = vmul.f32 %v5754, %v5933
  %v6139 = vmul.f32 %v5755, %v5938
  %v6140 = vmul.f32 %v5756, %v5943
  %v6141 = vmul.f32 %v5757, %v5948
  %v6142 = vmul.f32 %v5758, %v5953
  %v6143 = vmul.f32 %v5759, %v5958
  %v6144 = vmul.f32 %v5760, %v5963
  %v6145 = vmul.f32 %v5761, %v5968
  %v6146 = vmul.f32 %v5762, %v5973
  %v6147 = vmul.f32 %v5763, %v5978
  %v6148 = vmul.f32 %v5764, %v5983
  %v6149 = vmul.f32 %v5765, %v5988
  %v6150 = vmul.f32 %v5766, %v5993
  %v6151 = vmul.f32 %v5767, %v5998
  %v6152 = vmul.f32 %v5768, %v6003
  %v6153 = vmul.f32 %v5769, %v6008
  %v6154 = vmul.f32 %v5770, %v6013
  %v6155 = vmul.f32 %v5771, %v6018
  %v6156 = vmul.f32 %v5772, %v6023
  %v6157 = vmul.f32 %v5773, %v6028
  %v6158 = vmul.f32 %v5774, %v6033
  %v6159 = vmul.f32 %v5775, %v6038
  %v6160 = vmul.f32 %v5776, %v6043
  %v6161 = vmul.f32 %v5777, %v6048
  %v6162 = vmul.f32 %v5778, %v6053
  %v6163 = vmul.f32 %v5779, %v6058
  %v6164 = vmul.f32 %v5780, %v6063
  %v6165 = vmul.f32 %v5781, %v6068
  %v6166 = vmul.f32 %v5782, %v6073
  %v6167 = vmul.f32 %v5783, %v6078
  %v6168 = vmul.f32 %v5784, %v6083
  %v6169 = vmul.f32 %v5785, %v6088
  %v6170 = vmul.f32 %v5786, %v6093
  %v6171 = vmul.f32 %v5787, %v6098
  %v6172 = vmul.f32 %v5788, %v6103
  %v6173 = vmul.f32 %v5789, %v6108
  %v6174 = vmul.f32 %v5790, %v6113
  %v6175 = vmul.f32 %v5791, %v6118
  %v6176 = vmul.f32 %v5792, %v6123
  %v6177 = vmul.f32 %v5793, %v6128
  %v6178 = vld [vmem:[%s3] sm:$0xff]
  %v6179 = vld [vmem:[%s3 + $0x8] sm:$0xff]
  %v6180 = vld [vmem:[%s3 + $0x10] sm:$0xff]
  %v6181 = vld [vmem:[%s3 + $0x18] sm:$0xff]
  %v6182 = vld [vmem:[%s3 + $0x20] sm:$0xff]
  %v6183 = vld [vmem:[%s3 + $0x28] sm:$0xff]
  %v6184 = vld [vmem:[%s3 + $0x30] sm:$0xff]
  %v6185 = vld [vmem:[%s3 + $0x38] sm:$0xff]
  %v6186 = vld [vmem:[%s3 + $0x40] sm:$0xff]
  %v6187 = vld [vmem:[%s3 + $0x48] sm:$0xff]
  %v6188 = vld [vmem:[%s3 + $0x50] sm:$0xff]
  %v6189 = vld [vmem:[%s3 + $0x58] sm:$0xff]
  %v6190 = vld [vmem:[%s3 + $0x60] sm:$0xff]
  %v6191 = vld [vmem:[%s3 + $0x68] sm:$0xff]
  %v6192 = vld [vmem:[%s3 + $0x70] sm:$0xff]
  %v6193 = vld [vmem:[%s3 + $0x78] sm:$0xff]
  %v6194 = vld [vmem:[%s3 + $0x80] sm:$0xff]
  %v6195 = vld [vmem:[%s3 + $0x88] sm:$0xff]
  %v6196 = vld [vmem:[%s3 + $0x90] sm:$0xff]
  %v6197 = vld [vmem:[%s3 + $0x98] sm:$0xff]
  %v6198 = vld [vmem:[%s3 + $0xa0] sm:$0xff]
  %v6199 = vld [vmem:[%s3 + $0xa8] sm:$0xff]
  %v6200 = vld [vmem:[%s3 + $0xb0] sm:$0xff]
  %v6201 = vld [vmem:[%s3 + $0xb8] sm:$0xff]
  %v6202 = vld [vmem:[%s3 + $0xc0] sm:$0xff]
  %v6203 = vld [vmem:[%s3 + $0xc8] sm:$0xff]
  %v6204 = vld [vmem:[%s3 + $0xd0] sm:$0xff]
  %v6205 = vld [vmem:[%s3 + $0xd8] sm:$0xff]
  %v6206 = vld [vmem:[%s3 + $0xe0] sm:$0xff]
  %v6207 = vld [vmem:[%s3 + $0xe8] sm:$0xff]
  %v6208 = vld [vmem:[%s3 + $0xf0] sm:$0xff]
  %v6209 = vld [vmem:[%s3 + $0xf8] sm:$0xff]
  %v6210 = vld [vmem:[%s3 + $0x100] sm:$0xff]
  %v6211 = vld [vmem:[%s3 + $0x108] sm:$0xff]
  %v6212 = vld [vmem:[%s3 + $0x110] sm:$0xff]
  %v6213 = vld [vmem:[%s3 + $0x118] sm:$0xff]
  %v6214 = vld [vmem:[%s3 + $0x120] sm:$0xff]
  %v6215 = vld [vmem:[%s3 + $0x128] sm:$0xff]
  %v6216 = vld [vmem:[%s3 + $0x130] sm:$0xff]
  %v6217 = vld [vmem:[%s3 + $0x138] sm:$0xff]
  %v6218 = vld [vmem:[%s3 + $0x140] sm:$0xff]
  %v6219 = vld [vmem:[%s3 + $0x148] sm:$0xff]
  %v6220 = vld [vmem:[%s3 + $0x150] sm:$0xff]
  %v6221 = vld [vmem:[%s3 + $0x158] sm:$0xff]
  %v6222 = vld [vmem:[%s3 + $0x160] sm:$0xff]
  %v6223 = vld [vmem:[%s3 + $0x168] sm:$0xff]
  %v6224 = vld [vmem:[%s3 + $0x170] sm:$0xff]
  %v6225 = vld [vmem:[%s3 + $0x178] sm:$0xff]
  %6227 = vset.pattern.permute.xlu0 0
  %6228 = vperm.xlu0 %6227, %v6178
  %v6229 = vpop.permute.xlu0 %6228
  %6232 = vset.pattern.permute.xlu0 0
  %6233 = vperm.xlu0 %6232, %v6179
  %v6234 = vpop.permute.xlu0 %6233
  %6237 = vset.pattern.permute.xlu0 0
  %6238 = vperm.xlu0 %6237, %v6180
  %v6239 = vpop.permute.xlu0 %6238
  %6242 = vset.pattern.permute.xlu0 0
  %6243 = vperm.xlu0 %6242, %v6181
  %v6244 = vpop.permute.xlu0 %6243
  %6247 = vset.pattern.permute.xlu0 0
  %6248 = vperm.xlu0 %6247, %v6182
  %v6249 = vpop.permute.xlu0 %6248
  %6252 = vset.pattern.permute.xlu0 0
  %6253 = vperm.xlu0 %6252, %v6183
  %v6254 = vpop.permute.xlu0 %6253
  %6257 = vset.pattern.permute.xlu0 0
  %6258 = vperm.xlu0 %6257, %v6184
  %v6259 = vpop.permute.xlu0 %6258
  %6262 = vset.pattern.permute.xlu0 0
  %6263 = vperm.xlu0 %6262, %v6185
  %v6264 = vpop.permute.xlu0 %6263
  %6267 = vset.pattern.permute.xlu0 0
  %6268 = vperm.xlu0 %6267, %v6186
  %v6269 = vpop.permute.xlu0 %6268
  %6272 = vset.pattern.permute.xlu0 0
  %6273 = vperm.xlu0 %6272, %v6187
  %v6274 = vpop.permute.xlu0 %6273
  %6277 = vset.pattern.permute.xlu0 0
  %6278 = vperm.xlu0 %6277, %v6188
  %v6279 = vpop.permute.xlu0 %6278
  %6282 = vset.pattern.permute.xlu0 0
  %6283 = vperm.xlu0 %6282, %v6189
  %v6284 = vpop.permute.xlu0 %6283
  %6287 = vset.pattern.permute.xlu0 0
  %6288 = vperm.xlu0 %6287, %v6190
  %v6289 = vpop.permute.xlu0 %6288
  %6292 = vset.pattern.permute.xlu0 0
  %6293 = vperm.xlu0 %6292, %v6191
  %v6294 = vpop.permute.xlu0 %6293
  %6297 = vset.pattern.permute.xlu0 0
  %6298 = vperm.xlu0 %6297, %v6192
  %v6299 = vpop.permute.xlu0 %6298
  %6302 = vset.pattern.permute.xlu0 0
  %6303 = vperm.xlu0 %6302, %v6193
  %v6304 = vpop.permute.xlu0 %6303
  %6307 = vset.pattern.permute.xlu0 0
  %6308 = vperm.xlu0 %6307, %v6194
  %v6309 = vpop.permute.xlu0 %6308
  %6312 = vset.pattern.permute.xlu0 0
  %6313 = vperm.xlu0 %6312, %v6195
  %v6314 = vpop.permute.xlu0 %6313
  %6317 = vset.pattern.permute.xlu0 0
  %6318 = vperm.xlu0 %6317, %v6196
  %v6319 = vpop.permute.xlu0 %6318
  %6322 = vset.pattern.permute.xlu0 0
  %6323 = vperm.xlu0 %6322, %v6197
  %v6324 = vpop.permute.xlu0 %6323
  %6327 = vset.pattern.permute.xlu0 0
  %6328 = vperm.xlu0 %6327, %v6198
  %v6329 = vpop.permute.xlu0 %6328
  %6332 = vset.pattern.permute.xlu0 0
  %6333 = vperm.xlu0 %6332, %v6199
  %v6334 = vpop.permute.xlu0 %6333
  %6337 = vset.pattern.permute.xlu0 0
  %6338 = vperm.xlu0 %6337, %v6200
  %v6339 = vpop.permute.xlu0 %6338
  %6342 = vset.pattern.permute.xlu0 0
  %6343 = vperm.xlu0 %6342, %v6201
  %v6344 = vpop.permute.xlu0 %6343
  %6347 = vset.pattern.permute.xlu0 0
  %6348 = vperm.xlu0 %6347, %v6202
  %v6349 = vpop.permute.xlu0 %6348
  %6352 = vset.pattern.permute.xlu0 0
  %6353 = vperm.xlu0 %6352, %v6203
  %v6354 = vpop.permute.xlu0 %6353
  %6357 = vset.pattern.permute.xlu0 0
  %6358 = vperm.xlu0 %6357, %v6204
  %v6359 = vpop.permute.xlu0 %6358
  %6362 = vset.pattern.permute.xlu0 0
  %6363 = vperm.xlu0 %6362, %v6205
  %v6364 = vpop.permute.xlu0 %6363
  %6367 = vset.pattern.permute.xlu0 0
  %6368 = vperm.xlu0 %6367, %v6206
  %v6369 = vpop.permute.xlu0 %6368
  %6372 = vset.pattern.permute.xlu0 0
  %6373 = vperm.xlu0 %6372, %v6207
  %v6374 = vpop.permute.xlu0 %6373
  %6377 = vset.pattern.permute.xlu0 0
  %6378 = vperm.xlu0 %6377, %v6208
  %v6379 = vpop.permute.xlu0 %6378
  %6382 = vset.pattern.permute.xlu0 0
  %6383 = vperm.xlu0 %6382, %v6209
  %v6384 = vpop.permute.xlu0 %6383
  %6387 = vset.pattern.permute.xlu0 0
  %6388 = vperm.xlu0 %6387, %v6210
  %v6389 = vpop.permute.xlu0 %6388
  %6392 = vset.pattern.permute.xlu0 0
  %6393 = vperm.xlu0 %6392, %v6211
  %v6394 = vpop.permute.xlu0 %6393
  %6397 = vset.pattern.permute.xlu0 0
  %6398 = vperm.xlu0 %6397, %v6212
  %v6399 = vpop.permute.xlu0 %6398
  %6402 = vset.pattern.permute.xlu0 0
  %6403 = vperm.xlu0 %6402, %v6213
  %v6404 = vpop.permute.xlu0 %6403
  %6407 = vset.pattern.permute.xlu0 0
  %6408 = vperm.xlu0 %6407, %v6214
  %v6409 = vpop.permute.xlu0 %6408
  %6412 = vset.pattern.permute.xlu0 0
  %6413 = vperm.xlu0 %6412, %v6215
  %v6414 = vpop.permute.xlu0 %6413
  %6417 = vset.pattern.permute.xlu0 0
  %6418 = vperm.xlu0 %6417, %v6216
  %v6419 = vpop.permute.xlu0 %6418
  %6422 = vset.pattern.permute.xlu0 0
  %6423 = vperm.xlu0 %6422, %v6217
  %v6424 = vpop.permute.xlu0 %6423
  %6427 = vset.pattern.permute.xlu0 0
  %6428 = vperm.xlu0 %6427, %v6218
  %v6429 = vpop.permute.xlu0 %6428
  %6432 = vset.pattern.permute.xlu0 0
  %6433 = vperm.xlu0 %6432, %v6219
  %v6434 = vpop.permute.xlu0 %6433
  %6437 = vset.pattern.permute.xlu0 0
  %6438 = vperm.xlu0 %6437, %v6220
  %v6439 = vpop.permute.xlu0 %6438
  %6442 = vset.pattern.permute.xlu0 0
  %6443 = vperm.xlu0 %6442, %v6221
  %v6444 = vpop.permute.xlu0 %6443
  %6447 = vset.pattern.permute.xlu0 0
  %6448 = vperm.xlu0 %6447, %v6222
  %v6449 = vpop.permute.xlu0 %6448
  %6452 = vset.pattern.permute.xlu0 0
  %6453 = vperm.xlu0 %6452, %v6223
  %v6454 = vpop.permute.xlu0 %6453
  %6457 = vset.pattern.permute.xlu0 0
  %6458 = vperm.xlu0 %6457, %v6224
  %v6459 = vpop.permute.xlu0 %6458
  %6462 = vset.pattern.permute.xlu0 0
  %6463 = vperm.xlu0 %6462, %v6225
  %v6464 = vpop.permute.xlu0 %6463
  %v6466 = vadd.f32 %v6130, %v6229
  %v6467 = vadd.f32 %v6131, %v6234
  %v6468 = vadd.f32 %v6132, %v6239
  %v6469 = vadd.f32 %v6133, %v6244
  %v6470 = vadd.f32 %v6134, %v6249
  %v6471 = vadd.f32 %v6135, %v6254
  %v6472 = vadd.f32 %v6136, %v6259
  %v6473 = vadd.f32 %v6137, %v6264
  %v6474 = vadd.f32 %v6138, %v6269
  %v6475 = vadd.f32 %v6139, %v6274
  %v6476 = vadd.f32 %v6140, %v6279
  %v6477 = vadd.f32 %v6141, %v6284
  %v6478 = vadd.f32 %v6142, %v6289
  %v6479 = vadd.f32 %v6143, %v6294
  %v6480 = vadd.f32 %v6144, %v6299
  %v6481 = vadd.f32 %v6145, %v6304
  %v6482 = vadd.f32 %v6146, %v6309
  %v6483 = vadd.f32 %v6147, %v6314
  %v6484 = vadd.f32 %v6148, %v6319
  %v6485 = vadd.f32 %v6149, %v6324
  %v6486 = vadd.f32 %v6150, %v6329
  %v6487 = vadd.f32 %v6151, %v6334
  %v6488 = vadd.f32 %v6152, %v6339
  %v6489 = vadd.f32 %v6153, %v6344
  %v6490 = vadd.f32 %v6154, %v6349
  %v6491 = vadd.f32 %v6155, %v6354
  %v6492 = vadd.f32 %v6156, %v6359
  %v6493 = vadd.f32 %v6157, %v6364
  %v6494 = vadd.f32 %v6158, %v6369
  %v6495 = vadd.f32 %v6159, %v6374
  %v6496 = vadd.f32 %v6160, %v6379
  %v6497 = vadd.f32 %v6161, %v6384
  %v6498 = vadd.f32 %v6162, %v6389
  %v6499 = vadd.f32 %v6163, %v6394
  %v6500 = vadd.f32 %v6164, %v6399
  %v6501 = vadd.f32 %v6165, %v6404
  %v6502 = vadd.f32 %v6166, %v6409
  %v6503 = vadd.f32 %v6167, %v6414
  %v6504 = vadd.f32 %v6168, %v6419
  %v6505 = vadd.f32 %v6169, %v6424
  %v6506 = vadd.f32 %v6170, %v6429
  %v6507 = vadd.f32 %v6171, %v6434
  %v6508 = vadd.f32 %v6172, %v6439
  %v6509 = vadd.f32 %v6173, %v6444
  %v6510 = vadd.f32 %v6174, %v6449
  %v6511 = vadd.f32 %v6175, %v6454
  %v6512 = vadd.f32 %v6176, %v6459
  %v6513 = vadd.f32 %v6177, %v6464
  %v6514 = vld [vmem:[%s4] sm:$0xff]
  %v6515 = vld [vmem:[%s4 + $0x8] sm:$0xff]
  %v6516 = vld [vmem:[%s4 + $0x10] sm:$0xff]
  %v6517 = vld [vmem:[%s4 + $0x18] sm:$0xff]
  %v6518 = vld [vmem:[%s4 + $0x20] sm:$0xff]
  %v6519 = vld [vmem:[%s4 + $0x28] sm:$0xff]
  %v6520 = vld [vmem:[%s4 + $0x30] sm:$0xff]
  %v6521 = vld [vmem:[%s4 + $0x38] sm:$0xff]
  %v6522 = vld [vmem:[%s4 + $0x40] sm:$0xff]
  %v6523 = vld [vmem:[%s4 + $0x48] sm:$0xff]
  %v6524 = vld [vmem:[%s4 + $0x50] sm:$0xff]
  %v6525 = vld [vmem:[%s4 + $0x58] sm:$0xff]
  %v6526 = vld [vmem:[%s4 + $0x60] sm:$0xff]
  %v6527 = vld [vmem:[%s4 + $0x68] sm:$0xff]
  %v6528 = vld [vmem:[%s4 + $0x70] sm:$0xff]
  %v6529 = vld [vmem:[%s4 + $0x78] sm:$0xff]
  %v6530 = vld [vmem:[%s4 + $0x80] sm:$0xff]
  %v6531 = vld [vmem:[%s4 + $0x88] sm:$0xff]
  %v6532 = vld [vmem:[%s4 + $0x90] sm:$0xff]
  %v6533 = vld [vmem:[%s4 + $0x98] sm:$0xff]
  %v6534 = vld [vmem:[%s4 + $0xa0] sm:$0xff]
  %v6535 = vld [vmem:[%s4 + $0xa8] sm:$0xff]
  %v6536 = vld [vmem:[%s4 + $0xb0] sm:$0xff]
  %v6537 = vld [vmem:[%s4 + $0xb8] sm:$0xff]
  %v6538 = vld [vmem:[%s4 + $0xc0] sm:$0xff]
  %v6539 = vld [vmem:[%s4 + $0xc8] sm:$0xff]
  %v6540 = vld [vmem:[%s4 + $0xd0] sm:$0xff]
  %v6541 = vld [vmem:[%s4 + $0xd8] sm:$0xff]
  %v6542 = vld [vmem:[%s4 + $0xe0] sm:$0xff]
  %v6543 = vld [vmem:[%s4 + $0xe8] sm:$0xff]
  %v6544 = vld [vmem:[%s4 + $0xf0] sm:$0xff]
  %v6545 = vld [vmem:[%s4 + $0xf8] sm:$0xff]
  %v6546 = vld [vmem:[%s4 + $0x100] sm:$0xff]
  %v6547 = vld [vmem:[%s4 + $0x108] sm:$0xff]
  %v6548 = vld [vmem:[%s4 + $0x110] sm:$0xff]
  %v6549 = vld [vmem:[%s4 + $0x118] sm:$0xff]
  %v6550 = vld [vmem:[%s4 + $0x120] sm:$0xff]
  %v6551 = vld [vmem:[%s4 + $0x128] sm:$0xff]
  %v6552 = vld [vmem:[%s4 + $0x130] sm:$0xff]
  %v6553 = vld [vmem:[%s4 + $0x138] sm:$0xff]
  %v6554 = vld [vmem:[%s4 + $0x140] sm:$0xff]
  %v6555 = vld [vmem:[%s4 + $0x148] sm:$0xff]
  %v6556 = vld [vmem:[%s4 + $0x150] sm:$0xff]
  %v6557 = vld [vmem:[%s4 + $0x158] sm:$0xff]
  %v6558 = vld [vmem:[%s4 + $0x160] sm:$0xff]
  %v6559 = vld [vmem:[%s4 + $0x168] sm:$0xff]
  %v6560 = vld [vmem:[%s4 + $0x170] sm:$0xff]
  %v6561 = vld [vmem:[%s4 + $0x178] sm:$0xff]
  %v6562 = vadd.f32 %v6466, %v6514
  %v6563 = vadd.f32 %v6467, %v6515
  %v6564 = vadd.f32 %v6468, %v6516
  %v6565 = vadd.f32 %v6469, %v6517
  %v6566 = vadd.f32 %v6470, %v6518
  %v6567 = vadd.f32 %v6471, %v6519
  %v6568 = vadd.f32 %v6472, %v6520
  %v6569 = vadd.f32 %v6473, %v6521
  %v6570 = vadd.f32 %v6474, %v6522
  %v6571 = vadd.f32 %v6475, %v6523
  %v6572 = vadd.f32 %v6476, %v6524
  %v6573 = vadd.f32 %v6477, %v6525
  %v6574 = vadd.f32 %v6478, %v6526
  %v6575 = vadd.f32 %v6479, %v6527
  %v6576 = vadd.f32 %v6480, %v6528
  %v6577 = vadd.f32 %v6481, %v6529
  %v6578 = vadd.f32 %v6482, %v6530
  %v6579 = vadd.f32 %v6483, %v6531
  %v6580 = vadd.f32 %v6484, %v6532
  %v6581 = vadd.f32 %v6485, %v6533
  %v6582 = vadd.f32 %v6486, %v6534
  %v6583 = vadd.f32 %v6487, %v6535
  %v6584 = vadd.f32 %v6488, %v6536
  %v6585 = vadd.f32 %v6489, %v6537
  %v6586 = vadd.f32 %v6490, %v6538
  %v6587 = vadd.f32 %v6491, %v6539
  %v6588 = vadd.f32 %v6492, %v6540
  %v6589 = vadd.f32 %v6493, %v6541
  %v6590 = vadd.f32 %v6494, %v6542
  %v6591 = vadd.f32 %v6495, %v6543
  %v6592 = vadd.f32 %v6496, %v6544
  %v6593 = vadd.f32 %v6497, %v6545
  %v6594 = vadd.f32 %v6498, %v6546
  %v6595 = vadd.f32 %v6499, %v6547
  %v6596 = vadd.f32 %v6500, %v6548
  %v6597 = vadd.f32 %v6501, %v6549
  %v6598 = vadd.f32 %v6502, %v6550
  %v6599 = vadd.f32 %v6503, %v6551
  %v6600 = vadd.f32 %v6504, %v6552
  %v6601 = vadd.f32 %v6505, %v6553
  %v6602 = vadd.f32 %v6506, %v6554
  %v6603 = vadd.f32 %v6507, %v6555
  %v6604 = vadd.f32 %v6508, %v6556
  %v6605 = vadd.f32 %v6509, %v6557
  %v6606 = vadd.f32 %v6510, %v6558
  %v6607 = vadd.f32 %v6511, %v6559
  %v6608 = vadd.f32 %v6512, %v6560
  %v6609 = vadd.f32 %v6513, %v6561
  %v6610 = vld [vmem:[%s5] sm:$0xff]
  %v6611 = vld [vmem:[%s5 + $0x8] sm:$0xf]
  %v6612 = vld [vmem:[%s5 + $0xc] sm:$0xff]
  %v6613 = vld [vmem:[%s5 + $0x14] sm:$0xf]
  %v6614 = vld [vmem:[%s5 + $0x18] sm:$0xff]
  %v6615 = vld [vmem:[%s5 + $0x20] sm:$0xf]
  %v6616 = vld [vmem:[%s5 + $0x24] sm:$0xff]
  %v6617 = vld [vmem:[%s5 + $0x2c] sm:$0xf]
  %v6618 = vld [vmem:[%s5 + $0x30] sm:$0xff]
  %v6619 = vld [vmem:[%s5 + $0x38] sm:$0xf]
  %v6620 = vld [vmem:[%s5 + $0x3c] sm:$0xff]
  %v6621 = vld [vmem:[%s5 + $0x44] sm:$0xf]
  %v6622 = vld [vmem:[%s5 + $0x48] sm:$0xff]
  %v6623 = vld [vmem:[%s5 + $0x50] sm:$0xf]
  %v6624 = vld [vmem:[%s5 + $0x54] sm:$0xff]
  %v6625 = vld [vmem:[%s5 + $0x5c] sm:$0xf]
  %v6626 = vld [vmem:[%s5 + $0x60] sm:$0xff]
  %v6627 = vld [vmem:[%s5 + $0x68] sm:$0xf]
  %v6628 = vld [vmem:[%s5 + $0x6c] sm:$0xff]
  %v6629 = vld [vmem:[%s5 + $0x74] sm:$0xf]
  %v6630 = vld [vmem:[%s5 + $0x78] sm:$0xff]
  %v6631 = vld [vmem:[%s5 + $0x80] sm:$0xf]
  %v6632 = vld [vmem:[%s5 + $0x84] sm:$0xff]
  %v6633 = vld [vmem:[%s5 + $0x8c] sm:$0xf]
  %v6634 = vld [vmem:[%s5 + $0x90] sm:$0xff]
  %v6635 = vld [vmem:[%s5 + $0x98] sm:$0xf]
  %v6636 = vld [vmem:[%s5 + $0x9c] sm:$0xff]
  %v6637 = vld [vmem:[%s5 + $0xa4] sm:$0xf]
  %v6638 = vld [vmem:[%s5 + $0xa8] sm:$0xff]
  %v6639 = vld [vmem:[%s5 + $0xb0] sm:$0xf]
  %v6640 = vld [vmem:[%s5 + $0xb4] sm:$0xff]
  %v6641 = vld [vmem:[%s5 + $0xbc] sm:$0xf]
  %v6642 = vld [vmem:[%s5 + $0xc0] sm:$0xff]
  %v6643 = vld [vmem:[%s5 + $0xc8] sm:$0xf]
  %v6644 = vld [vmem:[%s5 + $0xcc] sm:$0xff]
  %v6645 = vld [vmem:[%s5 + $0xd4] sm:$0xf]
  %v6646 = vld [vmem:[%s5 + $0xd8] sm:$0xff]
  %v6647 = vld [vmem:[%s5 + $0xe0] sm:$0xf]
  %v6648 = vld [vmem:[%s5 + $0xe4] sm:$0xff]
  %v6649 = vld [vmem:[%s5 + $0xec] sm:$0xf]
  %v6650 = vld [vmem:[%s5 + $0xf0] sm:$0xff]
  %v6651 = vld [vmem:[%s5 + $0xf8] sm:$0xf]
  %v6652 = vld [vmem:[%s5 + $0xfc] sm:$0xff]
  %v6653 = vld [vmem:[%s5 + $0x104] sm:$0xf]
  %v6654 = vld [vmem:[%s5 + $0x108] sm:$0xff]
  %v6655 = vld [vmem:[%s5 + $0x110] sm:$0xf]
  %v6656 = vld [vmem:[%s5 + $0x114] sm:$0xff]
  %v6657 = vld [vmem:[%s5 + $0x11c] sm:$0xf]
  %v6658 = vld [vmem:[%s5 + $0x120] sm:$0xff]
  %v6659 = vld [vmem:[%s5 + $0x128] sm:$0xf]
  %v6660 = vld [vmem:[%s5 + $0x12c] sm:$0xff]
  %v6661 = vld [vmem:[%s5 + $0x134] sm:$0xf]
  %v6662 = vld [vmem:[%s5 + $0x138] sm:$0xff]
  %v6663 = vld [vmem:[%s5 + $0x140] sm:$0xf]
  %v6664 = vld [vmem:[%s5 + $0x144] sm:$0xff]
  %v6665 = vld [vmem:[%s5 + $0x14c] sm:$0xf]
  %v6666 = vld [vmem:[%s5 + $0x150] sm:$0xff]
  %v6667 = vld [vmem:[%s5 + $0x158] sm:$0xf]
  %v6668 = vld [vmem:[%s5 + $0x15c] sm:$0xff]
  %v6669 = vld [vmem:[%s5 + $0x164] sm:$0xf]
  %v6670 = vld [vmem:[%s5 + $0x168] sm:$0xff]
  %v6671 = vld [vmem:[%s5 + $0x170] sm:$0xf]
  %v6672 = vld [vmem:[%s5 + $0x174] sm:$0xff]
  %v6673 = vld [vmem:[%s5 + $0x17c] sm:$0xf]
  %v6674 = vld [vmem:[%s5 + $0x180] sm:$0xff]
  %v6675 = vld [vmem:[%s5 + $0x188] sm:$0xf]
  %v6676 = vld [vmem:[%s5 + $0x18c] sm:$0xff]
  %v6677 = vld [vmem:[%s5 + $0x194] sm:$0xf]
  %v6678 = vld [vmem:[%s5 + $0x198] sm:$0xff]
  %v6679 = vld [vmem:[%s5 + $0x1a0] sm:$0xf]
  %v6680 = vld [vmem:[%s5 + $0x1a4] sm:$0xff]
  %v6681 = vld [vmem:[%s5 + $0x1ac] sm:$0xf]
  %v6682 = vld [vmem:[%s5 + $0x1b0] sm:$0xff]
  %v6683 = vld [vmem:[%s5 + $0x1b8] sm:$0xf]
  %v6684 = vld [vmem:[%s5 + $0x1bc] sm:$0xff]
  %v6685 = vld [vmem:[%s5 + $0x1c4] sm:$0xf]
  %v6686 = vld [vmem:[%s5 + $0x1c8] sm:$0xff]
  %v6687 = vld [vmem:[%s5 + $0x1d0] sm:$0xf]
  %v6688 = vld [vmem:[%s5 + $0x1d4] sm:$0xff]
  %v6689 = vld [vmem:[%s5 + $0x1dc] sm:$0xf]
  %v6690 = vld [vmem:[%s5 + $0x1e0] sm:$0xff]
  %v6691 = vld [vmem:[%s5 + $0x1e8] sm:$0xf]
  %v6692 = vld [vmem:[%s5 + $0x1ec] sm:$0xff]
  %v6693 = vld [vmem:[%s5 + $0x1f4] sm:$0xf]
  %v6694 = vld [vmem:[%s5 + $0x1f8] sm:$0xff]
  %v6695 = vld [vmem:[%s5 + $0x200] sm:$0xf]
  %v6696 = vld [vmem:[%s5 + $0x204] sm:$0xff]
  %v6697 = vld [vmem:[%s5 + $0x20c] sm:$0xf]
  %v6698 = vld [vmem:[%s5 + $0x210] sm:$0xff]
  %v6699 = vld [vmem:[%s5 + $0x218] sm:$0xf]
  %v6700 = vld [vmem:[%s5 + $0x21c] sm:$0xff]
  %v6701 = vld [vmem:[%s5 + $0x224] sm:$0xf]
  %v6702 = vld [vmem:[%s5 + $0x228] sm:$0xff]
  %v6703 = vld [vmem:[%s5 + $0x230] sm:$0xf]
  %v6704 = vld [vmem:[%s5 + $0x234] sm:$0xff]
  %v6705 = vld [vmem:[%s5 + $0x23c] sm:$0xf]
  %v6706 = vld [vmem:[%s5 + $0x240] sm:$0xff]
  %v6707 = vld [vmem:[%s5 + $0x248] sm:$0xf]
  %v6708 = vld [vmem:[%s5 + $0x24c] sm:$0xff]
  %v6709 = vld [vmem:[%s5 + $0x254] sm:$0xf]
  %v6710 = vld [vmem:[%s5 + $0x258] sm:$0xff]
  %v6711 = vld [vmem:[%s5 + $0x260] sm:$0xf]
  %v6712 = vld [vmem:[%s5 + $0x264] sm:$0xff]
  %v6713 = vld [vmem:[%s5 + $0x26c] sm:$0xf]
  %v6714 = vld [vmem:[%s5 + $0x270] sm:$0xff]
  %v6715 = vld [vmem:[%s5 + $0x278] sm:$0xf]
  %v6716 = vld [vmem:[%s5 + $0x27c] sm:$0xff]
  %v6717 = vld [vmem:[%s5 + $0x284] sm:$0xf]
  %v6718 = vld [vmem:[%s5 + $0x288] sm:$0xff]
  %v6719 = vld [vmem:[%s5 + $0x290] sm:$0xf]
  %v6720 = vld [vmem:[%s5 + $0x294] sm:$0xff]
  %v6721 = vld [vmem:[%s5 + $0x29c] sm:$0xf]
  %v6722 = vld [vmem:[%s5 + $0x2a0] sm:$0xff]
  %v6723 = vld [vmem:[%s5 + $0x2a8] sm:$0xf]
  %v6724 = vld [vmem:[%s5 + $0x2ac] sm:$0xff]
  %v6725 = vld [vmem:[%s5 + $0x2b4] sm:$0xf]
  %v6726 = vld [vmem:[%s5 + $0x2b8] sm:$0xff]
  %v6727 = vld [vmem:[%s5 + $0x2c0] sm:$0xf]
  %v6728 = vld [vmem:[%s5 + $0x2c4] sm:$0xff]
  %v6729 = vld [vmem:[%s5 + $0x2cc] sm:$0xf]
  %v6730 = vld [vmem:[%s5 + $0x2d0] sm:$0xff]
  %v6731 = vld [vmem:[%s5 + $0x2d8] sm:$0xf]
  %v6732 = vld [vmem:[%s5 + $0x2dc] sm:$0xff]
  %v6733 = vld [vmem:[%s5 + $0x2e4] sm:$0xf]
  %v6734 = vld [vmem:[%s5 + $0x2e8] sm:$0xff]
  %v6735 = vld [vmem:[%s5 + $0x2f0] sm:$0xf]
  %v6736 = vld [vmem:[%s5 + $0x2f4] sm:$0xff]
  %v6737 = vld [vmem:[%s5 + $0x2fc] sm:$0xf]
  %v6738 = vld [vmem:[%s5 + $0x300] sm:$0xff]
  %v6739 = vld [vmem:[%s5 + $0x308] sm:$0xf]
  %v6740 = vld [vmem:[%s5 + $0x30c] sm:$0xff]
  %v6741 = vld [vmem:[%s5 + $0x314] sm:$0xf]
  %v6742 = vld [vmem:[%s5 + $0x318] sm:$0xff]
  %v6743 = vld [vmem:[%s5 + $0x320] sm:$0xf]
  %v6744 = vld [vmem:[%s5 + $0x324] sm:$0xff]
  %v6745 = vld [vmem:[%s5 + $0x32c] sm:$0xf]
  %v6746 = vld [vmem:[%s5 + $0x330] sm:$0xff]
  %v6747 = vld [vmem:[%s5 + $0x338] sm:$0xf]
  %v6748 = vld [vmem:[%s5 + $0x33c] sm:$0xff]
  %v6749 = vld [vmem:[%s5 + $0x344] sm:$0xf]
  %v6750 = vld [vmem:[%s5 + $0x348] sm:$0xff]
  %v6751 = vld [vmem:[%s5 + $0x350] sm:$0xf]
  %v6752 = vld [vmem:[%s5 + $0x354] sm:$0xff]
  %v6753 = vld [vmem:[%s5 + $0x35c] sm:$0xf]
  %v6754 = vld [vmem:[%s5 + $0x360] sm:$0xff]
  %v6755 = vld [vmem:[%s5 + $0x368] sm:$0xf]
  %v6756 = vld [vmem:[%s5 + $0x36c] sm:$0xff]
  %v6757 = vld [vmem:[%s5 + $0x374] sm:$0xf]
  %v6758 = vld [vmem:[%s5 + $0x378] sm:$0xff]
  %v6759 = vld [vmem:[%s5 + $0x380] sm:$0xf]
  %v6760 = vld [vmem:[%s5 + $0x384] sm:$0xff]
  %v6761 = vld [vmem:[%s5 + $0x38c] sm:$0xf]
  %v6762 = vld [vmem:[%s5 + $0x390] sm:$0xff]
  %v6763 = vld [vmem:[%s5 + $0x398] sm:$0xf]
  %v6764 = vld [vmem:[%s5 + $0x39c] sm:$0xff]
  %v6765 = vld [vmem:[%s5 + $0x3a4] sm:$0xf]
  %v6766 = vld [vmem:[%s5 + $0x3a8] sm:$0xff]
  %v6767 = vld [vmem:[%s5 + $0x3b0] sm:$0xf]
  %v6768 = vld [vmem:[%s5 + $0x3b4] sm:$0xff]
  %v6769 = vld [vmem:[%s5 + $0x3bc] sm:$0xf]
  %v6770 = vld [vmem:[%s5 + $0x3c0] sm:$0xff]
  %v6771 = vld [vmem:[%s5 + $0x3c8] sm:$0xf]
  %v6772 = vld [vmem:[%s5 + $0x3cc] sm:$0xff]
  %v6773 = vld [vmem:[%s5 + $0x3d4] sm:$0xf]
  %v6774 = vld [vmem:[%s5 + $0x3d8] sm:$0xff]
  %v6775 = vld [vmem:[%s5 + $0x3e0] sm:$0xf]
  %v6776 = vld [vmem:[%s5 + $0x3e4] sm:$0xff]
  %v6777 = vld [vmem:[%s5 + $0x3ec] sm:$0xf]
  %v6778 = vld [vmem:[%s5 + $0x3f0] sm:$0xff]
  %v6779 = vld [vmem:[%s5 + $0x3f8] sm:$0xf]
  %v6780 = vld [vmem:[%s5 + $0x3fc] sm:$0xff]
  %v6781 = vld [vmem:[%s5 + $0x404] sm:$0xf]
  %v6782 = vld [vmem:[%s5 + $0x408] sm:$0xff]
  %v6783 = vld [vmem:[%s5 + $0x410] sm:$0xf]
  %v6784 = vld [vmem:[%s5 + $0x414] sm:$0xff]
  %v6785 = vld [vmem:[%s5 + $0x41c] sm:$0xf]
  %v6786 = vld [vmem:[%s5 + $0x420] sm:$0xff]
  %v6787 = vld [vmem:[%s5 + $0x428] sm:$0xf]
  %v6788 = vld [vmem:[%s5 + $0x42c] sm:$0xff]
  %v6789 = vld [vmem:[%s5 + $0x434] sm:$0xf]
  %v6790 = vld [vmem:[%s5 + $0x438] sm:$0xff]
  %v6791 = vld [vmem:[%s5 + $0x440] sm:$0xf]
  %v6792 = vld [vmem:[%s5 + $0x444] sm:$0xff]
  %v6793 = vld [vmem:[%s5 + $0x44c] sm:$0xf]
  %v6794 = vld [vmem:[%s5 + $0x450] sm:$0xff]
  %v6795 = vld [vmem:[%s5 + $0x458] sm:$0xf]
  %v6796 = vld [vmem:[%s5 + $0x45c] sm:$0xff]
  %v6797 = vld [vmem:[%s5 + $0x464] sm:$0xf]
  %v6798 = vld [vmem:[%s5 + $0x468] sm:$0xff]
  %v6799 = vld [vmem:[%s5 + $0x470] sm:$0xf]
  %v6800 = vld [vmem:[%s5 + $0x474] sm:$0xff]
  %v6801 = vld [vmem:[%s5 + $0x47c] sm:$0xf]
  %v6802 = vld [vmem:[%s5 + $0x480] sm:$0xff]
  %v6803 = vld [vmem:[%s5 + $0x488] sm:$0xf]
  %v6804 = vld [vmem:[%s5 + $0x48c] sm:$0xff]
  %v6805 = vld [vmem:[%s5 + $0x494] sm:$0xf]
  %v6806 = vld [vmem:[%s5 + $0x498] sm:$0xff]
  %v6807 = vld [vmem:[%s5 + $0x4a0] sm:$0xf]
  %v6808 = vld [vmem:[%s5 + $0x4a4] sm:$0xff]
  %v6809 = vld [vmem:[%s5 + $0x4ac] sm:$0xf]
  %v6810 = vld [vmem:[%s5 + $0x4b0] sm:$0xff]
  %v6811 = vld [vmem:[%s5 + $0x4b8] sm:$0xf]
  %v6812 = vld [vmem:[%s5 + $0x4bc] sm:$0xff]
  %v6813 = vld [vmem:[%s5 + $0x4c4] sm:$0xf]
  %v6814 = vld [vmem:[%s5 + $0x4c8] sm:$0xff]
  %v6815 = vld [vmem:[%s5 + $0x4d0] sm:$0xf]
  %v6816 = vld [vmem:[%s5 + $0x4d4] sm:$0xff]
  %v6817 = vld [vmem:[%s5 + $0x4dc] sm:$0xf]
  %v6818 = vld [vmem:[%s5 + $0x4e0] sm:$0xff]
  %v6819 = vld [vmem:[%s5 + $0x4e8] sm:$0xf]
  %v6820 = vld [vmem:[%s5 + $0x4ec] sm:$0xff]
  %v6821 = vld [vmem:[%s5 + $0x4f4] sm:$0xf]
  %v6822 = vld [vmem:[%s5 + $0x4f8] sm:$0xff]
  %v6823 = vld [vmem:[%s5 + $0x500] sm:$0xf]
  %v6824 = vld [vmem:[%s5 + $0x504] sm:$0xff]
  %v6825 = vld [vmem:[%s5 + $0x50c] sm:$0xf]
  %v6826 = vld [vmem:[%s5 + $0x510] sm:$0xff]
  %v6827 = vld [vmem:[%s5 + $0x518] sm:$0xf]
  %v6828 = vld [vmem:[%s5 + $0x51c] sm:$0xff]
  %v6829 = vld [vmem:[%s5 + $0x524] sm:$0xf]
  %v6830 = vld [vmem:[%s5 + $0x528] sm:$0xff]
  %v6831 = vld [vmem:[%s5 + $0x530] sm:$0xf]
  %v6832 = vld [vmem:[%s5 + $0x534] sm:$0xff]
  %v6833 = vld [vmem:[%s5 + $0x53c] sm:$0xf]
  %v6834 = vld [vmem:[%s5 + $0x540] sm:$0xff]
  %v6835 = vld [vmem:[%s5 + $0x548] sm:$0xf]
  %v6836 = vld [vmem:[%s5 + $0x54c] sm:$0xff]
  %v6837 = vld [vmem:[%s5 + $0x554] sm:$0xf]
  %v6838 = vld [vmem:[%s5 + $0x558] sm:$0xff]
  %v6839 = vld [vmem:[%s5 + $0x560] sm:$0xf]
  %v6840 = vld [vmem:[%s5 + $0x564] sm:$0xff]
  %v6841 = vld [vmem:[%s5 + $0x56c] sm:$0xf]
  %v6842 = vld [vmem:[%s5 + $0x570] sm:$0xff]
  %v6843 = vld [vmem:[%s5 + $0x578] sm:$0xf]
  %v6844 = vld [vmem:[%s5 + $0x57c] sm:$0xff]
  %v6845 = vld [vmem:[%s5 + $0x584] sm:$0xf]
  %v6846 = vld [vmem:[%s5 + $0x588] sm:$0xff]
  %v6847 = vld [vmem:[%s5 + $0x590] sm:$0xf]
  %v6848 = vld [vmem:[%s5 + $0x594] sm:$0xff]
  %v6849 = vld [vmem:[%s5 + $0x59c] sm:$0xf]
  %v6850 = vld [vmem:[%s5 + $0x5a0] sm:$0xff]
  %v6851 = vld [vmem:[%s5 + $0x5a8] sm:$0xf]
  %v6852 = vld [vmem:[%s5 + $0x5ac] sm:$0xff]
  %v6853 = vld [vmem:[%s5 + $0x5b4] sm:$0xf]
  %v6854 = vld [vmem:[%s5 + $0x5b8] sm:$0xff]
  %v6855 = vld [vmem:[%s5 + $0x5c0] sm:$0xf]
  %v6856 = vld [vmem:[%s5 + $0x5c4] sm:$0xff]
  %v6857 = vld [vmem:[%s5 + $0x5cc] sm:$0xf]
  %v6858 = vld [vmem:[%s5 + $0x5d0] sm:$0xff]
  %v6859 = vld [vmem:[%s5 + $0x5d8] sm:$0xf]
  %v6860 = vld [vmem:[%s5 + $0x5dc] sm:$0xff]
  %v6861 = vld [vmem:[%s5 + $0x5e4] sm:$0xf]
  %v6862 = vld [vmem:[%s5 + $0x5e8] sm:$0xff]
  %v6863 = vld [vmem:[%s5 + $0x5f0] sm:$0xf]
  %v6864 = vld [vmem:[%s5 + $0x5f4] sm:$0xff]
  %v6865 = vld [vmem:[%s5 + $0x5fc] sm:$0xf]
  %v6866 = vld [vmem:[%s5 + $0x600] sm:$0xff]
  %v6867 = vld [vmem:[%s5 + $0x608] sm:$0xf]
  %v6868 = vld [vmem:[%s5 + $0x60c] sm:$0xff]
  %v6869 = vld [vmem:[%s5 + $0x614] sm:$0xf]
  %v6870 = vld [vmem:[%s5 + $0x618] sm:$0xff]
  %v6871 = vld [vmem:[%s5 + $0x620] sm:$0xf]
  %v6872 = vld [vmem:[%s5 + $0x624] sm:$0xff]
  %v6873 = vld [vmem:[%s5 + $0x62c] sm:$0xf]
  %v6874 = vld [vmem:[%s5 + $0x630] sm:$0xff]
  %v6875 = vld [vmem:[%s5 + $0x638] sm:$0xf]
  %v6876 = vld [vmem:[%s5 + $0x63c] sm:$0xff]
  %v6877 = vld [vmem:[%s5 + $0x644] sm:$0xf]
  %v6878 = vld [vmem:[%s5 + $0x648] sm:$0xff]
  %v6879 = vld [vmem:[%s5 + $0x650] sm:$0xf]
  %v6880 = vld [vmem:[%s5 + $0x654] sm:$0xff]
  %v6881 = vld [vmem:[%s5 + $0x65c] sm:$0xf]
  %v6882 = vld [vmem:[%s5 + $0x660] sm:$0xff]
  %v6883 = vld [vmem:[%s5 + $0x668] sm:$0xf]
  %v6884 = vld [vmem:[%s5 + $0x66c] sm:$0xff]
  %v6885 = vld [vmem:[%s5 + $0x674] sm:$0xf]
  %v6886 = vld [vmem:[%s5 + $0x678] sm:$0xff]
  %v6887 = vld [vmem:[%s5 + $0x680] sm:$0xf]
  %v6888 = vld [vmem:[%s5 + $0x684] sm:$0xff]
  %v6889 = vld [vmem:[%s5 + $0x68c] sm:$0xf]
  %v6890 = vld [vmem:[%s5 + $0x690] sm:$0xff]
  %v6891 = vld [vmem:[%s5 + $0x698] sm:$0xf]
  %v6892 = vld [vmem:[%s5 + $0x69c] sm:$0xff]
  %v6893 = vld [vmem:[%s5 + $0x6a4] sm:$0xf]
  %v6894 = vld [vmem:[%s5 + $0x6a8] sm:$0xff]
  %v6895 = vld [vmem:[%s5 + $0x6b0] sm:$0xf]
  %v6896 = vld [vmem:[%s5 + $0x6b4] sm:$0xff]
  %v6897 = vld [vmem:[%s5 + $0x6bc] sm:$0xf]
  %v6898 = vld [vmem:[%s5 + $0x6c0] sm:$0xff]
  %v6899 = vld [vmem:[%s5 + $0x6c8] sm:$0xf]
  %v6900 = vld [vmem:[%s5 + $0x6cc] sm:$0xff]
  %v6901 = vld [vmem:[%s5 + $0x6d4] sm:$0xf]
  %v6902 = vld [vmem:[%s5 + $0x6d8] sm:$0xff]
  %v6903 = vld [vmem:[%s5 + $0x6e0] sm:$0xf]
  %v6904 = vld [vmem:[%s5 + $0x6e4] sm:$0xff]
  %v6905 = vld [vmem:[%s5 + $0x6ec] sm:$0xf]
  %v6906 = vld [vmem:[%s5 + $0x6f0] sm:$0xff]
  %v6907 = vld [vmem:[%s5 + $0x6f8] sm:$0xf]
  %v6908 = vld [vmem:[%s5 + $0x6fc] sm:$0xff]
  %v6909 = vld [vmem:[%s5 + $0x704] sm:$0xf]
  %v6910 = vld [vmem:[%s5 + $0x708] sm:$0xff]
  %v6911 = vld [vmem:[%s5 + $0x710] sm:$0xf]
  %v6912 = vld [vmem:[%s5 + $0x714] sm:$0xff]
  %v6913 = vld [vmem:[%s5 + $0x71c] sm:$0xf]
  %v6914 = vld [vmem:[%s5 + $0x720] sm:$0xff]
  %v6915 = vld [vmem:[%s5 + $0x728] sm:$0xf]
  %v6916 = vld [vmem:[%s5 + $0x72c] sm:$0xff]
  %v6917 = vld [vmem:[%s5 + $0x734] sm:$0xf]
  %v6918 = vld [vmem:[%s5 + $0x738] sm:$0xff]
  %v6919 = vld [vmem:[%s5 + $0x740] sm:$0xf]
  %v6920 = vld [vmem:[%s5 + $0x744] sm:$0xff]
  %v6921 = vld [vmem:[%s5 + $0x74c] sm:$0xf]
  %v6922 = vld [vmem:[%s5 + $0x750] sm:$0xff]
  %v6923 = vld [vmem:[%s5 + $0x758] sm:$0xf]
  %v6924 = vld [vmem:[%s5 + $0x75c] sm:$0xff]
  %v6925 = vld [vmem:[%s5 + $0x764] sm:$0xf]
  %v6926 = vld [vmem:[%s5 + $0x768] sm:$0xff]
  %v6927 = vld [vmem:[%s5 + $0x770] sm:$0xf]
  %v6928 = vld [vmem:[%s5 + $0x774] sm:$0xff]
  %v6929 = vld [vmem:[%s5 + $0x77c] sm:$0xf]
  %v6930 = vld [vmem:[%s5 + $0x780] sm:$0xff]
  %v6931 = vld [vmem:[%s5 + $0x788] sm:$0xf]
  %v6932 = vld [vmem:[%s5 + $0x78c] sm:$0xff]
  %v6933 = vld [vmem:[%s5 + $0x794] sm:$0xf]
  %v6934 = vld [vmem:[%s5 + $0x798] sm:$0xff]
  %v6935 = vld [vmem:[%s5 + $0x7a0] sm:$0xf]
  %v6936 = vld [vmem:[%s5 + $0x7a4] sm:$0xff]
  %v6937 = vld [vmem:[%s5 + $0x7ac] sm:$0xf]
  %v6938 = vld [vmem:[%s5 + $0x7b0] sm:$0xff]
  %v6939 = vld [vmem:[%s5 + $0x7b8] sm:$0xf]
  %v6940 = vld [vmem:[%s5 + $0x7bc] sm:$0xff]
  %v6941 = vld [vmem:[%s5 + $0x7c4] sm:$0xf]
  %v6942 = vld [vmem:[%s5 + $0x7c8] sm:$0xff]
  %v6943 = vld [vmem:[%s5 + $0x7d0] sm:$0xf]
  %v6944 = vld [vmem:[%s5 + $0x7d4] sm:$0xff]
  %v6945 = vld [vmem:[%s5 + $0x7dc] sm:$0xf]
  %v6946 = vld [vmem:[%s5 + $0x7e0] sm:$0xff]
  %v6947 = vld [vmem:[%s5 + $0x7e8] sm:$0xf]
  %v6948 = vld [vmem:[%s5 + $0x7ec] sm:$0xff]
  %v6949 = vld [vmem:[%s5 + $0x7f4] sm:$0xf]
  %v6950 = vld [vmem:[%s5 + $0x7f8] sm:$0xff]
  %v6951 = vld [vmem:[%s5 + $0x800] sm:$0xf]
  %v6952 = vld [vmem:[%s5 + $0x804] sm:$0xff]
  %v6953 = vld [vmem:[%s5 + $0x80c] sm:$0xf]
  %v6954 = vld [vmem:[%s5 + $0x810] sm:$0xff]
  %v6955 = vld [vmem:[%s5 + $0x818] sm:$0xf]
  %v6956 = vld [vmem:[%s5 + $0x81c] sm:$0xff]
  %v6957 = vld [vmem:[%s5 + $0x824] sm:$0xf]
  %v6958 = vld [vmem:[%s5 + $0x828] sm:$0xff]
  %v6959 = vld [vmem:[%s5 + $0x830] sm:$0xf]
  %v6960 = vld [vmem:[%s5 + $0x834] sm:$0xff]
  %v6961 = vld [vmem:[%s5 + $0x83c] sm:$0xf]
  %v6962 = vld [vmem:[%s5 + $0x840] sm:$0xff]
  %v6963 = vld [vmem:[%s5 + $0x848] sm:$0xf]
  %v6964 = vld [vmem:[%s5 + $0x84c] sm:$0xff]
  %v6965 = vld [vmem:[%s5 + $0x854] sm:$0xf]
  %v6966 = vld [vmem:[%s5 + $0x858] sm:$0xff]
  %v6967 = vld [vmem:[%s5 + $0x860] sm:$0xf]
  %v6968 = vld [vmem:[%s5 + $0x864] sm:$0xff]
  %v6969 = vld [vmem:[%s5 + $0x86c] sm:$0xf]
  %v6970 = vld [vmem:[%s5 + $0x870] sm:$0xff]
  %v6971 = vld [vmem:[%s5 + $0x878] sm:$0xf]
  %v6972 = vld [vmem:[%s5 + $0x87c] sm:$0xff]
  %v6973 = vld [vmem:[%s5 + $0x884] sm:$0xf]
  %v6974 = vld [vmem:[%s5 + $0x888] sm:$0xff]
  %v6975 = vld [vmem:[%s5 + $0x890] sm:$0xf]
  %v6976 = vld [vmem:[%s5 + $0x894] sm:$0xff]
  %v6977 = vld [vmem:[%s5 + $0x89c] sm:$0xf]
  %v6978 = vld [vmem:[%s5 + $0x8a0] sm:$0xff]
  %v6979 = vld [vmem:[%s5 + $0x8a8] sm:$0xf]
  %v6980 = vld [vmem:[%s5 + $0x8ac] sm:$0xff]
  %v6981 = vld [vmem:[%s5 + $0x8b4] sm:$0xf]
  %v6982 = vld [vmem:[%s5 + $0x8b8] sm:$0xff]
  %v6983 = vld [vmem:[%s5 + $0x8c0] sm:$0xf]
  %v6984 = vld [vmem:[%s5 + $0x8c4] sm:$0xff]
  %v6985 = vld [vmem:[%s5 + $0x8cc] sm:$0xf]
  %v6986 = vld [vmem:[%s5 + $0x8d0] sm:$0xff]
  %v6987 = vld [vmem:[%s5 + $0x8d8] sm:$0xf]
  %v6988 = vld [vmem:[%s5 + $0x8dc] sm:$0xff]
  %v6989 = vld [vmem:[%s5 + $0x8e4] sm:$0xf]
  %v6990 = vld [vmem:[%s5 + $0x8e8] sm:$0xff]
  %v6991 = vld [vmem:[%s5 + $0x8f0] sm:$0xf]
  %v6992 = vld [vmem:[%s5 + $0x8f4] sm:$0xff]
  %v6993 = vld [vmem:[%s5 + $0x8fc] sm:$0xf]
  %v6994 = vld [vmem:[%s5 + $0x900] sm:$0xff]
  %v6995 = vld [vmem:[%s5 + $0x908] sm:$0xf]
  %v6996 = vld [vmem:[%s5 + $0x90c] sm:$0xff]
  %v6997 = vld [vmem:[%s5 + $0x914] sm:$0xf]
  %v6998 = vld [vmem:[%s5 + $0x918] sm:$0xff]
  %v6999 = vld [vmem:[%s5 + $0x920] sm:$0xf]
  %v7000 = vld [vmem:[%s5 + $0x924] sm:$0xff]
  %v7001 = vld [vmem:[%s5 + $0x92c] sm:$0xf]
  %v7002 = vld [vmem:[%s5 + $0x930] sm:$0xff]
  %v7003 = vld [vmem:[%s5 + $0x938] sm:$0xf]
  %v7004 = vld [vmem:[%s5 + $0x93c] sm:$0xff]
  %v7005 = vld [vmem:[%s5 + $0x944] sm:$0xf]
  %v7006 = vld [vmem:[%s5 + $0x948] sm:$0xff]
  %v7007 = vld [vmem:[%s5 + $0x950] sm:$0xf]
  %v7008 = vld [vmem:[%s5 + $0x954] sm:$0xff]
  %v7009 = vld [vmem:[%s5 + $0x95c] sm:$0xf]
  %v7010 = vld [vmem:[%s5 + $0x960] sm:$0xff]
  %v7011 = vld [vmem:[%s5 + $0x968] sm:$0xf]
  %v7012 = vld [vmem:[%s5 + $0x96c] sm:$0xff]
  %v7013 = vld [vmem:[%s5 + $0x974] sm:$0xf]
  %v7014 = vld [vmem:[%s5 + $0x978] sm:$0xff]
  %v7015 = vld [vmem:[%s5 + $0x980] sm:$0xf]
  %v7016 = vld [vmem:[%s5 + $0x984] sm:$0xff]
  %v7017 = vld [vmem:[%s5 + $0x98c] sm:$0xf]
  %v7018 = vld [vmem:[%s5 + $0x990] sm:$0xff]
  %v7019 = vld [vmem:[%s5 + $0x998] sm:$0xf]
  %v7020 = vld [vmem:[%s5 + $0x99c] sm:$0xff]
  %v7021 = vld [vmem:[%s5 + $0x9a4] sm:$0xf]
  %v7022 = vld [vmem:[%s5 + $0x9a8] sm:$0xff]
  %v7023 = vld [vmem:[%s5 + $0x9b0] sm:$0xf]
  %v7024 = vld [vmem:[%s5 + $0x9b4] sm:$0xff]
  %v7025 = vld [vmem:[%s5 + $0x9bc] sm:$0xf]
  %v7026 = vld [vmem:[%s5 + $0x9c0] sm:$0xff]
  %v7027 = vld [vmem:[%s5 + $0x9c8] sm:$0xf]
  %v7028 = vld [vmem:[%s5 + $0x9cc] sm:$0xff]
  %v7029 = vld [vmem:[%s5 + $0x9d4] sm:$0xf]
  %v7030 = vld [vmem:[%s5 + $0x9d8] sm:$0xff]
  %v7031 = vld [vmem:[%s5 + $0x9e0] sm:$0xf]
  %v7032 = vld [vmem:[%s5 + $0x9e4] sm:$0xff]
  %v7033 = vld [vmem:[%s5 + $0x9ec] sm:$0xf]
  %v7034 = vld [vmem:[%s5 + $0x9f0] sm:$0xff]
  %v7035 = vld [vmem:[%s5 + $0x9f8] sm:$0xf]
  %v7036 = vld [vmem:[%s5 + $0x9fc] sm:$0xff]
  %v7037 = vld [vmem:[%s5 + $0xa04] sm:$0xf]
  %v7038 = vld [vmem:[%s5 + $0xa08] sm:$0xff]
  %v7039 = vld [vmem:[%s5 + $0xa10] sm:$0xf]
  %v7040 = vld [vmem:[%s5 + $0xa14] sm:$0xff]
  %v7041 = vld [vmem:[%s5 + $0xa1c] sm:$0xf]
  %v7042 = vld [vmem:[%s5 + $0xa20] sm:$0xff]
  %v7043 = vld [vmem:[%s5 + $0xa28] sm:$0xf]
  %v7044 = vld [vmem:[%s5 + $0xa2c] sm:$0xff]
  %v7045 = vld [vmem:[%s5 + $0xa34] sm:$0xf]
  %v7046 = vld [vmem:[%s5 + $0xa38] sm:$0xff]
  %v7047 = vld [vmem:[%s5 + $0xa40] sm:$0xf]
  %v7048 = vld [vmem:[%s5 + $0xa44] sm:$0xff]
  %v7049 = vld [vmem:[%s5 + $0xa4c] sm:$0xf]
  %v7050 = vld [vmem:[%s5 + $0xa50] sm:$0xff]
  %v7051 = vld [vmem:[%s5 + $0xa58] sm:$0xf]
  %v7052 = vld [vmem:[%s5 + $0xa5c] sm:$0xff]
  %v7053 = vld [vmem:[%s5 + $0xa64] sm:$0xf]
  %v7054 = vld [vmem:[%s5 + $0xa68] sm:$0xff]
  %v7055 = vld [vmem:[%s5 + $0xa70] sm:$0xf]
  %v7056 = vld [vmem:[%s5 + $0xa74] sm:$0xff]
  %v7057 = vld [vmem:[%s5 + $0xa7c] sm:$0xf]
  %v7058 = vld [vmem:[%s5 + $0xa80] sm:$0xff]
  %v7059 = vld [vmem:[%s5 + $0xa88] sm:$0xf]
  %v7060 = vld [vmem:[%s5 + $0xa8c] sm:$0xff]
  %v7061 = vld [vmem:[%s5 + $0xa94] sm:$0xf]
  %v7062 = vld [vmem:[%s5 + $0xa98] sm:$0xff]
  %v7063 = vld [vmem:[%s5 + $0xaa0] sm:$0xf]
  %v7064 = vld [vmem:[%s5 + $0xaa4] sm:$0xff]
  %v7065 = vld [vmem:[%s5 + $0xaac] sm:$0xf]
  %v7066 = vld [vmem:[%s5 + $0xab0] sm:$0xff]
  %v7067 = vld [vmem:[%s5 + $0xab8] sm:$0xf]
  %v7068 = vld [vmem:[%s5 + $0xabc] sm:$0xff]
  %v7069 = vld [vmem:[%s5 + $0xac4] sm:$0xf]
  %v7070 = vld [vmem:[%s5 + $0xac8] sm:$0xff]
  %v7071 = vld [vmem:[%s5 + $0xad0] sm:$0xf]
  %v7072 = vld [vmem:[%s5 + $0xad4] sm:$0xff]
  %v7073 = vld [vmem:[%s5 + $0xadc] sm:$0xf]
  %v7074 = vld [vmem:[%s5 + $0xae0] sm:$0xff]
  %v7075 = vld [vmem:[%s5 + $0xae8] sm:$0xf]
  %v7076 = vld [vmem:[%s5 + $0xaec] sm:$0xff]
  %v7077 = vld [vmem:[%s5 + $0xaf4] sm:$0xf]
  %v7078 = vld [vmem:[%s5 + $0xaf8] sm:$0xff]
  %v7079 = vld [vmem:[%s5 + $0xb00] sm:$0xf]
  %v7080 = vld [vmem:[%s5 + $0xb04] sm:$0xff]
  %v7081 = vld [vmem:[%s5 + $0xb0c] sm:$0xf]
  %v7082 = vld [vmem:[%s5 + $0xb10] sm:$0xff]
  %v7083 = vld [vmem:[%s5 + $0xb18] sm:$0xf]
  %v7084 = vld [vmem:[%s5 + $0xb1c] sm:$0xff]
  %v7085 = vld [vmem:[%s5 + $0xb24] sm:$0xf]
  %v7086 = vld [vmem:[%s5 + $0xb28] sm:$0xff]
  %v7087 = vld [vmem:[%s5 + $0xb30] sm:$0xf]
  %v7088 = vld [vmem:[%s5 + $0xb34] sm:$0xff]
  %v7089 = vld [vmem:[%s5 + $0xb3c] sm:$0xf]
  %v7090 = vld [vmem:[%s5 + $0xb40] sm:$0xff]
  %v7091 = vld [vmem:[%s5 + $0xb48] sm:$0xf]
  %v7092 = vld [vmem:[%s5 + $0xb4c] sm:$0xff]
  %v7093 = vld [vmem:[%s5 + $0xb54] sm:$0xf]
  %v7094 = vld [vmem:[%s5 + $0xb58] sm:$0xff]
  %v7095 = vld [vmem:[%s5 + $0xb60] sm:$0xf]
  %v7096 = vld [vmem:[%s5 + $0xb64] sm:$0xff]
  %v7097 = vld [vmem:[%s5 + $0xb6c] sm:$0xf]
  %v7098 = vld [vmem:[%s5 + $0xb70] sm:$0xff]
  %v7099 = vld [vmem:[%s5 + $0xb78] sm:$0xf]
  %v7100 = vld [vmem:[%s5 + $0xb7c] sm:$0xff]
  %v7101 = vld [vmem:[%s5 + $0xb84] sm:$0xf]
  %v7102 = vld [vmem:[%s5 + $0xb88] sm:$0xff]
  %v7103 = vld [vmem:[%s5 + $0xb90] sm:$0xf]
  %v7104 = vld [vmem:[%s5 + $0xb94] sm:$0xff]
  %v7105 = vld [vmem:[%s5 + $0xb9c] sm:$0xf]
  %v7106 = vld [vmem:[%s5 + $0xba0] sm:$0xff]
  %v7107 = vld [vmem:[%s5 + $0xba8] sm:$0xf]
  %v7108 = vld [vmem:[%s5 + $0xbac] sm:$0xff]
  %v7109 = vld [vmem:[%s5 + $0xbb4] sm:$0xf]
  %v7110 = vld [vmem:[%s5 + $0xbb8] sm:$0xff]
  %v7111 = vld [vmem:[%s5 + $0xbc0] sm:$0xf]
  %v7112 = vld [vmem:[%s5 + $0xbc4] sm:$0xff]
  %v7113 = vld [vmem:[%s5 + $0xbcc] sm:$0xf]
  %v7114 = vld [vmem:[%s5 + $0xbd0] sm:$0xff]
  %v7115 = vld [vmem:[%s5 + $0xbd8] sm:$0xf]
  %v7116 = vld [vmem:[%s5 + $0xbdc] sm:$0xff]
  %v7117 = vld [vmem:[%s5 + $0xbe4] sm:$0xf]
  %v7118 = vld [vmem:[%s5 + $0xbe8] sm:$0xff]
  %v7119 = vld [vmem:[%s5 + $0xbf0] sm:$0xf]
  %v7120 = vld [vmem:[%s5 + $0xbf4] sm:$0xff]
  %v7121 = vld [vmem:[%s5 + $0xbfc] sm:$0xf]
  %v7122 = vld [vmem:[%s5 + $0xc00] sm:$0xff]
  %v7123 = vld [vmem:[%s5 + $0xc08] sm:$0xf]
  %v7124 = vld [vmem:[%s5 + $0xc0c] sm:$0xff]
  %v7125 = vld [vmem:[%s5 + $0xc14] sm:$0xf]
  %v7126 = vld [vmem:[%s5 + $0xc18] sm:$0xff]
  %v7127 = vld [vmem:[%s5 + $0xc20] sm:$0xf]
  %v7128 = vld [vmem:[%s5 + $0xc24] sm:$0xff]
  %v7129 = vld [vmem:[%s5 + $0xc2c] sm:$0xf]
  %v7130 = vld [vmem:[%s5 + $0xc30] sm:$0xff]
  %v7131 = vld [vmem:[%s5 + $0xc38] sm:$0xf]
  %v7132 = vld [vmem:[%s5 + $0xc3c] sm:$0xff]
  %v7133 = vld [vmem:[%s5 + $0xc44] sm:$0xf]
  %v7134 = vld [vmem:[%s5 + $0xc48] sm:$0xff]
  %v7135 = vld [vmem:[%s5 + $0xc50] sm:$0xf]
  %v7136 = vld [vmem:[%s5 + $0xc54] sm:$0xff]
  %v7137 = vld [vmem:[%s5 + $0xc5c] sm:$0xf]
  %v7138 = vld [vmem:[%s5 + $0xc60] sm:$0xff]
  %v7139 = vld [vmem:[%s5 + $0xc68] sm:$0xf]
  %v7140 = vld [vmem:[%s5 + $0xc6c] sm:$0xff]
  %v7141 = vld [vmem:[%s5 + $0xc74] sm:$0xf]
  %v7142 = vld [vmem:[%s5 + $0xc78] sm:$0xff]
  %v7143 = vld [vmem:[%s5 + $0xc80] sm:$0xf]
  %v7144 = vld [vmem:[%s5 + $0xc84] sm:$0xff]
  %v7145 = vld [vmem:[%s5 + $0xc8c] sm:$0xf]
  %v7146 = vld [vmem:[%s5 + $0xc90] sm:$0xff]
  %v7147 = vld [vmem:[%s5 + $0xc98] sm:$0xf]
  %v7148 = vld [vmem:[%s5 + $0xc9c] sm:$0xff]
  %v7149 = vld [vmem:[%s5 + $0xca4] sm:$0xf]
  %v7150 = vld [vmem:[%s5 + $0xca8] sm:$0xff]
  %v7151 = vld [vmem:[%s5 + $0xcb0] sm:$0xf]
  %v7152 = vld [vmem:[%s5 + $0xcb4] sm:$0xff]
  %v7153 = vld [vmem:[%s5 + $0xcbc] sm:$0xf]
  %v7154 = vld [vmem:[%s5 + $0xcc0] sm:$0xff]
  %v7155 = vld [vmem:[%s5 + $0xcc8] sm:$0xf]
  %v7156 = vld [vmem:[%s5 + $0xccc] sm:$0xff]
  %v7157 = vld [vmem:[%s5 + $0xcd4] sm:$0xf]
  %v7158 = vld [vmem:[%s5 + $0xcd8] sm:$0xff]
  %v7159 = vld [vmem:[%s5 + $0xce0] sm:$0xf]
  %v7160 = vld [vmem:[%s5 + $0xce4] sm:$0xff]
  %v7161 = vld [vmem:[%s5 + $0xcec] sm:$0xf]
  %v7162 = vld [vmem:[%s5 + $0xcf0] sm:$0xff]
  %v7163 = vld [vmem:[%s5 + $0xcf8] sm:$0xf]
  %v7164 = vld [vmem:[%s5 + $0xcfc] sm:$0xff]
  %v7165 = vld [vmem:[%s5 + $0xd04] sm:$0xf]
  %v7166 = vld [vmem:[%s5 + $0xd08] sm:$0xff]
  %v7167 = vld [vmem:[%s5 + $0xd10] sm:$0xf]
  %v7168 = vld [vmem:[%s5 + $0xd14] sm:$0xff]
  %v7169 = vld [vmem:[%s5 + $0xd1c] sm:$0xf]
  %v7170 = vld [vmem:[%s5 + $0xd20] sm:$0xff]
  %v7171 = vld [vmem:[%s5 + $0xd28] sm:$0xf]
  %v7172 = vld [vmem:[%s5 + $0xd2c] sm:$0xff]
  %v7173 = vld [vmem:[%s5 + $0xd34] sm:$0xf]
  %v7174 = vld [vmem:[%s5 + $0xd38] sm:$0xff]
  %v7175 = vld [vmem:[%s5 + $0xd40] sm:$0xf]
  %v7176 = vld [vmem:[%s5 + $0xd44] sm:$0xff]
  %v7177 = vld [vmem:[%s5 + $0xd4c] sm:$0xf]
  %v7178 = vld [vmem:[%s5 + $0xd50] sm:$0xff]
  %v7179 = vld [vmem:[%s5 + $0xd58] sm:$0xf]
  %v7180 = vld [vmem:[%s5 + $0xd5c] sm:$0xff]
  %v7181 = vld [vmem:[%s5 + $0xd64] sm:$0xf]
  %v7182 = vld [vmem:[%s5 + $0xd68] sm:$0xff]
  %v7183 = vld [vmem:[%s5 + $0xd70] sm:$0xf]
  %v7184 = vld [vmem:[%s5 + $0xd74] sm:$0xff]
  %v7185 = vld [vmem:[%s5 + $0xd7c] sm:$0xf]
  %v7186 = vpack.c.bf16 %v6563, %v6562
  %v7187 = vpack.c.bf16 %v6565, %v6564
  %v7188 = vpack.c.bf16 %v6567, %v6566
  %v7189 = vpack.c.bf16 %v6569, %v6568
  %v7190 = vpack.c.bf16 %v6571, %v6570
  %v7191 = vpack.c.bf16 %v6573, %v6572
  %v7192 = vpack.c.bf16 %v6575, %v6574
  %v7193 = vpack.c.bf16 %v6577, %v6576
  %v7194 = vpack.c.bf16 %v6579, %v6578
  %v7195 = vpack.c.bf16 %v6581, %v6580
  %v7196 = vpack.c.bf16 %v6583, %v6582
  %v7197 = vpack.c.bf16 %v6585, %v6584
  %v7198 = vpack.c.bf16 %v6587, %v6586
  %v7199 = vpack.c.bf16 %v6589, %v6588
  %v7200 = vpack.c.bf16 %v6591, %v6590
  %v7201 = vpack.c.bf16 %v6593, %v6592
  %v7202 = vpack.c.bf16 %v6595, %v6594
  %v7203 = vpack.c.bf16 %v6597, %v6596
  %v7204 = vpack.c.bf16 %v6599, %v6598
  %v7205 = vpack.c.bf16 %v6601, %v6600
  %v7206 = vpack.c.bf16 %v6603, %v6602
  %v7207 = vpack.c.bf16 %v6605, %v6604
  %v7208 = vpack.c.bf16 %v6607, %v6606
  %v7209 = vpack.c.bf16 %v6609, %v6608
  %v7786 = vunpack.c.l.b16 %v6610
  %v7787 = vunpack.c.h.b16 %v6610
  %v7788 = vunpack.c.l.b16 %v6611
  %v7789 = vunpack.c.l.b16 %v6612
  %v7790 = vunpack.c.h.b16 %v6612
  %v7791 = vunpack.c.l.b16 %v6613
  %v7792 = vunpack.c.l.b16 %v6614
  %v7793 = vunpack.c.h.b16 %v6614
  %v7794 = vunpack.c.l.b16 %v6615
  %v7795 = vunpack.c.l.b16 %v6616
  %v7796 = vunpack.c.h.b16 %v6616
  %v7797 = vunpack.c.l.b16 %v6617
  %v7798 = vunpack.c.l.b16 %v6618
  %v7799 = vunpack.c.h.b16 %v6618
  %v7800 = vunpack.c.l.b16 %v6619
  %v7801 = vunpack.c.l.b16 %v6620
  %v7802 = vunpack.c.h.b16 %v6620
  %v7803 = vunpack.c.l.b16 %v6621
  %v7804 = vunpack.c.l.b16 %v6622
  %v7805 = vunpack.c.h.b16 %v6622
  %v7806 = vunpack.c.l.b16 %v6623
  %v7807 = vunpack.c.l.b16 %v6624
  %v7808 = vunpack.c.h.b16 %v6624
  %v7809 = vunpack.c.l.b16 %v6625
  %v7810 = vunpack.c.l.b16 %v6626
  %v7811 = vunpack.c.h.b16 %v6626
  %v7812 = vunpack.c.l.b16 %v6627
  %v7813 = vunpack.c.l.b16 %v6628
  %v7814 = vunpack.c.h.b16 %v6628
  %v7815 = vunpack.c.l.b16 %v6629
  %v7816 = vunpack.c.l.b16 %v6630
  %v7817 = vunpack.c.h.b16 %v6630
  %v7818 = vunpack.c.l.b16 %v6631
  %v7819 = vunpack.c.l.b16 %v6632
  %v7820 = vunpack.c.h.b16 %v6632
  %v7821 = vunpack.c.l.b16 %v6633
  %v7822 = vunpack.c.l.b16 %v6634
  %v7823 = vunpack.c.h.b16 %v6634
  %v7824 = vunpack.c.l.b16 %v6635
  %v7825 = vunpack.c.l.b16 %v6636
  %v7826 = vunpack.c.h.b16 %v6636
  %v7827 = vunpack.c.l.b16 %v6637
  %v7828 = vunpack.c.l.b16 %v6638
  %v7829 = vunpack.c.h.b16 %v6638
  %v7830 = vunpack.c.l.b16 %v6639
  %v7831 = vunpack.c.l.b16 %v6640
  %v7832 = vunpack.c.h.b16 %v6640
  %v7833 = vunpack.c.l.b16 %v6641
  %v7834 = vunpack.c.l.b16 %v6642
  %v7835 = vunpack.c.h.b16 %v6642
  %v7836 = vunpack.c.l.b16 %v6643
  %v7837 = vunpack.c.l.b16 %v6644
  %v7838 = vunpack.c.h.b16 %v6644
  %v7839 = vunpack.c.l.b16 %v6645
  %v7840 = vunpack.c.l.b16 %v6646
  %v7841 = vunpack.c.h.b16 %v6646
  %v7842 = vunpack.c.l.b16 %v6647
  %v7843 = vunpack.c.l.b16 %v6648
  %v7844 = vunpack.c.h.b16 %v6648
  %v7845 = vunpack.c.l.b16 %v6649
  %v7846 = vunpack.c.l.b16 %v6650
  %v7847 = vunpack.c.h.b16 %v6650
  %v7848 = vunpack.c.l.b16 %v6651
  %v7849 = vunpack.c.l.b16 %v6652
  %v7850 = vunpack.c.h.b16 %v6652
  %v7851 = vunpack.c.l.b16 %v6653
  %v7852 = vunpack.c.l.b16 %v6654
  %v7853 = vunpack.c.h.b16 %v6654
  %v7854 = vunpack.c.l.b16 %v6655
  %v7855 = vunpack.c.l.b16 %v6656
  %v7856 = vunpack.c.h.b16 %v6656
  %v7857 = vunpack.c.l.b16 %v6657
  %v7858 = vunpack.c.l.b16 %v6658
  %v7859 = vunpack.c.h.b16 %v6658
  %v7860 = vunpack.c.l.b16 %v6659
  %v7861 = vunpack.c.l.b16 %v6660
  %v7862 = vunpack.c.h.b16 %v6660
  %v7863 = vunpack.c.l.b16 %v6661
  %v7864 = vunpack.c.l.b16 %v6662
  %v7865 = vunpack.c.h.b16 %v6662
  %v7866 = vunpack.c.l.b16 %v6663
  %v7867 = vunpack.c.l.b16 %v6664
  %v7868 = vunpack.c.h.b16 %v6664
  %v7869 = vunpack.c.l.b16 %v6665
  %v7870 = vunpack.c.l.b16 %v6666
  %v7871 = vunpack.c.h.b16 %v6666
  %v7872 = vunpack.c.l.b16 %v6667
  %v7873 = vunpack.c.l.b16 %v6668
  %v7874 = vunpack.c.h.b16 %v6668
  %v7875 = vunpack.c.l.b16 %v6669
  %v7876 = vunpack.c.l.b16 %v6670
  %v7877 = vunpack.c.h.b16 %v6670
  %v7878 = vunpack.c.l.b16 %v6671
  %v7879 = vunpack.c.l.b16 %v6672
  %v7880 = vunpack.c.h.b16 %v6672
  %v7881 = vunpack.c.l.b16 %v6673
  %v7882 = vunpack.c.l.b16 %v6674
  %v7883 = vunpack.c.h.b16 %v6674
  %v7884 = vunpack.c.l.b16 %v6675
  %v7885 = vunpack.c.l.b16 %v6676
  %v7886 = vunpack.c.h.b16 %v6676
  %v7887 = vunpack.c.l.b16 %v6677
  %v7888 = vunpack.c.l.b16 %v6678
  %v7889 = vunpack.c.h.b16 %v6678
  %v7890 = vunpack.c.l.b16 %v6679
  %v7891 = vunpack.c.l.b16 %v6680
  %v7892 = vunpack.c.h.b16 %v6680
  %v7893 = vunpack.c.l.b16 %v6681
  %v7894 = vunpack.c.l.b16 %v6682
  %v7895 = vunpack.c.h.b16 %v6682
  %v7896 = vunpack.c.l.b16 %v6683
  %v7897 = vunpack.c.l.b16 %v6684
  %v7898 = vunpack.c.h.b16 %v6684
  %v7899 = vunpack.c.l.b16 %v6685
  %v7900 = vunpack.c.l.b16 %v6686
  %v7901 = vunpack.c.h.b16 %v6686
  %v7902 = vunpack.c.l.b16 %v6687
  %v7903 = vunpack.c.l.b16 %v6688
  %v7904 = vunpack.c.h.b16 %v6688
  %v7905 = vunpack.c.l.b16 %v6689
  %v7906 = vunpack.c.l.b16 %v6690
  %v7907 = vunpack.c.h.b16 %v6690
  %v7908 = vunpack.c.l.b16 %v6691
  %v7909 = vunpack.c.l.b16 %v6692
  %v7910 = vunpack.c.h.b16 %v6692
  %v7911 = vunpack.c.l.b16 %v6693
  %v7912 = vunpack.c.l.b16 %v6694
  %v7913 = vunpack.c.h.b16 %v6694
  %v7914 = vunpack.c.l.b16 %v6695
  %v7915 = vunpack.c.l.b16 %v6696
  %v7916 = vunpack.c.h.b16 %v6696
  %v7917 = vunpack.c.l.b16 %v6697
  %v7918 = vunpack.c.l.b16 %v6698
  %v7919 = vunpack.c.h.b16 %v6698
  %v7920 = vunpack.c.l.b16 %v6699
  %v7921 = vunpack.c.l.b16 %v6700
  %v7922 = vunpack.c.h.b16 %v6700
  %v7923 = vunpack.c.l.b16 %v6701
  %v7924 = vunpack.c.l.b16 %v6702
  %v7925 = vunpack.c.h.b16 %v6702
  %v7926 = vunpack.c.l.b16 %v6703
  %v7927 = vunpack.c.l.b16 %v6704
  %v7928 = vunpack.c.h.b16 %v6704
  %v7929 = vunpack.c.l.b16 %v6705
  %v7930 = vunpack.c.l.b16 %v6706
  %v7931 = vunpack.c.h.b16 %v6706
  %v7932 = vunpack.c.l.b16 %v6707
  %v7933 = vunpack.c.l.b16 %v6708
  %v7934 = vunpack.c.h.b16 %v6708
  %v7935 = vunpack.c.l.b16 %v6709
  %v7936 = vunpack.c.l.b16 %v6710
  %v7937 = vunpack.c.h.b16 %v6710
  %v7938 = vunpack.c.l.b16 %v6711
  %v7939 = vunpack.c.l.b16 %v6712
  %v7940 = vunpack.c.h.b16 %v6712
  %v7941 = vunpack.c.l.b16 %v6713
  %v7942 = vunpack.c.l.b16 %v6714
  %v7943 = vunpack.c.h.b16 %v6714
  %v7944 = vunpack.c.l.b16 %v6715
  %v7945 = vunpack.c.l.b16 %v6716
  %v7946 = vunpack.c.h.b16 %v6716
  %v7947 = vunpack.c.l.b16 %v6717
  %v7948 = vunpack.c.l.b16 %v6718
  %v7949 = vunpack.c.h.b16 %v6718
  %v7950 = vunpack.c.l.b16 %v6719
  %v7951 = vunpack.c.l.b16 %v6720
  %v7952 = vunpack.c.h.b16 %v6720
  %v7953 = vunpack.c.l.b16 %v6721
  %v7954 = vunpack.c.l.b16 %v6722
  %v7955 = vunpack.c.h.b16 %v6722
  %v7956 = vunpack.c.l.b16 %v6723
  %v7957 = vunpack.c.l.b16 %v6724
  %v7958 = vunpack.c.h.b16 %v6724
  %v7959 = vunpack.c.l.b16 %v6725
  %v7960 = vunpack.c.l.b16 %v6726
  %v7961 = vunpack.c.h.b16 %v6726
  %v7962 = vunpack.c.l.b16 %v6727
  %v7963 = vunpack.c.l.b16 %v6728
  %v7964 = vunpack.c.h.b16 %v6728
  %v7965 = vunpack.c.l.b16 %v6729
  %v7966 = vunpack.c.l.b16 %v6730
  %v7967 = vunpack.c.h.b16 %v6730
  %v7968 = vunpack.c.l.b16 %v6731
  %v7969 = vunpack.c.l.b16 %v6732
  %v7970 = vunpack.c.h.b16 %v6732
  %v7971 = vunpack.c.l.b16 %v6733
  %v7972 = vunpack.c.l.b16 %v6734
  %v7973 = vunpack.c.h.b16 %v6734
  %v7974 = vunpack.c.l.b16 %v6735
  %v7975 = vunpack.c.l.b16 %v6736
  %v7976 = vunpack.c.h.b16 %v6736
  %v7977 = vunpack.c.l.b16 %v6737
  %v7978 = vunpack.c.l.b16 %v6738
  %v7979 = vunpack.c.h.b16 %v6738
  %v7980 = vunpack.c.l.b16 %v6739
  %v7981 = vunpack.c.l.b16 %v6740
  %v7982 = vunpack.c.h.b16 %v6740
  %v7983 = vunpack.c.l.b16 %v6741
  %v7984 = vunpack.c.l.b16 %v6742
  %v7985 = vunpack.c.h.b16 %v6742
  %v7986 = vunpack.c.l.b16 %v6743
  %v7987 = vunpack.c.l.b16 %v6744
  %v7988 = vunpack.c.h.b16 %v6744
  %v7989 = vunpack.c.l.b16 %v6745
  %v7990 = vunpack.c.l.b16 %v6746
  %v7991 = vunpack.c.h.b16 %v6746
  %v7992 = vunpack.c.l.b16 %v6747
  %v7993 = vunpack.c.l.b16 %v6748
  %v7994 = vunpack.c.h.b16 %v6748
  %v7995 = vunpack.c.l.b16 %v6749
  %v7996 = vunpack.c.l.b16 %v6750
  %v7997 = vunpack.c.h.b16 %v6750
  %v7998 = vunpack.c.l.b16 %v6751
  %v7999 = vunpack.c.l.b16 %v6752
  %v8000 = vunpack.c.h.b16 %v6752
  %v8001 = vunpack.c.l.b16 %v6753
  %v8002 = vunpack.c.l.b16 %v6754
  %v8003 = vunpack.c.h.b16 %v6754
  %v8004 = vunpack.c.l.b16 %v6755
  %v8005 = vunpack.c.l.b16 %v6756
  %v8006 = vunpack.c.h.b16 %v6756
  %v8007 = vunpack.c.l.b16 %v6757
  %v8008 = vunpack.c.l.b16 %v6758
  %v8009 = vunpack.c.h.b16 %v6758
  %v8010 = vunpack.c.l.b16 %v6759
  %v8011 = vunpack.c.l.b16 %v6760
  %v8012 = vunpack.c.h.b16 %v6760
  %v8013 = vunpack.c.l.b16 %v6761
  %v8014 = vunpack.c.l.b16 %v6762
  %v8015 = vunpack.c.h.b16 %v6762
  %v8016 = vunpack.c.l.b16 %v6763
  %v8017 = vunpack.c.l.b16 %v6764
  %v8018 = vunpack.c.h.b16 %v6764
  %v8019 = vunpack.c.l.b16 %v6765
  %v8020 = vunpack.c.l.b16 %v6766
  %v8021 = vunpack.c.h.b16 %v6766
  %v8022 = vunpack.c.l.b16 %v6767
  %v8023 = vunpack.c.l.b16 %v6768
  %v8024 = vunpack.c.h.b16 %v6768
  %v8025 = vunpack.c.l.b16 %v6769
  %v8026 = vunpack.c.l.b16 %v6770
  %v8027 = vunpack.c.h.b16 %v6770
  %v8028 = vunpack.c.l.b16 %v6771
  %v8029 = vunpack.c.l.b16 %v6772
  %v8030 = vunpack.c.h.b16 %v6772
  %v8031 = vunpack.c.l.b16 %v6773
  %v8032 = vunpack.c.l.b16 %v6774
  %v8033 = vunpack.c.h.b16 %v6774
  %v8034 = vunpack.c.l.b16 %v6775
  %v8035 = vunpack.c.l.b16 %v6776
  %v8036 = vunpack.c.h.b16 %v6776
  %v8037 = vunpack.c.l.b16 %v6777
  %v8038 = vunpack.c.l.b16 %v6778
  %v8039 = vunpack.c.h.b16 %v6778
  %v8040 = vunpack.c.l.b16 %v6779
  %v8041 = vunpack.c.l.b16 %v6780
  %v8042 = vunpack.c.h.b16 %v6780
  %v8043 = vunpack.c.l.b16 %v6781
  %v8044 = vunpack.c.l.b16 %v6782
  %v8045 = vunpack.c.h.b16 %v6782
  %v8046 = vunpack.c.l.b16 %v6783
  %v8047 = vunpack.c.l.b16 %v6784
  %v8048 = vunpack.c.h.b16 %v6784
  %v8049 = vunpack.c.l.b16 %v6785
  %v8050 = vunpack.c.l.b16 %v6786
  %v8051 = vunpack.c.h.b16 %v6786
  %v8052 = vunpack.c.l.b16 %v6787
  %v8053 = vunpack.c.l.b16 %v6788
  %v8054 = vunpack.c.h.b16 %v6788
  %v8055 = vunpack.c.l.b16 %v6789
  %v8056 = vunpack.c.l.b16 %v6790
  %v8057 = vunpack.c.h.b16 %v6790
  %v8058 = vunpack.c.l.b16 %v6791
  %v8059 = vunpack.c.l.b16 %v6792
  %v8060 = vunpack.c.h.b16 %v6792
  %v8061 = vunpack.c.l.b16 %v6793
  %v8062 = vunpack.c.l.b16 %v6794
  %v8063 = vunpack.c.h.b16 %v6794
  %v8064 = vunpack.c.l.b16 %v6795
  %v8065 = vunpack.c.l.b16 %v6796
  %v8066 = vunpack.c.h.b16 %v6796
  %v8067 = vunpack.c.l.b16 %v6797
  %v8068 = vunpack.c.l.b16 %v6798
  %v8069 = vunpack.c.h.b16 %v6798
  %v8070 = vunpack.c.l.b16 %v6799
  %v8071 = vunpack.c.l.b16 %v6800
  %v8072 = vunpack.c.h.b16 %v6800
  %v8073 = vunpack.c.l.b16 %v6801
  %v8074 = vunpack.c.l.b16 %v6802
  %v8075 = vunpack.c.h.b16 %v6802
  %v8076 = vunpack.c.l.b16 %v6803
  %v8077 = vunpack.c.l.b16 %v6804
  %v8078 = vunpack.c.h.b16 %v6804
  %v8079 = vunpack.c.l.b16 %v6805
  %v8080 = vunpack.c.l.b16 %v6806
  %v8081 = vunpack.c.h.b16 %v6806
  %v8082 = vunpack.c.l.b16 %v6807
  %v8083 = vunpack.c.l.b16 %v6808
  %v8084 = vunpack.c.h.b16 %v6808
  %v8085 = vunpack.c.l.b16 %v6809
  %v8086 = vunpack.c.l.b16 %v6810
  %v8087 = vunpack.c.h.b16 %v6810
  %v8088 = vunpack.c.l.b16 %v6811
  %v8089 = vunpack.c.l.b16 %v6812
  %v8090 = vunpack.c.h.b16 %v6812
  %v8091 = vunpack.c.l.b16 %v6813
  %v8092 = vunpack.c.l.b16 %v6814
  %v8093 = vunpack.c.h.b16 %v6814
  %v8094 = vunpack.c.l.b16 %v6815
  %v8095 = vunpack.c.l.b16 %v6816
  %v8096 = vunpack.c.h.b16 %v6816
  %v8097 = vunpack.c.l.b16 %v6817
  %v8098 = vunpack.c.l.b16 %v6818
  %v8099 = vunpack.c.h.b16 %v6818
  %v8100 = vunpack.c.l.b16 %v6819
  %v8101 = vunpack.c.l.b16 %v6820
  %v8102 = vunpack.c.h.b16 %v6820
  %v8103 = vunpack.c.l.b16 %v6821
  %v8104 = vunpack.c.l.b16 %v6822
  %v8105 = vunpack.c.h.b16 %v6822
  %v8106 = vunpack.c.l.b16 %v6823
  %v8107 = vunpack.c.l.b16 %v6824
  %v8108 = vunpack.c.h.b16 %v6824
  %v8109 = vunpack.c.l.b16 %v6825
  %v8110 = vunpack.c.l.b16 %v6826
  %v8111 = vunpack.c.h.b16 %v6826
  %v8112 = vunpack.c.l.b16 %v6827
  %v8113 = vunpack.c.l.b16 %v6828
  %v8114 = vunpack.c.h.b16 %v6828
  %v8115 = vunpack.c.l.b16 %v6829
  %v8116 = vunpack.c.l.b16 %v6830
  %v8117 = vunpack.c.h.b16 %v6830
  %v8118 = vunpack.c.l.b16 %v6831
  %v8119 = vunpack.c.l.b16 %v6832
  %v8120 = vunpack.c.h.b16 %v6832
  %v8121 = vunpack.c.l.b16 %v6833
  %v8122 = vunpack.c.l.b16 %v6834
  %v8123 = vunpack.c.h.b16 %v6834
  %v8124 = vunpack.c.l.b16 %v6835
  %v8125 = vunpack.c.l.b16 %v6836
  %v8126 = vunpack.c.h.b16 %v6836
  %v8127 = vunpack.c.l.b16 %v6837
  %v8128 = vunpack.c.l.b16 %v6838
  %v8129 = vunpack.c.h.b16 %v6838
  %v8130 = vunpack.c.l.b16 %v6839
  %v8131 = vunpack.c.l.b16 %v6840
  %v8132 = vunpack.c.h.b16 %v6840
  %v8133 = vunpack.c.l.b16 %v6841
  %v8134 = vunpack.c.l.b16 %v6842
  %v8135 = vunpack.c.h.b16 %v6842
  %v8136 = vunpack.c.l.b16 %v6843
  %v8137 = vunpack.c.l.b16 %v6844
  %v8138 = vunpack.c.h.b16 %v6844
  %v8139 = vunpack.c.l.b16 %v6845
  %v8140 = vunpack.c.l.b16 %v6846
  %v8141 = vunpack.c.h.b16 %v6846
  %v8142 = vunpack.c.l.b16 %v6847
  %v8143 = vunpack.c.l.b16 %v6848
  %v8144 = vunpack.c.h.b16 %v6848
  %v8145 = vunpack.c.l.b16 %v6849
  %v8146 = vunpack.c.l.b16 %v6850
  %v8147 = vunpack.c.h.b16 %v6850
  %v8148 = vunpack.c.l.b16 %v6851
  %v8149 = vunpack.c.l.b16 %v6852
  %v8150 = vunpack.c.h.b16 %v6852
  %v8151 = vunpack.c.l.b16 %v6853
  %v8152 = vunpack.c.l.b16 %v6854
  %v8153 = vunpack.c.h.b16 %v6854
  %v8154 = vunpack.c.l.b16 %v6855
  %v8155 = vunpack.c.l.b16 %v6856
  %v8156 = vunpack.c.h.b16 %v6856
  %v8157 = vunpack.c.l.b16 %v6857
  %v8158 = vunpack.c.l.b16 %v6858
  %v8159 = vunpack.c.h.b16 %v6858
  %v8160 = vunpack.c.l.b16 %v6859
  %v8161 = vunpack.c.l.b16 %v6860
  %v8162 = vunpack.c.h.b16 %v6860
  %v8163 = vunpack.c.l.b16 %v6861
  %v8164 = vunpack.c.l.b16 %v6862
  %v8165 = vunpack.c.h.b16 %v6862
  %v8166 = vunpack.c.l.b16 %v6863
  %v8167 = vunpack.c.l.b16 %v6864
  %v8168 = vunpack.c.h.b16 %v6864
  %v8169 = vunpack.c.l.b16 %v6865
  %v8170 = vunpack.c.l.b16 %v6866
  %v8171 = vunpack.c.h.b16 %v6866
  %v8172 = vunpack.c.l.b16 %v6867
  %v8173 = vunpack.c.l.b16 %v6868
  %v8174 = vunpack.c.h.b16 %v6868
  %v8175 = vunpack.c.l.b16 %v6869
  %v8176 = vunpack.c.l.b16 %v6870
  %v8177 = vunpack.c.h.b16 %v6870
  %v8178 = vunpack.c.l.b16 %v6871
  %v8179 = vunpack.c.l.b16 %v6872
  %v8180 = vunpack.c.h.b16 %v6872
  %v8181 = vunpack.c.l.b16 %v6873
  %v8182 = vunpack.c.l.b16 %v6874
  %v8183 = vunpack.c.h.b16 %v6874
  %v8184 = vunpack.c.l.b16 %v6875
  %v8185 = vunpack.c.l.b16 %v6876
  %v8186 = vunpack.c.h.b16 %v6876
  %v8187 = vunpack.c.l.b16 %v6877
  %v8188 = vunpack.c.l.b16 %v6878
  %v8189 = vunpack.c.h.b16 %v6878
  %v8190 = vunpack.c.l.b16 %v6879
  %v8191 = vunpack.c.l.b16 %v6880
  %v8192 = vunpack.c.h.b16 %v6880
  %v8193 = vunpack.c.l.b16 %v6881
  %v8194 = vunpack.c.l.b16 %v6882
  %v8195 = vunpack.c.h.b16 %v6882
  %v8196 = vunpack.c.l.b16 %v6883
  %v8197 = vunpack.c.l.b16 %v6884
  %v8198 = vunpack.c.h.b16 %v6884
  %v8199 = vunpack.c.l.b16 %v6885
  %v8200 = vunpack.c.l.b16 %v6886
  %v8201 = vunpack.c.h.b16 %v6886
  %v8202 = vunpack.c.l.b16 %v6887
  %v8203 = vunpack.c.l.b16 %v6888
  %v8204 = vunpack.c.h.b16 %v6888
  %v8205 = vunpack.c.l.b16 %v6889
  %v8206 = vunpack.c.l.b16 %v6890
  %v8207 = vunpack.c.h.b16 %v6890
  %v8208 = vunpack.c.l.b16 %v6891
  %v8209 = vunpack.c.l.b16 %v6892
  %v8210 = vunpack.c.h.b16 %v6892
  %v8211 = vunpack.c.l.b16 %v6893
  %v8212 = vunpack.c.l.b16 %v6894
  %v8213 = vunpack.c.h.b16 %v6894
  %v8214 = vunpack.c.l.b16 %v6895
  %v8215 = vunpack.c.l.b16 %v6896
  %v8216 = vunpack.c.h.b16 %v6896
  %v8217 = vunpack.c.l.b16 %v6897
  %v8218 = vunpack.c.l.b16 %v6898
  %v8219 = vunpack.c.h.b16 %v6898
  %v8220 = vunpack.c.l.b16 %v6899
  %v8221 = vunpack.c.l.b16 %v6900
  %v8222 = vunpack.c.h.b16 %v6900
  %v8223 = vunpack.c.l.b16 %v6901
  %v8224 = vunpack.c.l.b16 %v6902
  %v8225 = vunpack.c.h.b16 %v6902
  %v8226 = vunpack.c.l.b16 %v6903
  %v8227 = vunpack.c.l.b16 %v6904
  %v8228 = vunpack.c.h.b16 %v6904
  %v8229 = vunpack.c.l.b16 %v6905
  %v8230 = vunpack.c.l.b16 %v6906
  %v8231 = vunpack.c.h.b16 %v6906
  %v8232 = vunpack.c.l.b16 %v6907
  %v8233 = vunpack.c.l.b16 %v6908
  %v8234 = vunpack.c.h.b16 %v6908
  %v8235 = vunpack.c.l.b16 %v6909
  %v8236 = vunpack.c.l.b16 %v6910
  %v8237 = vunpack.c.h.b16 %v6910
  %v8238 = vunpack.c.l.b16 %v6911
  %v8239 = vunpack.c.l.b16 %v6912
  %v8240 = vunpack.c.h.b16 %v6912
  %v8241 = vunpack.c.l.b16 %v6913
  %v8242 = vunpack.c.l.b16 %v6914
  %v8243 = vunpack.c.h.b16 %v6914
  %v8244 = vunpack.c.l.b16 %v6915
  %v8245 = vunpack.c.l.b16 %v6916
  %v8246 = vunpack.c.h.b16 %v6916
  %v8247 = vunpack.c.l.b16 %v6917
  %v8248 = vunpack.c.l.b16 %v6918
  %v8249 = vunpack.c.h.b16 %v6918
  %v8250 = vunpack.c.l.b16 %v6919
  %v8251 = vunpack.c.l.b16 %v6920
  %v8252 = vunpack.c.h.b16 %v6920
  %v8253 = vunpack.c.l.b16 %v6921
  %v8254 = vunpack.c.l.b16 %v6922
  %v8255 = vunpack.c.h.b16 %v6922
  %v8256 = vunpack.c.l.b16 %v6923
  %v8257 = vunpack.c.l.b16 %v6924
  %v8258 = vunpack.c.h.b16 %v6924
  %v8259 = vunpack.c.l.b16 %v6925
  %v8260 = vunpack.c.l.b16 %v6926
  %v8261 = vunpack.c.h.b16 %v6926
  %v8262 = vunpack.c.l.b16 %v6927
  %v8263 = vunpack.c.l.b16 %v6928
  %v8264 = vunpack.c.h.b16 %v6928
  %v8265 = vunpack.c.l.b16 %v6929
  %v8266 = vunpack.c.l.b16 %v6930
  %v8267 = vunpack.c.h.b16 %v6930
  %v8268 = vunpack.c.l.b16 %v6931
  %v8269 = vunpack.c.l.b16 %v6932
  %v8270 = vunpack.c.h.b16 %v6932
  %v8271 = vunpack.c.l.b16 %v6933
  %v8272 = vunpack.c.l.b16 %v6934
  %v8273 = vunpack.c.h.b16 %v6934
  %v8274 = vunpack.c.l.b16 %v6935
  %v8275 = vunpack.c.l.b16 %v6936
  %v8276 = vunpack.c.h.b16 %v6936
  %v8277 = vunpack.c.l.b16 %v6937
  %v8278 = vunpack.c.l.b16 %v6938
  %v8279 = vunpack.c.h.b16 %v6938
  %v8280 = vunpack.c.l.b16 %v6939
  %v8281 = vunpack.c.l.b16 %v6940
  %v8282 = vunpack.c.h.b16 %v6940
  %v8283 = vunpack.c.l.b16 %v6941
  %v8284 = vunpack.c.l.b16 %v6942
  %v8285 = vunpack.c.h.b16 %v6942
  %v8286 = vunpack.c.l.b16 %v6943
  %v8287 = vunpack.c.l.b16 %v6944
  %v8288 = vunpack.c.h.b16 %v6944
  %v8289 = vunpack.c.l.b16 %v6945
  %v8290 = vunpack.c.l.b16 %v6946
  %v8291 = vunpack.c.h.b16 %v6946
  %v8292 = vunpack.c.l.b16 %v6947
  %v8293 = vunpack.c.l.b16 %v6948
  %v8294 = vunpack.c.h.b16 %v6948
  %v8295 = vunpack.c.l.b16 %v6949
  %v8296 = vunpack.c.l.b16 %v6950
  %v8297 = vunpack.c.h.b16 %v6950
  %v8298 = vunpack.c.l.b16 %v6951
  %v8299 = vunpack.c.l.b16 %v6952
  %v8300 = vunpack.c.h.b16 %v6952
  %v8301 = vunpack.c.l.b16 %v6953
  %v8302 = vunpack.c.l.b16 %v6954
  %v8303 = vunpack.c.h.b16 %v6954
  %v8304 = vunpack.c.l.b16 %v6955
  %v8305 = vunpack.c.l.b16 %v6956
  %v8306 = vunpack.c.h.b16 %v6956
  %v8307 = vunpack.c.l.b16 %v6957
  %v8308 = vunpack.c.l.b16 %v6958
  %v8309 = vunpack.c.h.b16 %v6958
  %v8310 = vunpack.c.l.b16 %v6959
  %v8311 = vunpack.c.l.b16 %v6960
  %v8312 = vunpack.c.h.b16 %v6960
  %v8313 = vunpack.c.l.b16 %v6961
  %v8314 = vunpack.c.l.b16 %v6962
  %v8315 = vunpack.c.h.b16 %v6962
  %v8316 = vunpack.c.l.b16 %v6963
  %v8317 = vunpack.c.l.b16 %v6964
  %v8318 = vunpack.c.h.b16 %v6964
  %v8319 = vunpack.c.l.b16 %v6965
  %v8320 = vunpack.c.l.b16 %v6966
  %v8321 = vunpack.c.h.b16 %v6966
  %v8322 = vunpack.c.l.b16 %v6967
  %v8323 = vunpack.c.l.b16 %v6968
  %v8324 = vunpack.c.h.b16 %v6968
  %v8325 = vunpack.c.l.b16 %v6969
  %v8326 = vunpack.c.l.b16 %v6970
  %v8327 = vunpack.c.h.b16 %v6970
  %v8328 = vunpack.c.l.b16 %v6971
  %v8329 = vunpack.c.l.b16 %v6972
  %v8330 = vunpack.c.h.b16 %v6972
  %v8331 = vunpack.c.l.b16 %v6973
  %v8332 = vunpack.c.l.b16 %v6974
  %v8333 = vunpack.c.h.b16 %v6974
  %v8334 = vunpack.c.l.b16 %v6975
  %v8335 = vunpack.c.l.b16 %v6976
  %v8336 = vunpack.c.h.b16 %v6976
  %v8337 = vunpack.c.l.b16 %v6977
  %v8338 = vunpack.c.l.b16 %v6978
  %v8339 = vunpack.c.h.b16 %v6978
  %v8340 = vunpack.c.l.b16 %v6979
  %v8341 = vunpack.c.l.b16 %v6980
  %v8342 = vunpack.c.h.b16 %v6980
  %v8343 = vunpack.c.l.b16 %v6981
  %v8344 = vunpack.c.l.b16 %v6982
  %v8345 = vunpack.c.h.b16 %v6982
  %v8346 = vunpack.c.l.b16 %v6983
  %v8347 = vunpack.c.l.b16 %v6984
  %v8348 = vunpack.c.h.b16 %v6984
  %v8349 = vunpack.c.l.b16 %v6985
  %v8350 = vunpack.c.l.b16 %v6986
  %v8351 = vunpack.c.h.b16 %v6986
  %v8352 = vunpack.c.l.b16 %v6987
  %v8353 = vunpack.c.l.b16 %v6988
  %v8354 = vunpack.c.h.b16 %v6988
  %v8355 = vunpack.c.l.b16 %v6989
  %v8356 = vunpack.c.l.b16 %v6990
  %v8357 = vunpack.c.h.b16 %v6990
  %v8358 = vunpack.c.l.b16 %v6991
  %v8359 = vunpack.c.l.b16 %v6992
  %v8360 = vunpack.c.h.b16 %v6992
  %v8361 = vunpack.c.l.b16 %v6993
  %v8362 = vunpack.c.l.b16 %v6994
  %v8363 = vunpack.c.h.b16 %v6994
  %v8364 = vunpack.c.l.b16 %v6995
  %v8365 = vunpack.c.l.b16 %v6996
  %v8366 = vunpack.c.h.b16 %v6996
  %v8367 = vunpack.c.l.b16 %v6997
  %v8368 = vunpack.c.l.b16 %v6998
  %v8369 = vunpack.c.h.b16 %v6998
  %v8370 = vunpack.c.l.b16 %v6999
  %v8371 = vunpack.c.l.b16 %v7000
  %v8372 = vunpack.c.h.b16 %v7000
  %v8373 = vunpack.c.l.b16 %v7001
  %v8374 = vunpack.c.l.b16 %v7002
  %v8375 = vunpack.c.h.b16 %v7002
  %v8376 = vunpack.c.l.b16 %v7003
  %v8377 = vunpack.c.l.b16 %v7004
  %v8378 = vunpack.c.h.b16 %v7004
  %v8379 = vunpack.c.l.b16 %v7005
  %v8380 = vunpack.c.l.b16 %v7006
  %v8381 = vunpack.c.h.b16 %v7006
  %v8382 = vunpack.c.l.b16 %v7007
  %v8383 = vunpack.c.l.b16 %v7008
  %v8384 = vunpack.c.h.b16 %v7008
  %v8385 = vunpack.c.l.b16 %v7009
  %v8386 = vunpack.c.l.b16 %v7010
  %v8387 = vunpack.c.h.b16 %v7010
  %v8388 = vunpack.c.l.b16 %v7011
  %v8389 = vunpack.c.l.b16 %v7012
  %v8390 = vunpack.c.h.b16 %v7012
  %v8391 = vunpack.c.l.b16 %v7013
  %v8392 = vunpack.c.l.b16 %v7014
  %v8393 = vunpack.c.h.b16 %v7014
  %v8394 = vunpack.c.l.b16 %v7015
  %v8395 = vunpack.c.l.b16 %v7016
  %v8396 = vunpack.c.h.b16 %v7016
  %v8397 = vunpack.c.l.b16 %v7017
  %v8398 = vunpack.c.l.b16 %v7018
  %v8399 = vunpack.c.h.b16 %v7018
  %v8400 = vunpack.c.l.b16 %v7019
  %v8401 = vunpack.c.l.b16 %v7020
  %v8402 = vunpack.c.h.b16 %v7020
  %v8403 = vunpack.c.l.b16 %v7021
  %v8404 = vunpack.c.l.b16 %v7022
  %v8405 = vunpack.c.h.b16 %v7022
  %v8406 = vunpack.c.l.b16 %v7023
  %v8407 = vunpack.c.l.b16 %v7024
  %v8408 = vunpack.c.h.b16 %v7024
  %v8409 = vunpack.c.l.b16 %v7025
  %v8410 = vunpack.c.l.b16 %v7026
  %v8411 = vunpack.c.h.b16 %v7026
  %v8412 = vunpack.c.l.b16 %v7027
  %v8413 = vunpack.c.l.b16 %v7028
  %v8414 = vunpack.c.h.b16 %v7028
  %v8415 = vunpack.c.l.b16 %v7029
  %v8416 = vunpack.c.l.b16 %v7030
  %v8417 = vunpack.c.h.b16 %v7030
  %v8418 = vunpack.c.l.b16 %v7031
  %v8419 = vunpack.c.l.b16 %v7032
  %v8420 = vunpack.c.h.b16 %v7032
  %v8421 = vunpack.c.l.b16 %v7033
  %v8422 = vunpack.c.l.b16 %v7034
  %v8423 = vunpack.c.h.b16 %v7034
  %v8424 = vunpack.c.l.b16 %v7035
  %v8425 = vunpack.c.l.b16 %v7036
  %v8426 = vunpack.c.h.b16 %v7036
  %v8427 = vunpack.c.l.b16 %v7037
  %v8428 = vunpack.c.l.b16 %v7038
  %v8429 = vunpack.c.h.b16 %v7038
  %v8430 = vunpack.c.l.b16 %v7039
  %v8431 = vunpack.c.l.b16 %v7040
  %v8432 = vunpack.c.h.b16 %v7040
  %v8433 = vunpack.c.l.b16 %v7041
  %v8434 = vunpack.c.l.b16 %v7042
  %v8435 = vunpack.c.h.b16 %v7042
  %v8436 = vunpack.c.l.b16 %v7043
  %v8437 = vunpack.c.l.b16 %v7044
  %v8438 = vunpack.c.h.b16 %v7044
  %v8439 = vunpack.c.l.b16 %v7045
  %v8440 = vunpack.c.l.b16 %v7046
  %v8441 = vunpack.c.h.b16 %v7046
  %v8442 = vunpack.c.l.b16 %v7047
  %v8443 = vunpack.c.l.b16 %v7048
  %v8444 = vunpack.c.h.b16 %v7048
  %v8445 = vunpack.c.l.b16 %v7049
  %v8446 = vunpack.c.l.b16 %v7050
  %v8447 = vunpack.c.h.b16 %v7050
  %v8448 = vunpack.c.l.b16 %v7051
  %v8449 = vunpack.c.l.b16 %v7052
  %v8450 = vunpack.c.h.b16 %v7052
  %v8451 = vunpack.c.l.b16 %v7053
  %v8452 = vunpack.c.l.b16 %v7054
  %v8453 = vunpack.c.h.b16 %v7054
  %v8454 = vunpack.c.l.b16 %v7055
  %v8455 = vunpack.c.l.b16 %v7056
  %v8456 = vunpack.c.h.b16 %v7056
  %v8457 = vunpack.c.l.b16 %v7057
  %v8458 = vunpack.c.l.b16 %v7058
  %v8459 = vunpack.c.h.b16 %v7058
  %v8460 = vunpack.c.l.b16 %v7059
  %v8461 = vunpack.c.l.b16 %v7060
  %v8462 = vunpack.c.h.b16 %v7060
  %v8463 = vunpack.c.l.b16 %v7061
  %v8464 = vunpack.c.l.b16 %v7062
  %v8465 = vunpack.c.h.b16 %v7062
  %v8466 = vunpack.c.l.b16 %v7063
  %v8467 = vunpack.c.l.b16 %v7064
  %v8468 = vunpack.c.h.b16 %v7064
  %v8469 = vunpack.c.l.b16 %v7065
  %v8470 = vunpack.c.l.b16 %v7066
  %v8471 = vunpack.c.h.b16 %v7066
  %v8472 = vunpack.c.l.b16 %v7067
  %v8473 = vunpack.c.l.b16 %v7068
  %v8474 = vunpack.c.h.b16 %v7068
  %v8475 = vunpack.c.l.b16 %v7069
  %v8476 = vunpack.c.l.b16 %v7070
  %v8477 = vunpack.c.h.b16 %v7070
  %v8478 = vunpack.c.l.b16 %v7071
  %v8479 = vunpack.c.l.b16 %v7072
  %v8480 = vunpack.c.h.b16 %v7072
  %v8481 = vunpack.c.l.b16 %v7073
  %v8482 = vunpack.c.l.b16 %v7074
  %v8483 = vunpack.c.h.b16 %v7074
  %v8484 = vunpack.c.l.b16 %v7075
  %v8485 = vunpack.c.l.b16 %v7076
  %v8486 = vunpack.c.h.b16 %v7076
  %v8487 = vunpack.c.l.b16 %v7077
  %v8488 = vunpack.c.l.b16 %v7078
  %v8489 = vunpack.c.h.b16 %v7078
  %v8490 = vunpack.c.l.b16 %v7079
  %v8491 = vunpack.c.l.b16 %v7080
  %v8492 = vunpack.c.h.b16 %v7080
  %v8493 = vunpack.c.l.b16 %v7081
  %v8494 = vunpack.c.l.b16 %v7082
  %v8495 = vunpack.c.h.b16 %v7082
  %v8496 = vunpack.c.l.b16 %v7083
  %v8497 = vunpack.c.l.b16 %v7084
  %v8498 = vunpack.c.h.b16 %v7084
  %v8499 = vunpack.c.l.b16 %v7085
  %v8500 = vunpack.c.l.b16 %v7086
  %v8501 = vunpack.c.h.b16 %v7086
  %v8502 = vunpack.c.l.b16 %v7087
  %v8503 = vunpack.c.l.b16 %v7088
  %v8504 = vunpack.c.h.b16 %v7088
  %v8505 = vunpack.c.l.b16 %v7089
  %v8506 = vunpack.c.l.b16 %v7090
  %v8507 = vunpack.c.h.b16 %v7090
  %v8508 = vunpack.c.l.b16 %v7091
  %v8509 = vunpack.c.l.b16 %v7092
  %v8510 = vunpack.c.h.b16 %v7092
  %v8511 = vunpack.c.l.b16 %v7093
  %v8512 = vunpack.c.l.b16 %v7094
  %v8513 = vunpack.c.h.b16 %v7094
  %v8514 = vunpack.c.l.b16 %v7095
  %v8515 = vunpack.c.l.b16 %v7096
  %v8516 = vunpack.c.h.b16 %v7096
  %v8517 = vunpack.c.l.b16 %v7097
  %v8518 = vunpack.c.l.b16 %v7098
  %v8519 = vunpack.c.h.b16 %v7098
  %v8520 = vunpack.c.l.b16 %v7099
  %v8521 = vunpack.c.l.b16 %v7100
  %v8522 = vunpack.c.h.b16 %v7100
  %v8523 = vunpack.c.l.b16 %v7101
  %v8524 = vunpack.c.l.b16 %v7102
  %v8525 = vunpack.c.h.b16 %v7102
  %v8526 = vunpack.c.l.b16 %v7103
  %v8527 = vunpack.c.l.b16 %v7104
  %v8528 = vunpack.c.h.b16 %v7104
  %v8529 = vunpack.c.l.b16 %v7105
  %v8530 = vunpack.c.l.b16 %v7106
  %v8531 = vunpack.c.h.b16 %v7106
  %v8532 = vunpack.c.l.b16 %v7107
  %v8533 = vunpack.c.l.b16 %v7108
  %v8534 = vunpack.c.h.b16 %v7108
  %v8535 = vunpack.c.l.b16 %v7109
  %v8536 = vunpack.c.l.b16 %v7110
  %v8537 = vunpack.c.h.b16 %v7110
  %v8538 = vunpack.c.l.b16 %v7111
  %v8539 = vunpack.c.l.b16 %v7112
  %v8540 = vunpack.c.h.b16 %v7112
  %v8541 = vunpack.c.l.b16 %v7113
  %v8542 = vunpack.c.l.b16 %v7114
  %v8543 = vunpack.c.h.b16 %v7114
  %v8544 = vunpack.c.l.b16 %v7115
  %v8545 = vunpack.c.l.b16 %v7116
  %v8546 = vunpack.c.h.b16 %v7116
  %v8547 = vunpack.c.l.b16 %v7117
  %v8548 = vunpack.c.l.b16 %v7118
  %v8549 = vunpack.c.h.b16 %v7118
  %v8550 = vunpack.c.l.b16 %v7119
  %v8551 = vunpack.c.l.b16 %v7120
  %v8552 = vunpack.c.h.b16 %v7120
  %v8553 = vunpack.c.l.b16 %v7121
  %v8554 = vunpack.c.l.b16 %v7122
  %v8555 = vunpack.c.h.b16 %v7122
  %v8556 = vunpack.c.l.b16 %v7123
  %v8557 = vunpack.c.l.b16 %v7124
  %v8558 = vunpack.c.h.b16 %v7124
  %v8559 = vunpack.c.l.b16 %v7125
  %v8560 = vunpack.c.l.b16 %v7126
  %v8561 = vunpack.c.h.b16 %v7126
  %v8562 = vunpack.c.l.b16 %v7127
  %v8563 = vunpack.c.l.b16 %v7128
  %v8564 = vunpack.c.h.b16 %v7128
  %v8565 = vunpack.c.l.b16 %v7129
  %v8566 = vunpack.c.l.b16 %v7130
  %v8567 = vunpack.c.h.b16 %v7130
  %v8568 = vunpack.c.l.b16 %v7131
  %v8569 = vunpack.c.l.b16 %v7132
  %v8570 = vunpack.c.h.b16 %v7132
  %v8571 = vunpack.c.l.b16 %v7133
  %v8572 = vunpack.c.l.b16 %v7134
  %v8573 = vunpack.c.h.b16 %v7134
  %v8574 = vunpack.c.l.b16 %v7135
  %v8575 = vunpack.c.l.b16 %v7136
  %v8576 = vunpack.c.h.b16 %v7136
  %v8577 = vunpack.c.l.b16 %v7137
  %v8578 = vunpack.c.l.b16 %v7138
  %v8579 = vunpack.c.h.b16 %v7138
  %v8580 = vunpack.c.l.b16 %v7139
  %v8581 = vunpack.c.l.b16 %v7140
  %v8582 = vunpack.c.h.b16 %v7140
  %v8583 = vunpack.c.l.b16 %v7141
  %v8584 = vunpack.c.l.b16 %v7142
  %v8585 = vunpack.c.h.b16 %v7142
  %v8586 = vunpack.c.l.b16 %v7143
  %v8587 = vunpack.c.l.b16 %v7144
  %v8588 = vunpack.c.h.b16 %v7144
  %v8589 = vunpack.c.l.b16 %v7145
  %v8590 = vunpack.c.l.b16 %v7146
  %v8591 = vunpack.c.h.b16 %v7146
  %v8592 = vunpack.c.l.b16 %v7147
  %v8593 = vunpack.c.l.b16 %v7148
  %v8594 = vunpack.c.h.b16 %v7148
  %v8595 = vunpack.c.l.b16 %v7149
  %v8596 = vunpack.c.l.b16 %v7150
  %v8597 = vunpack.c.h.b16 %v7150
  %v8598 = vunpack.c.l.b16 %v7151
  %v8599 = vunpack.c.l.b16 %v7152
  %v8600 = vunpack.c.h.b16 %v7152
  %v8601 = vunpack.c.l.b16 %v7153
  %v8602 = vunpack.c.l.b16 %v7154
  %v8603 = vunpack.c.h.b16 %v7154
  %v8604 = vunpack.c.l.b16 %v7155
  %v8605 = vunpack.c.l.b16 %v7156
  %v8606 = vunpack.c.h.b16 %v7156
  %v8607 = vunpack.c.l.b16 %v7157
  %v8608 = vunpack.c.l.b16 %v7158
  %v8609 = vunpack.c.h.b16 %v7158
  %v8610 = vunpack.c.l.b16 %v7159
  %v8611 = vunpack.c.l.b16 %v7160
  %v8612 = vunpack.c.h.b16 %v7160
  %v8613 = vunpack.c.l.b16 %v7161
  %v8614 = vunpack.c.l.b16 %v7162
  %v8615 = vunpack.c.h.b16 %v7162
  %v8616 = vunpack.c.l.b16 %v7163
  %v8617 = vunpack.c.l.b16 %v7164
  %v8618 = vunpack.c.h.b16 %v7164
  %v8619 = vunpack.c.l.b16 %v7165
  %v8620 = vunpack.c.l.b16 %v7166
  %v8621 = vunpack.c.h.b16 %v7166
  %v8622 = vunpack.c.l.b16 %v7167
  %v8623 = vunpack.c.l.b16 %v7168
  %v8624 = vunpack.c.h.b16 %v7168
  %v8625 = vunpack.c.l.b16 %v7169
  %v8626 = vunpack.c.l.b16 %v7170
  %v8627 = vunpack.c.h.b16 %v7170
  %v8628 = vunpack.c.l.b16 %v7171
  %v8629 = vunpack.c.l.b16 %v7172
  %v8630 = vunpack.c.h.b16 %v7172
  %v8631 = vunpack.c.l.b16 %v7173
  %v8632 = vunpack.c.l.b16 %v7174
  %v8633 = vunpack.c.h.b16 %v7174
  %v8634 = vunpack.c.l.b16 %v7175
  %v8635 = vunpack.c.l.b16 %v7176
  %v8636 = vunpack.c.h.b16 %v7176
  %v8637 = vunpack.c.l.b16 %v7177
  %v8638 = vunpack.c.l.b16 %v7178
  %v8639 = vunpack.c.h.b16 %v7178
  %v8640 = vunpack.c.l.b16 %v7179
  %v8641 = vunpack.c.l.b16 %v7180
  %v8642 = vunpack.c.h.b16 %v7180
  %v8643 = vunpack.c.l.b16 %v7181
  %v8644 = vunpack.c.l.b16 %v7182
  %v8645 = vunpack.c.h.b16 %v7182
  %v8646 = vunpack.c.l.b16 %v7183
  %v8647 = vunpack.c.l.b16 %v7184
  %v8648 = vunpack.c.h.b16 %v7184
  %v8649 = vunpack.c.l.b16 %v7185
  %v8650 = vpack.c.b16 %v7789, %v7786
  %v8651 = vpack.c.b16 %v7790, %v7787
  %v8652 = vpack.c.b16 %v7791, %v7788
  %v8653 = vpack.c.b16 %v7795, %v7792
  %v8654 = vpack.c.b16 %v7796, %v7793
  %v8655 = vpack.c.b16 %v7797, %v7794
  %v8656 = vpack.c.b16 %v7801, %v7798
  %v8657 = vpack.c.b16 %v7802, %v7799
  %v8658 = vpack.c.b16 %v7803, %v7800
  %v8659 = vpack.c.b16 %v7807, %v7804
  %v8660 = vpack.c.b16 %v7808, %v7805
  %v8661 = vpack.c.b16 %v7809, %v7806
  %v8662 = vpack.c.b16 %v7813, %v7810
  %v8663 = vpack.c.b16 %v7814, %v7811
  %v8664 = vpack.c.b16 %v7815, %v7812
  %v8665 = vpack.c.b16 %v7819, %v7816
  %v8666 = vpack.c.b16 %v7820, %v7817
  %v8667 = vpack.c.b16 %v7821, %v7818
  %v8668 = vpack.c.b16 %v7825, %v7822
  %v8669 = vpack.c.b16 %v7826, %v7823
  %v8670 = vpack.c.b16 %v7827, %v7824
  %v8671 = vpack.c.b16 %v7831, %v7828
  %v8672 = vpack.c.b16 %v7832, %v7829
  %v8673 = vpack.c.b16 %v7833, %v7830
  %v8674 = vpack.c.b16 %v7837, %v7834
  %v8675 = vpack.c.b16 %v7838, %v7835
  %v8676 = vpack.c.b16 %v7839, %v7836
  %v8677 = vpack.c.b16 %v7843, %v7840
  %v8678 = vpack.c.b16 %v7844, %v7841
  %v8679 = vpack.c.b16 %v7845, %v7842
  %v8680 = vpack.c.b16 %v7849, %v7846
  %v8681 = vpack.c.b16 %v7850, %v7847
  %v8682 = vpack.c.b16 %v7851, %v7848
  %v8683 = vpack.c.b16 %v7855, %v7852
  %v8684 = vpack.c.b16 %v7856, %v7853
  %v8685 = vpack.c.b16 %v7857, %v7854
  %v8686 = vpack.c.b16 %v7861, %v7858
  %v8687 = vpack.c.b16 %v7862, %v7859
  %v8688 = vpack.c.b16 %v7863, %v7860
  %v8689 = vpack.c.b16 %v7867, %v7864
  %v8690 = vpack.c.b16 %v7868, %v7865
  %v8691 = vpack.c.b16 %v7869, %v7866
  %v8692 = vpack.c.b16 %v7873, %v7870
  %v8693 = vpack.c.b16 %v7874, %v7871
  %v8694 = vpack.c.b16 %v7875, %v7872
  %v8695 = vpack.c.b16 %v7879, %v7876
  %v8696 = vpack.c.b16 %v7880, %v7877
  %v8697 = vpack.c.b16 %v7881, %v7878
  %v8698 = vpack.c.b16 %v7885, %v7882
  %v8699 = vpack.c.b16 %v7886, %v7883
  %v8700 = vpack.c.b16 %v7887, %v7884
  %v8701 = vpack.c.b16 %v7891, %v7888
  %v8702 = vpack.c.b16 %v7892, %v7889
  %v8703 = vpack.c.b16 %v7893, %v7890
  %v8704 = vpack.c.b16 %v7897, %v7894
  %v8705 = vpack.c.b16 %v7898, %v7895
  %v8706 = vpack.c.b16 %v7899, %v7896
  %v8707 = vpack.c.b16 %v7903, %v7900
  %v8708 = vpack.c.b16 %v7904, %v7901
  %v8709 = vpack.c.b16 %v7905, %v7902
  %v8710 = vpack.c.b16 %v7909, %v7906
  %v8711 = vpack.c.b16 %v7910, %v7907
  %v8712 = vpack.c.b16 %v7911, %v7908
  %v8713 = vpack.c.b16 %v7915, %v7912
  %v8714 = vpack.c.b16 %v7916, %v7913
  %v8715 = vpack.c.b16 %v7917, %v7914
  %v8716 = vpack.c.b16 %v7921, %v7918
  %v8717 = vpack.c.b16 %v7922, %v7919
  %v8718 = vpack.c.b16 %v7923, %v7920
  %v8719 = vpack.c.b16 %v7927, %v7924
  %v8720 = vpack.c.b16 %v7928, %v7925
  %v8721 = vpack.c.b16 %v7929, %v7926
  %v8722 = vpack.c.b16 %v7933, %v7930
  %v8723 = vpack.c.b16 %v7934, %v7931
  %v8724 = vpack.c.b16 %v7935, %v7932
  %v8725 = vpack.c.b16 %v7939, %v7936
  %v8726 = vpack.c.b16 %v7940, %v7937
  %v8727 = vpack.c.b16 %v7941, %v7938
  %v8728 = vpack.c.b16 %v7945, %v7942
  %v8729 = vpack.c.b16 %v7946, %v7943
  %v8730 = vpack.c.b16 %v7947, %v7944
  %v8731 = vpack.c.b16 %v7951, %v7948
  %v8732 = vpack.c.b16 %v7952, %v7949
  %v8733 = vpack.c.b16 %v7953, %v7950
  %v8734 = vpack.c.b16 %v7957, %v7954
  %v8735 = vpack.c.b16 %v7958, %v7955
  %v8736 = vpack.c.b16 %v7959, %v7956
  %v8737 = vpack.c.b16 %v7963, %v7960
  %v8738 = vpack.c.b16 %v7964, %v7961
  %v8739 = vpack.c.b16 %v7965, %v7962
  %v8740 = vpack.c.b16 %v7969, %v7966
  %v8741 = vpack.c.b16 %v7970, %v7967
  %v8742 = vpack.c.b16 %v7971, %v7968
  %v8743 = vpack.c.b16 %v7975, %v7972
  %v8744 = vpack.c.b16 %v7976, %v7973
  %v8745 = vpack.c.b16 %v7977, %v7974
  %v8746 = vpack.c.b16 %v7981, %v7978
  %v8747 = vpack.c.b16 %v7982, %v7979
  %v8748 = vpack.c.b16 %v7983, %v7980
  %v8749 = vpack.c.b16 %v7987, %v7984
  %v8750 = vpack.c.b16 %v7988, %v7985
  %v8751 = vpack.c.b16 %v7989, %v7986
  %v8752 = vpack.c.b16 %v7993, %v7990
  %v8753 = vpack.c.b16 %v7994, %v7991
  %v8754 = vpack.c.b16 %v7995, %v7992
  %v8755 = vpack.c.b16 %v7999, %v7996
  %v8756 = vpack.c.b16 %v8000, %v7997
  %v8757 = vpack.c.b16 %v8001, %v7998
  %v8758 = vpack.c.b16 %v8005, %v8002
  %v8759 = vpack.c.b16 %v8006, %v8003
  %v8760 = vpack.c.b16 %v8007, %v8004
  %v8761 = vpack.c.b16 %v8011, %v8008
  %v8762 = vpack.c.b16 %v8012, %v8009
  %v8763 = vpack.c.b16 %v8013, %v8010
  %v8764 = vpack.c.b16 %v8017, %v8014
  %v8765 = vpack.c.b16 %v8018, %v8015
  %v8766 = vpack.c.b16 %v8019, %v8016
  %v8767 = vpack.c.b16 %v8023, %v8020
  %v8768 = vpack.c.b16 %v8024, %v8021
  %v8769 = vpack.c.b16 %v8025, %v8022
  %v8770 = vpack.c.b16 %v8029, %v8026
  %v8771 = vpack.c.b16 %v8030, %v8027
  %v8772 = vpack.c.b16 %v8031, %v8028
  %v8773 = vpack.c.b16 %v8035, %v8032
  %v8774 = vpack.c.b16 %v8036, %v8033
  %v8775 = vpack.c.b16 %v8037, %v8034
  %v8776 = vpack.c.b16 %v8041, %v8038
  %v8777 = vpack.c.b16 %v8042, %v8039
  %v8778 = vpack.c.b16 %v8043, %v8040
  %v8779 = vpack.c.b16 %v8047, %v8044
  %v8780 = vpack.c.b16 %v8048, %v8045
  %v8781 = vpack.c.b16 %v8049, %v8046
  %v8782 = vpack.c.b16 %v8053, %v8050
  %v8783 = vpack.c.b16 %v8054, %v8051
  %v8784 = vpack.c.b16 %v8055, %v8052
  %v8785 = vpack.c.b16 %v8059, %v8056
  %v8786 = vpack.c.b16 %v8060, %v8057
  %v8787 = vpack.c.b16 %v8061, %v8058
  %v8788 = vpack.c.b16 %v8065, %v8062
  %v8789 = vpack.c.b16 %v8066, %v8063
  %v8790 = vpack.c.b16 %v8067, %v8064
  %v8791 = vpack.c.b16 %v8071, %v8068
  %v8792 = vpack.c.b16 %v8072, %v8069
  %v8793 = vpack.c.b16 %v8073, %v8070
  %v8794 = vpack.c.b16 %v8077, %v8074
  %v8795 = vpack.c.b16 %v8078, %v8075
  %v8796 = vpack.c.b16 %v8079, %v8076
  %v8797 = vpack.c.b16 %v8083, %v8080
  %v8798 = vpack.c.b16 %v8084, %v8081
  %v8799 = vpack.c.b16 %v8085, %v8082
  %v8800 = vpack.c.b16 %v8089, %v8086
  %v8801 = vpack.c.b16 %v8090, %v8087
  %v8802 = vpack.c.b16 %v8091, %v8088
  %v8803 = vpack.c.b16 %v8095, %v8092
  %v8804 = vpack.c.b16 %v8096, %v8093
  %v8805 = vpack.c.b16 %v8097, %v8094
  %v8806 = vpack.c.b16 %v8101, %v8098
  %v8807 = vpack.c.b16 %v8102, %v8099
  %v8808 = vpack.c.b16 %v8103, %v8100
  %v8809 = vpack.c.b16 %v8107, %v8104
  %v8810 = vpack.c.b16 %v8108, %v8105
  %v8811 = vpack.c.b16 %v8109, %v8106
  %v8812 = vpack.c.b16 %v8113, %v8110
  %v8813 = vpack.c.b16 %v8114, %v8111
  %v8814 = vpack.c.b16 %v8115, %v8112
  %v8815 = vpack.c.b16 %v8119, %v8116
  %v8816 = vpack.c.b16 %v8120, %v8117
  %v8817 = vpack.c.b16 %v8121, %v8118
  %v8818 = vpack.c.b16 %v8125, %v8122
  %v8819 = vpack.c.b16 %v8126, %v8123
  %v8820 = vpack.c.b16 %v8127, %v8124
  %v8821 = vpack.c.b16 %v8131, %v8128
  %v8822 = vpack.c.b16 %v8132, %v8129
  %v8823 = vpack.c.b16 %v8133, %v8130
  %v8824 = vpack.c.b16 %v8137, %v8134
  %v8825 = vpack.c.b16 %v8138, %v8135
  %v8826 = vpack.c.b16 %v8139, %v8136
  %v8827 = vpack.c.b16 %v8143, %v8140
  %v8828 = vpack.c.b16 %v8144, %v8141
  %v8829 = vpack.c.b16 %v8145, %v8142
  %v8830 = vpack.c.b16 %v8149, %v8146
  %v8831 = vpack.c.b16 %v8150, %v8147
  %v8832 = vpack.c.b16 %v8151, %v8148
  %v8833 = vpack.c.b16 %v8155, %v8152
  %v8834 = vpack.c.b16 %v8156, %v8153
  %v8835 = vpack.c.b16 %v8157, %v8154
  %v8836 = vpack.c.b16 %v8161, %v8158
  %v8837 = vpack.c.b16 %v8162, %v8159
  %v8838 = vpack.c.b16 %v8163, %v8160
  %v8839 = vpack.c.b16 %v8167, %v8164
  %v8840 = vpack.c.b16 %v8168, %v8165
  %v8841 = vpack.c.b16 %v8169, %v8166
  %v8842 = vpack.c.b16 %v8173, %v8170
  %v8843 = vpack.c.b16 %v8174, %v8171
  %v8844 = vpack.c.b16 %v8175, %v8172
  %v8845 = vpack.c.b16 %v8179, %v8176
  %v8846 = vpack.c.b16 %v8180, %v8177
  %v8847 = vpack.c.b16 %v8181, %v8178
  %v8848 = vpack.c.b16 %v8185, %v8182
  %v8849 = vpack.c.b16 %v8186, %v8183
  %v8850 = vpack.c.b16 %v8187, %v8184
  %v8851 = vpack.c.b16 %v8191, %v8188
  %v8852 = vpack.c.b16 %v8192, %v8189
  %v8853 = vpack.c.b16 %v8193, %v8190
  %v8854 = vpack.c.b16 %v8197, %v8194
  %v8855 = vpack.c.b16 %v8198, %v8195
  %v8856 = vpack.c.b16 %v8199, %v8196
  %v8857 = vpack.c.b16 %v8203, %v8200
  %v8858 = vpack.c.b16 %v8204, %v8201
  %v8859 = vpack.c.b16 %v8205, %v8202
  %v8860 = vpack.c.b16 %v8209, %v8206
  %v8861 = vpack.c.b16 %v8210, %v8207
  %v8862 = vpack.c.b16 %v8211, %v8208
  %v8863 = vpack.c.b16 %v8215, %v8212
  %v8864 = vpack.c.b16 %v8216, %v8213
  %v8865 = vpack.c.b16 %v8217, %v8214
  %v8866 = vpack.c.b16 %v8221, %v8218
  %v8867 = vpack.c.b16 %v8222, %v8219
  %v8868 = vpack.c.b16 %v8223, %v8220
  %v8869 = vpack.c.b16 %v8227, %v8224
  %v8870 = vpack.c.b16 %v8228, %v8225
  %v8871 = vpack.c.b16 %v8229, %v8226
  %v8872 = vpack.c.b16 %v8233, %v8230
  %v8873 = vpack.c.b16 %v8234, %v8231
  %v8874 = vpack.c.b16 %v8235, %v8232
  %v8875 = vpack.c.b16 %v8239, %v8236
  %v8876 = vpack.c.b16 %v8240, %v8237
  %v8877 = vpack.c.b16 %v8241, %v8238
  %v8878 = vpack.c.b16 %v8245, %v8242
  %v8879 = vpack.c.b16 %v8246, %v8243
  %v8880 = vpack.c.b16 %v8247, %v8244
  %v8881 = vpack.c.b16 %v8251, %v8248
  %v8882 = vpack.c.b16 %v8252, %v8249
  %v8883 = vpack.c.b16 %v8253, %v8250
  %v8884 = vpack.c.b16 %v8257, %v8254
  %v8885 = vpack.c.b16 %v8258, %v8255
  %v8886 = vpack.c.b16 %v8259, %v8256
  %v8887 = vpack.c.b16 %v8263, %v8260
  %v8888 = vpack.c.b16 %v8264, %v8261
  %v8889 = vpack.c.b16 %v8265, %v8262
  %v8890 = vpack.c.b16 %v8269, %v8266
  %v8891 = vpack.c.b16 %v8270, %v8267
  %v8892 = vpack.c.b16 %v8271, %v8268
  %v8893 = vpack.c.b16 %v8275, %v8272
  %v8894 = vpack.c.b16 %v8276, %v8273
  %v8895 = vpack.c.b16 %v8277, %v8274
  %v8896 = vpack.c.b16 %v8281, %v8278
  %v8897 = vpack.c.b16 %v8282, %v8279
  %v8898 = vpack.c.b16 %v8283, %v8280
  %v8899 = vpack.c.b16 %v8287, %v8284
  %v8900 = vpack.c.b16 %v8288, %v8285
  %v8901 = vpack.c.b16 %v8289, %v8286
  %v8902 = vpack.c.b16 %v8293, %v8290
  %v8903 = vpack.c.b16 %v8294, %v8291
  %v8904 = vpack.c.b16 %v8295, %v8292
  %v8905 = vpack.c.b16 %v8299, %v8296
  %v8906 = vpack.c.b16 %v8300, %v8297
  %v8907 = vpack.c.b16 %v8301, %v8298
  %v8908 = vpack.c.b16 %v8305, %v8302
  %v8909 = vpack.c.b16 %v8306, %v8303
  %v8910 = vpack.c.b16 %v8307, %v8304
  %v8911 = vpack.c.b16 %v8311, %v8308
  %v8912 = vpack.c.b16 %v8312, %v8309
  %v8913 = vpack.c.b16 %v8313, %v8310
  %v8914 = vpack.c.b16 %v8317, %v8314
  %v8915 = vpack.c.b16 %v8318, %v8315
  %v8916 = vpack.c.b16 %v8319, %v8316
  %v8917 = vpack.c.b16 %v8323, %v8320
  %v8918 = vpack.c.b16 %v8324, %v8321
  %v8919 = vpack.c.b16 %v8325, %v8322
  %v8920 = vpack.c.b16 %v8329, %v8326
  %v8921 = vpack.c.b16 %v8330, %v8327
  %v8922 = vpack.c.b16 %v8331, %v8328
  %v8923 = vpack.c.b16 %v8335, %v8332
  %v8924 = vpack.c.b16 %v8336, %v8333
  %v8925 = vpack.c.b16 %v8337, %v8334
  %v8926 = vpack.c.b16 %v8341, %v8338
  %v8927 = vpack.c.b16 %v8342, %v8339
  %v8928 = vpack.c.b16 %v8343, %v8340
  %v8929 = vpack.c.b16 %v8347, %v8344
  %v8930 = vpack.c.b16 %v8348, %v8345
  %v8931 = vpack.c.b16 %v8349, %v8346
  %v8932 = vpack.c.b16 %v8353, %v8350
  %v8933 = vpack.c.b16 %v8354, %v8351
  %v8934 = vpack.c.b16 %v8355, %v8352
  %v8935 = vpack.c.b16 %v8359, %v8356
  %v8936 = vpack.c.b16 %v8360, %v8357
  %v8937 = vpack.c.b16 %v8361, %v8358
  %v8938 = vpack.c.b16 %v8365, %v8362
  %v8939 = vpack.c.b16 %v8366, %v8363
  %v8940 = vpack.c.b16 %v8367, %v8364
  %v8941 = vpack.c.b16 %v8371, %v8368
  %v8942 = vpack.c.b16 %v8372, %v8369
  %v8943 = vpack.c.b16 %v8373, %v8370
  %v8944 = vpack.c.b16 %v8377, %v8374
  %v8945 = vpack.c.b16 %v8378, %v8375
  %v8946 = vpack.c.b16 %v8379, %v8376
  %v8947 = vpack.c.b16 %v8383, %v8380
  %v8948 = vpack.c.b16 %v8384, %v8381
  %v8949 = vpack.c.b16 %v8385, %v8382
  %v8950 = vpack.c.b16 %v8389, %v8386
  %v8951 = vpack.c.b16 %v8390, %v8387
  %v8952 = vpack.c.b16 %v8391, %v8388
  %v8953 = vpack.c.b16 %v8395, %v8392
  %v8954 = vpack.c.b16 %v8396, %v8393
  %v8955 = vpack.c.b16 %v8397, %v8394
  %v8956 = vpack.c.b16 %v8401, %v8398
  %v8957 = vpack.c.b16 %v8402, %v8399
  %v8958 = vpack.c.b16 %v8403, %v8400
  %v8959 = vpack.c.b16 %v8407, %v8404
  %v8960 = vpack.c.b16 %v8408, %v8405
  %v8961 = vpack.c.b16 %v8409, %v8406
  %v8962 = vpack.c.b16 %v8413, %v8410
  %v8963 = vpack.c.b16 %v8414, %v8411
  %v8964 = vpack.c.b16 %v8415, %v8412
  %v8965 = vpack.c.b16 %v8419, %v8416
  %v8966 = vpack.c.b16 %v8420, %v8417
  %v8967 = vpack.c.b16 %v8421, %v8418
  %v8968 = vpack.c.b16 %v8425, %v8422
  %v8969 = vpack.c.b16 %v8426, %v8423
  %v8970 = vpack.c.b16 %v8427, %v8424
  %v8971 = vpack.c.b16 %v8431, %v8428
  %v8972 = vpack.c.b16 %v8432, %v8429
  %v8973 = vpack.c.b16 %v8433, %v8430
  %v8974 = vpack.c.b16 %v8437, %v8434
  %v8975 = vpack.c.b16 %v8438, %v8435
  %v8976 = vpack.c.b16 %v8439, %v8436
  %v8977 = vpack.c.b16 %v8443, %v8440
  %v8978 = vpack.c.b16 %v8444, %v8441
  %v8979 = vpack.c.b16 %v8445, %v8442
  %v8980 = vpack.c.b16 %v8449, %v8446
  %v8981 = vpack.c.b16 %v8450, %v8447
  %v8982 = vpack.c.b16 %v8451, %v8448
  %v8983 = vpack.c.b16 %v8455, %v8452
  %v8984 = vpack.c.b16 %v8456, %v8453
  %v8985 = vpack.c.b16 %v8457, %v8454
  %v8986 = vpack.c.b16 %v8461, %v8458
  %v8987 = vpack.c.b16 %v8462, %v8459
  %v8988 = vpack.c.b16 %v8463, %v8460
  %v8989 = vpack.c.b16 %v8467, %v8464
  %v8990 = vpack.c.b16 %v8468, %v8465
  %v8991 = vpack.c.b16 %v8469, %v8466
  %v8992 = vpack.c.b16 %v8473, %v8470
  %v8993 = vpack.c.b16 %v8474, %v8471
  %v8994 = vpack.c.b16 %v8475, %v8472
  %v8995 = vpack.c.b16 %v8479, %v8476
  %v8996 = vpack.c.b16 %v8480, %v8477
  %v8997 = vpack.c.b16 %v8481, %v8478
  %v8998 = vpack.c.b16 %v8485, %v8482
  %v8999 = vpack.c.b16 %v8486, %v8483
  %v9000 = vpack.c.b16 %v8487, %v8484
  %v9001 = vpack.c.b16 %v8491, %v8488
  %v9002 = vpack.c.b16 %v8492, %v8489
  %v9003 = vpack.c.b16 %v8493, %v8490
  %v9004 = vpack.c.b16 %v8497, %v8494
  %v9005 = vpack.c.b16 %v8498, %v8495
  %v9006 = vpack.c.b16 %v8499, %v8496
  %v9007 = vpack.c.b16 %v8503, %v8500
  %v9008 = vpack.c.b16 %v8504, %v8501
  %v9009 = vpack.c.b16 %v8505, %v8502
  %v9010 = vpack.c.b16 %v8509, %v8506
  %v9011 = vpack.c.b16 %v8510, %v8507
  %v9012 = vpack.c.b16 %v8511, %v8508
  %v9013 = vpack.c.b16 %v8515, %v8512
  %v9014 = vpack.c.b16 %v8516, %v8513
  %v9015 = vpack.c.b16 %v8517, %v8514
  %v9016 = vpack.c.b16 %v8521, %v8518
  %v9017 = vpack.c.b16 %v8522, %v8519
  %v9018 = vpack.c.b16 %v8523, %v8520
  %v9019 = vpack.c.b16 %v8527, %v8524
  %v9020 = vpack.c.b16 %v8528, %v8525
  %v9021 = vpack.c.b16 %v8529, %v8526
  %v9022 = vpack.c.b16 %v8533, %v8530
  %v9023 = vpack.c.b16 %v8534, %v8531
  %v9024 = vpack.c.b16 %v8535, %v8532
  %v9025 = vpack.c.b16 %v8539, %v8536
  %v9026 = vpack.c.b16 %v8540, %v8537
  %v9027 = vpack.c.b16 %v8541, %v8538
  %v9028 = vpack.c.b16 %v8545, %v8542
  %v9029 = vpack.c.b16 %v8546, %v8543
  %v9030 = vpack.c.b16 %v8547, %v8544
  %v9031 = vpack.c.b16 %v8551, %v8548
  %v9032 = vpack.c.b16 %v8552, %v8549
  %v9033 = vpack.c.b16 %v8553, %v8550
  %v9034 = vpack.c.b16 %v8557, %v8554
  %v9035 = vpack.c.b16 %v8558, %v8555
  %v9036 = vpack.c.b16 %v8559, %v8556
  %v9037 = vpack.c.b16 %v8563, %v8560
  %v9038 = vpack.c.b16 %v8564, %v8561
  %v9039 = vpack.c.b16 %v8565, %v8562
  %v9040 = vpack.c.b16 %v8569, %v8566
  %v9041 = vpack.c.b16 %v8570, %v8567
  %v9042 = vpack.c.b16 %v8571, %v8568
  %v9043 = vpack.c.b16 %v8575, %v8572
  %v9044 = vpack.c.b16 %v8576, %v8573
  %v9045 = vpack.c.b16 %v8577, %v8574
  %v9046 = vpack.c.b16 %v8581, %v8578
  %v9047 = vpack.c.b16 %v8582, %v8579
  %v9048 = vpack.c.b16 %v8583, %v8580
  %v9049 = vpack.c.b16 %v8587, %v8584
  %v9050 = vpack.c.b16 %v8588, %v8585
  %v9051 = vpack.c.b16 %v8589, %v8586
  %v9052 = vpack.c.b16 %v8593, %v8590
  %v9053 = vpack.c.b16 %v8594, %v8591
  %v9054 = vpack.c.b16 %v8595, %v8592
  %v9055 = vpack.c.b16 %v8599, %v8596
  %v9056 = vpack.c.b16 %v8600, %v8597
  %v9057 = vpack.c.b16 %v8601, %v8598
  %v9058 = vpack.c.b16 %v8605, %v8602
  %v9059 = vpack.c.b16 %v8606, %v8603
  %v9060 = vpack.c.b16 %v8607, %v8604
  %v9061 = vpack.c.b16 %v8611, %v8608
  %v9062 = vpack.c.b16 %v8612, %v8609
  %v9063 = vpack.c.b16 %v8613, %v8610
  %v9064 = vpack.c.b16 %v8617, %v8614
  %v9065 = vpack.c.b16 %v8618, %v8615
  %v9066 = vpack.c.b16 %v8619, %v8616
  %v9067 = vpack.c.b16 %v8623, %v8620
  %v9068 = vpack.c.b16 %v8624, %v8621
  %v9069 = vpack.c.b16 %v8625, %v8622
  %v9070 = vpack.c.b16 %v8629, %v8626
  %v9071 = vpack.c.b16 %v8630, %v8627
  %v9072 = vpack.c.b16 %v8631, %v8628
  %v9073 = vpack.c.b16 %v8635, %v8632
  %v9074 = vpack.c.b16 %v8636, %v8633
  %v9075 = vpack.c.b16 %v8637, %v8634
  %v9076 = vpack.c.b16 %v8641, %v8638
  %v9077 = vpack.c.b16 %v8642, %v8639
  %v9078 = vpack.c.b16 %v8643, %v8640
  %v9079 = vpack.c.b16 %v8647, %v8644
  %v9080 = vpack.c.b16 %v8648, %v8645
  %v9081 = vpack.c.b16 %v8649, %v8646
  %9514 = vmatprep.subr.bf16.mxu0 0
  %9515 = vmatpush1.bf16.msra.mxu0 %v7186
  %9516 = vmatprep.subr.bf16.mxu0 0
  %9517 = vmatpush1.bf16.msra.mxu0 %v7187
  %9518 = vmatprep.subr.bf16.mxu0 0
  %9519 = vmatpush1.bf16.msra.mxu0 %v7188
  %9520 = vmatprep.subr.bf16.mxu0 0
  %9521 = vmatpush1.bf16.msra.mxu0 %v7189
  %9522 = vmatprep.subr.bf16.mxu0 0
  %9523 = vmatpush1.bf16.msra.mxu0 %v7190
  %9524 = vmatprep.subr.bf16.mxu0 0
  %9525 = vmatpush1.bf16.msra.mxu0 %v7191
  %9526 = vmatprep.subr.bf16.mxu0 0
  %9527 = vmatpush1.bf16.msra.mxu0 %v7192
  %9528 = vmatprep.subr.bf16.mxu0 0
  %9529 = vmatpush1.bf16.msra.mxu0 %v7193
  %9530 = vmatprep.subr.bf16.mxu0 0
  %9531 = vmatpush1.bf16.msra.mxu0 %v7194
  %9532 = vmatprep.subr.bf16.mxu0 0
  %9533 = vmatpush1.bf16.msra.mxu0 %v7195
  %9534 = vmatprep.subr.bf16.mxu0 0
  %9535 = vmatpush1.bf16.msra.mxu0 %v7196
  %9536 = vmatprep.subr.bf16.mxu0 0
  %9537 = vmatpush1.bf16.msra.mxu0 %v7197
  %9538 = vmatprep.subr.bf16.mxu0 0
  %9539 = vmatpush1.bf16.msra.mxu0 %v7198
  %9540 = vmatprep.subr.bf16.mxu0 0
  %9541 = vmatpush1.bf16.msra.mxu0 %v7199
  %9542 = vmatprep.subr.bf16.mxu0 0
  %9543 = vmatpush1.bf16.msra.mxu0 %v7200
  %9544 = vmatprep.subr.bf16.mxu0 0
  %9545 = vmatpush1.bf16.msra.mxu0 %v7201
  %9546 = vmatprep.mubr.bf16.mxu0 %v8651
  %9547 = vmatmul.mubr.bf16.gmra.mrb[0].mxu0 %v8650
  %v9548 = vpop.f32.mrb[0].mxu0
  %v9549 = vadd.f32 0.0, %v9548
  %v9550 = vpop.f32.mrb[0].mxu0
  %v9551 = vpop.f32.mrb[0].mxu0
  %v9552 = vadd.f32 0.0, %v9551
  %v9553 = vpop.f32.mrb[0].mxu0
  %9554 = vmatprep.mubr.bf16.mxu0 %v8654
  %9555 = vmatmul.mubr.bf16.gmra.mrb[0].mxu0 %v8653
  %v9556 = vpop.f32.mrb[0].mxu0
  %v9557 = vadd.f32 0.0, %v9556
  %v9558 = vpop.f32.mrb[0].mxu0
  %v9559 = vpop.f32.mrb[0].mxu0
  %v9560 = vadd.f32 0.0, %v9559
  %v9561 = vpop.f32.mrb[0].mxu0
  %9562 = vmatprep.mubr.bf16.mxu0 %v8657
  %9563 = vmatmul.mubr.bf16.gmra.mrb[0].mxu0 %v8656
  %v9564 = vpop.f32.mrb[0].mxu0
  %v9565 = vadd.f32 0.0, %v9564
  %v9566 = vpop.f32.mrb[0].mxu0
  %v9567 = vpop.f32.mrb[0].mxu0
  %v9568 = vadd.f32 0.0, %v9567
  %v9569 = vpop.f32.mrb[0].mxu0
  %9570 = vmatprep.mubr.bf16.mxu0 %v8660
  %9571 = vmatmul.mubr.bf16.gmra.mrb[0].mxu0 %v8659
  %v9572 = vpop.f32.mrb[0].mxu0
  %v9573 = vadd.f32 0.0, %v9572
  %v9574 = vpop.f32.mrb[0].mxu0
  %v9575 = vpop.f32.mrb[0].mxu0
  %v9576 = vadd.f32 0.0, %v9575
  %v9577 = vpop.f32.mrb[0].mxu0
  %9578 = vmatprep.mubr.bf16.mxu0 %v8663
  %9579 = vmatmul.mubr.bf16.gmra.mrb[0].mxu0 %v8662
  %v9580 = vpop.f32.mrb[0].mxu0
  %v9581 = vadd.f32 0.0, %v9580
  %v9582 = vpop.f32.mrb[0].mxu0
  %v9583 = vpop.f32.mrb[0].mxu0
  %v9584 = vadd.f32 0.0, %v9583
  %v9585 = vpop.f32.mrb[0].mxu0
  %9586 = vmatprep.mubr.bf16.mxu0 %v8666
  %9587 = vmatmul.mubr.bf16.gmra.mrb[0].mxu0 %v8665
  %v9588 = vpop.f32.mrb[0].mxu0
  %v9589 = vadd.f32 0.0, %v9588
  %v9590 = vpop.f32.mrb[0].mxu0
  %v9591 = vpop.f32.mrb[0].mxu0
  %v9592 = vadd.f32 0.0, %v9591
  %v9593 = vpop.f32.mrb[0].mxu0
  %9594 = vmatprep.mubr.bf16.mxu0 %v8669
  %9595 = vmatmul.mubr.bf16.gmra.mrb[0].mxu0 %v8668
  %v9596 = vpop.f32.mrb[0].mxu0
  %v9597 = vadd.f32 0.0, %v9596
  %v9598 = vpop.f32.mrb[0].mxu0
  %v9599 = vpop.f32.mrb[0].mxu0
  %v9600 = vadd.f32 0.0, %v9599
  %v9601 = vpop.f32.mrb[0].mxu0
  %9602 = vmatprep.mubr.bf16.mxu0 %v8672
  %9603 = vmatmul.mubr.bf16.gmra.mrb[0].mxu0 %v8671
  %v9604 = vpop.f32.mrb[0].mxu0
  %v9605 = vadd.f32 0.0, %v9604
  %v9606 = vpop.f32.mrb[0].mxu0
  %v9607 = vpop.f32.mrb[0].mxu0
  %v9608 = vadd.f32 0.0, %v9607
  %v9609 = vpop.f32.mrb[0].mxu0
  %9610 = vmatprep.mubr.bf16.mxu0 %v8675
  %9611 = vmatmul.mubr.bf16.gmra.mrb[0].mxu0 %v8674
  %v9612 = vpop.f32.mrb[0].mxu0
  %v9613 = vadd.f32 0.0, %v9612
  %v9614 = vpop.f32.mrb[0].mxu0
  %v9615 = vpop.f32.mrb[0].mxu0
  %v9616 = vadd.f32 0.0, %v9615
  %v9617 = vpop.f32.mrb[0].mxu0
  %9618 = vmatprep.mubr.bf16.mxu0 %v8678
  %9619 = vmatmul.mubr.bf16.gmra.mrb[0].mxu0 %v8677
  %v9620 = vpop.f32.mrb[0].mxu0
  %v9621 = vadd.f32 0.0, %v9620
  %v9622 = vpop.f32.mrb[0].mxu0
  %v9623 = vpop.f32.mrb[0].mxu0
  %v9624 = vadd.f32 0.0, %v9623
  %v9625 = vpop.f32.mrb[0].mxu0
  %9626 = vmatprep.mubr.bf16.mxu0 %v8681
  %9627 = vmatmul.mubr.bf16.gmra.mrb[0].mxu0 %v8680
  %v9628 = vpop.f32.mrb[0].mxu0
  %v9629 = vadd.f32 0.0, %v9628
  %v9630 = vpop.f32.mrb[0].mxu0
  %v9631 = vpop.f32.mrb[0].mxu0
  %v9632 = vadd.f32 0.0, %v9631
  %v9633 = vpop.f32.mrb[0].mxu0
  %9634 = vmatprep.mubr.bf16.mxu0 %v8684
  %9635 = vmatmul.mubr.bf16.gmra.mrb[0].mxu0 %v8683
  %v9636 = vpop.f32.mrb[0].mxu0
  %v9637 = vadd.f32 0.0, %v9636
  %v9638 = vpop.f32.mrb[0].mxu0
  %v9639 = vpop.f32.mrb[0].mxu0
  %v9640 = vadd.f32 0.0, %v9639
  %v9641 = vpop.f32.mrb[0].mxu0
  %9642 = vmatprep.mubr.bf16.mxu0 %v8687
  %9643 = vmatmul.mubr.bf16.gmra.mrb[0].mxu0 %v8686
  %v9644 = vpop.f32.mrb[0].mxu0
  %v9645 = vadd.f32 0.0, %v9644
  %v9646 = vpop.f32.mrb[0].mxu0
  %v9647 = vpop.f32.mrb[0].mxu0
  %v9648 = vadd.f32 0.0, %v9647
  %v9649 = vpop.f32.mrb[0].mxu0
  %9650 = vmatprep.mubr.bf16.mxu0 %v8690
  %9651 = vmatmul.mubr.bf16.gmra.mrb[0].mxu0 %v8689
  %v9652 = vpop.f32.mrb[0].mxu0
  %v9653 = vadd.f32 0.0, %v9652
  %v9654 = vpop.f32.mrb[0].mxu0
  %v9655 = vpop.f32.mrb[0].mxu0
  %v9656 = vadd.f32 0.0, %v9655
  %v9657 = vpop.f32.mrb[0].mxu0
  %9658 = vmatprep.mubr.bf16.mxu0 %v8693
  %9659 = vmatmul.mubr.bf16.gmra.mrb[0].mxu0 %v8692
  %v9660 = vpop.f32.mrb[0].mxu0
  %v9661 = vadd.f32 0.0, %v9660
  %v9662 = vpop.f32.mrb[0].mxu0
  %v9663 = vpop.f32.mrb[0].mxu0
  %v9664 = vadd.f32 0.0, %v9663
  %v9665 = vpop.f32.mrb[0].mxu0
  %9666 = vmatprep.mubr.bf16.mxu0 %v8696
  %9667 = vmatmul.mubr.bf16.gmra.mrb[0].mxu0 %v8695
  %v9668 = vpop.f32.mrb[0].mxu0
  %v9669 = vadd.f32 0.0, %v9668
  %v9670 = vpop.f32.mrb[0].mxu0
  %v9671 = vpop.f32.mrb[0].mxu0
  %v9672 = vadd.f32 0.0, %v9671
  %v9673 = vpop.f32.mrb[0].mxu0
  %9674 = vmatprep.mubr.bf16.mxu0 %v8699
  %9675 = vmatmul.mubr.bf16.gmra.mrb[0].mxu0 %v8698
  %v9676 = vpop.f32.mrb[0].mxu0
  %v9677 = vadd.f32 0.0, %v9676
  %v9678 = vpop.f32.mrb[0].mxu0
  %v9679 = vpop.f32.mrb[0].mxu0
  %v9680 = vadd.f32 0.0, %v9679
  %v9681 = vpop.f32.mrb[0].mxu0
  %9682 = vmatprep.mubr.bf16.mxu0 %v8702
  %9683 = vmatmul.mubr.bf16.gmra.mrb[0].mxu0 %v8701
  %v9684 = vpop.f32.mrb[0].mxu0
  %v9685 = vadd.f32 0.0, %v9684
  %v9686 = vpop.f32.mrb[0].mxu0
  %v9687 = vpop.f32.mrb[0].mxu0
  %v9688 = vadd.f32 0.0, %v9687
  %v9689 = vpop.f32.mrb[0].mxu0
  %9690 = vmatprep.mubr.bf16.mxu0 %v8705
  %9691 = vmatmul.mubr.bf16.gmra.mrb[0].mxu0 %v8704
  %v9692 = vpop.f32.mrb[0].mxu0
  %v9693 = vadd.f32 0.0, %v9692
  %v9694 = vpop.f32.mrb[0].mxu0
  %v9695 = vpop.f32.mrb[0].mxu0
  %v9696 = vadd.f32 0.0, %v9695
  %v9697 = vpop.f32.mrb[0].mxu0
  %9698 = vmatprep.mubr.bf16.mxu0 %v8708
  %9699 = vmatmul.mubr.bf16.gmra.mrb[0].mxu0 %v8707
  %v9700 = vpop.f32.mrb[0].mxu0
  %v9701 = vadd.f32 0.0, %v9700
  %v9702 = vpop.f32.mrb[0].mxu0
  %v9703 = vpop.f32.mrb[0].mxu0
  %v9704 = vadd.f32 0.0, %v9703
  %v9705 = vpop.f32.mrb[0].mxu0
  %9706 = vmatprep.mubr.bf16.mxu0 %v8711
  %9707 = vmatmul.mubr.bf16.gmra.mrb[0].mxu0 %v8710
  %v9708 = vpop.f32.mrb[0].mxu0
  %v9709 = vadd.f32 0.0, %v9708
  %v9710 = vpop.f32.mrb[0].mxu0
  %v9711 = vpop.f32.mrb[0].mxu0
  %v9712 = vadd.f32 0.0, %v9711
  %v9713 = vpop.f32.mrb[0].mxu0
  %9714 = vmatprep.mubr.bf16.mxu0 %v8714
  %9715 = vmatmul.mubr.bf16.gmra.mrb[0].mxu0 %v8713
  %v9716 = vpop.f32.mrb[0].mxu0
  %v9717 = vadd.f32 0.0, %v9716
  %v9718 = vpop.f32.mrb[0].mxu0
  %v9719 = vpop.f32.mrb[0].mxu0
  %v9720 = vadd.f32 0.0, %v9719
  %v9721 = vpop.f32.mrb[0].mxu0
  %9722 = vmatprep.mubr.bf16.mxu0 %v8717
  %9723 = vmatmul.mubr.bf16.gmra.mrb[0].mxu0 %v8716
  %v9724 = vpop.f32.mrb[0].mxu0
  %v9725 = vadd.f32 0.0, %v9724
  %v9726 = vpop.f32.mrb[0].mxu0
  %v9727 = vpop.f32.mrb[0].mxu0
  %v9728 = vadd.f32 0.0, %v9727
  %v9729 = vpop.f32.mrb[0].mxu0
  %9730 = vmatprep.mubr.bf16.mxu0 %v8720
  %9731 = vmatmul.mubr.bf16.gmra.mrb[0].mxu0 %v8719
  %v9732 = vpop.f32.mrb[0].mxu0
  %v9733 = vadd.f32 0.0, %v9732
  %v9734 = vpop.f32.mrb[0].mxu0
  %v9735 = vpop.f32.mrb[0].mxu0
  %v9736 = vadd.f32 0.0, %v9735
  %v9737 = vpop.f32.mrb[0].mxu0
  %9738 = vmatprep.mubr.bf16.mxu0 %v8723
  %9739 = vmatmul.mubr.bf16.gmra.mrb[0].mxu0 %v8722
  %v9740 = vpop.f32.mrb[0].mxu0
  %v9741 = vadd.f32 0.0, %v9740
  %v9742 = vpop.f32.mrb[0].mxu0
  %v9743 = vpop.f32.mrb[0].mxu0
  %v9744 = vadd.f32 0.0, %v9743
  %v9745 = vpop.f32.mrb[0].mxu0
  %9746 = vmatprep.mubr.bf16.mxu0 %v8726
  %9747 = vmatmul.mubr.bf16.gmra.mrb[0].mxu0 %v8725
  %v9748 = vpop.f32.mrb[0].mxu0
  %v9749 = vadd.f32 0.0, %v9748
  %v9750 = vpop.f32.mrb[0].mxu0
  %v9751 = vpop.f32.mrb[0].mxu0
  %v9752 = vadd.f32 0.0, %v9751
  %v9753 = vpop.f32.mrb[0].mxu0
  %9754 = vmatprep.mubr.bf16.mxu0 %v8729
  %9755 = vmatmul.mubr.bf16.gmra.mrb[0].mxu0 %v8728
  %v9756 = vpop.f32.mrb[0].mxu0
  %v9757 = vadd.f32 0.0, %v9756
  %v9758 = vpop.f32.mrb[0].mxu0
  %v9759 = vpop.f32.mrb[0].mxu0
  %v9760 = vadd.f32 0.0, %v9759
  %v9761 = vpop.f32.mrb[0].mxu0
  %9762 = vmatprep.mubr.bf16.mxu0 %v8732
  %9763 = vmatmul.mubr.bf16.gmra.mrb[0].mxu0 %v8731
  %v9764 = vpop.f32.mrb[0].mxu0
  %v9765 = vadd.f32 0.0, %v9764
  %v9766 = vpop.f32.mrb[0].mxu0
  %v9767 = vpop.f32.mrb[0].mxu0
  %v9768 = vadd.f32 0.0, %v9767
  %v9769 = vpop.f32.mrb[0].mxu0
  %9770 = vmatprep.mubr.bf16.mxu0 %v8735
  %9771 = vmatmul.mubr.bf16.gmra.mrb[0].mxu0 %v8734
  %v9772 = vpop.f32.mrb[0].mxu0
  %v9773 = vadd.f32 0.0, %v9772
  %v9774 = vpop.f32.mrb[0].mxu0
  %v9775 = vpop.f32.mrb[0].mxu0
  %v9776 = vadd.f32 0.0, %v9775
  %v9777 = vpop.f32.mrb[0].mxu0
  %9778 = vmatprep.mubr.bf16.mxu0 %v8738
  %9779 = vmatmul.mubr.bf16.gmra.mrb[0].mxu0 %v8737
  %v9780 = vpop.f32.mrb[0].mxu0
  %v9781 = vadd.f32 0.0, %v9780
  %v9782 = vpop.f32.mrb[0].mxu0
  %v9783 = vpop.f32.mrb[0].mxu0
  %v9784 = vadd.f32 0.0, %v9783
  %v9785 = vpop.f32.mrb[0].mxu0
  %9786 = vmatprep.mubr.bf16.mxu0 %v8741
  %9787 = vmatmul.mubr.bf16.gmra.mrb[0].mxu0 %v8740
  %v9788 = vpop.f32.mrb[0].mxu0
  %v9789 = vadd.f32 0.0, %v9788
  %v9790 = vpop.f32.mrb[0].mxu0
  %v9791 = vpop.f32.mrb[0].mxu0
  %v9792 = vadd.f32 0.0, %v9791
  %v9793 = vpop.f32.mrb[0].mxu0
  %9794 = vmatprep.mubr.bf16.mxu0 %v8744
  %9795 = vmatmul.mubr.bf16.gmra.mrb[0].mxu0 %v8743
  %v9796 = vpop.f32.mrb[0].mxu0
  %v9797 = vadd.f32 0.0, %v9796
  %v9798 = vpop.f32.mrb[0].mxu0
  %v9799 = vpop.f32.mrb[0].mxu0
  %v9800 = vadd.f32 0.0, %v9799
  %v9801 = vpop.f32.mrb[0].mxu0
  %9802 = vmatprep.mubr.bf16.mxu0 %v8747
  %9803 = vmatmul.mubr.bf16.gmra.mrb[0].mxu0 %v8746
  %v9804 = vpop.f32.mrb[0].mxu0
  %v9805 = vadd.f32 0.0, %v9804
  %v9806 = vpop.f32.mrb[0].mxu0
  %v9807 = vpop.f32.mrb[0].mxu0
  %v9808 = vadd.f32 0.0, %v9807
  %v9809 = vpop.f32.mrb[0].mxu0
  %9810 = vmatprep.mubr.bf16.mxu0 %v8750
  %9811 = vmatmul.mubr.bf16.gmra.mrb[0].mxu0 %v8749
  %v9812 = vpop.f32.mrb[0].mxu0
  %v9813 = vadd.f32 0.0, %v9812
  %v9814 = vpop.f32.mrb[0].mxu0
  %v9815 = vpop.f32.mrb[0].mxu0
  %v9816 = vadd.f32 0.0, %v9815
  %v9817 = vpop.f32.mrb[0].mxu0
  %9818 = vmatprep.mubr.bf16.mxu0 %v8753
  %9819 = vmatmul.mubr.bf16.gmra.mrb[0].mxu0 %v8752
  %v9820 = vpop.f32.mrb[0].mxu0
  %v9821 = vadd.f32 0.0, %v9820
  %v9822 = vpop.f32.mrb[0].mxu0
  %v9823 = vpop.f32.mrb[0].mxu0
  %v9824 = vadd.f32 0.0, %v9823
  %v9825 = vpop.f32.mrb[0].mxu0
  %9826 = vmatprep.mubr.bf16.mxu0 %v8756
  %9827 = vmatmul.mubr.bf16.gmra.mrb[0].mxu0 %v8755
  %v9828 = vpop.f32.mrb[0].mxu0
  %v9829 = vadd.f32 0.0, %v9828
  %v9830 = vpop.f32.mrb[0].mxu0
  %v9831 = vpop.f32.mrb[0].mxu0
  %v9832 = vadd.f32 0.0, %v9831
  %v9833 = vpop.f32.mrb[0].mxu0
  %9834 = vmatprep.mubr.bf16.mxu0 %v8759
  %9835 = vmatmul.mubr.bf16.gmra.mrb[0].mxu0 %v8758
  %v9836 = vpop.f32.mrb[0].mxu0
  %v9837 = vadd.f32 0.0, %v9836
  %v9838 = vpop.f32.mrb[0].mxu0
  %v9839 = vpop.f32.mrb[0].mxu0
  %v9840 = vadd.f32 0.0, %v9839
  %v9841 = vpop.f32.mrb[0].mxu0
  %9842 = vmatprep.mubr.bf16.mxu0 %v8762
  %9843 = vmatmul.mubr.bf16.gmra.mrb[0].mxu0 %v8761
  %v9844 = vpop.f32.mrb[0].mxu0
  %v9845 = vadd.f32 0.0, %v9844
  %v9846 = vpop.f32.mrb[0].mxu0
  %v9847 = vpop.f32.mrb[0].mxu0
  %v9848 = vadd.f32 0.0, %v9847
  %v9849 = vpop.f32.mrb[0].mxu0
  %9850 = vmatprep.mubr.bf16.mxu0 %v8765
  %9851 = vmatmul.mubr.bf16.gmra.mrb[0].mxu0 %v8764
  %v9852 = vpop.f32.mrb[0].mxu0
  %v9853 = vadd.f32 0.0, %v9852
  %v9854 = vpop.f32.mrb[0].mxu0
  %v9855 = vpop.f32.mrb[0].mxu0
  %v9856 = vadd.f32 0.0, %v9855
  %v9857 = vpop.f32.mrb[0].mxu0
  %9858 = vmatprep.mubr.bf16.mxu0 %v8768
  %9859 = vmatmul.mubr.bf16.gmra.mrb[0].mxu0 %v8767
  %v9860 = vpop.f32.mrb[0].mxu0
  %v9861 = vadd.f32 0.0, %v9860
  %v9862 = vpop.f32.mrb[0].mxu0
  %v9863 = vpop.f32.mrb[0].mxu0
  %v9864 = vadd.f32 0.0, %v9863
  %v9865 = vpop.f32.mrb[0].mxu0
  %9866 = vmatprep.mubr.bf16.mxu0 %v8771
  %9867 = vmatmul.mubr.bf16.gmra.mrb[0].mxu0 %v8770
  %v9868 = vpop.f32.mrb[0].mxu0
  %v9869 = vadd.f32 0.0, %v9868
  %v9870 = vpop.f32.mrb[0].mxu0
  %v9871 = vpop.f32.mrb[0].mxu0
  %v9872 = vadd.f32 0.0, %v9871
  %v9873 = vpop.f32.mrb[0].mxu0
  %9874 = vmatprep.mubr.bf16.mxu0 %v8774
  %9875 = vmatmul.mubr.bf16.gmra.mrb[0].mxu0 %v8773
  %v9876 = vpop.f32.mrb[0].mxu0
  %v9877 = vadd.f32 0.0, %v9876
  %v9878 = vpop.f32.mrb[0].mxu0
  %v9879 = vpop.f32.mrb[0].mxu0
  %v9880 = vadd.f32 0.0, %v9879
  %v9881 = vpop.f32.mrb[0].mxu0
  %9882 = vmatprep.mubr.bf16.mxu0 %v8777
  %9883 = vmatmul.mubr.bf16.gmra.mrb[0].mxu0 %v8776
  %v9884 = vpop.f32.mrb[0].mxu0
  %v9885 = vadd.f32 0.0, %v9884
  %v9886 = vpop.f32.mrb[0].mxu0
  %v9887 = vpop.f32.mrb[0].mxu0
  %v9888 = vadd.f32 0.0, %v9887
  %v9889 = vpop.f32.mrb[0].mxu0
  %9890 = vmatprep.mubr.bf16.mxu0 %v8780
  %9891 = vmatmul.mubr.bf16.gmra.mrb[0].mxu0 %v8779
  %v9892 = vpop.f32.mrb[0].mxu0
  %v9893 = vadd.f32 0.0, %v9892
  %v9894 = vpop.f32.mrb[0].mxu0
  %v9895 = vpop.f32.mrb[0].mxu0
  %v9896 = vadd.f32 0.0, %v9895
  %v9897 = vpop.f32.mrb[0].mxu0
  %9898 = vmatprep.mubr.bf16.mxu0 %v8783
  %9899 = vmatmul.mubr.bf16.gmra.mrb[0].mxu0 %v8782
  %v9900 = vpop.f32.mrb[0].mxu0
  %v9901 = vadd.f32 0.0, %v9900
  %v9902 = vpop.f32.mrb[0].mxu0
  %v9903 = vpop.f32.mrb[0].mxu0
  %v9904 = vadd.f32 0.0, %v9903
  %v9905 = vpop.f32.mrb[0].mxu0
  %9906 = vmatprep.mubr.bf16.mxu0 %v8786
  %9907 = vmatmul.mubr.bf16.gmra.mrb[0].mxu0 %v8785
  %v9908 = vpop.f32.mrb[0].mxu0
  %v9909 = vadd.f32 0.0, %v9908
  %v9910 = vpop.f32.mrb[0].mxu0
  %v9911 = vpop.f32.mrb[0].mxu0
  %v9912 = vadd.f32 0.0, %v9911
  %v9913 = vpop.f32.mrb[0].mxu0
  %9914 = vmatprep.mubr.bf16.mxu0 %v8789
  %9915 = vmatmul.mubr.bf16.gmra.mrb[0].mxu0 %v8788
  %v9916 = vpop.f32.mrb[0].mxu0
  %v9917 = vadd.f32 0.0, %v9916
  %v9918 = vpop.f32.mrb[0].mxu0
  %v9919 = vpop.f32.mrb[0].mxu0
  %v9920 = vadd.f32 0.0, %v9919
  %v9921 = vpop.f32.mrb[0].mxu0
  %9922 = vmatprep.mubr.bf16.mxu0 %v8792
  %9923 = vmatmul.mubr.bf16.gmra.mrb[0].mxu0 %v8791
  %v9924 = vpop.f32.mrb[0].mxu0
  %v9925 = vadd.f32 0.0, %v9924
  %v9926 = vpop.f32.mrb[0].mxu0
  %v9927 = vpop.f32.mrb[0].mxu0
  %v9928 = vadd.f32 0.0, %v9927
  %v9929 = vpop.f32.mrb[0].mxu0
  %9930 = vmatprep.mubr.bf16.mxu0 %v8795
  %9931 = vmatmul.mubr.bf16.gmra.mrb[0].mxu0 %v8794
  %v9932 = vpop.f32.mrb[0].mxu0
  %v9933 = vadd.f32 0.0, %v9932
  %v9934 = vpop.f32.mrb[0].mxu0
  %v9935 = vpop.f32.mrb[0].mxu0
  %v9936 = vadd.f32 0.0, %v9935
  %v9937 = vpop.f32.mrb[0].mxu0
  %9938 = vmatprep.mubr.bf16.mxu0 %v8798
  %9939 = vmatmul.mubr.bf16.gmra.mrb[0].mxu0 %v8797
  %v9940 = vpop.f32.mrb[0].mxu0
  %v9941 = vadd.f32 0.0, %v9940
  %v9942 = vpop.f32.mrb[0].mxu0
  %v9943 = vpop.f32.mrb[0].mxu0
  %v9944 = vadd.f32 0.0, %v9943
  %v9945 = vpop.f32.mrb[0].mxu0
  %9946 = vmatprep.mubr.bf16.mxu0 %v8801
  %9947 = vmatmul.mubr.bf16.gmra.mrb[0].mxu0 %v8800
  %v9948 = vpop.f32.mrb[0].mxu0
  %v9949 = vadd.f32 0.0, %v9948
  %v9950 = vpop.f32.mrb[0].mxu0
  %v9951 = vpop.f32.mrb[0].mxu0
  %v9952 = vadd.f32 0.0, %v9951
  %v9953 = vpop.f32.mrb[0].mxu0
  %9954 = vmatprep.mubr.bf16.mxu0 %v8804
  %9955 = vmatmul.mubr.bf16.gmra.mrb[0].mxu0 %v8803
  %v9956 = vpop.f32.mrb[0].mxu0
  %v9957 = vadd.f32 0.0, %v9956
  %v9958 = vpop.f32.mrb[0].mxu0
  %v9959 = vpop.f32.mrb[0].mxu0
  %v9960 = vadd.f32 0.0, %v9959
  %v9961 = vpop.f32.mrb[0].mxu0
  %9962 = vmatprep.mubr.bf16.mxu0 %v8807
  %9963 = vmatmul.mubr.bf16.gmra.mrb[0].mxu0 %v8806
  %v9964 = vpop.f32.mrb[0].mxu0
  %v9965 = vadd.f32 0.0, %v9964
  %v9966 = vpop.f32.mrb[0].mxu0
  %v9967 = vpop.f32.mrb[0].mxu0
  %v9968 = vadd.f32 0.0, %v9967
  %v9969 = vpop.f32.mrb[0].mxu0
  %9970 = vmatprep.mubr.bf16.mxu0 %v8810
  %9971 = vmatmul.mubr.bf16.gmra.mrb[0].mxu0 %v8809
  %v9972 = vpop.f32.mrb[0].mxu0
  %v9973 = vadd.f32 0.0, %v9972
  %v9974 = vpop.f32.mrb[0].mxu0
  %v9975 = vpop.f32.mrb[0].mxu0
  %v9976 = vadd.f32 0.0, %v9975
  %v9977 = vpop.f32.mrb[0].mxu0
  %9978 = vmatprep.mubr.bf16.mxu0 %v8813
  %9979 = vmatmul.mubr.bf16.gmra.mrb[0].mxu0 %v8812
  %v9980 = vpop.f32.mrb[0].mxu0
  %v9981 = vadd.f32 0.0, %v9980
  %v9982 = vpop.f32.mrb[0].mxu0
  %v9983 = vpop.f32.mrb[0].mxu0
  %v9984 = vadd.f32 0.0, %v9983
  %v9985 = vpop.f32.mrb[0].mxu0
  %9986 = vmatprep.mubr.bf16.mxu0 %v8816
  %9987 = vmatmul.mubr.bf16.gmra.mrb[0].mxu0 %v8815
  %v9988 = vpop.f32.mrb[0].mxu0
  %v9989 = vadd.f32 0.0, %v9988
  %v9990 = vpop.f32.mrb[0].mxu0
  %v9991 = vpop.f32.mrb[0].mxu0
  %v9992 = vadd.f32 0.0, %v9991
  %v9993 = vpop.f32.mrb[0].mxu0
  %9994 = vmatprep.mubr.bf16.mxu0 %v8819
  %9995 = vmatmul.mubr.bf16.gmra.mrb[0].mxu0 %v8818
  %v9996 = vpop.f32.mrb[0].mxu0
  %v9997 = vadd.f32 0.0, %v9996
  %v9998 = vpop.f32.mrb[0].mxu0
  %v9999 = vpop.f32.mrb[0].mxu0
  %v10000 = vadd.f32 0.0, %v9999
  %v10001 = vpop.f32.mrb[0].mxu0
  %10002 = vmatprep.mubr.bf16.mxu0 %v8822
  %10003 = vmatmul.mubr.bf16.gmra.mrb[0].mxu0 %v8821
  %v10004 = vpop.f32.mrb[0].mxu0
  %v10005 = vadd.f32 0.0, %v10004
  %v10006 = vpop.f32.mrb[0].mxu0
  %v10007 = vpop.f32.mrb[0].mxu0
  %v10008 = vadd.f32 0.0, %v10007
  %v10009 = vpop.f32.mrb[0].mxu0
  %10010 = vmatprep.mubr.bf16.mxu0 %v8825
  %10011 = vmatmul.mubr.bf16.gmra.mrb[0].mxu0 %v8824
  %v10012 = vpop.f32.mrb[0].mxu0
  %v10013 = vadd.f32 0.0, %v10012
  %v10014 = vpop.f32.mrb[0].mxu0
  %v10015 = vpop.f32.mrb[0].mxu0
  %v10016 = vadd.f32 0.0, %v10015
  %v10017 = vpop.f32.mrb[0].mxu0
  %10018 = vmatprep.mubr.bf16.mxu0 %v8828
  %10019 = vmatmul.mubr.bf16.gmra.mrb[0].mxu0 %v8827
  %v10020 = vpop.f32.mrb[0].mxu0
  %v10021 = vadd.f32 0.0, %v10020
  %v10022 = vpop.f32.mrb[0].mxu0
  %v10023 = vpop.f32.mrb[0].mxu0
  %v10024 = vadd.f32 0.0, %v10023
  %v10025 = vpop.f32.mrb[0].mxu0
  %10026 = vmatprep.mubr.bf16.mxu0 %v8831
  %10027 = vmatmul.mubr.bf16.gmra.mrb[0].mxu0 %v8830
  %v10028 = vpop.f32.mrb[0].mxu0
  %v10029 = vadd.f32 0.0, %v10028
  %v10030 = vpop.f32.mrb[0].mxu0
  %v10031 = vpop.f32.mrb[0].mxu0
  %v10032 = vadd.f32 0.0, %v10031
  %v10033 = vpop.f32.mrb[0].mxu0
  %10034 = vmatprep.mubr.bf16.mxu0 %v8834
  %10035 = vmatmul.mubr.bf16.gmra.mrb[0].mxu0 %v8833
  %v10036 = vpop.f32.mrb[0].mxu0
  %v10037 = vadd.f32 0.0, %v10036
  %v10038 = vpop.f32.mrb[0].mxu0
  %v10039 = vpop.f32.mrb[0].mxu0
  %v10040 = vadd.f32 0.0, %v10039
  %v10041 = vpop.f32.mrb[0].mxu0
  %10042 = vmatprep.mubr.bf16.mxu0 %v8837
  %10043 = vmatmul.mubr.bf16.gmra.mrb[0].mxu0 %v8836
  %v10044 = vpop.f32.mrb[0].mxu0
  %v10045 = vadd.f32 0.0, %v10044
  %v10046 = vpop.f32.mrb[0].mxu0
  %v10047 = vpop.f32.mrb[0].mxu0
  %v10048 = vadd.f32 0.0, %v10047
  %v10049 = vpop.f32.mrb[0].mxu0
  %10050 = vmatprep.mubr.bf16.mxu0 %v8840
  %10051 = vmatmul.mubr.bf16.gmra.mrb[0].mxu0 %v8839
  %v10052 = vpop.f32.mrb[0].mxu0
  %v10053 = vadd.f32 0.0, %v10052
  %v10054 = vpop.f32.mrb[0].mxu0
  %v10055 = vpop.f32.mrb[0].mxu0
  %v10056 = vadd.f32 0.0, %v10055
  %v10057 = vpop.f32.mrb[0].mxu0
  %10058 = vmatprep.mubr.bf16.mxu0 %v8843
  %10059 = vmatmul.mubr.bf16.gmra.mrb[0].mxu0 %v8842
  %v10060 = vpop.f32.mrb[0].mxu0
  %v10061 = vadd.f32 0.0, %v10060
  %v10062 = vpop.f32.mrb[0].mxu0
  %v10063 = vpop.f32.mrb[0].mxu0
  %v10064 = vadd.f32 0.0, %v10063
  %v10065 = vpop.f32.mrb[0].mxu0
  %10066 = vmatprep.mubr.bf16.mxu0 %v8846
  %10067 = vmatmul.mubr.bf16.gmra.mrb[0].mxu0 %v8845
  %v10068 = vpop.f32.mrb[0].mxu0
  %v10069 = vadd.f32 0.0, %v10068
  %v10070 = vpop.f32.mrb[0].mxu0
  %v10071 = vpop.f32.mrb[0].mxu0
  %v10072 = vadd.f32 0.0, %v10071
  %v10073 = vpop.f32.mrb[0].mxu0
  %10074 = vmatprep.mubr.bf16.mxu0 %v8849
  %10075 = vmatmul.mubr.bf16.gmra.mrb[0].mxu0 %v8848
  %v10076 = vpop.f32.mrb[0].mxu0
  %v10077 = vadd.f32 0.0, %v10076
  %v10078 = vpop.f32.mrb[0].mxu0
  %v10079 = vpop.f32.mrb[0].mxu0
  %v10080 = vadd.f32 0.0, %v10079
  %v10081 = vpop.f32.mrb[0].mxu0
  %10082 = vmatprep.mubr.bf16.mxu0 %v8852
  %10083 = vmatmul.mubr.bf16.gmra.mrb[0].mxu0 %v8851
  %v10084 = vpop.f32.mrb[0].mxu0
  %v10085 = vadd.f32 0.0, %v10084
  %v10086 = vpop.f32.mrb[0].mxu0
  %v10087 = vpop.f32.mrb[0].mxu0
  %v10088 = vadd.f32 0.0, %v10087
  %v10089 = vpop.f32.mrb[0].mxu0
  %10090 = vmatprep.mubr.bf16.mxu0 %v8855
  %10091 = vmatmul.mubr.bf16.gmra.mrb[0].mxu0 %v8854
  %v10092 = vpop.f32.mrb[0].mxu0
  %v10093 = vadd.f32 0.0, %v10092
  %v10094 = vpop.f32.mrb[0].mxu0
  %v10095 = vpop.f32.mrb[0].mxu0
  %v10096 = vadd.f32 0.0, %v10095
  %v10097 = vpop.f32.mrb[0].mxu0
  %10098 = vmatprep.mubr.bf16.mxu0 %v8858
  %10099 = vmatmul.mubr.bf16.gmra.mrb[0].mxu0 %v8857
  %v10100 = vpop.f32.mrb[0].mxu0
  %v10101 = vadd.f32 0.0, %v10100
  %v10102 = vpop.f32.mrb[0].mxu0
  %v10103 = vpop.f32.mrb[0].mxu0
  %v10104 = vadd.f32 0.0, %v10103
  %v10105 = vpop.f32.mrb[0].mxu0
  %10106 = vmatprep.mubr.bf16.mxu0 %v8861
  %10107 = vmatmul.mubr.bf16.gmra.mrb[0].mxu0 %v8860
  %v10108 = vpop.f32.mrb[0].mxu0
  %v10109 = vadd.f32 0.0, %v10108
  %v10110 = vpop.f32.mrb[0].mxu0
  %v10111 = vpop.f32.mrb[0].mxu0
  %v10112 = vadd.f32 0.0, %v10111
  %v10113 = vpop.f32.mrb[0].mxu0
  %10114 = vmatprep.mubr.bf16.mxu0 %v8864
  %10115 = vmatmul.mubr.bf16.gmra.mrb[0].mxu0 %v8863
  %v10116 = vpop.f32.mrb[0].mxu0
  %v10117 = vadd.f32 0.0, %v10116
  %v10118 = vpop.f32.mrb[0].mxu0
  %v10119 = vpop.f32.mrb[0].mxu0
  %v10120 = vadd.f32 0.0, %v10119
  %v10121 = vpop.f32.mrb[0].mxu0
  %10122 = vmatprep.mubr.bf16.mxu0 %v8867
  %10123 = vmatmul.mubr.bf16.gmra.mrb[0].mxu0 %v8866
  %v10124 = vpop.f32.mrb[0].mxu0
  %v10125 = vadd.f32 0.0, %v10124
  %v10126 = vpop.f32.mrb[0].mxu0
  %v10127 = vpop.f32.mrb[0].mxu0
  %v10128 = vadd.f32 0.0, %v10127
  %v10129 = vpop.f32.mrb[0].mxu0
  %10130 = vmatprep.mubr.bf16.mxu0 %v8870
  %10131 = vmatmul.mubr.bf16.gmra.mrb[0].mxu0 %v8869
  %v10132 = vpop.f32.mrb[0].mxu0
  %v10133 = vadd.f32 0.0, %v10132
  %v10134 = vpop.f32.mrb[0].mxu0
  %v10135 = vpop.f32.mrb[0].mxu0
  %v10136 = vadd.f32 0.0, %v10135
  %v10137 = vpop.f32.mrb[0].mxu0
  %10138 = vmatprep.mubr.bf16.mxu0 %v8873
  %10139 = vmatmul.mubr.bf16.gmra.mrb[0].mxu0 %v8872
  %v10140 = vpop.f32.mrb[0].mxu0
  %v10141 = vadd.f32 0.0, %v10140
  %v10142 = vpop.f32.mrb[0].mxu0
  %v10143 = vpop.f32.mrb[0].mxu0
  %v10144 = vadd.f32 0.0, %v10143
  %v10145 = vpop.f32.mrb[0].mxu0
  %10146 = vmatprep.mubr.bf16.mxu0 %v8876
  %10147 = vmatmul.mubr.bf16.gmra.mrb[0].mxu0 %v8875
  %v10148 = vpop.f32.mrb[0].mxu0
  %v10149 = vadd.f32 0.0, %v10148
  %v10150 = vpop.f32.mrb[0].mxu0
  %v10151 = vpop.f32.mrb[0].mxu0
  %v10152 = vadd.f32 0.0, %v10151
  %v10153 = vpop.f32.mrb[0].mxu0
  %10154 = vmatprep.mubr.bf16.mxu0 %v8879
  %10155 = vmatmul.mubr.bf16.gmra.mrb[0].mxu0 %v8878
  %v10156 = vpop.f32.mrb[0].mxu0
  %v10157 = vadd.f32 0.0, %v10156
  %v10158 = vpop.f32.mrb[0].mxu0
  %v10159 = vpop.f32.mrb[0].mxu0
  %v10160 = vadd.f32 0.0, %v10159
  %v10161 = vpop.f32.mrb[0].mxu0
  %10162 = vmatprep.mubr.bf16.mxu0 %v8882
  %10163 = vmatmul.mubr.bf16.gmra.mrb[0].mxu0 %v8881
  %v10164 = vpop.f32.mrb[0].mxu0
  %v10165 = vadd.f32 0.0, %v10164
  %v10166 = vpop.f32.mrb[0].mxu0
  %v10167 = vpop.f32.mrb[0].mxu0
  %v10168 = vadd.f32 0.0, %v10167
  %v10169 = vpop.f32.mrb[0].mxu0
  %10170 = vmatprep.mubr.bf16.mxu0 %v8885
  %10171 = vmatmul.mubr.bf16.gmra.mrb[0].mxu0 %v8884
  %v10172 = vpop.f32.mrb[0].mxu0
  %v10173 = vadd.f32 0.0, %v10172
  %v10174 = vpop.f32.mrb[0].mxu0
  %v10175 = vpop.f32.mrb[0].mxu0
  %v10176 = vadd.f32 0.0, %v10175
  %v10177 = vpop.f32.mrb[0].mxu0
  %10178 = vmatprep.mubr.bf16.mxu0 %v8888
  %10179 = vmatmul.mubr.bf16.gmra.mrb[0].mxu0 %v8887
  %v10180 = vpop.f32.mrb[0].mxu0
  %v10181 = vadd.f32 0.0, %v10180
  %v10182 = vpop.f32.mrb[0].mxu0
  %v10183 = vpop.f32.mrb[0].mxu0
  %v10184 = vadd.f32 0.0, %v10183
  %v10185 = vpop.f32.mrb[0].mxu0
  %10186 = vmatprep.mubr.bf16.mxu0 %v8891
  %10187 = vmatmul.mubr.bf16.gmra.mrb[0].mxu0 %v8890
  %v10188 = vpop.f32.mrb[0].mxu0
  %v10189 = vadd.f32 0.0, %v10188
  %v10190 = vpop.f32.mrb[0].mxu0
  %v10191 = vpop.f32.mrb[0].mxu0
  %v10192 = vadd.f32 0.0, %v10191
  %v10193 = vpop.f32.mrb[0].mxu0
  %10194 = vmatprep.mubr.bf16.mxu0 %v8894
  %10195 = vmatmul.mubr.bf16.gmra.mrb[0].mxu0 %v8893
  %v10196 = vpop.f32.mrb[0].mxu0
  %v10197 = vadd.f32 0.0, %v10196
  %v10198 = vpop.f32.mrb[0].mxu0
  %v10199 = vpop.f32.mrb[0].mxu0
  %v10200 = vadd.f32 0.0, %v10199
  %v10201 = vpop.f32.mrb[0].mxu0
  %10202 = vmatprep.mubr.bf16.mxu0 %v8897
  %10203 = vmatmul.mubr.bf16.gmra.mrb[0].mxu0 %v8896
  %v10204 = vpop.f32.mrb[0].mxu0
  %v10205 = vadd.f32 0.0, %v10204
  %v10206 = vpop.f32.mrb[0].mxu0
  %v10207 = vpop.f32.mrb[0].mxu0
  %v10208 = vadd.f32 0.0, %v10207
  %v10209 = vpop.f32.mrb[0].mxu0
  %10210 = vmatprep.mubr.bf16.mxu0 %v8900
  %10211 = vmatmul.mubr.bf16.gmra.mrb[0].mxu0 %v8899
  %v10212 = vpop.f32.mrb[0].mxu0
  %v10213 = vadd.f32 0.0, %v10212
  %v10214 = vpop.f32.mrb[0].mxu0
  %v10215 = vpop.f32.mrb[0].mxu0
  %v10216 = vadd.f32 0.0, %v10215
  %v10217 = vpop.f32.mrb[0].mxu0
  %10218 = vmatprep.mubr.bf16.mxu0 %v8903
  %10219 = vmatmul.mubr.bf16.gmra.mrb[0].mxu0 %v8902
  %v10220 = vpop.f32.mrb[0].mxu0
  %v10221 = vadd.f32 0.0, %v10220
  %v10222 = vpop.f32.mrb[0].mxu0
  %v10223 = vpop.f32.mrb[0].mxu0
  %v10224 = vadd.f32 0.0, %v10223
  %v10225 = vpop.f32.mrb[0].mxu0
  %10226 = vmatprep.mubr.bf16.mxu0 %v8906
  %10227 = vmatmul.mubr.bf16.gmra.mrb[0].mxu0 %v8905
  %v10228 = vpop.f32.mrb[0].mxu0
  %v10229 = vadd.f32 0.0, %v10228
  %v10230 = vpop.f32.mrb[0].mxu0
  %v10231 = vpop.f32.mrb[0].mxu0
  %v10232 = vadd.f32 0.0, %v10231
  %v10233 = vpop.f32.mrb[0].mxu0
  %10234 = vmatprep.mubr.bf16.mxu0 %v8909
  %10235 = vmatmul.mubr.bf16.gmra.mrb[0].mxu0 %v8908
  %v10236 = vpop.f32.mrb[0].mxu0
  %v10237 = vadd.f32 0.0, %v10236
  %v10238 = vpop.f32.mrb[0].mxu0
  %v10239 = vpop.f32.mrb[0].mxu0
  %v10240 = vadd.f32 0.0, %v10239
  %v10241 = vpop.f32.mrb[0].mxu0
  %10242 = vmatprep.mubr.bf16.mxu0 %v8912
  %10243 = vmatmul.mubr.bf16.gmra.mrb[0].mxu0 %v8911
  %v10244 = vpop.f32.mrb[0].mxu0
  %v10245 = vadd.f32 0.0, %v10244
  %v10246 = vpop.f32.mrb[0].mxu0
  %v10247 = vpop.f32.mrb[0].mxu0
  %v10248 = vadd.f32 0.0, %v10247
  %v10249 = vpop.f32.mrb[0].mxu0
  %10250 = vmatprep.mubr.bf16.mxu0 %v8915
  %10251 = vmatmul.mubr.bf16.gmra.mrb[0].mxu0 %v8914
  %v10252 = vpop.f32.mrb[0].mxu0
  %v10253 = vadd.f32 0.0, %v10252
  %v10254 = vpop.f32.mrb[0].mxu0
  %v10255 = vpop.f32.mrb[0].mxu0
  %v10256 = vadd.f32 0.0, %v10255
  %v10257 = vpop.f32.mrb[0].mxu0
  %10258 = vmatprep.mubr.bf16.mxu0 %v8918
  %10259 = vmatmul.mubr.bf16.gmra.mrb[0].mxu0 %v8917
  %v10260 = vpop.f32.mrb[0].mxu0
  %v10261 = vadd.f32 0.0, %v10260
  %v10262 = vpop.f32.mrb[0].mxu0
  %v10263 = vpop.f32.mrb[0].mxu0
  %v10264 = vadd.f32 0.0, %v10263
  %v10265 = vpop.f32.mrb[0].mxu0
  %10266 = vmatprep.mubr.bf16.mxu0 %v8921
  %10267 = vmatmul.mubr.bf16.gmra.mrb[0].mxu0 %v8920
  %v10268 = vpop.f32.mrb[0].mxu0
  %v10269 = vadd.f32 0.0, %v10268
  %v10270 = vpop.f32.mrb[0].mxu0
  %v10271 = vpop.f32.mrb[0].mxu0
  %v10272 = vadd.f32 0.0, %v10271
  %v10273 = vpop.f32.mrb[0].mxu0
  %10274 = vmatprep.mubr.bf16.mxu0 %v8924
  %10275 = vmatmul.mubr.bf16.gmra.mrb[0].mxu0 %v8923
  %v10276 = vpop.f32.mrb[0].mxu0
  %v10277 = vadd.f32 0.0, %v10276
  %v10278 = vpop.f32.mrb[0].mxu0
  %v10279 = vpop.f32.mrb[0].mxu0
  %v10280 = vadd.f32 0.0, %v10279
  %v10281 = vpop.f32.mrb[0].mxu0
  %10282 = vmatprep.mubr.bf16.mxu0 %v8927
  %10283 = vmatmul.mubr.bf16.gmra.mrb[0].mxu0 %v8926
  %v10284 = vpop.f32.mrb[0].mxu0
  %v10285 = vadd.f32 0.0, %v10284
  %v10286 = vpop.f32.mrb[0].mxu0
  %v10287 = vpop.f32.mrb[0].mxu0
  %v10288 = vadd.f32 0.0, %v10287
  %v10289 = vpop.f32.mrb[0].mxu0
  %10290 = vmatprep.mubr.bf16.mxu0 %v8930
  %10291 = vmatmul.mubr.bf16.gmra.mrb[0].mxu0 %v8929
  %v10292 = vpop.f32.mrb[0].mxu0
  %v10293 = vadd.f32 0.0, %v10292
  %v10294 = vpop.f32.mrb[0].mxu0
  %v10295 = vpop.f32.mrb[0].mxu0
  %v10296 = vadd.f32 0.0, %v10295
  %v10297 = vpop.f32.mrb[0].mxu0
  %10298 = vmatprep.mubr.bf16.mxu0 %v8933
  %10299 = vmatmul.mubr.bf16.gmra.mrb[0].mxu0 %v8932
  %v10300 = vpop.f32.mrb[0].mxu0
  %v10301 = vadd.f32 0.0, %v10300
  %v10302 = vpop.f32.mrb[0].mxu0
  %v10303 = vpop.f32.mrb[0].mxu0
  %v10304 = vadd.f32 0.0, %v10303
  %v10305 = vpop.f32.mrb[0].mxu0
  %10306 = vmatprep.mubr.bf16.mxu0 %v8936
  %10307 = vmatmul.mubr.bf16.gmra.mrb[0].mxu0 %v8935
  %v10308 = vpop.f32.mrb[0].mxu0
  %v10309 = vadd.f32 0.0, %v10308
  %v10310 = vpop.f32.mrb[0].mxu0
  %v10311 = vpop.f32.mrb[0].mxu0
  %v10312 = vadd.f32 0.0, %v10311
  %v10313 = vpop.f32.mrb[0].mxu0
  %10314 = vmatprep.mubr.bf16.mxu0 %v8939
  %10315 = vmatmul.mubr.bf16.gmra.mrb[0].mxu0 %v8938
  %v10316 = vpop.f32.mrb[0].mxu0
  %v10317 = vadd.f32 0.0, %v10316
  %v10318 = vpop.f32.mrb[0].mxu0
  %v10319 = vpop.f32.mrb[0].mxu0
  %v10320 = vadd.f32 0.0, %v10319
  %v10321 = vpop.f32.mrb[0].mxu0
  %10322 = vmatprep.mubr.bf16.mxu0 %v8942
  %10323 = vmatmul.mubr.bf16.gmra.mrb[0].mxu0 %v8941
  %v10324 = vpop.f32.mrb[0].mxu0
  %v10325 = vadd.f32 0.0, %v10324
  %v10326 = vpop.f32.mrb[0].mxu0
  %v10327 = vpop.f32.mrb[0].mxu0
  %v10328 = vadd.f32 0.0, %v10327
  %v10329 = vpop.f32.mrb[0].mxu0
  %10330 = vmatprep.mubr.bf16.mxu0 %v8945
  %10331 = vmatmul.mubr.bf16.gmra.mrb[0].mxu0 %v8944
  %v10332 = vpop.f32.mrb[0].mxu0
  %v10333 = vadd.f32 0.0, %v10332
  %v10334 = vpop.f32.mrb[0].mxu0
  %v10335 = vpop.f32.mrb[0].mxu0
  %v10336 = vadd.f32 0.0, %v10335
  %v10337 = vpop.f32.mrb[0].mxu0
  %10338 = vmatprep.mubr.bf16.mxu0 %v8948
  %10339 = vmatmul.mubr.bf16.gmra.mrb[0].mxu0 %v8947
  %v10340 = vpop.f32.mrb[0].mxu0
  %v10341 = vadd.f32 0.0, %v10340
  %v10342 = vpop.f32.mrb[0].mxu0
  %v10343 = vpop.f32.mrb[0].mxu0
  %v10344 = vadd.f32 0.0, %v10343
  %v10345 = vpop.f32.mrb[0].mxu0
  %10346 = vmatprep.mubr.bf16.mxu0 %v8951
  %10347 = vmatmul.mubr.bf16.gmra.mrb[0].mxu0 %v8950
  %v10348 = vpop.f32.mrb[0].mxu0
  %v10349 = vadd.f32 0.0, %v10348
  %v10350 = vpop.f32.mrb[0].mxu0
  %v10351 = vpop.f32.mrb[0].mxu0
  %v10352 = vadd.f32 0.0, %v10351
  %v10353 = vpop.f32.mrb[0].mxu0
  %10354 = vmatprep.mubr.bf16.mxu0 %v8954
  %10355 = vmatmul.mubr.bf16.gmra.mrb[0].mxu0 %v8953
  %v10356 = vpop.f32.mrb[0].mxu0
  %v10357 = vadd.f32 0.0, %v10356
  %v10358 = vpop.f32.mrb[0].mxu0
  %v10359 = vpop.f32.mrb[0].mxu0
  %v10360 = vadd.f32 0.0, %v10359
  %v10361 = vpop.f32.mrb[0].mxu0
  %10362 = vmatprep.mubr.bf16.mxu0 %v8957
  %10363 = vmatmul.mubr.bf16.gmra.mrb[0].mxu0 %v8956
  %v10364 = vpop.f32.mrb[0].mxu0
  %v10365 = vadd.f32 0.0, %v10364
  %v10366 = vpop.f32.mrb[0].mxu0
  %v10367 = vpop.f32.mrb[0].mxu0
  %v10368 = vadd.f32 0.0, %v10367
  %v10369 = vpop.f32.mrb[0].mxu0
  %10370 = vmatprep.mubr.bf16.mxu0 %v8960
  %10371 = vmatmul.mubr.bf16.gmra.mrb[0].mxu0 %v8959
  %v10372 = vpop.f32.mrb[0].mxu0
  %v10373 = vadd.f32 0.0, %v10372
  %v10374 = vpop.f32.mrb[0].mxu0
  %v10375 = vpop.f32.mrb[0].mxu0
  %v10376 = vadd.f32 0.0, %v10375
  %v10377 = vpop.f32.mrb[0].mxu0
  %10378 = vmatprep.mubr.bf16.mxu0 %v8963
  %10379 = vmatmul.mubr.bf16.gmra.mrb[0].mxu0 %v8962
  %v10380 = vpop.f32.mrb[0].mxu0
  %v10381 = vadd.f32 0.0, %v10380
  %v10382 = vpop.f32.mrb[0].mxu0
  %v10383 = vpop.f32.mrb[0].mxu0
  %v10384 = vadd.f32 0.0, %v10383
  %v10385 = vpop.f32.mrb[0].mxu0
  %10386 = vmatprep.mubr.bf16.mxu0 %v8966
  %10387 = vmatmul.mubr.bf16.gmra.mrb[0].mxu0 %v8965
  %v10388 = vpop.f32.mrb[0].mxu0
  %v10389 = vadd.f32 0.0, %v10388
  %v10390 = vpop.f32.mrb[0].mxu0
  %v10391 = vpop.f32.mrb[0].mxu0
  %v10392 = vadd.f32 0.0, %v10391
  %v10393 = vpop.f32.mrb[0].mxu0
  %10394 = vmatprep.mubr.bf16.mxu0 %v8969
  %10395 = vmatmul.mubr.bf16.gmra.mrb[0].mxu0 %v8968
  %v10396 = vpop.f32.mrb[0].mxu0
  %v10397 = vadd.f32 0.0, %v10396
  %v10398 = vpop.f32.mrb[0].mxu0
  %v10399 = vpop.f32.mrb[0].mxu0
  %v10400 = vadd.f32 0.0, %v10399
  %v10401 = vpop.f32.mrb[0].mxu0
  %10402 = vmatprep.mubr.bf16.mxu0 %v8972
  %10403 = vmatmul.mubr.bf16.gmra.mrb[0].mxu0 %v8971
  %v10404 = vpop.f32.mrb[0].mxu0
  %v10405 = vadd.f32 0.0, %v10404
  %v10406 = vpop.f32.mrb[0].mxu0
  %v10407 = vpop.f32.mrb[0].mxu0
  %v10408 = vadd.f32 0.0, %v10407
  %v10409 = vpop.f32.mrb[0].mxu0
  %10410 = vmatprep.mubr.bf16.mxu0 %v8975
  %10411 = vmatmul.mubr.bf16.gmra.mrb[0].mxu0 %v8974
  %v10412 = vpop.f32.mrb[0].mxu0
  %v10413 = vadd.f32 0.0, %v10412
  %v10414 = vpop.f32.mrb[0].mxu0
  %v10415 = vpop.f32.mrb[0].mxu0
  %v10416 = vadd.f32 0.0, %v10415
  %v10417 = vpop.f32.mrb[0].mxu0
  %10418 = vmatprep.mubr.bf16.mxu0 %v8978
  %10419 = vmatmul.mubr.bf16.gmra.mrb[0].mxu0 %v8977
  %v10420 = vpop.f32.mrb[0].mxu0
  %v10421 = vadd.f32 0.0, %v10420
  %v10422 = vpop.f32.mrb[0].mxu0
  %v10423 = vpop.f32.mrb[0].mxu0
  %v10424 = vadd.f32 0.0, %v10423
  %v10425 = vpop.f32.mrb[0].mxu0
  %10426 = vmatprep.mubr.bf16.mxu0 %v8981
  %10427 = vmatmul.mubr.bf16.gmra.mrb[0].mxu0 %v8980
  %v10428 = vpop.f32.mrb[0].mxu0
  %v10429 = vadd.f32 0.0, %v10428
  %v10430 = vpop.f32.mrb[0].mxu0
  %v10431 = vpop.f32.mrb[0].mxu0
  %v10432 = vadd.f32 0.0, %v10431
  %v10433 = vpop.f32.mrb[0].mxu0
  %10434 = vmatprep.mubr.bf16.mxu0 %v8984
  %10435 = vmatmul.mubr.bf16.gmra.mrb[0].mxu0 %v8983
  %v10436 = vpop.f32.mrb[0].mxu0
  %v10437 = vadd.f32 0.0, %v10436
  %v10438 = vpop.f32.mrb[0].mxu0
  %v10439 = vpop.f32.mrb[0].mxu0
  %v10440 = vadd.f32 0.0, %v10439
  %v10441 = vpop.f32.mrb[0].mxu0
  %10442 = vmatprep.mubr.bf16.mxu0 %v8987
  %10443 = vmatmul.mubr.bf16.gmra.mrb[0].mxu0 %v8986
  %v10444 = vpop.f32.mrb[0].mxu0
  %v10445 = vadd.f32 0.0, %v10444
  %v10446 = vpop.f32.mrb[0].mxu0
  %v10447 = vpop.f32.mrb[0].mxu0
  %v10448 = vadd.f32 0.0, %v10447
  %v10449 = vpop.f32.mrb[0].mxu0
  %10450 = vmatprep.mubr.bf16.mxu0 %v8990
  %10451 = vmatmul.mubr.bf16.gmra.mrb[0].mxu0 %v8989
  %v10452 = vpop.f32.mrb[0].mxu0
  %v10453 = vadd.f32 0.0, %v10452
  %v10454 = vpop.f32.mrb[0].mxu0
  %v10455 = vpop.f32.mrb[0].mxu0
  %v10456 = vadd.f32 0.0, %v10455
  %v10457 = vpop.f32.mrb[0].mxu0
  %10458 = vmatprep.mubr.bf16.mxu0 %v8993
  %10459 = vmatmul.mubr.bf16.gmra.mrb[0].mxu0 %v8992
  %v10460 = vpop.f32.mrb[0].mxu0
  %v10461 = vadd.f32 0.0, %v10460
  %v10462 = vpop.f32.mrb[0].mxu0
  %v10463 = vpop.f32.mrb[0].mxu0
  %v10464 = vadd.f32 0.0, %v10463
  %v10465 = vpop.f32.mrb[0].mxu0
  %10466 = vmatprep.mubr.bf16.mxu0 %v8996
  %10467 = vmatmul.mubr.bf16.gmra.mrb[0].mxu0 %v8995
  %v10468 = vpop.f32.mrb[0].mxu0
  %v10469 = vadd.f32 0.0, %v10468
  %v10470 = vpop.f32.mrb[0].mxu0
  %v10471 = vpop.f32.mrb[0].mxu0
  %v10472 = vadd.f32 0.0, %v10471
  %v10473 = vpop.f32.mrb[0].mxu0
  %10474 = vmatprep.mubr.bf16.mxu0 %v8999
  %10475 = vmatmul.mubr.bf16.gmra.mrb[0].mxu0 %v8998
  %v10476 = vpop.f32.mrb[0].mxu0
  %v10477 = vadd.f32 0.0, %v10476
  %v10478 = vpop.f32.mrb[0].mxu0
  %v10479 = vpop.f32.mrb[0].mxu0
  %v10480 = vadd.f32 0.0, %v10479
  %v10481 = vpop.f32.mrb[0].mxu0
  %10482 = vmatprep.mubr.bf16.mxu0 %v9002
  %10483 = vmatmul.mubr.bf16.gmra.mrb[0].mxu0 %v9001
  %v10484 = vpop.f32.mrb[0].mxu0
  %v10485 = vadd.f32 0.0, %v10484
  %v10486 = vpop.f32.mrb[0].mxu0
  %v10487 = vpop.f32.mrb[0].mxu0
  %v10488 = vadd.f32 0.0, %v10487
  %v10489 = vpop.f32.mrb[0].mxu0
  %10490 = vmatprep.mubr.bf16.mxu0 %v9005
  %10491 = vmatmul.mubr.bf16.gmra.mrb[0].mxu0 %v9004
  %v10492 = vpop.f32.mrb[0].mxu0
  %v10493 = vadd.f32 0.0, %v10492
  %v10494 = vpop.f32.mrb[0].mxu0
  %v10495 = vpop.f32.mrb[0].mxu0
  %v10496 = vadd.f32 0.0, %v10495
  %v10497 = vpop.f32.mrb[0].mxu0
  %10498 = vmatprep.mubr.bf16.mxu0 %v9008
  %10499 = vmatmul.mubr.bf16.gmra.mrb[0].mxu0 %v9007
  %v10500 = vpop.f32.mrb[0].mxu0
  %v10501 = vadd.f32 0.0, %v10500
  %v10502 = vpop.f32.mrb[0].mxu0
  %v10503 = vpop.f32.mrb[0].mxu0
  %v10504 = vadd.f32 0.0, %v10503
  %v10505 = vpop.f32.mrb[0].mxu0
  %10506 = vmatprep.mubr.bf16.mxu0 %v9011
  %10507 = vmatmul.mubr.bf16.gmra.mrb[0].mxu0 %v9010
  %v10508 = vpop.f32.mrb[0].mxu0
  %v10509 = vadd.f32 0.0, %v10508
  %v10510 = vpop.f32.mrb[0].mxu0
  %v10511 = vpop.f32.mrb[0].mxu0
  %v10512 = vadd.f32 0.0, %v10511
  %v10513 = vpop.f32.mrb[0].mxu0
  %10514 = vmatprep.mubr.bf16.mxu0 %v9014
  %10515 = vmatmul.mubr.bf16.gmra.mrb[0].mxu0 %v9013
  %v10516 = vpop.f32.mrb[0].mxu0
  %v10517 = vadd.f32 0.0, %v10516
  %v10518 = vpop.f32.mrb[0].mxu0
  %v10519 = vpop.f32.mrb[0].mxu0
  %v10520 = vadd.f32 0.0, %v10519
  %v10521 = vpop.f32.mrb[0].mxu0
  %10522 = vmatprep.mubr.bf16.mxu0 %v9017
  %10523 = vmatmul.mubr.bf16.gmra.mrb[0].mxu0 %v9016
  %v10524 = vpop.f32.mrb[0].mxu0
  %v10525 = vadd.f32 0.0, %v10524
  %v10526 = vpop.f32.mrb[0].mxu0
  %v10527 = vpop.f32.mrb[0].mxu0
  %v10528 = vadd.f32 0.0, %v10527
  %v10529 = vpop.f32.mrb[0].mxu0
  %10530 = vmatprep.mubr.bf16.mxu0 %v9020
  %10531 = vmatmul.mubr.bf16.gmra.mrb[0].mxu0 %v9019
  %v10532 = vpop.f32.mrb[0].mxu0
  %v10533 = vadd.f32 0.0, %v10532
  %v10534 = vpop.f32.mrb[0].mxu0
  %v10535 = vpop.f32.mrb[0].mxu0
  %v10536 = vadd.f32 0.0, %v10535
  %v10537 = vpop.f32.mrb[0].mxu0
  %10538 = vmatprep.mubr.bf16.mxu0 %v9023
  %10539 = vmatmul.mubr.bf16.gmra.mrb[0].mxu0 %v9022
  %v10540 = vpop.f32.mrb[0].mxu0
  %v10541 = vadd.f32 0.0, %v10540
  %v10542 = vpop.f32.mrb[0].mxu0
  %v10543 = vpop.f32.mrb[0].mxu0
  %v10544 = vadd.f32 0.0, %v10543
  %v10545 = vpop.f32.mrb[0].mxu0
  %10546 = vmatprep.mubr.bf16.mxu0 %v9026
  %10547 = vmatmul.mubr.bf16.gmra.mrb[0].mxu0 %v9025
  %v10548 = vpop.f32.mrb[0].mxu0
  %v10549 = vadd.f32 0.0, %v10548
  %v10550 = vpop.f32.mrb[0].mxu0
  %v10551 = vpop.f32.mrb[0].mxu0
  %v10552 = vadd.f32 0.0, %v10551
  %v10553 = vpop.f32.mrb[0].mxu0
  %10554 = vmatprep.mubr.bf16.mxu0 %v9029
  %10555 = vmatmul.mubr.bf16.gmra.mrb[0].mxu0 %v9028
  %v10556 = vpop.f32.mrb[0].mxu0
  %v10557 = vadd.f32 0.0, %v10556
  %v10558 = vpop.f32.mrb[0].mxu0
  %v10559 = vpop.f32.mrb[0].mxu0
  %v10560 = vadd.f32 0.0, %v10559
  %v10561 = vpop.f32.mrb[0].mxu0
  %10562 = vmatprep.mubr.bf16.mxu0 %v9032
  %10563 = vmatmul.mubr.bf16.gmra.mrb[0].mxu0 %v9031
  %v10564 = vpop.f32.mrb[0].mxu0
  %v10565 = vadd.f32 0.0, %v10564
  %v10566 = vpop.f32.mrb[0].mxu0
  %v10567 = vpop.f32.mrb[0].mxu0
  %v10568 = vadd.f32 0.0, %v10567
  %v10569 = vpop.f32.mrb[0].mxu0
  %10570 = vmatprep.mubr.bf16.mxu0 %v9035
  %10571 = vmatmul.mubr.bf16.gmra.mrb[0].mxu0 %v9034
  %v10572 = vpop.f32.mrb[0].mxu0
  %v10573 = vadd.f32 0.0, %v10572
  %v10574 = vpop.f32.mrb[0].mxu0
  %v10575 = vpop.f32.mrb[0].mxu0
  %v10576 = vadd.f32 0.0, %v10575
  %v10577 = vpop.f32.mrb[0].mxu0
  %10578 = vmatprep.mubr.bf16.mxu0 %v9038
  %10579 = vmatmul.mubr.bf16.gmra.mrb[0].mxu0 %v9037
  %v10580 = vpop.f32.mrb[0].mxu0
  %v10581 = vadd.f32 0.0, %v10580
  %v10582 = vpop.f32.mrb[0].mxu0
  %v10583 = vpop.f32.mrb[0].mxu0
  %v10584 = vadd.f32 0.0, %v10583
  %v10585 = vpop.f32.mrb[0].mxu0
  %10586 = vmatprep.mubr.bf16.mxu0 %v9041
  %10587 = vmatmul.mubr.bf16.gmra.mrb[0].mxu0 %v9040
  %v10588 = vpop.f32.mrb[0].mxu0
  %v10589 = vadd.f32 0.0, %v10588
  %v10590 = vpop.f32.mrb[0].mxu0
  %v10591 = vpop.f32.mrb[0].mxu0
  %v10592 = vadd.f32 0.0, %v10591
  %v10593 = vpop.f32.mrb[0].mxu0
  %10594 = vmatprep.mubr.bf16.mxu0 %v9044
  %10595 = vmatmul.mubr.bf16.gmra.mrb[0].mxu0 %v9043
  %v10596 = vpop.f32.mrb[0].mxu0
  %v10597 = vadd.f32 0.0, %v10596
  %v10598 = vpop.f32.mrb[0].mxu0
  %v10599 = vpop.f32.mrb[0].mxu0
  %v10600 = vadd.f32 0.0, %v10599
  %v10601 = vpop.f32.mrb[0].mxu0
  %10602 = vmatprep.mubr.bf16.mxu0 %v9047
  %10603 = vmatmul.mubr.bf16.gmra.mrb[0].mxu0 %v9046
  %v10604 = vpop.f32.mrb[0].mxu0
  %v10605 = vadd.f32 0.0, %v10604
  %v10606 = vpop.f32.mrb[0].mxu0
  %v10607 = vpop.f32.mrb[0].mxu0
  %v10608 = vadd.f32 0.0, %v10607
  %v10609 = vpop.f32.mrb[0].mxu0
  %10610 = vmatprep.mubr.bf16.mxu0 %v9050
  %10611 = vmatmul.mubr.bf16.gmra.mrb[0].mxu0 %v9049
  %v10612 = vpop.f32.mrb[0].mxu0
  %v10613 = vadd.f32 0.0, %v10612
  %v10614 = vpop.f32.mrb[0].mxu0
  %v10615 = vpop.f32.mrb[0].mxu0
  %v10616 = vadd.f32 0.0, %v10615
  %v10617 = vpop.f32.mrb[0].mxu0
  %10618 = vmatprep.mubr.bf16.mxu0 %v9053
  %10619 = vmatmul.mubr.bf16.gmra.mrb[0].mxu0 %v9052
  %v10620 = vpop.f32.mrb[0].mxu0
  %v10621 = vadd.f32 0.0, %v10620
  %v10622 = vpop.f32.mrb[0].mxu0
  %v10623 = vpop.f32.mrb[0].mxu0
  %v10624 = vadd.f32 0.0, %v10623
  %v10625 = vpop.f32.mrb[0].mxu0
  %10626 = vmatprep.mubr.bf16.mxu0 %v9056
  %10627 = vmatmul.mubr.bf16.gmra.mrb[0].mxu0 %v9055
  %v10628 = vpop.f32.mrb[0].mxu0
  %v10629 = vadd.f32 0.0, %v10628
  %v10630 = vpop.f32.mrb[0].mxu0
  %v10631 = vpop.f32.mrb[0].mxu0
  %v10632 = vadd.f32 0.0, %v10631
  %v10633 = vpop.f32.mrb[0].mxu0
  %10634 = vmatprep.mubr.bf16.mxu0 %v9059
  %10635 = vmatmul.mubr.bf16.gmra.mrb[0].mxu0 %v9058
  %v10636 = vpop.f32.mrb[0].mxu0
  %v10637 = vadd.f32 0.0, %v10636
  %v10638 = vpop.f32.mrb[0].mxu0
  %v10639 = vpop.f32.mrb[0].mxu0
  %v10640 = vadd.f32 0.0, %v10639
  %v10641 = vpop.f32.mrb[0].mxu0
  %10642 = vmatprep.mubr.bf16.mxu0 %v9062
  %10643 = vmatmul.mubr.bf16.gmra.mrb[0].mxu0 %v9061
  %v10644 = vpop.f32.mrb[0].mxu0
  %v10645 = vadd.f32 0.0, %v10644
  %v10646 = vpop.f32.mrb[0].mxu0
  %v10647 = vpop.f32.mrb[0].mxu0
  %v10648 = vadd.f32 0.0, %v10647
  %v10649 = vpop.f32.mrb[0].mxu0
  %10650 = vmatprep.mubr.bf16.mxu0 %v9065
  %10651 = vmatmul.mubr.bf16.gmra.mrb[0].mxu0 %v9064
  %v10652 = vpop.f32.mrb[0].mxu0
  %v10653 = vadd.f32 0.0, %v10652
  %v10654 = vpop.f32.mrb[0].mxu0
  %v10655 = vpop.f32.mrb[0].mxu0
  %v10656 = vadd.f32 0.0, %v10655
  %v10657 = vpop.f32.mrb[0].mxu0
  %10658 = vmatprep.mubr.bf16.mxu0 %v9068
  %10659 = vmatmul.mubr.bf16.gmra.mrb[0].mxu0 %v9067
  %v10660 = vpop.f32.mrb[0].mxu0
  %v10661 = vadd.f32 0.0, %v10660
  %v10662 = vpop.f32.mrb[0].mxu0
  %v10663 = vpop.f32.mrb[0].mxu0
  %v10664 = vadd.f32 0.0, %v10663
  %v10665 = vpop.f32.mrb[0].mxu0
  %10666 = vmatprep.mubr.bf16.mxu0 %v9071
  %10667 = vmatmul.mubr.bf16.gmra.mrb[0].mxu0 %v9070
  %v10668 = vpop.f32.mrb[0].mxu0
  %v10669 = vadd.f32 0.0, %v10668
  %v10670 = vpop.f32.mrb[0].mxu0
  %v10671 = vpop.f32.mrb[0].mxu0
  %v10672 = vadd.f32 0.0, %v10671
  %v10673 = vpop.f32.mrb[0].mxu0
  %10674 = vmatprep.mubr.bf16.mxu0 %v9074
  %10675 = vmatmul.mubr.bf16.gmra.mrb[0].mxu0 %v9073
  %v10676 = vpop.f32.mrb[0].mxu0
  %v10677 = vadd.f32 0.0, %v10676
  %v10678 = vpop.f32.mrb[0].mxu0
  %v10679 = vpop.f32.mrb[0].mxu0
  %v10680 = vadd.f32 0.0, %v10679
  %v10681 = vpop.f32.mrb[0].mxu0
  %10682 = vmatprep.mubr.bf16.mxu0 %v9077
  %10683 = vmatmul.mubr.bf16.gmra.mrb[0].mxu0 %v9076
  %v10684 = vpop.f32.mrb[0].mxu0
  %v10685 = vadd.f32 0.0, %v10684
  %v10686 = vpop.f32.mrb[0].mxu0
  %v10687 = vpop.f32.mrb[0].mxu0
  %v10688 = vadd.f32 0.0, %v10687
  %v10689 = vpop.f32.mrb[0].mxu0
  %10690 = vmatprep.mubr.bf16.mxu0 %v9080
  %10691 = vmatmul.mubr.bf16.gmra.mrb[0].mxu0 %v9079
  %v10692 = vpop.f32.mrb[0].mxu0
  %v10693 = vadd.f32 0.0, %v10692
  %v10694 = vpop.f32.mrb[0].mxu0
  %v10695 = vpop.f32.mrb[0].mxu0
  %v10696 = vadd.f32 0.0, %v10695
  %v10697 = vpop.f32.mrb[0].mxu0
  %10698 = vdwg.mxu0
  %10699 = vmatprep.subr.bf16.mxu0 0
  %10700 = vmatpush1.bf16.msra.mxu0 %v7202
  %10701 = vmatprep.subr.bf16.mxu0 0
  %10702 = vmatpush1.bf16.msra.mxu0 %v7203
  %10703 = vmatprep.subr.bf16.mxu0 0
  %10704 = vmatpush1.bf16.msra.mxu0 %v7204
  %10705 = vmatprep.subr.bf16.mxu0 0
  %10706 = vmatpush1.bf16.msra.mxu0 %v7205
  %10707 = vmatprep.subr.bf16.mxu0 0
  %10708 = vmatpush1.bf16.msra.mxu0 %v7206
  %10709 = vmatprep.subr.bf16.mxu0 0
  %10710 = vmatpush1.bf16.msra.mxu0 %v7207
  %10711 = vmatprep.subr.bf16.mxu0 0
  %10712 = vmatpush1.bf16.msra.mxu0 %v7208
  %10713 = vmatprep.subr.bf16.mxu0 0
  %10714 = vmatpush1.bf16.msra.mxu0 %v7209
  %10715 = vmatprep.subr.bf16.mxu0 0
  %10716 = vmatpush1.bf16.msra.mxu0 0
  %10717 = vmatprep.subr.bf16.mxu0 0
  %10718 = vmatpush1.bf16.msra.mxu0 0
  %10719 = vmatprep.subr.bf16.mxu0 0
  %10720 = vmatpush1.bf16.msra.mxu0 0
  %10721 = vmatprep.subr.bf16.mxu0 0
  %10722 = vmatpush1.bf16.msra.mxu0 0
  %10723 = vmatprep.subr.bf16.mxu0 0
  %10724 = vmatpush1.bf16.msra.mxu0 0
  %10725 = vmatprep.subr.bf16.mxu0 0
  %10726 = vmatpush1.bf16.msra.mxu0 0
  %10727 = vmatprep.subr.bf16.mxu0 0
  %10728 = vmatpush1.bf16.msra.mxu0 0
  %10729 = vmatprep.subr.bf16.mxu0 0
  %10730 = vmatpush1.bf16.msra.mxu0 0
  %10731 = vmatprep.mubr.bf16.mxu0 0
  %10732 = vmatmul.mubr.bf16.gmra.mrb[0].mxu0 %v8652
  %v10733 = vpop.f32.mrb[0].mxu0
  %v10734 = vadd.f32 %v9549, %v10733
  %v10735 = vpop.f32.mrb[0].mxu0
  %v10736 = vpop.f32.mrb[0].mxu0
  %v10737 = vadd.f32 %v9552, %v10736
  %v10738 = vpop.f32.mrb[0].mxu0
  %10739 = vmatprep.mubr.bf16.mxu0 0
  %10740 = vmatmul.mubr.bf16.gmra.mrb[0].mxu0 %v8655
  %v10741 = vpop.f32.mrb[0].mxu0
  %v10742 = vadd.f32 %v9557, %v10741
  %v10743 = vpop.f32.mrb[0].mxu0
  %v10744 = vpop.f32.mrb[0].mxu0
  %v10745 = vadd.f32 %v9560, %v10744
  %v10746 = vpop.f32.mrb[0].mxu0
  %10747 = vmatprep.mubr.bf16.mxu0 0
  %10748 = vmatmul.mubr.bf16.gmra.mrb[0].mxu0 %v8658
  %v10749 = vpop.f32.mrb[0].mxu0
  %v10750 = vadd.f32 %v9565, %v10749
  %v10751 = vpop.f32.mrb[0].mxu0
  %v10752 = vpop.f32.mrb[0].mxu0
  %v10753 = vadd.f32 %v9568, %v10752
  %v10754 = vpop.f32.mrb[0].mxu0
  %10755 = vmatprep.mubr.bf16.mxu0 0
  %10756 = vmatmul.mubr.bf16.gmra.mrb[0].mxu0 %v8661
  %v10757 = vpop.f32.mrb[0].mxu0
  %v10758 = vadd.f32 %v9573, %v10757
  %v10759 = vpop.f32.mrb[0].mxu0
  %v10760 = vpop.f32.mrb[0].mxu0
  %v10761 = vadd.f32 %v9576, %v10760
  %v10762 = vpop.f32.mrb[0].mxu0
  %10763 = vmatprep.mubr.bf16.mxu0 0
  %10764 = vmatmul.mubr.bf16.gmra.mrb[0].mxu0 %v8664
  %v10765 = vpop.f32.mrb[0].mxu0
  %v10766 = vadd.f32 %v9581, %v10765
  %v10767 = vpop.f32.mrb[0].mxu0
  %v10768 = vpop.f32.mrb[0].mxu0
  %v10769 = vadd.f32 %v9584, %v10768
  %v10770 = vpop.f32.mrb[0].mxu0
  %10771 = vmatprep.mubr.bf16.mxu0 0
  %10772 = vmatmul.mubr.bf16.gmra.mrb[0].mxu0 %v8667
  %v10773 = vpop.f32.mrb[0].mxu0
  %v10774 = vadd.f32 %v9589, %v10773
  %v10775 = vpop.f32.mrb[0].mxu0
  %v10776 = vpop.f32.mrb[0].mxu0
  %v10777 = vadd.f32 %v9592, %v10776
  %v10778 = vpop.f32.mrb[0].mxu0
  %10779 = vmatprep.mubr.bf16.mxu0 0
  %10780 = vmatmul.mubr.bf16.gmra.mrb[0].mxu0 %v8670
  %v10781 = vpop.f32.mrb[0].mxu0
  %v10782 = vadd.f32 %v9597, %v10781
  %v10783 = vpop.f32.mrb[0].mxu0
  %v10784 = vpop.f32.mrb[0].mxu0
  %v10785 = vadd.f32 %v9600, %v10784
  %v10786 = vpop.f32.mrb[0].mxu0
  %10787 = vmatprep.mubr.bf16.mxu0 0
  %10788 = vmatmul.mubr.bf16.gmra.mrb[0].mxu0 %v8673
  %v10789 = vpop.f32.mrb[0].mxu0
  %v10790 = vadd.f32 %v9605, %v10789
  %v10791 = vpop.f32.mrb[0].mxu0
  %v10792 = vpop.f32.mrb[0].mxu0
  %v10793 = vadd.f32 %v9608, %v10792
  %v10794 = vpop.f32.mrb[0].mxu0
  %10795 = vmatprep.mubr.bf16.mxu0 0
  %10796 = vmatmul.mubr.bf16.gmra.mrb[0].mxu0 %v8676
  %v10797 = vpop.f32.mrb[0].mxu0
  %v10798 = vadd.f32 %v9613, %v10797
  %v10799 = vpop.f32.mrb[0].mxu0
  %v10800 = vpop.f32.mrb[0].mxu0
  %v10801 = vadd.f32 %v9616, %v10800
  %v10802 = vpop.f32.mrb[0].mxu0
  %10803 = vmatprep.mubr.bf16.mxu0 0
  %10804 = vmatmul.mubr.bf16.gmra.mrb[0].mxu0 %v8679
  %v10805 = vpop.f32.mrb[0].mxu0
  %v10806 = vadd.f32 %v9621, %v10805
  %v10807 = vpop.f32.mrb[0].mxu0
  %v10808 = vpop.f32.mrb[0].mxu0
  %v10809 = vadd.f32 %v9624, %v10808
  %v10810 = vpop.f32.mrb[0].mxu0
  %10811 = vmatprep.mubr.bf16.mxu0 0
  %10812 = vmatmul.mubr.bf16.gmra.mrb[0].mxu0 %v8682
  %v10813 = vpop.f32.mrb[0].mxu0
  %v10814 = vadd.f32 %v9629, %v10813
  %v10815 = vpop.f32.mrb[0].mxu0
  %v10816 = vpop.f32.mrb[0].mxu0
  %v10817 = vadd.f32 %v9632, %v10816
  %v10818 = vpop.f32.mrb[0].mxu0
  %10819 = vmatprep.mubr.bf16.mxu0 0
  %10820 = vmatmul.mubr.bf16.gmra.mrb[0].mxu0 %v8685
  %v10821 = vpop.f32.mrb[0].mxu0
  %v10822 = vadd.f32 %v9637, %v10821
  %v10823 = vpop.f32.mrb[0].mxu0
  %v10824 = vpop.f32.mrb[0].mxu0
  %v10825 = vadd.f32 %v9640, %v10824
  %v10826 = vpop.f32.mrb[0].mxu0
  %10827 = vmatprep.mubr.bf16.mxu0 0
  %10828 = vmatmul.mubr.bf16.gmra.mrb[0].mxu0 %v8688
  %v10829 = vpop.f32.mrb[0].mxu0
  %v10830 = vadd.f32 %v9645, %v10829
  %v10831 = vpop.f32.mrb[0].mxu0
  %v10832 = vpop.f32.mrb[0].mxu0
  %v10833 = vadd.f32 %v9648, %v10832
  %v10834 = vpop.f32.mrb[0].mxu0
  %10835 = vmatprep.mubr.bf16.mxu0 0
  %10836 = vmatmul.mubr.bf16.gmra.mrb[0].mxu0 %v8691
  %v10837 = vpop.f32.mrb[0].mxu0
  %v10838 = vadd.f32 %v9653, %v10837
  %v10839 = vpop.f32.mrb[0].mxu0
  %v10840 = vpop.f32.mrb[0].mxu0
  %v10841 = vadd.f32 %v9656, %v10840
  %v10842 = vpop.f32.mrb[0].mxu0
  %10843 = vmatprep.mubr.bf16.mxu0 0
  %10844 = vmatmul.mubr.bf16.gmra.mrb[0].mxu0 %v8694
  %v10845 = vpop.f32.mrb[0].mxu0
  %v10846 = vadd.f32 %v9661, %v10845
  %v10847 = vpop.f32.mrb[0].mxu0
  %v10848 = vpop.f32.mrb[0].mxu0
  %v10849 = vadd.f32 %v9664, %v10848
  %v10850 = vpop.f32.mrb[0].mxu0
  %10851 = vmatprep.mubr.bf16.mxu0 0
  %10852 = vmatmul.mubr.bf16.gmra.mrb[0].mxu0 %v8697
  %v10853 = vpop.f32.mrb[0].mxu0
  %v10854 = vadd.f32 %v9669, %v10853
  %v10855 = vpop.f32.mrb[0].mxu0
  %v10856 = vpop.f32.mrb[0].mxu0
  %v10857 = vadd.f32 %v9672, %v10856
  %v10858 = vpop.f32.mrb[0].mxu0
  %10859 = vmatprep.mubr.bf16.mxu0 0
  %10860 = vmatmul.mubr.bf16.gmra.mrb[0].mxu0 %v8700
  %v10861 = vpop.f32.mrb[0].mxu0
  %v10862 = vadd.f32 %v9677, %v10861
  %v10863 = vpop.f32.mrb[0].mxu0
  %v10864 = vpop.f32.mrb[0].mxu0
  %v10865 = vadd.f32 %v9680, %v10864
  %v10866 = vpop.f32.mrb[0].mxu0
  %10867 = vmatprep.mubr.bf16.mxu0 0
  %10868 = vmatmul.mubr.bf16.gmra.mrb[0].mxu0 %v8703
  %v10869 = vpop.f32.mrb[0].mxu0
  %v10870 = vadd.f32 %v9685, %v10869
  %v10871 = vpop.f32.mrb[0].mxu0
  %v10872 = vpop.f32.mrb[0].mxu0
  %v10873 = vadd.f32 %v9688, %v10872
  %v10874 = vpop.f32.mrb[0].mxu0
  %10875 = vmatprep.mubr.bf16.mxu0 0
  %10876 = vmatmul.mubr.bf16.gmra.mrb[0].mxu0 %v8706
  %v10877 = vpop.f32.mrb[0].mxu0
  %v10878 = vadd.f32 %v9693, %v10877
  %v10879 = vpop.f32.mrb[0].mxu0
  %v10880 = vpop.f32.mrb[0].mxu0
  %v10881 = vadd.f32 %v9696, %v10880
  %v10882 = vpop.f32.mrb[0].mxu0
  %10883 = vmatprep.mubr.bf16.mxu0 0
  %10884 = vmatmul.mubr.bf16.gmra.mrb[0].mxu0 %v8709
  %v10885 = vpop.f32.mrb[0].mxu0
  %v10886 = vadd.f32 %v9701, %v10885
  %v10887 = vpop.f32.mrb[0].mxu0
  %v10888 = vpop.f32.mrb[0].mxu0
  %v10889 = vadd.f32 %v9704, %v10888
  %v10890 = vpop.f32.mrb[0].mxu0
  %10891 = vmatprep.mubr.bf16.mxu0 0
  %10892 = vmatmul.mubr.bf16.gmra.mrb[0].mxu0 %v8712
  %v10893 = vpop.f32.mrb[0].mxu0
  %v10894 = vadd.f32 %v9709, %v10893
  %v10895 = vpop.f32.mrb[0].mxu0
  %v10896 = vpop.f32.mrb[0].mxu0
  %v10897 = vadd.f32 %v9712, %v10896
  %v10898 = vpop.f32.mrb[0].mxu0
  %10899 = vmatprep.mubr.bf16.mxu0 0
  %10900 = vmatmul.mubr.bf16.gmra.mrb[0].mxu0 %v8715
  %v10901 = vpop.f32.mrb[0].mxu0
  %v10902 = vadd.f32 %v9717, %v10901
  %v10903 = vpop.f32.mrb[0].mxu0
  %v10904 = vpop.f32.mrb[0].mxu0
  %v10905 = vadd.f32 %v9720, %v10904
  %v10906 = vpop.f32.mrb[0].mxu0
  %10907 = vmatprep.mubr.bf16.mxu0 0
  %10908 = vmatmul.mubr.bf16.gmra.mrb[0].mxu0 %v8718
  %v10909 = vpop.f32.mrb[0].mxu0
  %v10910 = vadd.f32 %v9725, %v10909
  %v10911 = vpop.f32.mrb[0].mxu0
  %v10912 = vpop.f32.mrb[0].mxu0
  %v10913 = vadd.f32 %v9728, %v10912
  %v10914 = vpop.f32.mrb[0].mxu0
  %10915 = vmatprep.mubr.bf16.mxu0 0
  %10916 = vmatmul.mubr.bf16.gmra.mrb[0].mxu0 %v8721
  %v10917 = vpop.f32.mrb[0].mxu0
  %v10918 = vadd.f32 %v9733, %v10917
  %v10919 = vpop.f32.mrb[0].mxu0
  %v10920 = vpop.f32.mrb[0].mxu0
  %v10921 = vadd.f32 %v9736, %v10920
  %v10922 = vpop.f32.mrb[0].mxu0
  %10923 = vmatprep.mubr.bf16.mxu0 0
  %10924 = vmatmul.mubr.bf16.gmra.mrb[0].mxu0 %v8724
  %v10925 = vpop.f32.mrb[0].mxu0
  %v10926 = vadd.f32 %v9741, %v10925
  %v10927 = vpop.f32.mrb[0].mxu0
  %v10928 = vpop.f32.mrb[0].mxu0
  %v10929 = vadd.f32 %v9744, %v10928
  %v10930 = vpop.f32.mrb[0].mxu0
  %10931 = vmatprep.mubr.bf16.mxu0 0
  %10932 = vmatmul.mubr.bf16.gmra.mrb[0].mxu0 %v8727
  %v10933 = vpop.f32.mrb[0].mxu0
  %v10934 = vadd.f32 %v9749, %v10933
  %v10935 = vpop.f32.mrb[0].mxu0
  %v10936 = vpop.f32.mrb[0].mxu0
  %v10937 = vadd.f32 %v9752, %v10936
  %v10938 = vpop.f32.mrb[0].mxu0
  %10939 = vmatprep.mubr.bf16.mxu0 0
  %10940 = vmatmul.mubr.bf16.gmra.mrb[0].mxu0 %v8730
  %v10941 = vpop.f32.mrb[0].mxu0
  %v10942 = vadd.f32 %v9757, %v10941
  %v10943 = vpop.f32.mrb[0].mxu0
  %v10944 = vpop.f32.mrb[0].mxu0
  %v10945 = vadd.f32 %v9760, %v10944
  %v10946 = vpop.f32.mrb[0].mxu0
  %10947 = vmatprep.mubr.bf16.mxu0 0
  %10948 = vmatmul.mubr.bf16.gmra.mrb[0].mxu0 %v8733
  %v10949 = vpop.f32.mrb[0].mxu0
  %v10950 = vadd.f32 %v9765, %v10949
  %v10951 = vpop.f32.mrb[0].mxu0
  %v10952 = vpop.f32.mrb[0].mxu0
  %v10953 = vadd.f32 %v9768, %v10952
  %v10954 = vpop.f32.mrb[0].mxu0
  %10955 = vmatprep.mubr.bf16.mxu0 0
  %10956 = vmatmul.mubr.bf16.gmra.mrb[0].mxu0 %v8736
  %v10957 = vpop.f32.mrb[0].mxu0
  %v10958 = vadd.f32 %v9773, %v10957
  %v10959 = vpop.f32.mrb[0].mxu0
  %v10960 = vpop.f32.mrb[0].mxu0
  %v10961 = vadd.f32 %v9776, %v10960
  %v10962 = vpop.f32.mrb[0].mxu0
  %10963 = vmatprep.mubr.bf16.mxu0 0
  %10964 = vmatmul.mubr.bf16.gmra.mrb[0].mxu0 %v8739
  %v10965 = vpop.f32.mrb[0].mxu0
  %v10966 = vadd.f32 %v9781, %v10965
  %v10967 = vpop.f32.mrb[0].mxu0
  %v10968 = vpop.f32.mrb[0].mxu0
  %v10969 = vadd.f32 %v9784, %v10968
  %v10970 = vpop.f32.mrb[0].mxu0
  %10971 = vmatprep.mubr.bf16.mxu0 0
  %10972 = vmatmul.mubr.bf16.gmra.mrb[0].mxu0 %v8742
  %v10973 = vpop.f32.mrb[0].mxu0
  %v10974 = vadd.f32 %v9789, %v10973
  %v10975 = vpop.f32.mrb[0].mxu0
  %v10976 = vpop.f32.mrb[0].mxu0
  %v10977 = vadd.f32 %v9792, %v10976
  %v10978 = vpop.f32.mrb[0].mxu0
  %10979 = vmatprep.mubr.bf16.mxu0 0
  %10980 = vmatmul.mubr.bf16.gmra.mrb[0].mxu0 %v8745
  %v10981 = vpop.f32.mrb[0].mxu0
  %v10982 = vadd.f32 %v9797, %v10981
  %v10983 = vpop.f32.mrb[0].mxu0
  %v10984 = vpop.f32.mrb[0].mxu0
  %v10985 = vadd.f32 %v9800, %v10984
  %v10986 = vpop.f32.mrb[0].mxu0
  %10987 = vmatprep.mubr.bf16.mxu0 0
  %10988 = vmatmul.mubr.bf16.gmra.mrb[0].mxu0 %v8748
  %v10989 = vpop.f32.mrb[0].mxu0
  %v10990 = vadd.f32 %v9805, %v10989
  %v10991 = vpop.f32.mrb[0].mxu0
  %v10992 = vpop.f32.mrb[0].mxu0
  %v10993 = vadd.f32 %v9808, %v10992
  %v10994 = vpop.f32.mrb[0].mxu0
  %10995 = vmatprep.mubr.bf16.mxu0 0
  %10996 = vmatmul.mubr.bf16.gmra.mrb[0].mxu0 %v8751
  %v10997 = vpop.f32.mrb[0].mxu0
  %v10998 = vadd.f32 %v9813, %v10997
  %v10999 = vpop.f32.mrb[0].mxu0
  %v11000 = vpop.f32.mrb[0].mxu0
  %v11001 = vadd.f32 %v9816, %v11000
  %v11002 = vpop.f32.mrb[0].mxu0
  %11003 = vmatprep.mubr.bf16.mxu0 0
  %11004 = vmatmul.mubr.bf16.gmra.mrb[0].mxu0 %v8754
  %v11005 = vpop.f32.mrb[0].mxu0
  %v11006 = vadd.f32 %v9821, %v11005
  %v11007 = vpop.f32.mrb[0].mxu0
  %v11008 = vpop.f32.mrb[0].mxu0
  %v11009 = vadd.f32 %v9824, %v11008
  %v11010 = vpop.f32.mrb[0].mxu0
  %11011 = vmatprep.mubr.bf16.mxu0 0
  %11012 = vmatmul.mubr.bf16.gmra.mrb[0].mxu0 %v8757
  %v11013 = vpop.f32.mrb[0].mxu0
  %v11014 = vadd.f32 %v9829, %v11013
  %v11015 = vpop.f32.mrb[0].mxu0
  %v11016 = vpop.f32.mrb[0].mxu0
  %v11017 = vadd.f32 %v9832, %v11016
  %v11018 = vpop.f32.mrb[0].mxu0
  %11019 = vmatprep.mubr.bf16.mxu0 0
  %11020 = vmatmul.mubr.bf16.gmra.mrb[0].mxu0 %v8760
  %v11021 = vpop.f32.mrb[0].mxu0
  %v11022 = vadd.f32 %v9837, %v11021
  %v11023 = vpop.f32.mrb[0].mxu0
  %v11024 = vpop.f32.mrb[0].mxu0
  %v11025 = vadd.f32 %v9840, %v11024
  %v11026 = vpop.f32.mrb[0].mxu0
  %11027 = vmatprep.mubr.bf16.mxu0 0
  %11028 = vmatmul.mubr.bf16.gmra.mrb[0].mxu0 %v8763
  %v11029 = vpop.f32.mrb[0].mxu0
  %v11030 = vadd.f32 %v9845, %v11029
  %v11031 = vpop.f32.mrb[0].mxu0
  %v11032 = vpop.f32.mrb[0].mxu0
  %v11033 = vadd.f32 %v9848, %v11032
  %v11034 = vpop.f32.mrb[0].mxu0
  %11035 = vmatprep.mubr.bf16.mxu0 0
  %11036 = vmatmul.mubr.bf16.gmra.mrb[0].mxu0 %v8766
  %v11037 = vpop.f32.mrb[0].mxu0
  %v11038 = vadd.f32 %v9853, %v11037
  %v11039 = vpop.f32.mrb[0].mxu0
  %v11040 = vpop.f32.mrb[0].mxu0
  %v11041 = vadd.f32 %v9856, %v11040
  %v11042 = vpop.f32.mrb[0].mxu0
  %11043 = vmatprep.mubr.bf16.mxu0 0
  %11044 = vmatmul.mubr.bf16.gmra.mrb[0].mxu0 %v8769
  %v11045 = vpop.f32.mrb[0].mxu0
  %v11046 = vadd.f32 %v9861, %v11045
  %v11047 = vpop.f32.mrb[0].mxu0
  %v11048 = vpop.f32.mrb[0].mxu0
  %v11049 = vadd.f32 %v9864, %v11048
  %v11050 = vpop.f32.mrb[0].mxu0
  %11051 = vmatprep.mubr.bf16.mxu0 0
  %11052 = vmatmul.mubr.bf16.gmra.mrb[0].mxu0 %v8772
  %v11053 = vpop.f32.mrb[0].mxu0
  %v11054 = vadd.f32 %v9869, %v11053
  %v11055 = vpop.f32.mrb[0].mxu0
  %v11056 = vpop.f32.mrb[0].mxu0
  %v11057 = vadd.f32 %v9872, %v11056
  %v11058 = vpop.f32.mrb[0].mxu0
  %11059 = vmatprep.mubr.bf16.mxu0 0
  %11060 = vmatmul.mubr.bf16.gmra.mrb[0].mxu0 %v8775
  %v11061 = vpop.f32.mrb[0].mxu0
  %v11062 = vadd.f32 %v9877, %v11061
  %v11063 = vpop.f32.mrb[0].mxu0
  %v11064 = vpop.f32.mrb[0].mxu0
  %v11065 = vadd.f32 %v9880, %v11064
  %v11066 = vpop.f32.mrb[0].mxu0
  %11067 = vmatprep.mubr.bf16.mxu0 0
  %11068 = vmatmul.mubr.bf16.gmra.mrb[0].mxu0 %v8778
  %v11069 = vpop.f32.mrb[0].mxu0
  %v11070 = vadd.f32 %v9885, %v11069
  %v11071 = vpop.f32.mrb[0].mxu0
  %v11072 = vpop.f32.mrb[0].mxu0
  %v11073 = vadd.f32 %v9888, %v11072
  %v11074 = vpop.f32.mrb[0].mxu0
  %11075 = vmatprep.mubr.bf16.mxu0 0
  %11076 = vmatmul.mubr.bf16.gmra.mrb[0].mxu0 %v8781
  %v11077 = vpop.f32.mrb[0].mxu0
  %v11078 = vadd.f32 %v9893, %v11077
  %v11079 = vpop.f32.mrb[0].mxu0
  %v11080 = vpop.f32.mrb[0].mxu0
  %v11081 = vadd.f32 %v9896, %v11080
  %v11082 = vpop.f32.mrb[0].mxu0
  %11083 = vmatprep.mubr.bf16.mxu0 0
  %11084 = vmatmul.mubr.bf16.gmra.mrb[0].mxu0 %v8784
  %v11085 = vpop.f32.mrb[0].mxu0
  %v11086 = vadd.f32 %v9901, %v11085
  %v11087 = vpop.f32.mrb[0].mxu0
  %v11088 = vpop.f32.mrb[0].mxu0
  %v11089 = vadd.f32 %v9904, %v11088
  %v11090 = vpop.f32.mrb[0].mxu0
  %11091 = vmatprep.mubr.bf16.mxu0 0
  %11092 = vmatmul.mubr.bf16.gmra.mrb[0].mxu0 %v8787
  %v11093 = vpop.f32.mrb[0].mxu0
  %v11094 = vadd.f32 %v9909, %v11093
  %v11095 = vpop.f32.mrb[0].mxu0
  %v11096 = vpop.f32.mrb[0].mxu0
  %v11097 = vadd.f32 %v9912, %v11096
  %v11098 = vpop.f32.mrb[0].mxu0
  %11099 = vmatprep.mubr.bf16.mxu0 0
  %11100 = vmatmul.mubr.bf16.gmra.mrb[0].mxu0 %v8790
  %v11101 = vpop.f32.mrb[0].mxu0
  %v11102 = vadd.f32 %v9917, %v11101
  %v11103 = vpop.f32.mrb[0].mxu0
  %v11104 = vpop.f32.mrb[0].mxu0
  %v11105 = vadd.f32 %v9920, %v11104
  %v11106 = vpop.f32.mrb[0].mxu0
  %11107 = vmatprep.mubr.bf16.mxu0 0
  %11108 = vmatmul.mubr.bf16.gmra.mrb[0].mxu0 %v8793
  %v11109 = vpop.f32.mrb[0].mxu0
  %v11110 = vadd.f32 %v9925, %v11109
  %v11111 = vpop.f32.mrb[0].mxu0
  %v11112 = vpop.f32.mrb[0].mxu0
  %v11113 = vadd.f32 %v9928, %v11112
  %v11114 = vpop.f32.mrb[0].mxu0
  %11115 = vmatprep.mubr.bf16.mxu0 0
  %11116 = vmatmul.mubr.bf16.gmra.mrb[0].mxu0 %v8796
  %v11117 = vpop.f32.mrb[0].mxu0
  %v11118 = vadd.f32 %v9933, %v11117
  %v11119 = vpop.f32.mrb[0].mxu0
  %v11120 = vpop.f32.mrb[0].mxu0
  %v11121 = vadd.f32 %v9936, %v11120
  %v11122 = vpop.f32.mrb[0].mxu0
  %11123 = vmatprep.mubr.bf16.mxu0 0
  %11124 = vmatmul.mubr.bf16.gmra.mrb[0].mxu0 %v8799
  %v11125 = vpop.f32.mrb[0].mxu0
  %v11126 = vadd.f32 %v9941, %v11125
  %v11127 = vpop.f32.mrb[0].mxu0
  %v11128 = vpop.f32.mrb[0].mxu0
  %v11129 = vadd.f32 %v9944, %v11128
  %v11130 = vpop.f32.mrb[0].mxu0
  %11131 = vmatprep.mubr.bf16.mxu0 0
  %11132 = vmatmul.mubr.bf16.gmra.mrb[0].mxu0 %v8802
  %v11133 = vpop.f32.mrb[0].mxu0
  %v11134 = vadd.f32 %v9949, %v11133
  %v11135 = vpop.f32.mrb[0].mxu0
  %v11136 = vpop.f32.mrb[0].mxu0
  %v11137 = vadd.f32 %v9952, %v11136
  %v11138 = vpop.f32.mrb[0].mxu0
  %11139 = vmatprep.mubr.bf16.mxu0 0
  %11140 = vmatmul.mubr.bf16.gmra.mrb[0].mxu0 %v8805
  %v11141 = vpop.f32.mrb[0].mxu0
  %v11142 = vadd.f32 %v9957, %v11141
  %v11143 = vpop.f32.mrb[0].mxu0
  %v11144 = vpop.f32.mrb[0].mxu0
  %v11145 = vadd.f32 %v9960, %v11144
  %v11146 = vpop.f32.mrb[0].mxu0
  %11147 = vmatprep.mubr.bf16.mxu0 0
  %11148 = vmatmul.mubr.bf16.gmra.mrb[0].mxu0 %v8808
  %v11149 = vpop.f32.mrb[0].mxu0
  %v11150 = vadd.f32 %v9965, %v11149
  %v11151 = vpop.f32.mrb[0].mxu0
  %v11152 = vpop.f32.mrb[0].mxu0
  %v11153 = vadd.f32 %v9968, %v11152
  %v11154 = vpop.f32.mrb[0].mxu0
  %11155 = vmatprep.mubr.bf16.mxu0 0
  %11156 = vmatmul.mubr.bf16.gmra.mrb[0].mxu0 %v8811
  %v11157 = vpop.f32.mrb[0].mxu0
  %v11158 = vadd.f32 %v9973, %v11157
  %v11159 = vpop.f32.mrb[0].mxu0
  %v11160 = vpop.f32.mrb[0].mxu0
  %v11161 = vadd.f32 %v9976, %v11160
  %v11162 = vpop.f32.mrb[0].mxu0
  %11163 = vmatprep.mubr.bf16.mxu0 0
  %11164 = vmatmul.mubr.bf16.gmra.mrb[0].mxu0 %v8814
  %v11165 = vpop.f32.mrb[0].mxu0
  %v11166 = vadd.f32 %v9981, %v11165
  %v11167 = vpop.f32.mrb[0].mxu0
  %v11168 = vpop.f32.mrb[0].mxu0
  %v11169 = vadd.f32 %v9984, %v11168
  %v11170 = vpop.f32.mrb[0].mxu0
  %11171 = vmatprep.mubr.bf16.mxu0 0
  %11172 = vmatmul.mubr.bf16.gmra.mrb[0].mxu0 %v8817
  %v11173 = vpop.f32.mrb[0].mxu0
  %v11174 = vadd.f32 %v9989, %v11173
  %v11175 = vpop.f32.mrb[0].mxu0
  %v11176 = vpop.f32.mrb[0].mxu0
  %v11177 = vadd.f32 %v9992, %v11176
  %v11178 = vpop.f32.mrb[0].mxu0
  %11179 = vmatprep.mubr.bf16.mxu0 0
  %11180 = vmatmul.mubr.bf16.gmra.mrb[0].mxu0 %v8820
  %v11181 = vpop.f32.mrb[0].mxu0
  %v11182 = vadd.f32 %v9997, %v11181
  %v11183 = vpop.f32.mrb[0].mxu0
  %v11184 = vpop.f32.mrb[0].mxu0
  %v11185 = vadd.f32 %v10000, %v11184
  %v11186 = vpop.f32.mrb[0].mxu0
  %11187 = vmatprep.mubr.bf16.mxu0 0
  %11188 = vmatmul.mubr.bf16.gmra.mrb[0].mxu0 %v8823
  %v11189 = vpop.f32.mrb[0].mxu0
  %v11190 = vadd.f32 %v10005, %v11189
  %v11191 = vpop.f32.mrb[0].mxu0
  %v11192 = vpop.f32.mrb[0].mxu0
  %v11193 = vadd.f32 %v10008, %v11192
  %v11194 = vpop.f32.mrb[0].mxu0
  %11195 = vmatprep.mubr.bf16.mxu0 0
  %11196 = vmatmul.mubr.bf16.gmra.mrb[0].mxu0 %v8826
  %v11197 = vpop.f32.mrb[0].mxu0
  %v11198 = vadd.f32 %v10013, %v11197
  %v11199 = vpop.f32.mrb[0].mxu0
  %v11200 = vpop.f32.mrb[0].mxu0
  %v11201 = vadd.f32 %v10016, %v11200
  %v11202 = vpop.f32.mrb[0].mxu0
  %11203 = vmatprep.mubr.bf16.mxu0 0
  %11204 = vmatmul.mubr.bf16.gmra.mrb[0].mxu0 %v8829
  %v11205 = vpop.f32.mrb[0].mxu0
  %v11206 = vadd.f32 %v10021, %v11205
  %v11207 = vpop.f32.mrb[0].mxu0
  %v11208 = vpop.f32.mrb[0].mxu0
  %v11209 = vadd.f32 %v10024, %v11208
  %v11210 = vpop.f32.mrb[0].mxu0
  %11211 = vmatprep.mubr.bf16.mxu0 0
  %11212 = vmatmul.mubr.bf16.gmra.mrb[0].mxu0 %v8832
  %v11213 = vpop.f32.mrb[0].mxu0
  %v11214 = vadd.f32 %v10029, %v11213
  %v11215 = vpop.f32.mrb[0].mxu0
  %v11216 = vpop.f32.mrb[0].mxu0
  %v11217 = vadd.f32 %v10032, %v11216
  %v11218 = vpop.f32.mrb[0].mxu0
  %11219 = vmatprep.mubr.bf16.mxu0 0
  %11220 = vmatmul.mubr.bf16.gmra.mrb[0].mxu0 %v8835
  %v11221 = vpop.f32.mrb[0].mxu0
  %v11222 = vadd.f32 %v10037, %v11221
  %v11223 = vpop.f32.mrb[0].mxu0
  %v11224 = vpop.f32.mrb[0].mxu0
  %v11225 = vadd.f32 %v10040, %v11224
  %v11226 = vpop.f32.mrb[0].mxu0
  %11227 = vmatprep.mubr.bf16.mxu0 0
  %11228 = vmatmul.mubr.bf16.gmra.mrb[0].mxu0 %v8838
  %v11229 = vpop.f32.mrb[0].mxu0
  %v11230 = vadd.f32 %v10045, %v11229
  %v11231 = vpop.f32.mrb[0].mxu0
  %v11232 = vpop.f32.mrb[0].mxu0
  %v11233 = vadd.f32 %v10048, %v11232
  %v11234 = vpop.f32.mrb[0].mxu0
  %11235 = vmatprep.mubr.bf16.mxu0 0
  %11236 = vmatmul.mubr.bf16.gmra.mrb[0].mxu0 %v8841
  %v11237 = vpop.f32.mrb[0].mxu0
  %v11238 = vadd.f32 %v10053, %v11237
  %v11239 = vpop.f32.mrb[0].mxu0
  %v11240 = vpop.f32.mrb[0].mxu0
  %v11241 = vadd.f32 %v10056, %v11240
  %v11242 = vpop.f32.mrb[0].mxu0
  %11243 = vmatprep.mubr.bf16.mxu0 0
  %11244 = vmatmul.mubr.bf16.gmra.mrb[0].mxu0 %v8844
  %v11245 = vpop.f32.mrb[0].mxu0
  %v11246 = vadd.f32 %v10061, %v11245
  %v11247 = vpop.f32.mrb[0].mxu0
  %v11248 = vpop.f32.mrb[0].mxu0
  %v11249 = vadd.f32 %v10064, %v11248
  %v11250 = vpop.f32.mrb[0].mxu0
  %11251 = vmatprep.mubr.bf16.mxu0 0
  %11252 = vmatmul.mubr.bf16.gmra.mrb[0].mxu0 %v8847
  %v11253 = vpop.f32.mrb[0].mxu0
  %v11254 = vadd.f32 %v10069, %v11253
  %v11255 = vpop.f32.mrb[0].mxu0
  %v11256 = vpop.f32.mrb[0].mxu0
  %v11257 = vadd.f32 %v10072, %v11256
  %v11258 = vpop.f32.mrb[0].mxu0
  %11259 = vmatprep.mubr.bf16.mxu0 0
  %11260 = vmatmul.mubr.bf16.gmra.mrb[0].mxu0 %v8850
  %v11261 = vpop.f32.mrb[0].mxu0
  %v11262 = vadd.f32 %v10077, %v11261
  %v11263 = vpop.f32.mrb[0].mxu0
  %v11264 = vpop.f32.mrb[0].mxu0
  %v11265 = vadd.f32 %v10080, %v11264
  %v11266 = vpop.f32.mrb[0].mxu0
  %11267 = vmatprep.mubr.bf16.mxu0 0
  %11268 = vmatmul.mubr.bf16.gmra.mrb[0].mxu0 %v8853
  %v11269 = vpop.f32.mrb[0].mxu0
  %v11270 = vadd.f32 %v10085, %v11269
  %v11271 = vpop.f32.mrb[0].mxu0
  %v11272 = vpop.f32.mrb[0].mxu0
  %v11273 = vadd.f32 %v10088, %v11272
  %v11274 = vpop.f32.mrb[0].mxu0
  %11275 = vmatprep.mubr.bf16.mxu0 0
  %11276 = vmatmul.mubr.bf16.gmra.mrb[0].mxu0 %v8856
  %v11277 = vpop.f32.mrb[0].mxu0
  %v11278 = vadd.f32 %v10093, %v11277
  %v11279 = vpop.f32.mrb[0].mxu0
  %v11280 = vpop.f32.mrb[0].mxu0
  %v11281 = vadd.f32 %v10096, %v11280
  %v11282 = vpop.f32.mrb[0].mxu0
  %11283 = vmatprep.mubr.bf16.mxu0 0
  %11284 = vmatmul.mubr.bf16.gmra.mrb[0].mxu0 %v8859
  %v11285 = vpop.f32.mrb[0].mxu0
  %v11286 = vadd.f32 %v10101, %v11285
  %v11287 = vpop.f32.mrb[0].mxu0
  %v11288 = vpop.f32.mrb[0].mxu0
  %v11289 = vadd.f32 %v10104, %v11288
  %v11290 = vpop.f32.mrb[0].mxu0
  %11291 = vmatprep.mubr.bf16.mxu0 0
  %11292 = vmatmul.mubr.bf16.gmra.mrb[0].mxu0 %v8862
  %v11293 = vpop.f32.mrb[0].mxu0
  %v11294 = vadd.f32 %v10109, %v11293
  %v11295 = vpop.f32.mrb[0].mxu0
  %v11296 = vpop.f32.mrb[0].mxu0
  %v11297 = vadd.f32 %v10112, %v11296
  %v11298 = vpop.f32.mrb[0].mxu0
  %11299 = vmatprep.mubr.bf16.mxu0 0
  %11300 = vmatmul.mubr.bf16.gmra.mrb[0].mxu0 %v8865
  %v11301 = vpop.f32.mrb[0].mxu0
  %v11302 = vadd.f32 %v10117, %v11301
  %v11303 = vpop.f32.mrb[0].mxu0
  %v11304 = vpop.f32.mrb[0].mxu0
  %v11305 = vadd.f32 %v10120, %v11304
  %v11306 = vpop.f32.mrb[0].mxu0
  %11307 = vmatprep.mubr.bf16.mxu0 0
  %11308 = vmatmul.mubr.bf16.gmra.mrb[0].mxu0 %v8868
  %v11309 = vpop.f32.mrb[0].mxu0
  %v11310 = vadd.f32 %v10125, %v11309
  %v11311 = vpop.f32.mrb[0].mxu0
  %v11312 = vpop.f32.mrb[0].mxu0
  %v11313 = vadd.f32 %v10128, %v11312
  %v11314 = vpop.f32.mrb[0].mxu0
  %11315 = vmatprep.mubr.bf16.mxu0 0
  %11316 = vmatmul.mubr.bf16.gmra.mrb[0].mxu0 %v8871
  %v11317 = vpop.f32.mrb[0].mxu0
  %v11318 = vadd.f32 %v10133, %v11317
  %v11319 = vpop.f32.mrb[0].mxu0
  %v11320 = vpop.f32.mrb[0].mxu0
  %v11321 = vadd.f32 %v10136, %v11320
  %v11322 = vpop.f32.mrb[0].mxu0
  %11323 = vmatprep.mubr.bf16.mxu0 0
  %11324 = vmatmul.mubr.bf16.gmra.mrb[0].mxu0 %v8874
  %v11325 = vpop.f32.mrb[0].mxu0
  %v11326 = vadd.f32 %v10141, %v11325
  %v11327 = vpop.f32.mrb[0].mxu0
  %v11328 = vpop.f32.mrb[0].mxu0
  %v11329 = vadd.f32 %v10144, %v11328
  %v11330 = vpop.f32.mrb[0].mxu0
  %11331 = vmatprep.mubr.bf16.mxu0 0
  %11332 = vmatmul.mubr.bf16.gmra.mrb[0].mxu0 %v8877
  %v11333 = vpop.f32.mrb[0].mxu0
  %v11334 = vadd.f32 %v10149, %v11333
  %v11335 = vpop.f32.mrb[0].mxu0
  %v11336 = vpop.f32.mrb[0].mxu0
  %v11337 = vadd.f32 %v10152, %v11336
  %v11338 = vpop.f32.mrb[0].mxu0
  %11339 = vmatprep.mubr.bf16.mxu0 0
  %11340 = vmatmul.mubr.bf16.gmra.mrb[0].mxu0 %v8880
  %v11341 = vpop.f32.mrb[0].mxu0
  %v11342 = vadd.f32 %v10157, %v11341
  %v11343 = vpop.f32.mrb[0].mxu0
  %v11344 = vpop.f32.mrb[0].mxu0
  %v11345 = vadd.f32 %v10160, %v11344
  %v11346 = vpop.f32.mrb[0].mxu0
  %11347 = vmatprep.mubr.bf16.mxu0 0
  %11348 = vmatmul.mubr.bf16.gmra.mrb[0].mxu0 %v8883
  %v11349 = vpop.f32.mrb[0].mxu0
  %v11350 = vadd.f32 %v10165, %v11349
  %v11351 = vpop.f32.mrb[0].mxu0
  %v11352 = vpop.f32.mrb[0].mxu0
  %v11353 = vadd.f32 %v10168, %v11352
  %v11354 = vpop.f32.mrb[0].mxu0
  %11355 = vmatprep.mubr.bf16.mxu0 0
  %11356 = vmatmul.mubr.bf16.gmra.mrb[0].mxu0 %v8886
  %v11357 = vpop.f32.mrb[0].mxu0
  %v11358 = vadd.f32 %v10173, %v11357
  %v11359 = vpop.f32.mrb[0].mxu0
  %v11360 = vpop.f32.mrb[0].mxu0
  %v11361 = vadd.f32 %v10176, %v11360
  %v11362 = vpop.f32.mrb[0].mxu0
  %11363 = vmatprep.mubr.bf16.mxu0 0
  %11364 = vmatmul.mubr.bf16.gmra.mrb[0].mxu0 %v8889
  %v11365 = vpop.f32.mrb[0].mxu0
  %v11366 = vadd.f32 %v10181, %v11365
  %v11367 = vpop.f32.mrb[0].mxu0
  %v11368 = vpop.f32.mrb[0].mxu0
  %v11369 = vadd.f32 %v10184, %v11368
  %v11370 = vpop.f32.mrb[0].mxu0
  %11371 = vmatprep.mubr.bf16.mxu0 0
  %11372 = vmatmul.mubr.bf16.gmra.mrb[0].mxu0 %v8892
  %v11373 = vpop.f32.mrb[0].mxu0
  %v11374 = vadd.f32 %v10189, %v11373
  %v11375 = vpop.f32.mrb[0].mxu0
  %v11376 = vpop.f32.mrb[0].mxu0
  %v11377 = vadd.f32 %v10192, %v11376
  %v11378 = vpop.f32.mrb[0].mxu0
  %11379 = vmatprep.mubr.bf16.mxu0 0
  %11380 = vmatmul.mubr.bf16.gmra.mrb[0].mxu0 %v8895
  %v11381 = vpop.f32.mrb[0].mxu0
  %v11382 = vadd.f32 %v10197, %v11381
  %v11383 = vpop.f32.mrb[0].mxu0
  %v11384 = vpop.f32.mrb[0].mxu0
  %v11385 = vadd.f32 %v10200, %v11384
  %v11386 = vpop.f32.mrb[0].mxu0
  %11387 = vmatprep.mubr.bf16.mxu0 0
  %11388 = vmatmul.mubr.bf16.gmra.mrb[0].mxu0 %v8898
  %v11389 = vpop.f32.mrb[0].mxu0
  %v11390 = vadd.f32 %v10205, %v11389
  %v11391 = vpop.f32.mrb[0].mxu0
  %v11392 = vpop.f32.mrb[0].mxu0
  %v11393 = vadd.f32 %v10208, %v11392
  %v11394 = vpop.f32.mrb[0].mxu0
  %11395 = vmatprep.mubr.bf16.mxu0 0
  %11396 = vmatmul.mubr.bf16.gmra.mrb[0].mxu0 %v8901
  %v11397 = vpop.f32.mrb[0].mxu0
  %v11398 = vadd.f32 %v10213, %v11397
  %v11399 = vpop.f32.mrb[0].mxu0
  %v11400 = vpop.f32.mrb[0].mxu0
  %v11401 = vadd.f32 %v10216, %v11400
  %v11402 = vpop.f32.mrb[0].mxu0
  %11403 = vmatprep.mubr.bf16.mxu0 0
  %11404 = vmatmul.mubr.bf16.gmra.mrb[0].mxu0 %v8904
  %v11405 = vpop.f32.mrb[0].mxu0
  %v11406 = vadd.f32 %v10221, %v11405
  %v11407 = vpop.f32.mrb[0].mxu0
  %v11408 = vpop.f32.mrb[0].mxu0
  %v11409 = vadd.f32 %v10224, %v11408
  %v11410 = vpop.f32.mrb[0].mxu0
  %11411 = vmatprep.mubr.bf16.mxu0 0
  %11412 = vmatmul.mubr.bf16.gmra.mrb[0].mxu0 %v8907
  %v11413 = vpop.f32.mrb[0].mxu0
  %v11414 = vadd.f32 %v10229, %v11413
  %v11415 = vpop.f32.mrb[0].mxu0
  %v11416 = vpop.f32.mrb[0].mxu0
  %v11417 = vadd.f32 %v10232, %v11416
  %v11418 = vpop.f32.mrb[0].mxu0
  %11419 = vmatprep.mubr.bf16.mxu0 0
  %11420 = vmatmul.mubr.bf16.gmra.mrb[0].mxu0 %v8910
  %v11421 = vpop.f32.mrb[0].mxu0
  %v11422 = vadd.f32 %v10237, %v11421
  %v11423 = vpop.f32.mrb[0].mxu0
  %v11424 = vpop.f32.mrb[0].mxu0
  %v11425 = vadd.f32 %v10240, %v11424
  %v11426 = vpop.f32.mrb[0].mxu0
  %11427 = vmatprep.mubr.bf16.mxu0 0
  %11428 = vmatmul.mubr.bf16.gmra.mrb[0].mxu0 %v8913
  %v11429 = vpop.f32.mrb[0].mxu0
  %v11430 = vadd.f32 %v10245, %v11429
  %v11431 = vpop.f32.mrb[0].mxu0
  %v11432 = vpop.f32.mrb[0].mxu0
  %v11433 = vadd.f32 %v10248, %v11432
  %v11434 = vpop.f32.mrb[0].mxu0
  %11435 = vmatprep.mubr.bf16.mxu0 0
  %11436 = vmatmul.mubr.bf16.gmra.mrb[0].mxu0 %v8916
  %v11437 = vpop.f32.mrb[0].mxu0
  %v11438 = vadd.f32 %v10253, %v11437
  %v11439 = vpop.f32.mrb[0].mxu0
  %v11440 = vpop.f32.mrb[0].mxu0
  %v11441 = vadd.f32 %v10256, %v11440
  %v11442 = vpop.f32.mrb[0].mxu0
  %11443 = vmatprep.mubr.bf16.mxu0 0
  %11444 = vmatmul.mubr.bf16.gmra.mrb[0].mxu0 %v8919
  %v11445 = vpop.f32.mrb[0].mxu0
  %v11446 = vadd.f32 %v10261, %v11445
  %v11447 = vpop.f32.mrb[0].mxu0
  %v11448 = vpop.f32.mrb[0].mxu0
  %v11449 = vadd.f32 %v10264, %v11448
  %v11450 = vpop.f32.mrb[0].mxu0
  %11451 = vmatprep.mubr.bf16.mxu0 0
  %11452 = vmatmul.mubr.bf16.gmra.mrb[0].mxu0 %v8922
  %v11453 = vpop.f32.mrb[0].mxu0
  %v11454 = vadd.f32 %v10269, %v11453
  %v11455 = vpop.f32.mrb[0].mxu0
  %v11456 = vpop.f32.mrb[0].mxu0
  %v11457 = vadd.f32 %v10272, %v11456
  %v11458 = vpop.f32.mrb[0].mxu0
  %11459 = vmatprep.mubr.bf16.mxu0 0
  %11460 = vmatmul.mubr.bf16.gmra.mrb[0].mxu0 %v8925
  %v11461 = vpop.f32.mrb[0].mxu0
  %v11462 = vadd.f32 %v10277, %v11461
  %v11463 = vpop.f32.mrb[0].mxu0
  %v11464 = vpop.f32.mrb[0].mxu0
  %v11465 = vadd.f32 %v10280, %v11464
  %v11466 = vpop.f32.mrb[0].mxu0
  %11467 = vmatprep.mubr.bf16.mxu0 0
  %11468 = vmatmul.mubr.bf16.gmra.mrb[0].mxu0 %v8928
  %v11469 = vpop.f32.mrb[0].mxu0
  %v11470 = vadd.f32 %v10285, %v11469
  %v11471 = vpop.f32.mrb[0].mxu0
  %v11472 = vpop.f32.mrb[0].mxu0
  %v11473 = vadd.f32 %v10288, %v11472
  %v11474 = vpop.f32.mrb[0].mxu0
  %11475 = vmatprep.mubr.bf16.mxu0 0
  %11476 = vmatmul.mubr.bf16.gmra.mrb[0].mxu0 %v8931
  %v11477 = vpop.f32.mrb[0].mxu0
  %v11478 = vadd.f32 %v10293, %v11477
  %v11479 = vpop.f32.mrb[0].mxu0
  %v11480 = vpop.f32.mrb[0].mxu0
  %v11481 = vadd.f32 %v10296, %v11480
  %v11482 = vpop.f32.mrb[0].mxu0
  %11483 = vmatprep.mubr.bf16.mxu0 0
  %11484 = vmatmul.mubr.bf16.gmra.mrb[0].mxu0 %v8934
  %v11485 = vpop.f32.mrb[0].mxu0
  %v11486 = vadd.f32 %v10301, %v11485
  %v11487 = vpop.f32.mrb[0].mxu0
  %v11488 = vpop.f32.mrb[0].mxu0
  %v11489 = vadd.f32 %v10304, %v11488
  %v11490 = vpop.f32.mrb[0].mxu0
  %11491 = vmatprep.mubr.bf16.mxu0 0
  %11492 = vmatmul.mubr.bf16.gmra.mrb[0].mxu0 %v8937
  %v11493 = vpop.f32.mrb[0].mxu0
  %v11494 = vadd.f32 %v10309, %v11493
  %v11495 = vpop.f32.mrb[0].mxu0
  %v11496 = vpop.f32.mrb[0].mxu0
  %v11497 = vadd.f32 %v10312, %v11496
  %v11498 = vpop.f32.mrb[0].mxu0
  %11499 = vmatprep.mubr.bf16.mxu0 0
  %11500 = vmatmul.mubr.bf16.gmra.mrb[0].mxu0 %v8940
  %v11501 = vpop.f32.mrb[0].mxu0
  %v11502 = vadd.f32 %v10317, %v11501
  %v11503 = vpop.f32.mrb[0].mxu0
  %v11504 = vpop.f32.mrb[0].mxu0
  %v11505 = vadd.f32 %v10320, %v11504
  %v11506 = vpop.f32.mrb[0].mxu0
  %11507 = vmatprep.mubr.bf16.mxu0 0
  %11508 = vmatmul.mubr.bf16.gmra.mrb[0].mxu0 %v8943
  %v11509 = vpop.f32.mrb[0].mxu0
  %v11510 = vadd.f32 %v10325, %v11509
  %v11511 = vpop.f32.mrb[0].mxu0
  %v11512 = vpop.f32.mrb[0].mxu0
  %v11513 = vadd.f32 %v10328, %v11512
  %v11514 = vpop.f32.mrb[0].mxu0
  %11515 = vmatprep.mubr.bf16.mxu0 0
  %11516 = vmatmul.mubr.bf16.gmra.mrb[0].mxu0 %v8946
  %v11517 = vpop.f32.mrb[0].mxu0
  %v11518 = vadd.f32 %v10333, %v11517
  %v11519 = vpop.f32.mrb[0].mxu0
  %v11520 = vpop.f32.mrb[0].mxu0
  %v11521 = vadd.f32 %v10336, %v11520
  %v11522 = vpop.f32.mrb[0].mxu0
  %11523 = vmatprep.mubr.bf16.mxu0 0
  %11524 = vmatmul.mubr.bf16.gmra.mrb[0].mxu0 %v8949
  %v11525 = vpop.f32.mrb[0].mxu0
  %v11526 = vadd.f32 %v10341, %v11525
  %v11527 = vpop.f32.mrb[0].mxu0
  %v11528 = vpop.f32.mrb[0].mxu0
  %v11529 = vadd.f32 %v10344, %v11528
  %v11530 = vpop.f32.mrb[0].mxu0
  %11531 = vmatprep.mubr.bf16.mxu0 0
  %11532 = vmatmul.mubr.bf16.gmra.mrb[0].mxu0 %v8952
  %v11533 = vpop.f32.mrb[0].mxu0
  %v11534 = vadd.f32 %v10349, %v11533
  %v11535 = vpop.f32.mrb[0].mxu0
  %v11536 = vpop.f32.mrb[0].mxu0
  %v11537 = vadd.f32 %v10352, %v11536
  %v11538 = vpop.f32.mrb[0].mxu0
  %11539 = vmatprep.mubr.bf16.mxu0 0
  %11540 = vmatmul.mubr.bf16.gmra.mrb[0].mxu0 %v8955
  %v11541 = vpop.f32.mrb[0].mxu0
  %v11542 = vadd.f32 %v10357, %v11541
  %v11543 = vpop.f32.mrb[0].mxu0
  %v11544 = vpop.f32.mrb[0].mxu0
  %v11545 = vadd.f32 %v10360, %v11544
  %v11546 = vpop.f32.mrb[0].mxu0
  %11547 = vmatprep.mubr.bf16.mxu0 0
  %11548 = vmatmul.mubr.bf16.gmra.mrb[0].mxu0 %v8958
  %v11549 = vpop.f32.mrb[0].mxu0
  %v11550 = vadd.f32 %v10365, %v11549
  %v11551 = vpop.f32.mrb[0].mxu0
  %v11552 = vpop.f32.mrb[0].mxu0
  %v11553 = vadd.f32 %v10368, %v11552
  %v11554 = vpop.f32.mrb[0].mxu0
  %11555 = vmatprep.mubr.bf16.mxu0 0
  %11556 = vmatmul.mubr.bf16.gmra.mrb[0].mxu0 %v8961
  %v11557 = vpop.f32.mrb[0].mxu0
  %v11558 = vadd.f32 %v10373, %v11557
  %v11559 = vpop.f32.mrb[0].mxu0
  %v11560 = vpop.f32.mrb[0].mxu0
  %v11561 = vadd.f32 %v10376, %v11560
  %v11562 = vpop.f32.mrb[0].mxu0
  %11563 = vmatprep.mubr.bf16.mxu0 0
  %11564 = vmatmul.mubr.bf16.gmra.mrb[0].mxu0 %v8964
  %v11565 = vpop.f32.mrb[0].mxu0
  %v11566 = vadd.f32 %v10381, %v11565
  %v11567 = vpop.f32.mrb[0].mxu0
  %v11568 = vpop.f32.mrb[0].mxu0
  %v11569 = vadd.f32 %v10384, %v11568
  %v11570 = vpop.f32.mrb[0].mxu0
  %11571 = vmatprep.mubr.bf16.mxu0 0
  %11572 = vmatmul.mubr.bf16.gmra.mrb[0].mxu0 %v8967
  %v11573 = vpop.f32.mrb[0].mxu0
  %v11574 = vadd.f32 %v10389, %v11573
  %v11575 = vpop.f32.mrb[0].mxu0
  %v11576 = vpop.f32.mrb[0].mxu0
  %v11577 = vadd.f32 %v10392, %v11576
  %v11578 = vpop.f32.mrb[0].mxu0
  %11579 = vmatprep.mubr.bf16.mxu0 0
  %11580 = vmatmul.mubr.bf16.gmra.mrb[0].mxu0 %v8970
  %v11581 = vpop.f32.mrb[0].mxu0
  %v11582 = vadd.f32 %v10397, %v11581
  %v11583 = vpop.f32.mrb[0].mxu0
  %v11584 = vpop.f32.mrb[0].mxu0
  %v11585 = vadd.f32 %v10400, %v11584
  %v11586 = vpop.f32.mrb[0].mxu0
  %11587 = vmatprep.mubr.bf16.mxu0 0
  %11588 = vmatmul.mubr.bf16.gmra.mrb[0].mxu0 %v8973
  %v11589 = vpop.f32.mrb[0].mxu0
  %v11590 = vadd.f32 %v10405, %v11589
  %v11591 = vpop.f32.mrb[0].mxu0
  %v11592 = vpop.f32.mrb[0].mxu0
  %v11593 = vadd.f32 %v10408, %v11592
  %v11594 = vpop.f32.mrb[0].mxu0
  %11595 = vmatprep.mubr.bf16.mxu0 0
  %11596 = vmatmul.mubr.bf16.gmra.mrb[0].mxu0 %v8976
  %v11597 = vpop.f32.mrb[0].mxu0
  %v11598 = vadd.f32 %v10413, %v11597
  %v11599 = vpop.f32.mrb[0].mxu0
  %v11600 = vpop.f32.mrb[0].mxu0
  %v11601 = vadd.f32 %v10416, %v11600
  %v11602 = vpop.f32.mrb[0].mxu0
  %11603 = vmatprep.mubr.bf16.mxu0 0
  %11604 = vmatmul.mubr.bf16.gmra.mrb[0].mxu0 %v8979
  %v11605 = vpop.f32.mrb[0].mxu0
  %v11606 = vadd.f32 %v10421, %v11605
  %v11607 = vpop.f32.mrb[0].mxu0
  %v11608 = vpop.f32.mrb[0].mxu0
  %v11609 = vadd.f32 %v10424, %v11608
  %v11610 = vpop.f32.mrb[0].mxu0
  %11611 = vmatprep.mubr.bf16.mxu0 0
  %11612 = vmatmul.mubr.bf16.gmra.mrb[0].mxu0 %v8982
  %v11613 = vpop.f32.mrb[0].mxu0
  %v11614 = vadd.f32 %v10429, %v11613
  %v11615 = vpop.f32.mrb[0].mxu0
  %v11616 = vpop.f32.mrb[0].mxu0
  %v11617 = vadd.f32 %v10432, %v11616
  %v11618 = vpop.f32.mrb[0].mxu0
  %11619 = vmatprep.mubr.bf16.mxu0 0
  %11620 = vmatmul.mubr.bf16.gmra.mrb[0].mxu0 %v8985
  %v11621 = vpop.f32.mrb[0].mxu0
  %v11622 = vadd.f32 %v10437, %v11621
  %v11623 = vpop.f32.mrb[0].mxu0
  %v11624 = vpop.f32.mrb[0].mxu0
  %v11625 = vadd.f32 %v10440, %v11624
  %v11626 = vpop.f32.mrb[0].mxu0
  %11627 = vmatprep.mubr.bf16.mxu0 0
  %11628 = vmatmul.mubr.bf16.gmra.mrb[0].mxu0 %v8988
  %v11629 = vpop.f32.mrb[0].mxu0
  %v11630 = vadd.f32 %v10445, %v11629
  %v11631 = vpop.f32.mrb[0].mxu0
  %v11632 = vpop.f32.mrb[0].mxu0
  %v11633 = vadd.f32 %v10448, %v11632
  %v11634 = vpop.f32.mrb[0].mxu0
  %11635 = vmatprep.mubr.bf16.mxu0 0
  %11636 = vmatmul.mubr.bf16.gmra.mrb[0].mxu0 %v8991
  %v11637 = vpop.f32.mrb[0].mxu0
  %v11638 = vadd.f32 %v10453, %v11637
  %v11639 = vpop.f32.mrb[0].mxu0
  %v11640 = vpop.f32.mrb[0].mxu0
  %v11641 = vadd.f32 %v10456, %v11640
  %v11642 = vpop.f32.mrb[0].mxu0
  %11643 = vmatprep.mubr.bf16.mxu0 0
  %11644 = vmatmul.mubr.bf16.gmra.mrb[0].mxu0 %v8994
  %v11645 = vpop.f32.mrb[0].mxu0
  %v11646 = vadd.f32 %v10461, %v11645
  %v11647 = vpop.f32.mrb[0].mxu0
  %v11648 = vpop.f32.mrb[0].mxu0
  %v11649 = vadd.f32 %v10464, %v11648
  %v11650 = vpop.f32.mrb[0].mxu0
  %11651 = vmatprep.mubr.bf16.mxu0 0
  %11652 = vmatmul.mubr.bf16.gmra.mrb[0].mxu0 %v8997
  %v11653 = vpop.f32.mrb[0].mxu0
  %v11654 = vadd.f32 %v10469, %v11653
  %v11655 = vpop.f32.mrb[0].mxu0
  %v11656 = vpop.f32.mrb[0].mxu0
  %v11657 = vadd.f32 %v10472, %v11656
  %v11658 = vpop.f32.mrb[0].mxu0
  %11659 = vmatprep.mubr.bf16.mxu0 0
  %11660 = vmatmul.mubr.bf16.gmra.mrb[0].mxu0 %v9000
  %v11661 = vpop.f32.mrb[0].mxu0
  %v11662 = vadd.f32 %v10477, %v11661
  %v11663 = vpop.f32.mrb[0].mxu0
  %v11664 = vpop.f32.mrb[0].mxu0
  %v11665 = vadd.f32 %v10480, %v11664
  %v11666 = vpop.f32.mrb[0].mxu0
  %11667 = vmatprep.mubr.bf16.mxu0 0
  %11668 = vmatmul.mubr.bf16.gmra.mrb[0].mxu0 %v9003
  %v11669 = vpop.f32.mrb[0].mxu0
  %v11670 = vadd.f32 %v10485, %v11669
  %v11671 = vpop.f32.mrb[0].mxu0
  %v11672 = vpop.f32.mrb[0].mxu0
  %v11673 = vadd.f32 %v10488, %v11672
  %v11674 = vpop.f32.mrb[0].mxu0
  %11675 = vmatprep.mubr.bf16.mxu0 0
  %11676 = vmatmul.mubr.bf16.gmra.mrb[0].mxu0 %v9006
  %v11677 = vpop.f32.mrb[0].mxu0
  %v11678 = vadd.f32 %v10493, %v11677
  %v11679 = vpop.f32.mrb[0].mxu0
  %v11680 = vpop.f32.mrb[0].mxu0
  %v11681 = vadd.f32 %v10496, %v11680
  %v11682 = vpop.f32.mrb[0].mxu0
  %11683 = vmatprep.mubr.bf16.mxu0 0
  %11684 = vmatmul.mubr.bf16.gmra.mrb[0].mxu0 %v9009
  %v11685 = vpop.f32.mrb[0].mxu0
  %v11686 = vadd.f32 %v10501, %v11685
  %v11687 = vpop.f32.mrb[0].mxu0
  %v11688 = vpop.f32.mrb[0].mxu0
  %v11689 = vadd.f32 %v10504, %v11688
  %v11690 = vpop.f32.mrb[0].mxu0
  %11691 = vmatprep.mubr.bf16.mxu0 0
  %11692 = vmatmul.mubr.bf16.gmra.mrb[0].mxu0 %v9012
  %v11693 = vpop.f32.mrb[0].mxu0
  %v11694 = vadd.f32 %v10509, %v11693
  %v11695 = vpop.f32.mrb[0].mxu0
  %v11696 = vpop.f32.mrb[0].mxu0
  %v11697 = vadd.f32 %v10512, %v11696
  %v11698 = vpop.f32.mrb[0].mxu0
  %11699 = vmatprep.mubr.bf16.mxu0 0
  %11700 = vmatmul.mubr.bf16.gmra.mrb[0].mxu0 %v9015
  %v11701 = vpop.f32.mrb[0].mxu0
  %v11702 = vadd.f32 %v10517, %v11701
  %v11703 = vpop.f32.mrb[0].mxu0
  %v11704 = vpop.f32.mrb[0].mxu0
  %v11705 = vadd.f32 %v10520, %v11704
  %v11706 = vpop.f32.mrb[0].mxu0
  %11707 = vmatprep.mubr.bf16.mxu0 0
  %11708 = vmatmul.mubr.bf16.gmra.mrb[0].mxu0 %v9018
  %v11709 = vpop.f32.mrb[0].mxu0
  %v11710 = vadd.f32 %v10525, %v11709
  %v11711 = vpop.f32.mrb[0].mxu0
  %v11712 = vpop.f32.mrb[0].mxu0
  %v11713 = vadd.f32 %v10528, %v11712
  %v11714 = vpop.f32.mrb[0].mxu0
  %11715 = vmatprep.mubr.bf16.mxu0 0
  %11716 = vmatmul.mubr.bf16.gmra.mrb[0].mxu0 %v9021
  %v11717 = vpop.f32.mrb[0].mxu0
  %v11718 = vadd.f32 %v10533, %v11717
  %v11719 = vpop.f32.mrb[0].mxu0
  %v11720 = vpop.f32.mrb[0].mxu0
  %v11721 = vadd.f32 %v10536, %v11720
  %v11722 = vpop.f32.mrb[0].mxu0
  %11723 = vmatprep.mubr.bf16.mxu0 0
  %11724 = vmatmul.mubr.bf16.gmra.mrb[0].mxu0 %v9024
  %v11725 = vpop.f32.mrb[0].mxu0
  %v11726 = vadd.f32 %v10541, %v11725
  %v11727 = vpop.f32.mrb[0].mxu0
  %v11728 = vpop.f32.mrb[0].mxu0
  %v11729 = vadd.f32 %v10544, %v11728
  %v11730 = vpop.f32.mrb[0].mxu0
  %11731 = vmatprep.mubr.bf16.mxu0 0
  %11732 = vmatmul.mubr.bf16.gmra.mrb[0].mxu0 %v9027
  %v11733 = vpop.f32.mrb[0].mxu0
  %v11734 = vadd.f32 %v10549, %v11733
  %v11735 = vpop.f32.mrb[0].mxu0
  %v11736 = vpop.f32.mrb[0].mxu0
  %v11737 = vadd.f32 %v10552, %v11736
  %v11738 = vpop.f32.mrb[0].mxu0
  %11739 = vmatprep.mubr.bf16.mxu0 0
  %11740 = vmatmul.mubr.bf16.gmra.mrb[0].mxu0 %v9030
  %v11741 = vpop.f32.mrb[0].mxu0
  %v11742 = vadd.f32 %v10557, %v11741
  %v11743 = vpop.f32.mrb[0].mxu0
  %v11744 = vpop.f32.mrb[0].mxu0
  %v11745 = vadd.f32 %v10560, %v11744
  %v11746 = vpop.f32.mrb[0].mxu0
  %11747 = vmatprep.mubr.bf16.mxu0 0
  %11748 = vmatmul.mubr.bf16.gmra.mrb[0].mxu0 %v9033
  %v11749 = vpop.f32.mrb[0].mxu0
  %v11750 = vadd.f32 %v10565, %v11749
  %v11751 = vpop.f32.mrb[0].mxu0
  %v11752 = vpop.f32.mrb[0].mxu0
  %v11753 = vadd.f32 %v10568, %v11752
  %v11754 = vpop.f32.mrb[0].mxu0
  %11755 = vmatprep.mubr.bf16.mxu0 0
  %11756 = vmatmul.mubr.bf16.gmra.mrb[0].mxu0 %v9036
  %v11757 = vpop.f32.mrb[0].mxu0
  %v11758 = vadd.f32 %v10573, %v11757
  %v11759 = vpop.f32.mrb[0].mxu0
  %v11760 = vpop.f32.mrb[0].mxu0
  %v11761 = vadd.f32 %v10576, %v11760
  %v11762 = vpop.f32.mrb[0].mxu0
  %11763 = vmatprep.mubr.bf16.mxu0 0
  %11764 = vmatmul.mubr.bf16.gmra.mrb[0].mxu0 %v9039
  %v11765 = vpop.f32.mrb[0].mxu0
  %v11766 = vadd.f32 %v10581, %v11765
  %v11767 = vpop.f32.mrb[0].mxu0
  %v11768 = vpop.f32.mrb[0].mxu0
  %v11769 = vadd.f32 %v10584, %v11768
  %v11770 = vpop.f32.mrb[0].mxu0
  %11771 = vmatprep.mubr.bf16.mxu0 0
  %11772 = vmatmul.mubr.bf16.gmra.mrb[0].mxu0 %v9042
  %v11773 = vpop.f32.mrb[0].mxu0
  %v11774 = vadd.f32 %v10589, %v11773
  %v11775 = vpop.f32.mrb[0].mxu0
  %v11776 = vpop.f32.mrb[0].mxu0
  %v11777 = vadd.f32 %v10592, %v11776
  %v11778 = vpop.f32.mrb[0].mxu0
  %11779 = vmatprep.mubr.bf16.mxu0 0
  %11780 = vmatmul.mubr.bf16.gmra.mrb[0].mxu0 %v9045
  %v11781 = vpop.f32.mrb[0].mxu0
  %v11782 = vadd.f32 %v10597, %v11781
  %v11783 = vpop.f32.mrb[0].mxu0
  %v11784 = vpop.f32.mrb[0].mxu0
  %v11785 = vadd.f32 %v10600, %v11784
  %v11786 = vpop.f32.mrb[0].mxu0
  %11787 = vmatprep.mubr.bf16.mxu0 0
  %11788 = vmatmul.mubr.bf16.gmra.mrb[0].mxu0 %v9048
  %v11789 = vpop.f32.mrb[0].mxu0
  %v11790 = vadd.f32 %v10605, %v11789
  %v11791 = vpop.f32.mrb[0].mxu0
  %v11792 = vpop.f32.mrb[0].mxu0
  %v11793 = vadd.f32 %v10608, %v11792
  %v11794 = vpop.f32.mrb[0].mxu0
  %11795 = vmatprep.mubr.bf16.mxu0 0
  %11796 = vmatmul.mubr.bf16.gmra.mrb[0].mxu0 %v9051
  %v11797 = vpop.f32.mrb[0].mxu0
  %v11798 = vadd.f32 %v10613, %v11797
  %v11799 = vpop.f32.mrb[0].mxu0
  %v11800 = vpop.f32.mrb[0].mxu0
  %v11801 = vadd.f32 %v10616, %v11800
  %v11802 = vpop.f32.mrb[0].mxu0
  %11803 = vmatprep.mubr.bf16.mxu0 0
  %11804 = vmatmul.mubr.bf16.gmra.mrb[0].mxu0 %v9054
  %v11805 = vpop.f32.mrb[0].mxu0
  %v11806 = vadd.f32 %v10621, %v11805
  %v11807 = vpop.f32.mrb[0].mxu0
  %v11808 = vpop.f32.mrb[0].mxu0
  %v11809 = vadd.f32 %v10624, %v11808
  %v11810 = vpop.f32.mrb[0].mxu0
  %11811 = vmatprep.mubr.bf16.mxu0 0
  %11812 = vmatmul.mubr.bf16.gmra.mrb[0].mxu0 %v9057
  %v11813 = vpop.f32.mrb[0].mxu0
  %v11814 = vadd.f32 %v10629, %v11813
  %v11815 = vpop.f32.mrb[0].mxu0
  %v11816 = vpop.f32.mrb[0].mxu0
  %v11817 = vadd.f32 %v10632, %v11816
  %v11818 = vpop.f32.mrb[0].mxu0
  %11819 = vmatprep.mubr.bf16.mxu0 0
  %11820 = vmatmul.mubr.bf16.gmra.mrb[0].mxu0 %v9060
  %v11821 = vpop.f32.mrb[0].mxu0
  %v11822 = vadd.f32 %v10637, %v11821
  %v11823 = vpop.f32.mrb[0].mxu0
  %v11824 = vpop.f32.mrb[0].mxu0
  %v11825 = vadd.f32 %v10640, %v11824
  %v11826 = vpop.f32.mrb[0].mxu0
  %11827 = vmatprep.mubr.bf16.mxu0 0
  %11828 = vmatmul.mubr.bf16.gmra.mrb[0].mxu0 %v9063
  %v11829 = vpop.f32.mrb[0].mxu0
  %v11830 = vadd.f32 %v10645, %v11829
  %v11831 = vpop.f32.mrb[0].mxu0
  %v11832 = vpop.f32.mrb[0].mxu0
  %v11833 = vadd.f32 %v10648, %v11832
  %v11834 = vpop.f32.mrb[0].mxu0
  %11835 = vmatprep.mubr.bf16.mxu0 0
  %11836 = vmatmul.mubr.bf16.gmra.mrb[0].mxu0 %v9066
  %v11837 = vpop.f32.mrb[0].mxu0
  %v11838 = vadd.f32 %v10653, %v11837
  %v11839 = vpop.f32.mrb[0].mxu0
  %v11840 = vpop.f32.mrb[0].mxu0
  %v11841 = vadd.f32 %v10656, %v11840
  %v11842 = vpop.f32.mrb[0].mxu0
  %11843 = vmatprep.mubr.bf16.mxu0 0
  %11844 = vmatmul.mubr.bf16.gmra.mrb[0].mxu0 %v9069
  %v11845 = vpop.f32.mrb[0].mxu0
  %v11846 = vadd.f32 %v10661, %v11845
  %v11847 = vpop.f32.mrb[0].mxu0
  %v11848 = vpop.f32.mrb[0].mxu0
  %v11849 = vadd.f32 %v10664, %v11848
  %v11850 = vpop.f32.mrb[0].mxu0
  %11851 = vmatprep.mubr.bf16.mxu0 0
  %11852 = vmatmul.mubr.bf16.gmra.mrb[0].mxu0 %v9072
  %v11853 = vpop.f32.mrb[0].mxu0
  %v11854 = vadd.f32 %v10669, %v11853
  %v11855 = vpop.f32.mrb[0].mxu0
  %v11856 = vpop.f32.mrb[0].mxu0
  %v11857 = vadd.f32 %v10672, %v11856
  %v11858 = vpop.f32.mrb[0].mxu0
  %11859 = vmatprep.mubr.bf16.mxu0 0
  %11860 = vmatmul.mubr.bf16.gmra.mrb[0].mxu0 %v9075
  %v11861 = vpop.f32.mrb[0].mxu0
  %v11862 = vadd.f32 %v10677, %v11861
  %v11863 = vpop.f32.mrb[0].mxu0
  %v11864 = vpop.f32.mrb[0].mxu0
  %v11865 = vadd.f32 %v10680, %v11864
  %v11866 = vpop.f32.mrb[0].mxu0
  %11867 = vmatprep.mubr.bf16.mxu0 0
  %11868 = vmatmul.mubr.bf16.gmra.mrb[0].mxu0 %v9078
  %v11869 = vpop.f32.mrb[0].mxu0
  %v11870 = vadd.f32 %v10685, %v11869
  %v11871 = vpop.f32.mrb[0].mxu0
  %v11872 = vpop.f32.mrb[0].mxu0
  %v11873 = vadd.f32 %v10688, %v11872
  %v11874 = vpop.f32.mrb[0].mxu0
  %11875 = vmatprep.mubr.bf16.mxu0 0
  %11876 = vmatmul.mubr.bf16.gmra.mrb[0].mxu0 %v9081
  %v11877 = vpop.f32.mrb[0].mxu0
  %v11878 = vadd.f32 %v10693, %v11877
  %v11879 = vpop.f32.mrb[0].mxu0
  %v11880 = vpop.f32.mrb[0].mxu0
  %v11881 = vadd.f32 %v10696, %v11880
  %v11882 = vpop.f32.mrb[0].mxu0
  %11883 = vdwg.mxu0
  %11884 = vst.msk [vmem:[%s6] sm:$0xff] %vm5073, %v10734
  %11885 = vst.msk [vmem:[%s6 + $0x8] sm:$0xff] %vm5073, %v10737
  %11886 = vst.msk [vmem:[%s6 + $0x10] sm:$0xff] %vm5073, %v10742
  %11887 = vst.msk [vmem:[%s6 + $0x18] sm:$0xff] %vm5073, %v10745
  %11888 = vst.msk [vmem:[%s6 + $0x20] sm:$0xff] %vm5073, %v10750
  %11889 = vst.msk [vmem:[%s6 + $0x28] sm:$0xff] %vm5073, %v10753
  %11890 = vst.msk [vmem:[%s6 + $0x30] sm:$0xff] %vm5073, %v10758
  %11891 = vst.msk [vmem:[%s6 + $0x38] sm:$0xff] %vm5073, %v10761
  %11892 = vst.msk [vmem:[%s6 + $0x40] sm:$0xff] %vm5073, %v10766
  %11893 = vst.msk [vmem:[%s6 + $0x48] sm:$0xff] %vm5073, %v10769
  %11894 = vst.msk [vmem:[%s6 + $0x50] sm:$0xff] %vm5073, %v10774
  %11895 = vst.msk [vmem:[%s6 + $0x58] sm:$0xff] %vm5073, %v10777
  %11896 = vst.msk [vmem:[%s6 + $0x60] sm:$0xff] %vm5073, %v10782
  %11897 = vst.msk [vmem:[%s6 + $0x68] sm:$0xff] %vm5073, %v10785
  %11898 = vst.msk [vmem:[%s6 + $0x70] sm:$0xff] %vm5073, %v10790
  %11899 = vst.msk [vmem:[%s6 + $0x78] sm:$0xff] %vm5073, %v10793
  %11900 = vst.msk [vmem:[%s6 + $0x80] sm:$0xff] %vm5073, %v10798
  %11901 = vst.msk [vmem:[%s6 + $0x88] sm:$0xff] %vm5073, %v10801
  %11902 = vst.msk [vmem:[%s6 + $0x90] sm:$0xff] %vm5073, %v10806
  %11903 = vst.msk [vmem:[%s6 + $0x98] sm:$0xff] %vm5073, %v10809
  %11904 = vst.msk [vmem:[%s6 + $0xa0] sm:$0xff] %vm5073, %v10814
  %11905 = vst.msk [vmem:[%s6 + $0xa8] sm:$0xff] %vm5073, %v10817
  %11906 = vst.msk [vmem:[%s6 + $0xb0] sm:$0xff] %vm5073, %v10822
  %11907 = vst.msk [vmem:[%s6 + $0xb8] sm:$0xff] %vm5073, %v10825
  %11908 = vst.msk [vmem:[%s6 + $0xc0] sm:$0xff] %vm5073, %v10830
  %11909 = vst.msk [vmem:[%s6 + $0xc8] sm:$0xff] %vm5073, %v10833
  %11910 = vst.msk [vmem:[%s6 + $0xd0] sm:$0xff] %vm5073, %v10838
  %11911 = vst.msk [vmem:[%s6 + $0xd8] sm:$0xff] %vm5073, %v10841
  %11912 = vst.msk [vmem:[%s6 + $0xe0] sm:$0xff] %vm5073, %v10846
  %11913 = vst.msk [vmem:[%s6 + $0xe8] sm:$0xff] %vm5073, %v10849
  %11914 = vst.msk [vmem:[%s6 + $0xf0] sm:$0xff] %vm5073, %v10854
  %11915 = vst.msk [vmem:[%s6 + $0xf8] sm:$0xff] %vm5073, %v10857
  %11916 = vst.msk [vmem:[%s6 + $0x100] sm:$0xff] %vm5073, %v10862
  %11917 = vst.msk [vmem:[%s6 + $0x108] sm:$0xff] %vm5073, %v10865
  %11918 = vst.msk [vmem:[%s6 + $0x110] sm:$0xff] %vm5073, %v10870
  %11919 = vst.msk [vmem:[%s6 + $0x118] sm:$0xff] %vm5073, %v10873
  %11920 = vst.msk [vmem:[%s6 + $0x120] sm:$0xff] %vm5073, %v10878
  %11921 = vst.msk [vmem:[%s6 + $0x128] sm:$0xff] %vm5073, %v10881
  %11922 = vst.msk [vmem:[%s6 + $0x130] sm:$0xff] %vm5073, %v10886
  %11923 = vst.msk [vmem:[%s6 + $0x138] sm:$0xff] %vm5073, %v10889
  %11924 = vst.msk [vmem:[%s6 + $0x140] sm:$0xff] %vm5073, %v10894
  %11925 = vst.msk [vmem:[%s6 + $0x148] sm:$0xff] %vm5073, %v10897
  %11926 = vst.msk [vmem:[%s6 + $0x150] sm:$0xff] %vm5073, %v10902
  %11927 = vst.msk [vmem:[%s6 + $0x158] sm:$0xff] %vm5073, %v10905
  %11928 = vst.msk [vmem:[%s6 + $0x160] sm:$0xff] %vm5073, %v10910
  %11929 = vst.msk [vmem:[%s6 + $0x168] sm:$0xff] %vm5073, %v10913
  %11930 = vst.msk [vmem:[%s6 + $0x170] sm:$0xff] %vm5073, %v10918
  %11931 = vst.msk [vmem:[%s6 + $0x178] sm:$0xff] %vm5073, %v10921
  %11932 = vst.msk [vmem:[%s6 + $0x180] sm:$0xff] %vm5073, %v10926
  %11933 = vst.msk [vmem:[%s6 + $0x188] sm:$0xff] %vm5073, %v10929
  %11934 = vst.msk [vmem:[%s6 + $0x190] sm:$0xff] %vm5073, %v10934
  %11935 = vst.msk [vmem:[%s6 + $0x198] sm:$0xff] %vm5073, %v10937
  %11936 = vst.msk [vmem:[%s6 + $0x1a0] sm:$0xff] %vm5073, %v10942
  %11937 = vst.msk [vmem:[%s6 + $0x1a8] sm:$0xff] %vm5073, %v10945
  %11938 = vst.msk [vmem:[%s6 + $0x1b0] sm:$0xff] %vm5073, %v10950
  %11939 = vst.msk [vmem:[%s6 + $0x1b8] sm:$0xff] %vm5073, %v10953
  %11940 = vst.msk [vmem:[%s6 + $0x1c0] sm:$0xff] %vm5073, %v10958
  %11941 = vst.msk [vmem:[%s6 + $0x1c8] sm:$0xff] %vm5073, %v10961
  %11942 = vst.msk [vmem:[%s6 + $0x1d0] sm:$0xff] %vm5073, %v10966
  %11943 = vst.msk [vmem:[%s6 + $0x1d8] sm:$0xff] %vm5073, %v10969
  %11944 = vst.msk [vmem:[%s6 + $0x1e0] sm:$0xff] %vm5073, %v10974
  %11945 = vst.msk [vmem:[%s6 + $0x1e8] sm:$0xff] %vm5073, %v10977
  %11946 = vst.msk [vmem:[%s6 + $0x1f0] sm:$0xff] %vm5073, %v10982
  %11947 = vst.msk [vmem:[%s6 + $0x1f8] sm:$0xff] %vm5073, %v10985
  %11948 = vst.msk [vmem:[%s6 + $0x200] sm:$0xff] %vm5073, %v10990
  %11949 = vst.msk [vmem:[%s6 + $0x208] sm:$0xff] %vm5073, %v10993
  %11950 = vst.msk [vmem:[%s6 + $0x210] sm:$0xff] %vm5073, %v10998
  %11951 = vst.msk [vmem:[%s6 + $0x218] sm:$0xff] %vm5073, %v11001
  %11952 = vst.msk [vmem:[%s6 + $0x220] sm:$0xff] %vm5073, %v11006
  %11953 = vst.msk [vmem:[%s6 + $0x228] sm:$0xff] %vm5073, %v11009
  %11954 = vst.msk [vmem:[%s6 + $0x230] sm:$0xff] %vm5073, %v11014
  %11955 = vst.msk [vmem:[%s6 + $0x238] sm:$0xff] %vm5073, %v11017
  %11956 = vst.msk [vmem:[%s6 + $0x240] sm:$0xff] %vm5073, %v11022
  %11957 = vst.msk [vmem:[%s6 + $0x248] sm:$0xff] %vm5073, %v11025
  %11958 = vst.msk [vmem:[%s6 + $0x250] sm:$0xff] %vm5073, %v11030
  %11959 = vst.msk [vmem:[%s6 + $0x258] sm:$0xff] %vm5073, %v11033
  %11960 = vst.msk [vmem:[%s6 + $0x260] sm:$0xff] %vm5073, %v11038
  %11961 = vst.msk [vmem:[%s6 + $0x268] sm:$0xff] %vm5073, %v11041
  %11962 = vst.msk [vmem:[%s6 + $0x270] sm:$0xff] %vm5073, %v11046
  %11963 = vst.msk [vmem:[%s6 + $0x278] sm:$0xff] %vm5073, %v11049
  %11964 = vst.msk [vmem:[%s6 + $0x280] sm:$0xff] %vm5073, %v11054
  %11965 = vst.msk [vmem:[%s6 + $0x288] sm:$0xff] %vm5073, %v11057
  %11966 = vst.msk [vmem:[%s6 + $0x290] sm:$0xff] %vm5073, %v11062
  %11967 = vst.msk [vmem:[%s6 + $0x298] sm:$0xff] %vm5073, %v11065
  %11968 = vst.msk [vmem:[%s6 + $0x2a0] sm:$0xff] %vm5073, %v11070
  %11969 = vst.msk [vmem:[%s6 + $0x2a8] sm:$0xff] %vm5073, %v11073
  %11970 = vst.msk [vmem:[%s6 + $0x2b0] sm:$0xff] %vm5073, %v11078
  %11971 = vst.msk [vmem:[%s6 + $0x2b8] sm:$0xff] %vm5073, %v11081
  %11972 = vst.msk [vmem:[%s6 + $0x2c0] sm:$0xff] %vm5073, %v11086
  %11973 = vst.msk [vmem:[%s6 + $0x2c8] sm:$0xff] %vm5073, %v11089
  %11974 = vst.msk [vmem:[%s6 + $0x2d0] sm:$0xff] %vm5073, %v11094
  %11975 = vst.msk [vmem:[%s6 + $0x2d8] sm:$0xff] %vm5073, %v11097
  %11976 = vst.msk [vmem:[%s6 + $0x2e0] sm:$0xff] %vm5073, %v11102
  %11977 = vst.msk [vmem:[%s6 + $0x2e8] sm:$0xff] %vm5073, %v11105
  %11978 = vst.msk [vmem:[%s6 + $0x2f0] sm:$0xff] %vm5073, %v11110
  %11979 = vst.msk [vmem:[%s6 + $0x2f8] sm:$0xff] %vm5073, %v11113
  %11980 = vst.msk [vmem:[%s6 + $0x300] sm:$0xff] %vm5073, %v11118
  %11981 = vst.msk [vmem:[%s6 + $0x308] sm:$0xff] %vm5073, %v11121
  %11982 = vst.msk [vmem:[%s6 + $0x310] sm:$0xff] %vm5073, %v11126
  %11983 = vst.msk [vmem:[%s6 + $0x318] sm:$0xff] %vm5073, %v11129
  %11984 = vst.msk [vmem:[%s6 + $0x320] sm:$0xff] %vm5073, %v11134
  %11985 = vst.msk [vmem:[%s6 + $0x328] sm:$0xff] %vm5073, %v11137
  %11986 = vst.msk [vmem:[%s6 + $0x330] sm:$0xff] %vm5073, %v11142
  %11987 = vst.msk [vmem:[%s6 + $0x338] sm:$0xff] %vm5073, %v11145
  %11988 = vst.msk [vmem:[%s6 + $0x340] sm:$0xff] %vm5073, %v11150
  %11989 = vst.msk [vmem:[%s6 + $0x348] sm:$0xff] %vm5073, %v11153
  %11990 = vst.msk [vmem:[%s6 + $0x350] sm:$0xff] %vm5073, %v11158
  %11991 = vst.msk [vmem:[%s6 + $0x358] sm:$0xff] %vm5073, %v11161
  %11992 = vst.msk [vmem:[%s6 + $0x360] sm:$0xff] %vm5073, %v11166
  %11993 = vst.msk [vmem:[%s6 + $0x368] sm:$0xff] %vm5073, %v11169
  %11994 = vst.msk [vmem:[%s6 + $0x370] sm:$0xff] %vm5073, %v11174
  %11995 = vst.msk [vmem:[%s6 + $0x378] sm:$0xff] %vm5073, %v11177
  %11996 = vst.msk [vmem:[%s6 + $0x380] sm:$0xff] %vm5073, %v11182
  %11997 = vst.msk [vmem:[%s6 + $0x388] sm:$0xff] %vm5073, %v11185
  %11998 = vst.msk [vmem:[%s6 + $0x390] sm:$0xff] %vm5073, %v11190
  %11999 = vst.msk [vmem:[%s6 + $0x398] sm:$0xff] %vm5073, %v11193
  %12000 = vst.msk [vmem:[%s6 + $0x3a0] sm:$0xff] %vm5073, %v11198
  %12001 = vst.msk [vmem:[%s6 + $0x3a8] sm:$0xff] %vm5073, %v11201
  %12002 = vst.msk [vmem:[%s6 + $0x3b0] sm:$0xff] %vm5073, %v11206
  %12003 = vst.msk [vmem:[%s6 + $0x3b8] sm:$0xff] %vm5073, %v11209
  %12004 = vst.msk [vmem:[%s6 + $0x3c0] sm:$0xff] %vm5073, %v11214
  %12005 = vst.msk [vmem:[%s6 + $0x3c8] sm:$0xff] %vm5073, %v11217
  %12006 = vst.msk [vmem:[%s6 + $0x3d0] sm:$0xff] %vm5073, %v11222
  %12007 = vst.msk [vmem:[%s6 + $0x3d8] sm:$0xff] %vm5073, %v11225
  %12008 = vst.msk [vmem:[%s6 + $0x3e0] sm:$0xff] %vm5073, %v11230
  %12009 = vst.msk [vmem:[%s6 + $0x3e8] sm:$0xff] %vm5073, %v11233
  %12010 = vst.msk [vmem:[%s6 + $0x3f0] sm:$0xff] %vm5073, %v11238
  %12011 = vst.msk [vmem:[%s6 + $0x3f8] sm:$0xff] %vm5073, %v11241
  %12012 = vst.msk [vmem:[%s6 + $0x400] sm:$0xff] %vm5073, %v11246
  %12013 = vst.msk [vmem:[%s6 + $0x408] sm:$0xff] %vm5073, %v11249
  %12014 = vst.msk [vmem:[%s6 + $0x410] sm:$0xff] %vm5073, %v11254
  %12015 = vst.msk [vmem:[%s6 + $0x418] sm:$0xff] %vm5073, %v11257
  %12016 = vst.msk [vmem:[%s6 + $0x420] sm:$0xff] %vm5073, %v11262
  %12017 = vst.msk [vmem:[%s6 + $0x428] sm:$0xff] %vm5073, %v11265
  %12018 = vst.msk [vmem:[%s6 + $0x430] sm:$0xff] %vm5073, %v11270
  %12019 = vst.msk [vmem:[%s6 + $0x438] sm:$0xff] %vm5073, %v11273
  %12020 = vst.msk [vmem:[%s6 + $0x440] sm:$0xff] %vm5073, %v11278
  %12021 = vst.msk [vmem:[%s6 + $0x448] sm:$0xff] %vm5073, %v11281
  %12022 = vst.msk [vmem:[%s6 + $0x450] sm:$0xff] %vm5073, %v11286
  %12023 = vst.msk [vmem:[%s6 + $0x458] sm:$0xff] %vm5073, %v11289
  %12024 = vst.msk [vmem:[%s6 + $0x460] sm:$0xff] %vm5073, %v11294
  %12025 = vst.msk [vmem:[%s6 + $0x468] sm:$0xff] %vm5073, %v11297
  %12026 = vst.msk [vmem:[%s6 + $0x470] sm:$0xff] %vm5073, %v11302
  %12027 = vst.msk [vmem:[%s6 + $0x478] sm:$0xff] %vm5073, %v11305
  %12028 = vst.msk [vmem:[%s6 + $0x480] sm:$0xff] %vm5073, %v11310
  %12029 = vst.msk [vmem:[%s6 + $0x488] sm:$0xff] %vm5073, %v11313
  %12030 = vst.msk [vmem:[%s6 + $0x490] sm:$0xff] %vm5073, %v11318
  %12031 = vst.msk [vmem:[%s6 + $0x498] sm:$0xff] %vm5073, %v11321
  %12032 = vst.msk [vmem:[%s6 + $0x4a0] sm:$0xff] %vm5073, %v11326
  %12033 = vst.msk [vmem:[%s6 + $0x4a8] sm:$0xff] %vm5073, %v11329
  %12034 = vst.msk [vmem:[%s6 + $0x4b0] sm:$0xff] %vm5073, %v11334
  %12035 = vst.msk [vmem:[%s6 + $0x4b8] sm:$0xff] %vm5073, %v11337
  %12036 = vst.msk [vmem:[%s6 + $0x4c0] sm:$0xff] %vm5073, %v11342
  %12037 = vst.msk [vmem:[%s6 + $0x4c8] sm:$0xff] %vm5073, %v11345
  %12038 = vst.msk [vmem:[%s6 + $0x4d0] sm:$0xff] %vm5073, %v11350
  %12039 = vst.msk [vmem:[%s6 + $0x4d8] sm:$0xff] %vm5073, %v11353
  %12040 = vst.msk [vmem:[%s6 + $0x4e0] sm:$0xff] %vm5073, %v11358
  %12041 = vst.msk [vmem:[%s6 + $0x4e8] sm:$0xff] %vm5073, %v11361
  %12042 = vst.msk [vmem:[%s6 + $0x4f0] sm:$0xff] %vm5073, %v11366
  %12043 = vst.msk [vmem:[%s6 + $0x4f8] sm:$0xff] %vm5073, %v11369
  %12044 = vst.msk [vmem:[%s6 + $0x500] sm:$0xff] %vm5073, %v11374
  %12045 = vst.msk [vmem:[%s6 + $0x508] sm:$0xff] %vm5073, %v11377
  %12046 = vst.msk [vmem:[%s6 + $0x510] sm:$0xff] %vm5073, %v11382
  %12047 = vst.msk [vmem:[%s6 + $0x518] sm:$0xff] %vm5073, %v11385
  %12048 = vst.msk [vmem:[%s6 + $0x520] sm:$0xff] %vm5073, %v11390
  %12049 = vst.msk [vmem:[%s6 + $0x528] sm:$0xff] %vm5073, %v11393
  %12050 = vst.msk [vmem:[%s6 + $0x530] sm:$0xff] %vm5073, %v11398
  %12051 = vst.msk [vmem:[%s6 + $0x538] sm:$0xff] %vm5073, %v11401
  %12052 = vst.msk [vmem:[%s6 + $0x540] sm:$0xff] %vm5073, %v11406
  %12053 = vst.msk [vmem:[%s6 + $0x548] sm:$0xff] %vm5073, %v11409
  %12054 = vst.msk [vmem:[%s6 + $0x550] sm:$0xff] %vm5073, %v11414
  %12055 = vst.msk [vmem:[%s6 + $0x558] sm:$0xff] %vm5073, %v11417
  %12056 = vst.msk [vmem:[%s6 + $0x560] sm:$0xff] %vm5073, %v11422
  %12057 = vst.msk [vmem:[%s6 + $0x568] sm:$0xff] %vm5073, %v11425
  %12058 = vst.msk [vmem:[%s6 + $0x570] sm:$0xff] %vm5073, %v11430
  %12059 = vst.msk [vmem:[%s6 + $0x578] sm:$0xff] %vm5073, %v11433
  %12060 = vst.msk [vmem:[%s6 + $0x580] sm:$0xff] %vm5073, %v11438
  %12061 = vst.msk [vmem:[%s6 + $0x588] sm:$0xff] %vm5073, %v11441
  %12062 = vst.msk [vmem:[%s6 + $0x590] sm:$0xff] %vm5073, %v11446
  %12063 = vst.msk [vmem:[%s6 + $0x598] sm:$0xff] %vm5073, %v11449
  %12064 = vst.msk [vmem:[%s6 + $0x5a0] sm:$0xff] %vm5073, %v11454
  %12065 = vst.msk [vmem:[%s6 + $0x5a8] sm:$0xff] %vm5073, %v11457
  %12066 = vst.msk [vmem:[%s6 + $0x5b0] sm:$0xff] %vm5073, %v11462
  %12067 = vst.msk [vmem:[%s6 + $0x5b8] sm:$0xff] %vm5073, %v11465
  %12068 = vst.msk [vmem:[%s6 + $0x5c0] sm:$0xff] %vm5073, %v11470
  %12069 = vst.msk [vmem:[%s6 + $0x5c8] sm:$0xff] %vm5073, %v11473
  %12070 = vst.msk [vmem:[%s6 + $0x5d0] sm:$0xff] %vm5073, %v11478
  %12071 = vst.msk [vmem:[%s6 + $0x5d8] sm:$0xff] %vm5073, %v11481
  %12072 = vst.msk [vmem:[%s6 + $0x5e0] sm:$0xff] %vm5073, %v11486
  %12073 = vst.msk [vmem:[%s6 + $0x5e8] sm:$0xff] %vm5073, %v11489
  %12074 = vst.msk [vmem:[%s6 + $0x5f0] sm:$0xff] %vm5073, %v11494
  %12075 = vst.msk [vmem:[%s6 + $0x5f8] sm:$0xff] %vm5073, %v11497
  %12076 = vst.msk [vmem:[%s6 + $0x600] sm:$0xff] %vm5073, %v11502
  %12077 = vst.msk [vmem:[%s6 + $0x608] sm:$0xff] %vm5073, %v11505
  %12078 = vst.msk [vmem:[%s6 + $0x610] sm:$0xff] %vm5073, %v11510
  %12079 = vst.msk [vmem:[%s6 + $0x618] sm:$0xff] %vm5073, %v11513
  %12080 = vst.msk [vmem:[%s6 + $0x620] sm:$0xff] %vm5073, %v11518
  %12081 = vst.msk [vmem:[%s6 + $0x628] sm:$0xff] %vm5073, %v11521
  %12082 = vst.msk [vmem:[%s6 + $0x630] sm:$0xff] %vm5073, %v11526
  %12083 = vst.msk [vmem:[%s6 + $0x638] sm:$0xff] %vm5073, %v11529
  %12084 = vst.msk [vmem:[%s6 + $0x640] sm:$0xff] %vm5073, %v11534
  %12085 = vst.msk [vmem:[%s6 + $0x648] sm:$0xff] %vm5073, %v11537
  %12086 = vst.msk [vmem:[%s6 + $0x650] sm:$0xff] %vm5073, %v11542
  %12087 = vst.msk [vmem:[%s6 + $0x658] sm:$0xff] %vm5073, %v11545
  %12088 = vst.msk [vmem:[%s6 + $0x660] sm:$0xff] %vm5073, %v11550
  %12089 = vst.msk [vmem:[%s6 + $0x668] sm:$0xff] %vm5073, %v11553
  %12090 = vst.msk [vmem:[%s6 + $0x670] sm:$0xff] %vm5073, %v11558
  %12091 = vst.msk [vmem:[%s6 + $0x678] sm:$0xff] %vm5073, %v11561
  %12092 = vst.msk [vmem:[%s6 + $0x680] sm:$0xff] %vm5073, %v11566
  %12093 = vst.msk [vmem:[%s6 + $0x688] sm:$0xff] %vm5073, %v11569
  %12094 = vst.msk [vmem:[%s6 + $0x690] sm:$0xff] %vm5073, %v11574
  %12095 = vst.msk [vmem:[%s6 + $0x698] sm:$0xff] %vm5073, %v11577
  %12096 = vst.msk [vmem:[%s6 + $0x6a0] sm:$0xff] %vm5073, %v11582
  %12097 = vst.msk [vmem:[%s6 + $0x6a8] sm:$0xff] %vm5073, %v11585
  %12098 = vst.msk [vmem:[%s6 + $0x6b0] sm:$0xff] %vm5073, %v11590
  %12099 = vst.msk [vmem:[%s6 + $0x6b8] sm:$0xff] %vm5073, %v11593
  %12100 = vst.msk [vmem:[%s6 + $0x6c0] sm:$0xff] %vm5073, %v11598
  %12101 = vst.msk [vmem:[%s6 + $0x6c8] sm:$0xff] %vm5073, %v11601
  %12102 = vst.msk [vmem:[%s6 + $0x6d0] sm:$0xff] %vm5073, %v11606
  %12103 = vst.msk [vmem:[%s6 + $0x6d8] sm:$0xff] %vm5073, %v11609
  %12104 = vst.msk [vmem:[%s6 + $0x6e0] sm:$0xff] %vm5073, %v11614
  %12105 = vst.msk [vmem:[%s6 + $0x6e8] sm:$0xff] %vm5073, %v11617
  %12106 = vst.msk [vmem:[%s6 + $0x6f0] sm:$0xff] %vm5073, %v11622
  %12107 = vst.msk [vmem:[%s6 + $0x6f8] sm:$0xff] %vm5073, %v11625
  %12108 = vst.msk [vmem:[%s6 + $0x700] sm:$0xff] %vm5073, %v11630
  %12109 = vst.msk [vmem:[%s6 + $0x708] sm:$0xff] %vm5073, %v11633
  %12110 = vst.msk [vmem:[%s6 + $0x710] sm:$0xff] %vm5073, %v11638
  %12111 = vst.msk [vmem:[%s6 + $0x718] sm:$0xff] %vm5073, %v11641
  %12112 = vst.msk [vmem:[%s6 + $0x720] sm:$0xff] %vm5073, %v11646
  %12113 = vst.msk [vmem:[%s6 + $0x728] sm:$0xff] %vm5073, %v11649
  %12114 = vst.msk [vmem:[%s6 + $0x730] sm:$0xff] %vm5073, %v11654
  %12115 = vst.msk [vmem:[%s6 + $0x738] sm:$0xff] %vm5073, %v11657
  %12116 = vst.msk [vmem:[%s6 + $0x740] sm:$0xff] %vm5073, %v11662
  %12117 = vst.msk [vmem:[%s6 + $0x748] sm:$0xff] %vm5073, %v11665
  %12118 = vst.msk [vmem:[%s6 + $0x750] sm:$0xff] %vm5073, %v11670
  %12119 = vst.msk [vmem:[%s6 + $0x758] sm:$0xff] %vm5073, %v11673
  %12120 = vst.msk [vmem:[%s6 + $0x760] sm:$0xff] %vm5073, %v11678
  %12121 = vst.msk [vmem:[%s6 + $0x768] sm:$0xff] %vm5073, %v11681
  %12122 = vst.msk [vmem:[%s6 + $0x770] sm:$0xff] %vm5073, %v11686
  %12123 = vst.msk [vmem:[%s6 + $0x778] sm:$0xff] %vm5073, %v11689
  %12124 = vst.msk [vmem:[%s6 + $0x780] sm:$0xff] %vm5073, %v11694
  %12125 = vst.msk [vmem:[%s6 + $0x788] sm:$0xff] %vm5073, %v11697
  %12126 = vst.msk [vmem:[%s6 + $0x790] sm:$0xff] %vm5073, %v11702
  %12127 = vst.msk [vmem:[%s6 + $0x798] sm:$0xff] %vm5073, %v11705
  %12128 = vst.msk [vmem:[%s6 + $0x7a0] sm:$0xff] %vm5073, %v11710
  %12129 = vst.msk [vmem:[%s6 + $0x7a8] sm:$0xff] %vm5073, %v11713
  %12130 = vst.msk [vmem:[%s6 + $0x7b0] sm:$0xff] %vm5073, %v11718
  %12131 = vst.msk [vmem:[%s6 + $0x7b8] sm:$0xff] %vm5073, %v11721
  %12132 = vst.msk [vmem:[%s6 + $0x7c0] sm:$0xff] %vm5073, %v11726
  %12133 = vst.msk [vmem:[%s6 + $0x7c8] sm:$0xff] %vm5073, %v11729
  %12134 = vst.msk [vmem:[%s6 + $0x7d0] sm:$0xff] %vm5073, %v11734
  %12135 = vst.msk [vmem:[%s6 + $0x7d8] sm:$0xff] %vm5073, %v11737
  %12136 = vst.msk [vmem:[%s6 + $0x7e0] sm:$0xff] %vm5073, %v11742
  %12137 = vst.msk [vmem:[%s6 + $0x7e8] sm:$0xff] %vm5073, %v11745
  %12138 = vst.msk [vmem:[%s6 + $0x7f0] sm:$0xff] %vm5073, %v11750
  %12139 = vst.msk [vmem:[%s6 + $0x7f8] sm:$0xff] %vm5073, %v11753
  %12140 = vst.msk [vmem:[%s6 + $0x800] sm:$0xff] %vm5073, %v11758
  %12141 = vst.msk [vmem:[%s6 + $0x808] sm:$0xff] %vm5073, %v11761
  %12142 = vst.msk [vmem:[%s6 + $0x810] sm:$0xff] %vm5073, %v11766
  %12143 = vst.msk [vmem:[%s6 + $0x818] sm:$0xff] %vm5073, %v11769
  %12144 = vst.msk [vmem:[%s6 + $0x820] sm:$0xff] %vm5073, %v11774
  %12145 = vst.msk [vmem:[%s6 + $0x828] sm:$0xff] %vm5073, %v11777
  %12146 = vst.msk [vmem:[%s6 + $0x830] sm:$0xff] %vm5073, %v11782
  %12147 = vst.msk [vmem:[%s6 + $0x838] sm:$0xff] %vm5073, %v11785
  %12148 = vst.msk [vmem:[%s6 + $0x840] sm:$0xff] %vm5073, %v11790
  %12149 = vst.msk [vmem:[%s6 + $0x848] sm:$0xff] %vm5073, %v11793
  %12150 = vst.msk [vmem:[%s6 + $0x850] sm:$0xff] %vm5073, %v11798
  %12151 = vst.msk [vmem:[%s6 + $0x858] sm:$0xff] %vm5073, %v11801
  %12152 = vst.msk [vmem:[%s6 + $0x860] sm:$0xff] %vm5073, %v11806
  %12153 = vst.msk [vmem:[%s6 + $0x868] sm:$0xff] %vm5073, %v11809
  %12154 = vst.msk [vmem:[%s6 + $0x870] sm:$0xff] %vm5073, %v11814
  %12155 = vst.msk [vmem:[%s6 + $0x878] sm:$0xff] %vm5073, %v11817
  %12156 = vst.msk [vmem:[%s6 + $0x880] sm:$0xff] %vm5073, %v11822
  %12157 = vst.msk [vmem:[%s6 + $0x888] sm:$0xff] %vm5073, %v11825
  %12158 = vst.msk [vmem:[%s6 + $0x890] sm:$0xff] %vm5073, %v11830
  %12159 = vst.msk [vmem:[%s6 + $0x898] sm:$0xff] %vm5073, %v11833
  %12160 = vst.msk [vmem:[%s6 + $0x8a0] sm:$0xff] %vm5073, %v11838
  %12161 = vst.msk [vmem:[%s6 + $0x8a8] sm:$0xff] %vm5073, %v11841
  %12162 = vst.msk [vmem:[%s6 + $0x8b0] sm:$0xff] %vm5073, %v11846
  %12163 = vst.msk [vmem:[%s6 + $0x8b8] sm:$0xff] %vm5073, %v11849
  %12164 = vst.msk [vmem:[%s6 + $0x8c0] sm:$0xff] %vm5073, %v11854
  %12165 = vst.msk [vmem:[%s6 + $0x8c8] sm:$0xff] %vm5073, %v11857
  %12166 = vst.msk [vmem:[%s6 + $0x8d0] sm:$0xff] %vm5073, %v11862
  %12167 = vst.msk [vmem:[%s6 + $0x8d8] sm:$0xff] %vm5073, %v11865
  %12168 = vst.msk [vmem:[%s6 + $0x8e0] sm:$0xff] %vm5073, %v11870
  %12169 = vst.msk [vmem:[%s6 + $0x8e8] sm:$0xff] %vm5073, %v11873
  %12170 = vst.msk [vmem:[%s6 + $0x8f0] sm:$0xff] %vm5073, %v11878
  %12171 = vst.msk [vmem:[%s6 + $0x8f8] sm:$0xff] %vm5073, %v11881
  // Predicated region
  $region26: #{fused_forward.1} parent=0 // pred_check
    _
  $region27: #{fused_forward.1} parent=0 // pred_check_branch
    %12173 = sbr.rel (0) target = $region29
  $region28: #{fused_forward.1} parent=0 // pred_region
    _
  $region29: #{fused_forward.1} parent=0 // pred_fallthru
    _
  // Predicated region
  $region30: #{fused_forward.1} parent=0 // pred_check
    _
  $region31: #{fused_forward.1} parent=0 // pred_check_branch
    %12175 = sbr.rel (0) target = $region33
  $region32: #{fused_forward.1} parent=0 // pred_region
    _
  $region33: #{fused_forward.1} parent=0 // pred_fallthru
    _

</llo_original>
